<compile_context>
chip_gen: v7x
topology: tpu7x:2x2x1
jax: 0.10.0
libtpu: 0.0.40
codegen_flags: <defaults>
</compile_context>

<pallas_src>
import functools
import math

import numpy as np

import jax
import jax.numpy as jnp
from jax import lax
from jax.experimental import pallas as pl
from jax.experimental.pallas import tpu as pltpu


# ----------------------------------------------------------------------------
# Static layer plan (mirrors the MyEncoder / MyDecoder Sequential structure)
# ----------------------------------------------------------------------------
def _make_plan(nlayers, nchannels):
    C = nchannels
    plan = []
    # --- encoder ---
    plan.append(dict(kind="conv", stride=1, relu=False, cout=C))      # 1 -> C
    for _ in range(nlayers - 1):
        plan.append(dict(kind="conv", stride=1, relu=True, cout=C))   # C -> C, +ReLU
        plan.append(dict(kind="conv", stride=2, relu=False, cout=C))  # C -> C, L/2
    plan.append(dict(kind="conv", stride=1, relu=False, cout=1))      # C -> 1 bottleneck
    # (Flatten / unsqueeze at the bottleneck are pure shape no-ops in our layout)
    # --- decoder ---
    for _ in range(nlayers - 1):
        plan.append(dict(kind="convT", stride=2, relu=True, cout=C))  # L*2, +ReLU
        plan.append(dict(kind="conv", stride=1, relu=False, cout=C))
    plan.append(dict(kind="conv", stride=1, relu=False, cout=1))      # C -> 1
    return plan


# ----------------------------------------------------------------------------
# Fused Pallas kernel: whole autoencoder forward in one call
# ----------------------------------------------------------------------------
def _fused_autoencoder_kernel(*refs, plan, batch):
    """refs = (x_ref, *param_refs, out_ref).

    x_ref   : (B*L, 1) f32   -- per-sample length on sublanes, channels on lanes
    params  : per layer, in plan order:
                conv  stride 1: W (3*Cin, Cout), bias (1, Cout)
                conv  stride 2: W, bias, S (B*Lout, B*Lin)   0/1 row-select
                convT         : We (3*Cin, Cout), Wo (2*Cin, Cout),
                                bias (1, Cout), P (B*2Lin, 2*B*Lin) interleave
    out_ref : (B*L, 1) f32
    """
    x_ref = refs[0]
    out_ref = refs[-1]
    it = iter(refs[1:-1])

    dot = functools.partial(jnp.dot, precision=lax.Precision.HIGHEST,
                            preferred_element_type=jnp.float32)

    h = x_ref[...]                                       # (B*L, 1)

    for layer in plan:
        rows, cin = h.shape
        lin = rows // batch

        # Batch-boundary-aware shifted copies of the activation: row r = b*lin+n
        # gets x[n-1] / x[n+1] of the SAME sample, 0 outside the sample.
        row = lax.broadcasted_iota(jnp.int32, (rows, cin), 0)
        not_first = (row % lin) != 0
        not_last = (row % lin) != (lin - 1)
        zrow = jnp.zeros((1, cin), jnp.float32)
        h_prev = jnp.where(not_first,
                           jnp.concatenate([zrow, h[:rows - 1, :]], axis=0), 0.0)
        h_next = jnp.where(not_last,
                           jnp.concatenate([h[1:, :], zrow], axis=0), 0.0)

        if layer["kind"] == "conv":                      # Conv1d(k=3, pad=1)
            w = next(it)[...]
            bias = next(it)[...]
            # im2col: 3 taps concatenated on the lane axis -> one MXU matmul.
            y = dot(jnp.concatenate([h_prev, h, h_next], axis=1), w) + bias
            if layer["stride"] == 2:
                sel = next(it)[...]
                y = dot(sel, y)                          # keep even rows (no strided read)
            if layer["relu"]:
                y = jnp.maximum(y, 0.0)
        else:                                            # ConvTranspose1d(k=5,s=2,p=2,op=1)
            we = next(it)[...]
            wo = next(it)[...]
            bias = next(it)[...]
            perm = next(it)[...]
            # Polyphase: even outputs use taps (4,2,0), odd outputs taps (3,1).
            ye = dot(jnp.concatenate([h_prev, h, h_next], axis=1), we)
            yo = dot(jnp.concatenate([h, h_next], axis=1), wo)
            y = dot(perm, jnp.concatenate([ye, yo], axis=0)) + bias
            if layer["relu"]:
                y = jnp.maximum(y, 0.0)
        h = y

    out_ref[...] = h.astype(out_ref.dtype)               # (B*L, 1)


# ----------------------------------------------------------------------------
# Forward wrapper: splice precomputed selection/interleave matrices and call
# the single fused pallas_call.
# ----------------------------------------------------------------------------
def autoencoder_forward(kparams, x, *, nlayers=3, nchannels=16):
    """x: (B, L) float32 -> (B, 1, L) float32 (same as MyAutoencoder.forward)."""
    B, L = x.shape
    assert L % (2 ** (nlayers - 1)) == 0, "L must be divisible by 2**(nlayers-1)"
    plan = _make_plan(nlayers, nchannels)

    # Flatten per-layer params and splice in the static 0/1 selection /
    # interleave matrices.  They depend only on (B, L, plan), so they are plain
    # numpy constants baked in at trace time (zero per-call glue ops).
    flat = []
    lcur = L
    for layer, p in zip(plan, kparams):
        if layer["kind"] == "conv":
            w, b = p
            flat += [w, b]
            if layer["stride"] == 2:
                lout = (lcur - 1) // 2 + 1
                sel = np.zeros((B * lout, B * lcur), np.float32)
                for bb in range(B):
                    for m in range(lout):
                        sel[bb * lout + m, bb * lcur + 2 * m] = 1.0
                flat.append(jnp.asarray(sel))
                lcur = lout
        else:
            we, wo, b = p
            lout = 2 * lcur
            perm = np.zeros((B * lout, 2 * B * lcur), np.float32)
            for bb in range(B):
                for m in range(lcur):
                    perm[bb * lout + 2 * m, bb * lcur + m] = 1.0
                    perm[bb * lout + 2 * m + 1, B * lcur + bb * lcur + m] = 1.0
            flat += [we, wo, b, jnp.asarray(perm)]
            lcur = lout
    assert lcur == L

    out = pl.pallas_call(
        functools.partial(_fused_autoencoder_kernel, plan=plan, batch=B),
        out_shape=jax.ShapeDtypeStruct((B * L, 1), jnp.float32),
        in_specs=[pl.BlockSpec(memory_space=pltpu.MemorySpace.VMEM)] * (1 + len(flat)),
        out_specs=pl.BlockSpec(memory_space=pltpu.MemorySpace.VMEM),
    )(x.astype(jnp.float32).reshape(B * L, 1), *flat)

    # (B*L, 1) -> (B, 1, L): metadata-only reshapes in XLA.
    return out.reshape(B, L)[:, None, :]


# ----------------------------------------------------------------------------
# Parameters: PyTorch-style raw weights + one-time re-layout for the kernel
# ----------------------------------------------------------------------------
def init_params(key, nlayers=3, nchannels=16):
    """Raw parameters (PyTorch layouts, uniform init), in plan order.

    conv : w (Cout, Cin, 3), b (Cout,)
    convT: w (Cin, Cout, 5), b (Cout,)
    """
    plan = _make_plan(nlayers, nchannels)
    keys = list(jax.random.split(key, 2 * len(plan)))
    ki = iter(keys)

    raw = []
    cin = 1
    for layer in plan:
        cout = layer["cout"]
        if layer["kind"] == "conv":
            k = 3
            bound = 1.0 / math.sqrt(cin * k)
            w = jax.random.uniform(next(ki), (cout, cin, k), jnp.float32, -bound, bound)
        else:
            k = 5
            bound = 1.0 / math.sqrt(cout * k)
            w = jax.random.uniform(next(ki), (cin, cout, k), jnp.float32, -bound, bound)
        b = jax.random.uniform(next(ki), (cout,), jnp.float32, -bound, bound)
        raw.append((w, b))
        cin = cout
    return raw


def preprocess_params(raw, nlayers=3, nchannels=16):
    """One-time weight re-layout for the fused kernel (done at init, not per call)."""
    plan = _make_plan(nlayers, nchannels)
    out = []
    for layer, (w, b) in zip(plan, raw):
        if layer["kind"] == "conv":
            cout, cin, k = w.shape
            # im2col weight: row (tap*Cin + c) multiplies x[n - 1 + tap, c]
            wcat = jnp.transpose(w, (2, 1, 0)).reshape(k * cin, cout)
            out.append((wcat, b.reshape(1, cout)))
        else:
            cin, cout, _ = w.shape
            # polyphase split: even outputs use taps (4, 2, 0), odd use (3, 1)
            we = jnp.concatenate([w[:, :, 4], w[:, :, 2], w[:, :, 0]], axis=0)
            wo = jnp.concatenate([w[:, :, 3], w[:, :, 1]], axis=0)
            out.append((we, wo, b.reshape(1, cout)))
    return out


# ----------------------------------------------------------------------------
# NumPy reference (direct PyTorch Conv1d / ConvTranspose1d semantics)
# ----------------------------------------------------------------------------
def _ref_conv1d(x, w, b, stride, padding):
    B, cin, L = x.shape
    cout, _, K = w.shape
    xp = np.zeros((B, cin, L + 2 * padding), x.dtype)
    xp[:, :, padding:padding + L] = x
    lout = (L + 2 * padding - K) // stride + 1
    y = np.zeros((B, cout, lout), x.dtype)
    for n in range(lout):
        seg = xp[:, :, n * stride:n * stride + K]
        y[:, :, n] = np.einsum("bck,ock->bo", seg, w)
    return y + b[None, :, None]


def _ref_conv_transpose1d(x, w, b, stride, padding, output_padding):
    B, cin, L = x.shape
    _, cout, K = w.shape
    lout = (L - 1) * stride - 2 * padding + K + output_padding
    y = np.zeros((B, cout, lout), x.dtype)
    for m in range(L):
        for k in range(K):
            n = m * stride - padding + k
            if 0 <= n < lout:
                y[:, :, n] += np.einsum("bc,co->bo", x[:, :, m], w[:, :, k])
    return y + b[None, :, None]


def reference_forward(raw, x, nlayers=3, nchannels=16):
    plan = _make_plan(nlayers, nchannels)
    h = np.asarray(x, np.float64)[:, None, :]      # NCL
    for layer, (w, b) in zip(plan, raw):
        w = np.asarray(w, np.float64)
        b = np.asarray(b, np.float64)
        if layer["kind"] == "conv":
            h = _ref_conv1d(h, w, b, stride=layer["stride"], padding=1)
        else:
            h = _ref_conv_transpose1d(h, w, b, stride=2, padding=2, output_padding=1)
        if layer["relu"]:
            h = np.maximum(h, 0.0)
    return h                                        # (B, 1, L)


# ----------------------------------------------------------------------------
if __name__ == "__main__":
    key = jax.random.PRNGKey(0)
    pkey, xkey = jax.random.split(key)

    nlayers, nchannels = 3, 16
    B, L = 2, 16                       # L divisible by 2**(nlayers-1)

    raw = init_params(pkey, nlayers=nlayers, nchannels=nchannels)
    kparams = preprocess_params(raw, nlayers=nlayers, nchannels=nchannels)
    x = jax.random.normal(xkey, (B, L), jnp.float32)

    fwd = jax.jit(functools.partial(autoencoder_forward,
                                    nlayers=nlayers, nchannels=nchannels))
    y = fwd(kparams, x)
    jax.block_until_ready(y)

    assert y.shape == (B, 1, L), f"unexpected output shape {y.shape}"
    assert y.dtype == jnp.float32
    assert bool(jnp.all(jnp.isfinite(y)))

    # Tolerance check against a pure-NumPy reference of the PyTorch module.
    y_ref = reference_forward(raw, np.asarray(x), nlayers=nlayers, nchannels=nchannels)
    err = float(np.max(np.abs(np.asarray(y, np.float64) - y_ref)))
    scale = float(np.max(np.abs(y_ref))) + 1e-6
    assert err < 5e-3 + 5e-3 * scale, f"kernel/reference mismatch: max abs err = {err}"

    print("KERNEL_OK")
</pallas_src>

<mosaic_0001>
module attributes {stable_mosaic.version = 11 : i64} {
  func.func @_fused_autoencoder_kernel(%arg0: memref<32x1xf32, #tpu.memory_space<vmem>>, %arg1: memref<3x16xf32, #tpu.memory_space<vmem>>, %arg2: memref<1x16xf32, #tpu.memory_space<vmem>>, %arg3: memref<48x16xf32, #tpu.memory_space<vmem>>, %arg4: memref<1x16xf32, #tpu.memory_space<vmem>>, %arg5: memref<48x16xf32, #tpu.memory_space<vmem>>, %arg6: memref<1x16xf32, #tpu.memory_space<vmem>>, %arg7: memref<16x32xf32, #tpu.memory_space<vmem>>, %arg8: memref<48x16xf32, #tpu.memory_space<vmem>>, %arg9: memref<1x16xf32, #tpu.memory_space<vmem>>, %arg10: memref<48x16xf32, #tpu.memory_space<vmem>>, %arg11: memref<1x16xf32, #tpu.memory_space<vmem>>, %arg12: memref<8x16xf32, #tpu.memory_space<vmem>>, %arg13: memref<48x1xf32, #tpu.memory_space<vmem>>, %arg14: memref<1x1xf32, #tpu.memory_space<vmem>>, %arg15: memref<3x16xf32, #tpu.memory_space<vmem>>, %arg16: memref<2x16xf32, #tpu.memory_space<vmem>>, %arg17: memref<1x16xf32, #tpu.memory_space<vmem>>, %arg18: memref<16x16xf32, #tpu.memory_space<vmem>>, %arg19: memref<48x16xf32, #tpu.memory_space<vmem>>, %arg20: memref<1x16xf32, #tpu.memory_space<vmem>>, %arg21: memref<48x16xf32, #tpu.memory_space<vmem>>, %arg22: memref<32x16xf32, #tpu.memory_space<vmem>>, %arg23: memref<1x16xf32, #tpu.memory_space<vmem>>, %arg24: memref<32x32xf32, #tpu.memory_space<vmem>>, %arg25: memref<48x16xf32, #tpu.memory_space<vmem>>, %arg26: memref<1x16xf32, #tpu.memory_space<vmem>>, %arg27: memref<48x1xf32, #tpu.memory_space<vmem>>, %arg28: memref<1x1xf32, #tpu.memory_space<vmem>>, %arg29: memref<32x1xf32, #tpu.memory_space<vmem>>) attributes {dimension_semantics = [], scalar_prefetch = 0 : i64, scratch_operands = 0 : i64, tpu.core_type = #tpu.core_type<tc>} {
    %c0 = arith.constant 0 : index
    %c0_0 = arith.constant 0 : index
    %0 = vector.load %arg0[%c0, %c0_0] : memref<32x1xf32, #tpu.memory_space<vmem>>, vector<32x1xf32>
    %1 = tpu.iota {dimensions = array<i32: 0>} : vector<32x1xi32>
    %c16_i32 = arith.constant 16 : i32
    %c0_i32 = arith.constant 0 : i32
    %2 = arith.cmpi eq, %c16_i32, %c0_i32 : i32
    %c1_i32 = arith.constant 1 : i32
    %3 = arith.select %2, %c1_i32, %c16_i32 : i32
    %4 = vector.broadcast %3 : i32 to vector<32x1xi32>
    %5 = arith.remsi %1, %4 : vector<32x1xi32>
    %c0_i32_1 = arith.constant 0 : i32
    %6 = vector.broadcast %c0_i32_1 : i32 to vector<32x1xi32>
    %7 = arith.cmpi ne, %5, %6 : vector<32x1xi32>
    %c0_i32_2 = arith.constant 0 : i32
    %8 = vector.broadcast %c0_i32_2 : i32 to vector<32x1xi32>
    %9 = arith.cmpi slt, %5, %8 : vector<32x1xi32>
    %c0_i32_3 = arith.constant 0 : i32
    %10 = arith.cmpi slt, %3, %c0_i32_3 : i32
    %11 = vector.broadcast %10 : i1 to vector<32x1xi1>
    %12 = vector.broadcast %11 : vector<32x1xi1> to vector<32x1xi1>
    %13 = arith.xori %9, %12 : vector<32x1xi1>
    %14 = arith.andi %13, %7 : vector<32x1xi1>
    %15 = vector.broadcast %3 : i32 to vector<32x1xi32>
    %16 = arith.addi %5, %15 : vector<32x1xi32>
    %17 = arith.select %14, %16, %5 : vector<32x1xi1>, vector<32x1xi32>
    %c0_i32_4 = arith.constant 0 : i32
    %18 = vector.broadcast %c0_i32_4 : i32 to vector<32x1xi32>
    %19 = arith.cmpi ne, %17, %18 : vector<32x1xi32>
    %c16_i32_5 = arith.constant 16 : i32
    %c0_i32_6 = arith.constant 0 : i32
    %20 = arith.cmpi eq, %c16_i32_5, %c0_i32_6 : i32
    %c1_i32_7 = arith.constant 1 : i32
    %21 = arith.select %20, %c1_i32_7, %c16_i32_5 : i32
    %22 = vector.broadcast %21 : i32 to vector<32x1xi32>
    %23 = arith.remsi %1, %22 : vector<32x1xi32>
    %c0_i32_8 = arith.constant 0 : i32
    %24 = vector.broadcast %c0_i32_8 : i32 to vector<32x1xi32>
    %25 = arith.cmpi ne, %23, %24 : vector<32x1xi32>
    %c0_i32_9 = arith.constant 0 : i32
    %26 = vector.broadcast %c0_i32_9 : i32 to vector<32x1xi32>
    %27 = arith.cmpi slt, %23, %26 : vector<32x1xi32>
    %c0_i32_10 = arith.constant 0 : i32
    %28 = arith.cmpi slt, %21, %c0_i32_10 : i32
    %29 = vector.broadcast %28 : i1 to vector<32x1xi1>
    %30 = vector.broadcast %29 : vector<32x1xi1> to vector<32x1xi1>
    %31 = arith.xori %27, %30 : vector<32x1xi1>
    %32 = arith.andi %31, %25 : vector<32x1xi1>
    %33 = vector.broadcast %21 : i32 to vector<32x1xi32>
    %34 = arith.addi %23, %33 : vector<32x1xi32>
    %35 = arith.select %32, %34, %23 : vector<32x1xi1>, vector<32x1xi32>
    %c15_i32 = arith.constant 15 : i32
    %36 = vector.broadcast %c15_i32 : i32 to vector<32x1xi32>
    %37 = arith.cmpi ne, %35, %36 : vector<32x1xi32>
    %cst = arith.constant 0.000000e+00 : f32
    %38 = vector.broadcast %cst : f32 to vector<1x1xf32>
    %39 = vector.extract_strided_slice %0 {offsets = [0, 0], sizes = [31, 1], strides = [1, 1]} : vector<32x1xf32> to vector<31x1xf32>
    %40 = tpu.concatenate %38, %39 in 0 : vector<1x1xf32>, vector<31x1xf32> -> vector<32x1xf32>
    %cst_11 = arith.constant 0.000000e+00 : f32
    %41 = vector.broadcast %cst_11 : f32 to vector<32x1xf32>
    %42 = arith.select %19, %40, %41 : vector<32x1xi1>, vector<32x1xf32>
    %43 = vector.extract_strided_slice %0 {offsets = [1, 0], sizes = [31, 1], strides = [1, 1]} : vector<32x1xf32> to vector<31x1xf32>
    %44 = tpu.concatenate %43, %38 in 0 : vector<31x1xf32>, vector<1x1xf32> -> vector<32x1xf32>
    %cst_12 = arith.constant 0.000000e+00 : f32
    %45 = vector.broadcast %cst_12 : f32 to vector<32x1xf32>
    %46 = arith.select %37, %44, %45 : vector<32x1xi1>, vector<32x1xf32>
    %c0_13 = arith.constant 0 : index
    %c0_14 = arith.constant 0 : index
    %47 = vector.load %arg1[%c0_13, %c0_14] : memref<3x16xf32, #tpu.memory_space<vmem>>, vector<3x16xf32>
    %c0_15 = arith.constant 0 : index
    %c0_16 = arith.constant 0 : index
    %48 = vector.load %arg2[%c0_15, %c0_16] : memref<1x16xf32, #tpu.memory_space<vmem>>, vector<1x16xf32>
    %49 = tpu.concatenate %42, %0, %46 in 1 : vector<32x1xf32>, vector<32x1xf32>, vector<32x1xf32> -> vector<32x3xf32>
    %cst_17 = arith.constant dense<0.000000e+00> : vector<32x16xf32>
    %50 = tpu.matmul %49, %47, %cst_17 {dimension_numbers = #tpu.dot_dimension_numbers<[1], [0], [0], [1], [0, 0, 1, 1], [], []>, precision = #tpu.contract_precision<fp32>} : vector<32x3xf32>, vector<3x16xf32>, vector<32x16xf32> -> vector<32x16xf32>
    %51 = vector.broadcast %48 : vector<1x16xf32> to vector<32x16xf32>
    %52 = arith.addf %50, %51 : vector<32x16xf32>
    %53 = tpu.iota {dimensions = array<i32: 0>} : vector<32x16xi32>
    %c16_i32_18 = arith.constant 16 : i32
    %c0_i32_19 = arith.constant 0 : i32
    %54 = arith.cmpi eq, %c16_i32_18, %c0_i32_19 : i32
    %c1_i32_20 = arith.constant 1 : i32
    %55 = arith.select %54, %c1_i32_20, %c16_i32_18 : i32
    %56 = vector.broadcast %55 : i32 to vector<32x16xi32>
    %57 = arith.remsi %53, %56 : vector<32x16xi32>
    %c0_i32_21 = arith.constant 0 : i32
    %58 = vector.broadcast %c0_i32_21 : i32 to vector<32x16xi32>
    %59 = arith.cmpi ne, %57, %58 : vector<32x16xi32>
    %c0_i32_22 = arith.constant 0 : i32
    %60 = vector.broadcast %c0_i32_22 : i32 to vector<32x16xi32>
    %61 = arith.cmpi slt, %57, %60 : vector<32x16xi32>
    %c0_i32_23 = arith.constant 0 : i32
    %62 = arith.cmpi slt, %55, %c0_i32_23 : i32
    %63 = vector.broadcast %62 : i1 to vector<32x16xi1>
    %64 = vector.broadcast %63 : vector<32x16xi1> to vector<32x16xi1>
    %65 = arith.xori %61, %64 : vector<32x16xi1>
    %66 = arith.andi %65, %59 : vector<32x16xi1>
    %67 = vector.broadcast %55 : i32 to vector<32x16xi32>
    %68 = arith.addi %57, %67 : vector<32x16xi32>
    %69 = arith.select %66, %68, %57 : vector<32x16xi1>, vector<32x16xi32>
    %c0_i32_24 = arith.constant 0 : i32
    %70 = vector.broadcast %c0_i32_24 : i32 to vector<32x16xi32>
    %71 = arith.cmpi ne, %69, %70 : vector<32x16xi32>
    %c16_i32_25 = arith.constant 16 : i32
    %c0_i32_26 = arith.constant 0 : i32
    %72 = arith.cmpi eq, %c16_i32_25, %c0_i32_26 : i32
    %c1_i32_27 = arith.constant 1 : i32
    %73 = arith.select %72, %c1_i32_27, %c16_i32_25 : i32
    %74 = vector.broadcast %73 : i32 to vector<32x16xi32>
    %75 = arith.remsi %53, %74 : vector<32x16xi32>
    %c0_i32_28 = arith.constant 0 : i32
    %76 = vector.broadcast %c0_i32_28 : i32 to vector<32x16xi32>
    %77 = arith.cmpi ne, %75, %76 : vector<32x16xi32>
    %c0_i32_29 = arith.constant 0 : i32
    %78 = vector.broadcast %c0_i32_29 : i32 to vector<32x16xi32>
    %79 = arith.cmpi slt, %75, %78 : vector<32x16xi32>
    %c0_i32_30 = arith.constant 0 : i32
    %80 = arith.cmpi slt, %73, %c0_i32_30 : i32
    %81 = vector.broadcast %80 : i1 to vector<32x16xi1>
    %82 = vector.broadcast %81 : vector<32x16xi1> to vector<32x16xi1>
    %83 = arith.xori %79, %82 : vector<32x16xi1>
    %84 = arith.andi %83, %77 : vector<32x16xi1>
    %85 = vector.broadcast %73 : i32 to vector<32x16xi32>
    %86 = arith.addi %75, %85 : vector<32x16xi32>
    %87 = arith.select %84, %86, %75 : vector<32x16xi1>, vector<32x16xi32>
    %c15_i32_31 = arith.constant 15 : i32
    %88 = vector.broadcast %c15_i32_31 : i32 to vector<32x16xi32>
    %89 = arith.cmpi ne, %87, %88 : vector<32x16xi32>
    %cst_32 = arith.constant 0.000000e+00 : f32
    %90 = vector.broadcast %cst_32 : f32 to vector<1x16xf32>
    %91 = vector.extract_strided_slice %52 {offsets = [0, 0], sizes = [31, 16], strides = [1, 1]} : vector<32x16xf32> to vector<31x16xf32>
    %92 = tpu.concatenate %90, %91 in 0 : vector<1x16xf32>, vector<31x16xf32> -> vector<32x16xf32>
    %cst_33 = arith.constant 0.000000e+00 : f32
    %93 = vector.broadcast %cst_33 : f32 to vector<32x16xf32>
    %94 = arith.select %71, %92, %93 : vector<32x16xi1>, vector<32x16xf32>
    %95 = vector.extract_strided_slice %52 {offsets = [1, 0], sizes = [31, 16], strides = [1, 1]} : vector<32x16xf32> to vector<31x16xf32>
    %96 = tpu.concatenate %95, %90 in 0 : vector<31x16xf32>, vector<1x16xf32> -> vector<32x16xf32>
    %cst_34 = arith.constant 0.000000e+00 : f32
    %97 = vector.broadcast %cst_34 : f32 to vector<32x16xf32>
    %98 = arith.select %89, %96, %97 : vector<32x16xi1>, vector<32x16xf32>
    %c0_35 = arith.constant 0 : index
    %c0_36 = arith.constant 0 : index
    %99 = vector.load %arg3[%c0_35, %c0_36] : memref<48x16xf32, #tpu.memory_space<vmem>>, vector<48x16xf32>
    %c0_37 = arith.constant 0 : index
    %c0_38 = arith.constant 0 : index
    %100 = vector.load %arg4[%c0_37, %c0_38] : memref<1x16xf32, #tpu.memory_space<vmem>>, vector<1x16xf32>
    %101 = tpu.concatenate %94, %52, %98 in 1 : vector<32x16xf32>, vector<32x16xf32>, vector<32x16xf32> -> vector<32x48xf32>
    %cst_39 = arith.constant dense<0.000000e+00> : vector<32x16xf32>
    %102 = tpu.matmul %101, %99, %cst_39 {dimension_numbers = #tpu.dot_dimension_numbers<[1], [0], [0], [1], [0, 0, 1, 1], [], []>, precision = #tpu.contract_precision<fp32>} : vector<32x48xf32>, vector<48x16xf32>, vector<32x16xf32> -> vector<32x16xf32>
    %103 = vector.broadcast %100 : vector<1x16xf32> to vector<32x16xf32>
    %104 = arith.addf %102, %103 : vector<32x16xf32>
    %cst_40 = arith.constant 0.000000e+00 : f32
    %105 = vector.broadcast %cst_40 : f32 to vector<32x16xf32>
    %106 = arith.maximumf %104, %105 : vector<32x16xf32>
    %107 = tpu.iota {dimensions = array<i32: 0>} : vector<32x16xi32>
    %c16_i32_41 = arith.constant 16 : i32
    %c0_i32_42 = arith.constant 0 : i32
    %108 = arith.cmpi eq, %c16_i32_41, %c0_i32_42 : i32
    %c1_i32_43 = arith.constant 1 : i32
    %109 = arith.select %108, %c1_i32_43, %c16_i32_41 : i32
    %110 = vector.broadcast %109 : i32 to vector<32x16xi32>
    %111 = arith.remsi %107, %110 : vector<32x16xi32>
    %c0_i32_44 = arith.constant 0 : i32
    %112 = vector.broadcast %c0_i32_44 : i32 to vector<32x16xi32>
    %113 = arith.cmpi ne, %111, %112 : vector<32x16xi32>
    %c0_i32_45 = arith.constant 0 : i32
    %114 = vector.broadcast %c0_i32_45 : i32 to vector<32x16xi32>
    %115 = arith.cmpi slt, %111, %114 : vector<32x16xi32>
    %c0_i32_46 = arith.constant 0 : i32
    %116 = arith.cmpi slt, %109, %c0_i32_46 : i32
    %117 = vector.broadcast %116 : i1 to vector<32x16xi1>
    %118 = vector.broadcast %117 : vector<32x16xi1> to vector<32x16xi1>
    %119 = arith.xori %115, %118 : vector<32x16xi1>
    %120 = arith.andi %119, %113 : vector<32x16xi1>
    %121 = vector.broadcast %109 : i32 to vector<32x16xi32>
    %122 = arith.addi %111, %121 : vector<32x16xi32>
    %123 = arith.select %120, %122, %111 : vector<32x16xi1>, vector<32x16xi32>
    %c0_i32_47 = arith.constant 0 : i32
    %124 = vector.broadcast %c0_i32_47 : i32 to vector<32x16xi32>
    %125 = arith.cmpi ne, %123, %124 : vector<32x16xi32>
    %c16_i32_48 = arith.constant 16 : i32
    %c0_i32_49 = arith.constant 0 : i32
    %126 = arith.cmpi eq, %c16_i32_48, %c0_i32_49 : i32
    %c1_i32_50 = arith.constant 1 : i32
    %127 = arith.select %126, %c1_i32_50, %c16_i32_48 : i32
    %128 = vector.broadcast %127 : i32 to vector<32x16xi32>
    %129 = arith.remsi %107, %128 : vector<32x16xi32>
    %c0_i32_51 = arith.constant 0 : i32
    %130 = vector.broadcast %c0_i32_51 : i32 to vector<32x16xi32>
    %131 = arith.cmpi ne, %129, %130 : vector<32x16xi32>
    %c0_i32_52 = arith.constant 0 : i32
    %132 = vector.broadcast %c0_i32_52 : i32 to vector<32x16xi32>
    %133 = arith.cmpi slt, %129, %132 : vector<32x16xi32>
    %c0_i32_53 = arith.constant 0 : i32
    %134 = arith.cmpi slt, %127, %c0_i32_53 : i32
    %135 = vector.broadcast %134 : i1 to vector<32x16xi1>
    %136 = vector.broadcast %135 : vector<32x16xi1> to vector<32x16xi1>
    %137 = arith.xori %133, %136 : vector<32x16xi1>
    %138 = arith.andi %137, %131 : vector<32x16xi1>
    %139 = vector.broadcast %127 : i32 to vector<32x16xi32>
    %140 = arith.addi %129, %139 : vector<32x16xi32>
    %141 = arith.select %138, %140, %129 : vector<32x16xi1>, vector<32x16xi32>
    %c15_i32_54 = arith.constant 15 : i32
    %142 = vector.broadcast %c15_i32_54 : i32 to vector<32x16xi32>
    %143 = arith.cmpi ne, %141, %142 : vector<32x16xi32>
    %cst_55 = arith.constant 0.000000e+00 : f32
    %144 = vector.broadcast %cst_55 : f32 to vector<1x16xf32>
    %145 = vector.extract_strided_slice %106 {offsets = [0, 0], sizes = [31, 16], strides = [1, 1]} : vector<32x16xf32> to vector<31x16xf32>
    %146 = tpu.concatenate %144, %145 in 0 : vector<1x16xf32>, vector<31x16xf32> -> vector<32x16xf32>
    %cst_56 = arith.constant 0.000000e+00 : f32
    %147 = vector.broadcast %cst_56 : f32 to vector<32x16xf32>
    %148 = arith.select %125, %146, %147 : vector<32x16xi1>, vector<32x16xf32>
    %149 = vector.extract_strided_slice %106 {offsets = [1, 0], sizes = [31, 16], strides = [1, 1]} : vector<32x16xf32> to vector<31x16xf32>
    %150 = tpu.concatenate %149, %144 in 0 : vector<31x16xf32>, vector<1x16xf32> -> vector<32x16xf32>
    %cst_57 = arith.constant 0.000000e+00 : f32
    %151 = vector.broadcast %cst_57 : f32 to vector<32x16xf32>
    %152 = arith.select %143, %150, %151 : vector<32x16xi1>, vector<32x16xf32>
    %c0_58 = arith.constant 0 : index
    %c0_59 = arith.constant 0 : index
    %153 = vector.load %arg5[%c0_58, %c0_59] : memref<48x16xf32, #tpu.memory_space<vmem>>, vector<48x16xf32>
    %c0_60 = arith.constant 0 : index
    %c0_61 = arith.constant 0 : index
    %154 = vector.load %arg6[%c0_60, %c0_61] : memref<1x16xf32, #tpu.memory_space<vmem>>, vector<1x16xf32>
    %155 = tpu.concatenate %148, %106, %152 in 1 : vector<32x16xf32>, vector<32x16xf32>, vector<32x16xf32> -> vector<32x48xf32>
    %cst_62 = arith.constant dense<0.000000e+00> : vector<32x16xf32>
    %156 = tpu.matmul %155, %153, %cst_62 {dimension_numbers = #tpu.dot_dimension_numbers<[1], [0], [0], [1], [0, 0, 1, 1], [], []>, precision = #tpu.contract_precision<fp32>} : vector<32x48xf32>, vector<48x16xf32>, vector<32x16xf32> -> vector<32x16xf32>
    %157 = vector.broadcast %154 : vector<1x16xf32> to vector<32x16xf32>
    %158 = arith.addf %156, %157 : vector<32x16xf32>
    %c0_63 = arith.constant 0 : index
    %c0_64 = arith.constant 0 : index
    %159 = vector.load %arg7[%c0_63, %c0_64] : memref<16x32xf32, #tpu.memory_space<vmem>>, vector<16x32xf32>
    %cst_65 = arith.constant dense<0.000000e+00> : vector<16x16xf32>
    %160 = tpu.matmul %159, %158, %cst_65 {dimension_numbers = #tpu.dot_dimension_numbers<[1], [0], [0], [1], [0, 0, 1, 1], [], []>, precision = #tpu.contract_precision<fp32>} : vector<16x32xf32>, vector<32x16xf32>, vector<16x16xf32> -> vector<16x16xf32>
    %161 = tpu.iota {dimensions = array<i32: 0>} : vector<16x16xi32>
    %c8_i32 = arith.constant 8 : i32
    %c0_i32_66 = arith.constant 0 : i32
    %162 = arith.cmpi eq, %c8_i32, %c0_i32_66 : i32
    %c1_i32_67 = arith.constant 1 : i32
    %163 = arith.select %162, %c1_i32_67, %c8_i32 : i32
    %164 = vector.broadcast %163 : i32 to vector<16x16xi32>
    %165 = arith.remsi %161, %164 : vector<16x16xi32>
    %c0_i32_68 = arith.constant 0 : i32
    %166 = vector.broadcast %c0_i32_68 : i32 to vector<16x16xi32>
    %167 = arith.cmpi ne, %165, %166 : vector<16x16xi32>
    %c0_i32_69 = arith.constant 0 : i32
    %168 = vector.broadcast %c0_i32_69 : i32 to vector<16x16xi32>
    %169 = arith.cmpi slt, %165, %168 : vector<16x16xi32>
    %c0_i32_70 = arith.constant 0 : i32
    %170 = arith.cmpi slt, %163, %c0_i32_70 : i32
    %171 = vector.broadcast %170 : i1 to vector<16x16xi1>
    %172 = vector.broadcast %171 : vector<16x16xi1> to vector<16x16xi1>
    %173 = arith.xori %169, %172 : vector<16x16xi1>
    %174 = arith.andi %173, %167 : vector<16x16xi1>
    %175 = vector.broadcast %163 : i32 to vector<16x16xi32>
    %176 = arith.addi %165, %175 : vector<16x16xi32>
    %177 = arith.select %174, %176, %165 : vector<16x16xi1>, vector<16x16xi32>
    %c0_i32_71 = arith.constant 0 : i32
    %178 = vector.broadcast %c0_i32_71 : i32 to vector<16x16xi32>
    %179 = arith.cmpi ne, %177, %178 : vector<16x16xi32>
    %c8_i32_72 = arith.constant 8 : i32
    %c0_i32_73 = arith.constant 0 : i32
    %180 = arith.cmpi eq, %c8_i32_72, %c0_i32_73 : i32
    %c1_i32_74 = arith.constant 1 : i32
    %181 = arith.select %180, %c1_i32_74, %c8_i32_72 : i32
    %182 = vector.broadcast %181 : i32 to vector<16x16xi32>
    %183 = arith.remsi %161, %182 : vector<16x16xi32>
    %c0_i32_75 = arith.constant 0 : i32
    %184 = vector.broadcast %c0_i32_75 : i32 to vector<16x16xi32>
    %185 = arith.cmpi ne, %183, %184 : vector<16x16xi32>
    %c0_i32_76 = arith.constant 0 : i32
    %186 = vector.broadcast %c0_i32_76 : i32 to vector<16x16xi32>
    %187 = arith.cmpi slt, %183, %186 : vector<16x16xi32>
    %c0_i32_77 = arith.constant 0 : i32
    %188 = arith.cmpi slt, %181, %c0_i32_77 : i32
    %189 = vector.broadcast %188 : i1 to vector<16x16xi1>
    %190 = vector.broadcast %189 : vector<16x16xi1> to vector<16x16xi1>
    %191 = arith.xori %187, %190 : vector<16x16xi1>
    %192 = arith.andi %191, %185 : vector<16x16xi1>
    %193 = vector.broadcast %181 : i32 to vector<16x16xi32>
    %194 = arith.addi %183, %193 : vector<16x16xi32>
    %195 = arith.select %192, %194, %183 : vector<16x16xi1>, vector<16x16xi32>
    %c7_i32 = arith.constant 7 : i32
    %196 = vector.broadcast %c7_i32 : i32 to vector<16x16xi32>
    %197 = arith.cmpi ne, %195, %196 : vector<16x16xi32>
    %cst_78 = arith.constant 0.000000e+00 : f32
    %198 = vector.broadcast %cst_78 : f32 to vector<1x16xf32>
    %199 = vector.extract_strided_slice %160 {offsets = [0, 0], sizes = [15, 16], strides = [1, 1]} : vector<16x16xf32> to vector<15x16xf32>
    %200 = tpu.concatenate %198, %199 in 0 : vector<1x16xf32>, vector<15x16xf32> -> vector<16x16xf32>
    %cst_79 = arith.constant 0.000000e+00 : f32
    %201 = vector.broadcast %cst_79 : f32 to vector<16x16xf32>
    %202 = arith.select %179, %200, %201 : vector<16x16xi1>, vector<16x16xf32>
    %203 = vector.extract_strided_slice %160 {offsets = [1, 0], sizes = [15, 16], strides = [1, 1]} : vector<16x16xf32> to vector<15x16xf32>
    %204 = tpu.concatenate %203, %198 in 0 : vector<15x16xf32>, vector<1x16xf32> -> vector<16x16xf32>
    %cst_80 = arith.constant 0.000000e+00 : f32
    %205 = vector.broadcast %cst_80 : f32 to vector<16x16xf32>
    %206 = arith.select %197, %204, %205 : vector<16x16xi1>, vector<16x16xf32>
    %c0_81 = arith.constant 0 : index
    %c0_82 = arith.constant 0 : index
    %207 = vector.load %arg8[%c0_81, %c0_82] : memref<48x16xf32, #tpu.memory_space<vmem>>, vector<48x16xf32>
    %c0_83 = arith.constant 0 : index
    %c0_84 = arith.constant 0 : index
    %208 = vector.load %arg9[%c0_83, %c0_84] : memref<1x16xf32, #tpu.memory_space<vmem>>, vector<1x16xf32>
    %209 = tpu.concatenate %202, %160, %206 in 1 : vector<16x16xf32>, vector<16x16xf32>, vector<16x16xf32> -> vector<16x48xf32>
    %cst_85 = arith.constant dense<0.000000e+00> : vector<16x16xf32>
    %210 = tpu.matmul %209, %207, %cst_85 {dimension_numbers = #tpu.dot_dimension_numbers<[1], [0], [0], [1], [0, 0, 1, 1], [], []>, precision = #tpu.contract_precision<fp32>} : vector<16x48xf32>, vector<48x16xf32>, vector<16x16xf32> -> vector<16x16xf32>
    %211 = vector.broadcast %208 : vector<1x16xf32> to vector<16x16xf32>
    %212 = arith.addf %210, %211 : vector<16x16xf32>
    %cst_86 = arith.constant 0.000000e+00 : f32
    %213 = vector.broadcast %cst_86 : f32 to vector<16x16xf32>
    %214 = arith.maximumf %212, %213 : vector<16x16xf32>
    %215 = tpu.iota {dimensions = array<i32: 0>} : vector<16x16xi32>
    %c8_i32_87 = arith.constant 8 : i32
    %c0_i32_88 = arith.constant 0 : i32
    %216 = arith.cmpi eq, %c8_i32_87, %c0_i32_88 : i32
    %c1_i32_89 = arith.constant 1 : i32
    %217 = arith.select %216, %c1_i32_89, %c8_i32_87 : i32
    %218 = vector.broadcast %217 : i32 to vector<16x16xi32>
    %219 = arith.remsi %215, %218 : vector<16x16xi32>
    %c0_i32_90 = arith.constant 0 : i32
    %220 = vector.broadcast %c0_i32_90 : i32 to vector<16x16xi32>
    %221 = arith.cmpi ne, %219, %220 : vector<16x16xi32>
    %c0_i32_91 = arith.constant 0 : i32
    %222 = vector.broadcast %c0_i32_91 : i32 to vector<16x16xi32>
    %223 = arith.cmpi slt, %219, %222 : vector<16x16xi32>
    %c0_i32_92 = arith.constant 0 : i32
    %224 = arith.cmpi slt, %217, %c0_i32_92 : i32
    %225 = vector.broadcast %224 : i1 to vector<16x16xi1>
    %226 = vector.broadcast %225 : vector<16x16xi1> to vector<16x16xi1>
    %227 = arith.xori %223, %226 : vector<16x16xi1>
    %228 = arith.andi %227, %221 : vector<16x16xi1>
    %229 = vector.broadcast %217 : i32 to vector<16x16xi32>
    %230 = arith.addi %219, %229 : vector<16x16xi32>
    %231 = arith.select %228, %230, %219 : vector<16x16xi1>, vector<16x16xi32>
    %c0_i32_93 = arith.constant 0 : i32
    %232 = vector.broadcast %c0_i32_93 : i32 to vector<16x16xi32>
    %233 = arith.cmpi ne, %231, %232 : vector<16x16xi32>
    %c8_i32_94 = arith.constant 8 : i32
    %c0_i32_95 = arith.constant 0 : i32
    %234 = arith.cmpi eq, %c8_i32_94, %c0_i32_95 : i32
    %c1_i32_96 = arith.constant 1 : i32
    %235 = arith.select %234, %c1_i32_96, %c8_i32_94 : i32
    %236 = vector.broadcast %235 : i32 to vector<16x16xi32>
    %237 = arith.remsi %215, %236 : vector<16x16xi32>
    %c0_i32_97 = arith.constant 0 : i32
    %238 = vector.broadcast %c0_i32_97 : i32 to vector<16x16xi32>
    %239 = arith.cmpi ne, %237, %238 : vector<16x16xi32>
    %c0_i32_98 = arith.constant 0 : i32
    %240 = vector.broadcast %c0_i32_98 : i32 to vector<16x16xi32>
    %241 = arith.cmpi slt, %237, %240 : vector<16x16xi32>
    %c0_i32_99 = arith.constant 0 : i32
    %242 = arith.cmpi slt, %235, %c0_i32_99 : i32
    %243 = vector.broadcast %242 : i1 to vector<16x16xi1>
    %244 = vector.broadcast %243 : vector<16x16xi1> to vector<16x16xi1>
    %245 = arith.xori %241, %244 : vector<16x16xi1>
    %246 = arith.andi %245, %239 : vector<16x16xi1>
    %247 = vector.broadcast %235 : i32 to vector<16x16xi32>
    %248 = arith.addi %237, %247 : vector<16x16xi32>
    %249 = arith.select %246, %248, %237 : vector<16x16xi1>, vector<16x16xi32>
    %c7_i32_100 = arith.constant 7 : i32
    %250 = vector.broadcast %c7_i32_100 : i32 to vector<16x16xi32>
    %251 = arith.cmpi ne, %249, %250 : vector<16x16xi32>
    %cst_101 = arith.constant 0.000000e+00 : f32
    %252 = vector.broadcast %cst_101 : f32 to vector<1x16xf32>
    %253 = vector.extract_strided_slice %214 {offsets = [0, 0], sizes = [15, 16], strides = [1, 1]} : vector<16x16xf32> to vector<15x16xf32>
    %254 = tpu.concatenate %252, %253 in 0 : vector<1x16xf32>, vector<15x16xf32> -> vector<16x16xf32>
    %cst_102 = arith.constant 0.000000e+00 : f32
    %255 = vector.broadcast %cst_102 : f32 to vector<16x16xf32>
    %256 = arith.select %233, %254, %255 : vector<16x16xi1>, vector<16x16xf32>
    %257 = vector.extract_strided_slice %214 {offsets = [1, 0], sizes = [15, 16], strides = [1, 1]} : vector<16x16xf32> to vector<15x16xf32>
    %258 = tpu.concatenate %257, %252 in 0 : vector<15x16xf32>, vector<1x16xf32> -> vector<16x16xf32>
    %cst_103 = arith.constant 0.000000e+00 : f32
    %259 = vector.broadcast %cst_103 : f32 to vector<16x16xf32>
    %260 = arith.select %251, %258, %259 : vector<16x16xi1>, vector<16x16xf32>
    %c0_104 = arith.constant 0 : index
    %c0_105 = arith.constant 0 : index
    %261 = vector.load %arg10[%c0_104, %c0_105] : memref<48x16xf32, #tpu.memory_space<vmem>>, vector<48x16xf32>
    %c0_106 = arith.constant 0 : index
    %c0_107 = arith.constant 0 : index
    %262 = vector.load %arg11[%c0_106, %c0_107] : memref<1x16xf32, #tpu.memory_space<vmem>>, vector<1x16xf32>
    %263 = tpu.concatenate %256, %214, %260 in 1 : vector<16x16xf32>, vector<16x16xf32>, vector<16x16xf32> -> vector<16x48xf32>
    %cst_108 = arith.constant dense<0.000000e+00> : vector<16x16xf32>
    %264 = tpu.matmul %263, %261, %cst_108 {dimension_numbers = #tpu.dot_dimension_numbers<[1], [0], [0], [1], [0, 0, 1, 1], [], []>, precision = #tpu.contract_precision<fp32>} : vector<16x48xf32>, vector<48x16xf32>, vector<16x16xf32> -> vector<16x16xf32>
    %265 = vector.broadcast %262 : vector<1x16xf32> to vector<16x16xf32>
    %266 = arith.addf %264, %265 : vector<16x16xf32>
    %c0_109 = arith.constant 0 : index
    %c0_110 = arith.constant 0 : index
    %267 = vector.load %arg12[%c0_109, %c0_110] : memref<8x16xf32, #tpu.memory_space<vmem>>, vector<8x16xf32>
    %cst_111 = arith.constant dense<0.000000e+00> : vector<8x16xf32>
    %268 = tpu.matmul %267, %266, %cst_111 {dimension_numbers = #tpu.dot_dimension_numbers<[1], [0], [0], [1], [0, 0, 1, 1], [], []>, precision = #tpu.contract_precision<fp32>} : vector<8x16xf32>, vector<16x16xf32>, vector<8x16xf32> -> vector<8x16xf32>
    %269 = tpu.iota {dimensions = array<i32: 0>} : vector<8x16xi32>
    %c4_i32 = arith.constant 4 : i32
    %c0_i32_112 = arith.constant 0 : i32
    %270 = arith.cmpi eq, %c4_i32, %c0_i32_112 : i32
    %c1_i32_113 = arith.constant 1 : i32
    %271 = arith.select %270, %c1_i32_113, %c4_i32 : i32
    %272 = vector.broadcast %271 : i32 to vector<8x16xi32>
    %273 = arith.remsi %269, %272 : vector<8x16xi32>
    %c0_i32_114 = arith.constant 0 : i32
    %274 = vector.broadcast %c0_i32_114 : i32 to vector<8x16xi32>
    %275 = arith.cmpi ne, %273, %274 : vector<8x16xi32>
    %c0_i32_115 = arith.constant 0 : i32
    %276 = vector.broadcast %c0_i32_115 : i32 to vector<8x16xi32>
    %277 = arith.cmpi slt, %273, %276 : vector<8x16xi32>
    %c0_i32_116 = arith.constant 0 : i32
    %278 = arith.cmpi slt, %271, %c0_i32_116 : i32
    %279 = vector.broadcast %278 : i1 to vector<8x16xi1>
    %280 = vector.broadcast %279 : vector<8x16xi1> to vector<8x16xi1>
    %281 = arith.xori %277, %280 : vector<8x16xi1>
    %282 = arith.andi %281, %275 : vector<8x16xi1>
    %283 = vector.broadcast %271 : i32 to vector<8x16xi32>
    %284 = arith.addi %273, %283 : vector<8x16xi32>
    %285 = arith.select %282, %284, %273 : vector<8x16xi1>, vector<8x16xi32>
    %c0_i32_117 = arith.constant 0 : i32
    %286 = vector.broadcast %c0_i32_117 : i32 to vector<8x16xi32>
    %287 = arith.cmpi ne, %285, %286 : vector<8x16xi32>
    %c4_i32_118 = arith.constant 4 : i32
    %c0_i32_119 = arith.constant 0 : i32
    %288 = arith.cmpi eq, %c4_i32_118, %c0_i32_119 : i32
    %c1_i32_120 = arith.constant 1 : i32
    %289 = arith.select %288, %c1_i32_120, %c4_i32_118 : i32
    %290 = vector.broadcast %289 : i32 to vector<8x16xi32>
    %291 = arith.remsi %269, %290 : vector<8x16xi32>
    %c0_i32_121 = arith.constant 0 : i32
    %292 = vector.broadcast %c0_i32_121 : i32 to vector<8x16xi32>
    %293 = arith.cmpi ne, %291, %292 : vector<8x16xi32>
    %c0_i32_122 = arith.constant 0 : i32
    %294 = vector.broadcast %c0_i32_122 : i32 to vector<8x16xi32>
    %295 = arith.cmpi slt, %291, %294 : vector<8x16xi32>
    %c0_i32_123 = arith.constant 0 : i32
    %296 = arith.cmpi slt, %289, %c0_i32_123 : i32
    %297 = vector.broadcast %296 : i1 to vector<8x16xi1>
    %298 = vector.broadcast %297 : vector<8x16xi1> to vector<8x16xi1>
    %299 = arith.xori %295, %298 : vector<8x16xi1>
    %300 = arith.andi %299, %293 : vector<8x16xi1>
    %301 = vector.broadcast %289 : i32 to vector<8x16xi32>
    %302 = arith.addi %291, %301 : vector<8x16xi32>
    %303 = arith.select %300, %302, %291 : vector<8x16xi1>, vector<8x16xi32>
    %c3_i32 = arith.constant 3 : i32
    %304 = vector.broadcast %c3_i32 : i32 to vector<8x16xi32>
    %305 = arith.cmpi ne, %303, %304 : vector<8x16xi32>
    %cst_124 = arith.constant 0.000000e+00 : f32
    %306 = vector.broadcast %cst_124 : f32 to vector<1x16xf32>
    %307 = vector.extract_strided_slice %268 {offsets = [0, 0], sizes = [7, 16], strides = [1, 1]} : vector<8x16xf32> to vector<7x16xf32>
    %308 = tpu.concatenate %306, %307 in 0 : vector<1x16xf32>, vector<7x16xf32> -> vector<8x16xf32>
    %cst_125 = arith.constant 0.000000e+00 : f32
    %309 = vector.broadcast %cst_125 : f32 to vector<8x16xf32>
    %310 = arith.select %287, %308, %309 : vector<8x16xi1>, vector<8x16xf32>
    %311 = vector.extract_strided_slice %268 {offsets = [1, 0], sizes = [7, 16], strides = [1, 1]} : vector<8x16xf32> to vector<7x16xf32>
    %312 = tpu.concatenate %311, %306 in 0 : vector<7x16xf32>, vector<1x16xf32> -> vector<8x16xf32>
    %cst_126 = arith.constant 0.000000e+00 : f32
    %313 = vector.broadcast %cst_126 : f32 to vector<8x16xf32>
    %314 = arith.select %305, %312, %313 : vector<8x16xi1>, vector<8x16xf32>
    %c0_127 = arith.constant 0 : index
    %c0_128 = arith.constant 0 : index
    %315 = vector.load %arg13[%c0_127, %c0_128] : memref<48x1xf32, #tpu.memory_space<vmem>>, vector<48x1xf32>
    %c0_129 = arith.constant 0 : index
    %c0_130 = arith.constant 0 : index
    %316 = vector.load %arg14[%c0_129, %c0_130] : memref<1x1xf32, #tpu.memory_space<vmem>>, vector<1x1xf32>
    %317 = tpu.concatenate %310, %268, %314 in 1 : vector<8x16xf32>, vector<8x16xf32>, vector<8x16xf32> -> vector<8x48xf32>
    %cst_131 = arith.constant dense<0.000000e+00> : vector<8x1xf32>
    %318 = tpu.matmul %317, %315, %cst_131 {dimension_numbers = #tpu.dot_dimension_numbers<[1], [0], [0], [1], [0, 0, 1, 1], [], []>, precision = #tpu.contract_precision<fp32>} : vector<8x48xf32>, vector<48x1xf32>, vector<8x1xf32> -> vector<8x1xf32>
    %319 = vector.broadcast %316 : vector<1x1xf32> to vector<8x1xf32>
    %320 = arith.addf %318, %319 : vector<8x1xf32>
    %321 = tpu.iota {dimensions = array<i32: 0>} : vector<8x1xi32>
    %c4_i32_132 = arith.constant 4 : i32
    %c0_i32_133 = arith.constant 0 : i32
    %322 = arith.cmpi eq, %c4_i32_132, %c0_i32_133 : i32
    %c1_i32_134 = arith.constant 1 : i32
    %323 = arith.select %322, %c1_i32_134, %c4_i32_132 : i32
    %324 = vector.broadcast %323 : i32 to vector<8x1xi32>
    %325 = arith.remsi %321, %324 : vector<8x1xi32>
    %c0_i32_135 = arith.constant 0 : i32
    %326 = vector.broadcast %c0_i32_135 : i32 to vector<8x1xi32>
    %327 = arith.cmpi ne, %325, %326 : vector<8x1xi32>
    %c0_i32_136 = arith.constant 0 : i32
    %328 = vector.broadcast %c0_i32_136 : i32 to vector<8x1xi32>
    %329 = arith.cmpi slt, %325, %328 : vector<8x1xi32>
    %c0_i32_137 = arith.constant 0 : i32
    %330 = arith.cmpi slt, %323, %c0_i32_137 : i32
    %331 = vector.broadcast %330 : i1 to vector<8x1xi1>
    %332 = vector.broadcast %331 : vector<8x1xi1> to vector<8x1xi1>
    %333 = arith.xori %329, %332 : vector<8x1xi1>
    %334 = arith.andi %333, %327 : vector<8x1xi1>
    %335 = vector.broadcast %323 : i32 to vector<8x1xi32>
    %336 = arith.addi %325, %335 : vector<8x1xi32>
    %337 = arith.select %334, %336, %325 : vector<8x1xi1>, vector<8x1xi32>
    %c0_i32_138 = arith.constant 0 : i32
    %338 = vector.broadcast %c0_i32_138 : i32 to vector<8x1xi32>
    %339 = arith.cmpi ne, %337, %338 : vector<8x1xi32>
    %c4_i32_139 = arith.constant 4 : i32
    %c0_i32_140 = arith.constant 0 : i32
    %340 = arith.cmpi eq, %c4_i32_139, %c0_i32_140 : i32
    %c1_i32_141 = arith.constant 1 : i32
    %341 = arith.select %340, %c1_i32_141, %c4_i32_139 : i32
    %342 = vector.broadcast %341 : i32 to vector<8x1xi32>
    %343 = arith.remsi %321, %342 : vector<8x1xi32>
    %c0_i32_142 = arith.constant 0 : i32
    %344 = vector.broadcast %c0_i32_142 : i32 to vector<8x1xi32>
    %345 = arith.cmpi ne, %343, %344 : vector<8x1xi32>
    %c0_i32_143 = arith.constant 0 : i32
    %346 = vector.broadcast %c0_i32_143 : i32 to vector<8x1xi32>
    %347 = arith.cmpi slt, %343, %346 : vector<8x1xi32>
    %c0_i32_144 = arith.constant 0 : i32
    %348 = arith.cmpi slt, %341, %c0_i32_144 : i32
    %349 = vector.broadcast %348 : i1 to vector<8x1xi1>
    %350 = vector.broadcast %349 : vector<8x1xi1> to vector<8x1xi1>
    %351 = arith.xori %347, %350 : vector<8x1xi1>
    %352 = arith.andi %351, %345 : vector<8x1xi1>
    %353 = vector.broadcast %341 : i32 to vector<8x1xi32>
    %354 = arith.addi %343, %353 : vector<8x1xi32>
    %355 = arith.select %352, %354, %343 : vector<8x1xi1>, vector<8x1xi32>
    %c3_i32_145 = arith.constant 3 : i32
    %356 = vector.broadcast %c3_i32_145 : i32 to vector<8x1xi32>
    %357 = arith.cmpi ne, %355, %356 : vector<8x1xi32>
    %cst_146 = arith.constant 0.000000e+00 : f32
    %358 = vector.broadcast %cst_146 : f32 to vector<1x1xf32>
    %359 = vector.extract_strided_slice %320 {offsets = [0, 0], sizes = [7, 1], strides = [1, 1]} : vector<8x1xf32> to vector<7x1xf32>
    %360 = tpu.concatenate %358, %359 in 0 : vector<1x1xf32>, vector<7x1xf32> -> vector<8x1xf32>
    %cst_147 = arith.constant 0.000000e+00 : f32
    %361 = vector.broadcast %cst_147 : f32 to vector<8x1xf32>
    %362 = arith.select %339, %360, %361 : vector<8x1xi1>, vector<8x1xf32>
    %363 = vector.extract_strided_slice %320 {offsets = [1, 0], sizes = [7, 1], strides = [1, 1]} : vector<8x1xf32> to vector<7x1xf32>
    %364 = tpu.concatenate %363, %358 in 0 : vector<7x1xf32>, vector<1x1xf32> -> vector<8x1xf32>
    %cst_148 = arith.constant 0.000000e+00 : f32
    %365 = vector.broadcast %cst_148 : f32 to vector<8x1xf32>
    %366 = arith.select %357, %364, %365 : vector<8x1xi1>, vector<8x1xf32>
    %c0_149 = arith.constant 0 : index
    %c0_150 = arith.constant 0 : index
    %367 = vector.load %arg15[%c0_149, %c0_150] : memref<3x16xf32, #tpu.memory_space<vmem>>, vector<3x16xf32>
    %c0_151 = arith.constant 0 : index
    %c0_152 = arith.constant 0 : index
    %368 = vector.load %arg16[%c0_151, %c0_152] : memref<2x16xf32, #tpu.memory_space<vmem>>, vector<2x16xf32>
    %c0_153 = arith.constant 0 : index
    %c0_154 = arith.constant 0 : index
    %369 = vector.load %arg17[%c0_153, %c0_154] : memref<1x16xf32, #tpu.memory_space<vmem>>, vector<1x16xf32>
    %c0_155 = arith.constant 0 : index
    %c0_156 = arith.constant 0 : index
    %370 = vector.load %arg18[%c0_155, %c0_156] : memref<16x16xf32, #tpu.memory_space<vmem>>, vector<16x16xf32>
    %371 = tpu.concatenate %362, %320, %366 in 1 : vector<8x1xf32>, vector<8x1xf32>, vector<8x1xf32> -> vector<8x3xf32>
    %cst_157 = arith.constant dense<0.000000e+00> : vector<8x16xf32>
    %372 = tpu.matmul %371, %367, %cst_157 {dimension_numbers = #tpu.dot_dimension_numbers<[1], [0], [0], [1], [0, 0, 1, 1], [], []>, precision = #tpu.contract_precision<fp32>} : vector<8x3xf32>, vector<3x16xf32>, vector<8x16xf32> -> vector<8x16xf32>
    %373 = tpu.concatenate %320, %366 in 1 : vector<8x1xf32>, vector<8x1xf32> -> vector<8x2xf32>
    %cst_158 = arith.constant dense<0.000000e+00> : vector<8x16xf32>
    %374 = tpu.matmul %373, %368, %cst_158 {dimension_numbers = #tpu.dot_dimension_numbers<[1], [0], [0], [1], [0, 0, 1, 1], [], []>, precision = #tpu.contract_precision<fp32>} : vector<8x2xf32>, vector<2x16xf32>, vector<8x16xf32> -> vector<8x16xf32>
    %375 = tpu.concatenate %372, %374 in 0 : vector<8x16xf32>, vector<8x16xf32> -> vector<16x16xf32>
    %cst_159 = arith.constant dense<0.000000e+00> : vector<16x16xf32>
    %376 = tpu.matmul %370, %375, %cst_159 {dimension_numbers = #tpu.dot_dimension_numbers<[1], [0], [0], [1], [0, 0, 1, 1], [], []>, precision = #tpu.contract_precision<fp32>} : vector<16x16xf32>, vector<16x16xf32>, vector<16x16xf32> -> vector<16x16xf32>
    %377 = vector.broadcast %369 : vector<1x16xf32> to vector<16x16xf32>
    %378 = arith.addf %376, %377 : vector<16x16xf32>
    %cst_160 = arith.constant 0.000000e+00 : f32
    %379 = vector.broadcast %cst_160 : f32 to vector<16x16xf32>
    %380 = arith.maximumf %378, %379 : vector<16x16xf32>
    %381 = tpu.iota {dimensions = array<i32: 0>} : vector<16x16xi32>
    %c8_i32_161 = arith.constant 8 : i32
    %c0_i32_162 = arith.constant 0 : i32
    %382 = arith.cmpi eq, %c8_i32_161, %c0_i32_162 : i32
    %c1_i32_163 = arith.constant 1 : i32
    %383 = arith.select %382, %c1_i32_163, %c8_i32_161 : i32
    %384 = vector.broadcast %383 : i32 to vector<16x16xi32>
    %385 = arith.remsi %381, %384 : vector<16x16xi32>
    %c0_i32_164 = arith.constant 0 : i32
    %386 = vector.broadcast %c0_i32_164 : i32 to vector<16x16xi32>
    %387 = arith.cmpi ne, %385, %386 : vector<16x16xi32>
    %c0_i32_165 = arith.constant 0 : i32
    %388 = vector.broadcast %c0_i32_165 : i32 to vector<16x16xi32>
    %389 = arith.cmpi slt, %385, %388 : vector<16x16xi32>
    %c0_i32_166 = arith.constant 0 : i32
    %390 = arith.cmpi slt, %383, %c0_i32_166 : i32
    %391 = vector.broadcast %390 : i1 to vector<16x16xi1>
    %392 = vector.broadcast %391 : vector<16x16xi1> to vector<16x16xi1>
    %393 = arith.xori %389, %392 : vector<16x16xi1>
    %394 = arith.andi %393, %387 : vector<16x16xi1>
    %395 = vector.broadcast %383 : i32 to vector<16x16xi32>
    %396 = arith.addi %385, %395 : vector<16x16xi32>
    %397 = arith.select %394, %396, %385 : vector<16x16xi1>, vector<16x16xi32>
    %c0_i32_167 = arith.constant 0 : i32
    %398 = vector.broadcast %c0_i32_167 : i32 to vector<16x16xi32>
    %399 = arith.cmpi ne, %397, %398 : vector<16x16xi32>
    %c8_i32_168 = arith.constant 8 : i32
    %c0_i32_169 = arith.constant 0 : i32
    %400 = arith.cmpi eq, %c8_i32_168, %c0_i32_169 : i32
    %c1_i32_170 = arith.constant 1 : i32
    %401 = arith.select %400, %c1_i32_170, %c8_i32_168 : i32
    %402 = vector.broadcast %401 : i32 to vector<16x16xi32>
    %403 = arith.remsi %381, %402 : vector<16x16xi32>
    %c0_i32_171 = arith.constant 0 : i32
    %404 = vector.broadcast %c0_i32_171 : i32 to vector<16x16xi32>
    %405 = arith.cmpi ne, %403, %404 : vector<16x16xi32>
    %c0_i32_172 = arith.constant 0 : i32
    %406 = vector.broadcast %c0_i32_172 : i32 to vector<16x16xi32>
    %407 = arith.cmpi slt, %403, %406 : vector<16x16xi32>
    %c0_i32_173 = arith.constant 0 : i32
    %408 = arith.cmpi slt, %401, %c0_i32_173 : i32
    %409 = vector.broadcast %408 : i1 to vector<16x16xi1>
    %410 = vector.broadcast %409 : vector<16x16xi1> to vector<16x16xi1>
    %411 = arith.xori %407, %410 : vector<16x16xi1>
    %412 = arith.andi %411, %405 : vector<16x16xi1>
    %413 = vector.broadcast %401 : i32 to vector<16x16xi32>
    %414 = arith.addi %403, %413 : vector<16x16xi32>
    %415 = arith.select %412, %414, %403 : vector<16x16xi1>, vector<16x16xi32>
    %c7_i32_174 = arith.constant 7 : i32
    %416 = vector.broadcast %c7_i32_174 : i32 to vector<16x16xi32>
    %417 = arith.cmpi ne, %415, %416 : vector<16x16xi32>
    %cst_175 = arith.constant 0.000000e+00 : f32
    %418 = vector.broadcast %cst_175 : f32 to vector<1x16xf32>
    %419 = vector.extract_strided_slice %380 {offsets = [0, 0], sizes = [15, 16], strides = [1, 1]} : vector<16x16xf32> to vector<15x16xf32>
    %420 = tpu.concatenate %418, %419 in 0 : vector<1x16xf32>, vector<15x16xf32> -> vector<16x16xf32>
    %cst_176 = arith.constant 0.000000e+00 : f32
    %421 = vector.broadcast %cst_176 : f32 to vector<16x16xf32>
    %422 = arith.select %399, %420, %421 : vector<16x16xi1>, vector<16x16xf32>
    %423 = vector.extract_strided_slice %380 {offsets = [1, 0], sizes = [15, 16], strides = [1, 1]} : vector<16x16xf32> to vector<15x16xf32>
    %424 = tpu.concatenate %423, %418 in 0 : vector<15x16xf32>, vector<1x16xf32> -> vector<16x16xf32>
    %cst_177 = arith.constant 0.000000e+00 : f32
    %425 = vector.broadcast %cst_177 : f32 to vector<16x16xf32>
    %426 = arith.select %417, %424, %425 : vector<16x16xi1>, vector<16x16xf32>
    %c0_178 = arith.constant 0 : index
    %c0_179 = arith.constant 0 : index
    %427 = vector.load %arg19[%c0_178, %c0_179] : memref<48x16xf32, #tpu.memory_space<vmem>>, vector<48x16xf32>
    %c0_180 = arith.constant 0 : index
    %c0_181 = arith.constant 0 : index
    %428 = vector.load %arg20[%c0_180, %c0_181] : memref<1x16xf32, #tpu.memory_space<vmem>>, vector<1x16xf32>
    %429 = tpu.concatenate %422, %380, %426 in 1 : vector<16x16xf32>, vector<16x16xf32>, vector<16x16xf32> -> vector<16x48xf32>
    %cst_182 = arith.constant dense<0.000000e+00> : vector<16x16xf32>
    %430 = tpu.matmul %429, %427, %cst_182 {dimension_numbers = #tpu.dot_dimension_numbers<[1], [0], [0], [1], [0, 0, 1, 1], [], []>, precision = #tpu.contract_precision<fp32>} : vector<16x48xf32>, vector<48x16xf32>, vector<16x16xf32> -> vector<16x16xf32>
    %431 = vector.broadcast %428 : vector<1x16xf32> to vector<16x16xf32>
    %432 = arith.addf %430, %431 : vector<16x16xf32>
    %433 = tpu.iota {dimensions = array<i32: 0>} : vector<16x16xi32>
    %c8_i32_183 = arith.constant 8 : i32
    %c0_i32_184 = arith.constant 0 : i32
    %434 = arith.cmpi eq, %c8_i32_183, %c0_i32_184 : i32
    %c1_i32_185 = arith.constant 1 : i32
    %435 = arith.select %434, %c1_i32_185, %c8_i32_183 : i32
    %436 = vector.broadcast %435 : i32 to vector<16x16xi32>
    %437 = arith.remsi %433, %436 : vector<16x16xi32>
    %c0_i32_186 = arith.constant 0 : i32
    %438 = vector.broadcast %c0_i32_186 : i32 to vector<16x16xi32>
    %439 = arith.cmpi ne, %437, %438 : vector<16x16xi32>
    %c0_i32_187 = arith.constant 0 : i32
    %440 = vector.broadcast %c0_i32_187 : i32 to vector<16x16xi32>
    %441 = arith.cmpi slt, %437, %440 : vector<16x16xi32>
    %c0_i32_188 = arith.constant 0 : i32
    %442 = arith.cmpi slt, %435, %c0_i32_188 : i32
    %443 = vector.broadcast %442 : i1 to vector<16x16xi1>
    %444 = vector.broadcast %443 : vector<16x16xi1> to vector<16x16xi1>
    %445 = arith.xori %441, %444 : vector<16x16xi1>
    %446 = arith.andi %445, %439 : vector<16x16xi1>
    %447 = vector.broadcast %435 : i32 to vector<16x16xi32>
    %448 = arith.addi %437, %447 : vector<16x16xi32>
    %449 = arith.select %446, %448, %437 : vector<16x16xi1>, vector<16x16xi32>
    %c0_i32_189 = arith.constant 0 : i32
    %450 = vector.broadcast %c0_i32_189 : i32 to vector<16x16xi32>
    %451 = arith.cmpi ne, %449, %450 : vector<16x16xi32>
    %c8_i32_190 = arith.constant 8 : i32
    %c0_i32_191 = arith.constant 0 : i32
    %452 = arith.cmpi eq, %c8_i32_190, %c0_i32_191 : i32
    %c1_i32_192 = arith.constant 1 : i32
    %453 = arith.select %452, %c1_i32_192, %c8_i32_190 : i32
    %454 = vector.broadcast %453 : i32 to vector<16x16xi32>
    %455 = arith.remsi %433, %454 : vector<16x16xi32>
    %c0_i32_193 = arith.constant 0 : i32
    %456 = vector.broadcast %c0_i32_193 : i32 to vector<16x16xi32>
    %457 = arith.cmpi ne, %455, %456 : vector<16x16xi32>
    %c0_i32_194 = arith.constant 0 : i32
    %458 = vector.broadcast %c0_i32_194 : i32 to vector<16x16xi32>
    %459 = arith.cmpi slt, %455, %458 : vector<16x16xi32>
    %c0_i32_195 = arith.constant 0 : i32
    %460 = arith.cmpi slt, %453, %c0_i32_195 : i32
    %461 = vector.broadcast %460 : i1 to vector<16x16xi1>
    %462 = vector.broadcast %461 : vector<16x16xi1> to vector<16x16xi1>
    %463 = arith.xori %459, %462 : vector<16x16xi1>
    %464 = arith.andi %463, %457 : vector<16x16xi1>
    %465 = vector.broadcast %453 : i32 to vector<16x16xi32>
    %466 = arith.addi %455, %465 : vector<16x16xi32>
    %467 = arith.select %464, %466, %455 : vector<16x16xi1>, vector<16x16xi32>
    %c7_i32_196 = arith.constant 7 : i32
    %468 = vector.broadcast %c7_i32_196 : i32 to vector<16x16xi32>
    %469 = arith.cmpi ne, %467, %468 : vector<16x16xi32>
    %cst_197 = arith.constant 0.000000e+00 : f32
    %470 = vector.broadcast %cst_197 : f32 to vector<1x16xf32>
    %471 = vector.extract_strided_slice %432 {offsets = [0, 0], sizes = [15, 16], strides = [1, 1]} : vector<16x16xf32> to vector<15x16xf32>
    %472 = tpu.concatenate %470, %471 in 0 : vector<1x16xf32>, vector<15x16xf32> -> vector<16x16xf32>
    %cst_198 = arith.constant 0.000000e+00 : f32
    %473 = vector.broadcast %cst_198 : f32 to vector<16x16xf32>
    %474 = arith.select %451, %472, %473 : vector<16x16xi1>, vector<16x16xf32>
    %475 = vector.extract_strided_slice %432 {offsets = [1, 0], sizes = [15, 16], strides = [1, 1]} : vector<16x16xf32> to vector<15x16xf32>
    %476 = tpu.concatenate %475, %470 in 0 : vector<15x16xf32>, vector<1x16xf32> -> vector<16x16xf32>
    %cst_199 = arith.constant 0.000000e+00 : f32
    %477 = vector.broadcast %cst_199 : f32 to vector<16x16xf32>
    %478 = arith.select %469, %476, %477 : vector<16x16xi1>, vector<16x16xf32>
    %c0_200 = arith.constant 0 : index
    %c0_201 = arith.constant 0 : index
    %479 = vector.load %arg21[%c0_200, %c0_201] : memref<48x16xf32, #tpu.memory_space<vmem>>, vector<48x16xf32>
    %c0_202 = arith.constant 0 : index
    %c0_203 = arith.constant 0 : index
    %480 = vector.load %arg22[%c0_202, %c0_203] : memref<32x16xf32, #tpu.memory_space<vmem>>, vector<32x16xf32>
    %c0_204 = arith.constant 0 : index
    %c0_205 = arith.constant 0 : index
    %481 = vector.load %arg23[%c0_204, %c0_205] : memref<1x16xf32, #tpu.memory_space<vmem>>, vector<1x16xf32>
    %c0_206 = arith.constant 0 : index
    %c0_207 = arith.constant 0 : index
    %482 = vector.load %arg24[%c0_206, %c0_207] : memref<32x32xf32, #tpu.memory_space<vmem>>, vector<32x32xf32>
    %483 = tpu.concatenate %474, %432, %478 in 1 : vector<16x16xf32>, vector<16x16xf32>, vector<16x16xf32> -> vector<16x48xf32>
    %cst_208 = arith.constant dense<0.000000e+00> : vector<16x16xf32>
    %484 = tpu.matmul %483, %479, %cst_208 {dimension_numbers = #tpu.dot_dimension_numbers<[1], [0], [0], [1], [0, 0, 1, 1], [], []>, precision = #tpu.contract_precision<fp32>} : vector<16x48xf32>, vector<48x16xf32>, vector<16x16xf32> -> vector<16x16xf32>
    %485 = tpu.concatenate %432, %478 in 1 : vector<16x16xf32>, vector<16x16xf32> -> vector<16x32xf32>
    %cst_209 = arith.constant dense<0.000000e+00> : vector<16x16xf32>
    %486 = tpu.matmul %485, %480, %cst_209 {dimension_numbers = #tpu.dot_dimension_numbers<[1], [0], [0], [1], [0, 0, 1, 1], [], []>, precision = #tpu.contract_precision<fp32>} : vector<16x32xf32>, vector<32x16xf32>, vector<16x16xf32> -> vector<16x16xf32>
    %487 = tpu.concatenate %484, %486 in 0 : vector<16x16xf32>, vector<16x16xf32> -> vector<32x16xf32>
    %cst_210 = arith.constant dense<0.000000e+00> : vector<32x16xf32>
    %488 = tpu.matmul %482, %487, %cst_210 {dimension_numbers = #tpu.dot_dimension_numbers<[1], [0], [0], [1], [0, 0, 1, 1], [], []>, precision = #tpu.contract_precision<fp32>} : vector<32x32xf32>, vector<32x16xf32>, vector<32x16xf32> -> vector<32x16xf32>
    %489 = vector.broadcast %481 : vector<1x16xf32> to vector<32x16xf32>
    %490 = arith.addf %488, %489 : vector<32x16xf32>
    %cst_211 = arith.constant 0.000000e+00 : f32
    %491 = vector.broadcast %cst_211 : f32 to vector<32x16xf32>
    %492 = arith.maximumf %490, %491 : vector<32x16xf32>
    %493 = tpu.iota {dimensions = array<i32: 0>} : vector<32x16xi32>
    %c16_i32_212 = arith.constant 16 : i32
    %c0_i32_213 = arith.constant 0 : i32
    %494 = arith.cmpi eq, %c16_i32_212, %c0_i32_213 : i32
    %c1_i32_214 = arith.constant 1 : i32
    %495 = arith.select %494, %c1_i32_214, %c16_i32_212 : i32
    %496 = vector.broadcast %495 : i32 to vector<32x16xi32>
    %497 = arith.remsi %493, %496 : vector<32x16xi32>
    %c0_i32_215 = arith.constant 0 : i32
    %498 = vector.broadcast %c0_i32_215 : i32 to vector<32x16xi32>
    %499 = arith.cmpi ne, %497, %498 : vector<32x16xi32>
    %c0_i32_216 = arith.constant 0 : i32
    %500 = vector.broadcast %c0_i32_216 : i32 to vector<32x16xi32>
    %501 = arith.cmpi slt, %497, %500 : vector<32x16xi32>
    %c0_i32_217 = arith.constant 0 : i32
    %502 = arith.cmpi slt, %495, %c0_i32_217 : i32
    %503 = vector.broadcast %502 : i1 to vector<32x16xi1>
    %504 = vector.broadcast %503 : vector<32x16xi1> to vector<32x16xi1>
    %505 = arith.xori %501, %504 : vector<32x16xi1>
    %506 = arith.andi %505, %499 : vector<32x16xi1>
    %507 = vector.broadcast %495 : i32 to vector<32x16xi32>
    %508 = arith.addi %497, %507 : vector<32x16xi32>
    %509 = arith.select %506, %508, %497 : vector<32x16xi1>, vector<32x16xi32>
    %c0_i32_218 = arith.constant 0 : i32
    %510 = vector.broadcast %c0_i32_218 : i32 to vector<32x16xi32>
    %511 = arith.cmpi ne, %509, %510 : vector<32x16xi32>
    %c16_i32_219 = arith.constant 16 : i32
    %c0_i32_220 = arith.constant 0 : i32
    %512 = arith.cmpi eq, %c16_i32_219, %c0_i32_220 : i32
    %c1_i32_221 = arith.constant 1 : i32
    %513 = arith.select %512, %c1_i32_221, %c16_i32_219 : i32
    %514 = vector.broadcast %513 : i32 to vector<32x16xi32>
    %515 = arith.remsi %493, %514 : vector<32x16xi32>
    %c0_i32_222 = arith.constant 0 : i32
    %516 = vector.broadcast %c0_i32_222 : i32 to vector<32x16xi32>
    %517 = arith.cmpi ne, %515, %516 : vector<32x16xi32>
    %c0_i32_223 = arith.constant 0 : i32
    %518 = vector.broadcast %c0_i32_223 : i32 to vector<32x16xi32>
    %519 = arith.cmpi slt, %515, %518 : vector<32x16xi32>
    %c0_i32_224 = arith.constant 0 : i32
    %520 = arith.cmpi slt, %513, %c0_i32_224 : i32
    %521 = vector.broadcast %520 : i1 to vector<32x16xi1>
    %522 = vector.broadcast %521 : vector<32x16xi1> to vector<32x16xi1>
    %523 = arith.xori %519, %522 : vector<32x16xi1>
    %524 = arith.andi %523, %517 : vector<32x16xi1>
    %525 = vector.broadcast %513 : i32 to vector<32x16xi32>
    %526 = arith.addi %515, %525 : vector<32x16xi32>
    %527 = arith.select %524, %526, %515 : vector<32x16xi1>, vector<32x16xi32>
    %c15_i32_225 = arith.constant 15 : i32
    %528 = vector.broadcast %c15_i32_225 : i32 to vector<32x16xi32>
    %529 = arith.cmpi ne, %527, %528 : vector<32x16xi32>
    %cst_226 = arith.constant 0.000000e+00 : f32
    %530 = vector.broadcast %cst_226 : f32 to vector<1x16xf32>
    %531 = vector.extract_strided_slice %492 {offsets = [0, 0], sizes = [31, 16], strides = [1, 1]} : vector<32x16xf32> to vector<31x16xf32>
    %532 = tpu.concatenate %530, %531 in 0 : vector<1x16xf32>, vector<31x16xf32> -> vector<32x16xf32>
    %cst_227 = arith.constant 0.000000e+00 : f32
    %533 = vector.broadcast %cst_227 : f32 to vector<32x16xf32>
    %534 = arith.select %511, %532, %533 : vector<32x16xi1>, vector<32x16xf32>
    %535 = vector.extract_strided_slice %492 {offsets = [1, 0], sizes = [31, 16], strides = [1, 1]} : vector<32x16xf32> to vector<31x16xf32>
    %536 = tpu.concatenate %535, %530 in 0 : vector<31x16xf32>, vector<1x16xf32> -> vector<32x16xf32>
    %cst_228 = arith.constant 0.000000e+00 : f32
    %537 = vector.broadcast %cst_228 : f32 to vector<32x16xf32>
    %538 = arith.select %529, %536, %537 : vector<32x16xi1>, vector<32x16xf32>
    %c0_229 = arith.constant 0 : index
    %c0_230 = arith.constant 0 : index
    %539 = vector.load %arg25[%c0_229, %c0_230] : memref<48x16xf32, #tpu.memory_space<vmem>>, vector<48x16xf32>
    %c0_231 = arith.constant 0 : index
    %c0_232 = arith.constant 0 : index
    %540 = vector.load %arg26[%c0_231, %c0_232] : memref<1x16xf32, #tpu.memory_space<vmem>>, vector<1x16xf32>
    %541 = tpu.concatenate %534, %492, %538 in 1 : vector<32x16xf32>, vector<32x16xf32>, vector<32x16xf32> -> vector<32x48xf32>
    %cst_233 = arith.constant dense<0.000000e+00> : vector<32x16xf32>
    %542 = tpu.matmul %541, %539, %cst_233 {dimension_numbers = #tpu.dot_dimension_numbers<[1], [0], [0], [1], [0, 0, 1, 1], [], []>, precision = #tpu.contract_precision<fp32>} : vector<32x48xf32>, vector<48x16xf32>, vector<32x16xf32> -> vector<32x16xf32>
    %543 = vector.broadcast %540 : vector<1x16xf32> to vector<32x16xf32>
    %544 = arith.addf %542, %543 : vector<32x16xf32>
    %545 = tpu.iota {dimensions = array<i32: 0>} : vector<32x16xi32>
    %c16_i32_234 = arith.constant 16 : i32
    %c0_i32_235 = arith.constant 0 : i32
    %546 = arith.cmpi eq, %c16_i32_234, %c0_i32_235 : i32
    %c1_i32_236 = arith.constant 1 : i32
    %547 = arith.select %546, %c1_i32_236, %c16_i32_234 : i32
    %548 = vector.broadcast %547 : i32 to vector<32x16xi32>
    %549 = arith.remsi %545, %548 : vector<32x16xi32>
    %c0_i32_237 = arith.constant 0 : i32
    %550 = vector.broadcast %c0_i32_237 : i32 to vector<32x16xi32>
    %551 = arith.cmpi ne, %549, %550 : vector<32x16xi32>
    %c0_i32_238 = arith.constant 0 : i32
    %552 = vector.broadcast %c0_i32_238 : i32 to vector<32x16xi32>
    %553 = arith.cmpi slt, %549, %552 : vector<32x16xi32>
    %c0_i32_239 = arith.constant 0 : i32
    %554 = arith.cmpi slt, %547, %c0_i32_239 : i32
    %555 = vector.broadcast %554 : i1 to vector<32x16xi1>
    %556 = vector.broadcast %555 : vector<32x16xi1> to vector<32x16xi1>
    %557 = arith.xori %553, %556 : vector<32x16xi1>
    %558 = arith.andi %557, %551 : vector<32x16xi1>
    %559 = vector.broadcast %547 : i32 to vector<32x16xi32>
    %560 = arith.addi %549, %559 : vector<32x16xi32>
    %561 = arith.select %558, %560, %549 : vector<32x16xi1>, vector<32x16xi32>
    %c0_i32_240 = arith.constant 0 : i32
    %562 = vector.broadcast %c0_i32_240 : i32 to vector<32x16xi32>
    %563 = arith.cmpi ne, %561, %562 : vector<32x16xi32>
    %c16_i32_241 = arith.constant 16 : i32
    %c0_i32_242 = arith.constant 0 : i32
    %564 = arith.cmpi eq, %c16_i32_241, %c0_i32_242 : i32
    %c1_i32_243 = arith.constant 1 : i32
    %565 = arith.select %564, %c1_i32_243, %c16_i32_241 : i32
    %566 = vector.broadcast %565 : i32 to vector<32x16xi32>
    %567 = arith.remsi %545, %566 : vector<32x16xi32>
    %c0_i32_244 = arith.constant 0 : i32
    %568 = vector.broadcast %c0_i32_244 : i32 to vector<32x16xi32>
    %569 = arith.cmpi ne, %567, %568 : vector<32x16xi32>
    %c0_i32_245 = arith.constant 0 : i32
    %570 = vector.broadcast %c0_i32_245 : i32 to vector<32x16xi32>
    %571 = arith.cmpi slt, %567, %570 : vector<32x16xi32>
    %c0_i32_246 = arith.constant 0 : i32
    %572 = arith.cmpi slt, %565, %c0_i32_246 : i32
    %573 = vector.broadcast %572 : i1 to vector<32x16xi1>
    %574 = vector.broadcast %573 : vector<32x16xi1> to vector<32x16xi1>
    %575 = arith.xori %571, %574 : vector<32x16xi1>
    %576 = arith.andi %575, %569 : vector<32x16xi1>
    %577 = vector.broadcast %565 : i32 to vector<32x16xi32>
    %578 = arith.addi %567, %577 : vector<32x16xi32>
    %579 = arith.select %576, %578, %567 : vector<32x16xi1>, vector<32x16xi32>
    %c15_i32_247 = arith.constant 15 : i32
    %580 = vector.broadcast %c15_i32_247 : i32 to vector<32x16xi32>
    %581 = arith.cmpi ne, %579, %580 : vector<32x16xi32>
    %cst_248 = arith.constant 0.000000e+00 : f32
    %582 = vector.broadcast %cst_248 : f32 to vector<1x16xf32>
    %583 = vector.extract_strided_slice %544 {offsets = [0, 0], sizes = [31, 16], strides = [1, 1]} : vector<32x16xf32> to vector<31x16xf32>
    %584 = tpu.concatenate %582, %583 in 0 : vector<1x16xf32>, vector<31x16xf32> -> vector<32x16xf32>
    %cst_249 = arith.constant 0.000000e+00 : f32
    %585 = vector.broadcast %cst_249 : f32 to vector<32x16xf32>
    %586 = arith.select %563, %584, %585 : vector<32x16xi1>, vector<32x16xf32>
    %587 = vector.extract_strided_slice %544 {offsets = [1, 0], sizes = [31, 16], strides = [1, 1]} : vector<32x16xf32> to vector<31x16xf32>
    %588 = tpu.concatenate %587, %582 in 0 : vector<31x16xf32>, vector<1x16xf32> -> vector<32x16xf32>
    %cst_250 = arith.constant 0.000000e+00 : f32
    %589 = vector.broadcast %cst_250 : f32 to vector<32x16xf32>
    %590 = arith.select %581, %588, %589 : vector<32x16xi1>, vector<32x16xf32>
    %c0_251 = arith.constant 0 : index
    %c0_252 = arith.constant 0 : index
    %591 = vector.load %arg27[%c0_251, %c0_252] : memref<48x1xf32, #tpu.memory_space<vmem>>, vector<48x1xf32>
    %c0_253 = arith.constant 0 : index
    %c0_254 = arith.constant 0 : index
    %592 = vector.load %arg28[%c0_253, %c0_254] : memref<1x1xf32, #tpu.memory_space<vmem>>, vector<1x1xf32>
    %593 = tpu.concatenate %586, %544, %590 in 1 : vector<32x16xf32>, vector<32x16xf32>, vector<32x16xf32> -> vector<32x48xf32>
    %cst_255 = arith.constant dense<0.000000e+00> : vector<32x1xf32>
    %594 = tpu.matmul %593, %591, %cst_255 {dimension_numbers = #tpu.dot_dimension_numbers<[1], [0], [0], [1], [0, 0, 1, 1], [], []>, precision = #tpu.contract_precision<fp32>} : vector<32x48xf32>, vector<48x1xf32>, vector<32x1xf32> -> vector<32x1xf32>
    %595 = vector.broadcast %592 : vector<1x1xf32> to vector<32x1xf32>
    %596 = arith.addf %594, %595 : vector<32x1xf32>
    %c0_256 = arith.constant 0 : index
    %c0_257 = arith.constant 0 : index
    %597 = vector.load %arg29[%c0_256, %c0_257] : memref<32x1xf32, #tpu.memory_space<vmem>>, vector<32x1xf32>
    tpu.vector_store %arg29[%c0_256, %c0_257], %596 {strides = array<i32>} : memref<32x1xf32, #tpu.memory_space<vmem>>, vector<32x1xf32>,
    return
  }
}

</mosaic_0001>

<llo_original>
// kernel: autoencoder_forward.1
$region0: #{autoencoder_forward.1}
  #allocation0 [shape = 'u32[]', space=smem, size = 0x4, offset = 0x4, fixed_abs, tag = 'smem constant byte address 0x4 - core index']
  #allocation1 [shape = 'u32[144,128]{1,0:T(1,128)}', space=vmem, size = 0x12000, scoped, tag = 'internal scratch']
  #allocation2 [shape = 'f32[1,1]{1,0:T(1,128)S(1)}', space=vmem, size = 0x200, scoped, tag = 'scoped memory for autoencoder_forward.1']
  #allocation3 [shape = 'f32[1,1]{1,0:T(1,128)S(1)}', space=vmem, size = 0x200, scoped, tag = 'scoped memory for autoencoder_forward.1']
  %s0 = inlined_call_operand.smem [shape: u32[30], index: -1, kind: input, shape index: {}]
  %s1 = sld [smem:[%s0]]
  %s2 = scalar_lea.smem %s0, 1
  %s3 = sld [smem:[%s2]]
  %s4 = scalar_lea.smem %s0, 2
  %s5 = sld [smem:[%s4]]
  %s6 = scalar_lea.smem %s0, 3
  %s7 = sld [smem:[%s6]]
  %s8 = scalar_lea.smem %s0, 4
  %s9 = sld [smem:[%s8]]
  %s10 = scalar_lea.smem %s0, 5
  %s11 = sld [smem:[%s10]]
  %s12 = scalar_lea.smem %s0, 6
  %s13 = sld [smem:[%s12]]
  %s14 = scalar_lea.smem %s0, 7
  %s15 = sld [smem:[%s14]]
  %s16 = scalar_lea.smem %s0, 8
  %s17 = sld [smem:[%s16]]
  %s18 = scalar_lea.smem %s0, 9
  %s19 = sld [smem:[%s18]]
  %s20 = scalar_lea.smem %s0, 10
  %s21 = sld [smem:[%s20]]
  %s22 = scalar_lea.smem %s0, 11
  %s23 = sld [smem:[%s22]]
  %s24 = scalar_lea.smem %s0, 12
  %s25 = sld [smem:[%s24]]
  %s26 = scalar_lea.smem %s0, 13
  %s27 = sld [smem:[%s26]]
  %s28 = scalar_lea.smem %s0, 14
  %s29 = sld [smem:[%s28]]
  %s30 = scalar_lea.smem %s0, 15
  %s31 = sld [smem:[%s30]]
  %s32 = scalar_lea.smem %s0, 16
  %s33 = sld [smem:[%s32]]
  %s34 = scalar_lea.smem %s0, 17
  %s35 = sld [smem:[%s34]]
  %s36 = scalar_lea.smem %s0, 18
  %s37 = sld [smem:[%s36]]
  %s38 = scalar_lea.smem %s0, 19
  %s39 = sld [smem:[%s38]]
  %s40 = scalar_lea.smem %s0, 20
  %s41 = sld [smem:[%s40]]
  %s42 = scalar_lea.smem %s0, 21
  %s43 = sld [smem:[%s42]]
  %s44 = scalar_lea.smem %s0, 22
  %s45 = sld [smem:[%s44]]
  %s46 = scalar_lea.smem %s0, 23
  %s47 = sld [smem:[%s46]]
  %s48 = scalar_lea.smem %s0, 24
  %s49 = sld [smem:[%s48]]
  %s50 = scalar_lea.smem %s0, 25
  %s51 = sld [smem:[%s50]]
  %s52 = scalar_lea.smem %s0, 26
  %s53 = sld [smem:[%s52]]
  %s54 = scalar_lea.smem %s0, 27
  %s55 = sld [smem:[%s54]]
  %s56 = scalar_lea.smem %s0, 28
  %s57 = sld [smem:[%s56]]
  %s58 = scalar_lea.smem %s0, 29
  %s59 = sld [smem:[%s58]]
  %s60 = sld [smem:[#allocation0]]
  $region126: #{autoencoder_forward.1} parent=0
    _
  %s62 = ssub.s32 1, %s60
  %s63 = scalar_select 0, %s62, %s60
  %v64 = vstv %s29
  %65 = vst [vmem:[#allocation2] sm:$0x1] %v64
  %v66 = vstv %s57
  %67 = vst [vmem:[#allocation3] sm:$0x1] %v66
  // Predicated region
  $region2: #{autoencoder_forward.1} parent=0 // pred_check
    _
  $region3: #{autoencoder_forward.1} parent=0 // pred_check_branch
    %69 = sbr.rel (0) target = $region5
  $region4: #{autoencoder_forward.1} parent=0 // pred_region
    _
  $region5: #{autoencoder_forward.1} parent=0 // pred_fallthru
    _
  // Predicated region
  $region6: #{autoencoder_forward.1} parent=0 // pred_check
    _
  $region7: #{autoencoder_forward.1} parent=0 // pred_check_branch
    %71 = sbr.rel (0) target = $region9
  $region8: #{autoencoder_forward.1} parent=0 // pred_region
    _
  $region9: #{autoencoder_forward.1} parent=0 // pred_fallthru
    _
  // Predicated region
  $region10: #{autoencoder_forward.1} parent=0 // pred_check
    _
  $region11: #{autoencoder_forward.1} parent=0 // pred_check_branch
    %73 = sbr.rel (0) target = $region13
  $region12: #{autoencoder_forward.1} parent=0 // pred_region
    _
  $region13: #{autoencoder_forward.1} parent=0 // pred_fallthru
    _
  // Predicated region
  $region14: #{autoencoder_forward.1} parent=0 // pred_check
    _
  $region15: #{autoencoder_forward.1} parent=0 // pred_check_branch
    %75 = sbr.rel (0) target = $region17
  $region16: #{autoencoder_forward.1} parent=0 // pred_region
    _
  $region17: #{autoencoder_forward.1} parent=0 // pred_fallthru
    _
  // Predicated region
  $region18: #{autoencoder_forward.1} parent=0 // pred_check
    _
  $region19: #{autoencoder_forward.1} parent=0 // pred_check_branch
    %77 = sbr.rel (0) target = $region21
  $region20: #{autoencoder_forward.1} parent=0 // pred_region
    _
  $region21: #{autoencoder_forward.1} parent=0 // pred_fallthru
    _
  // Predicated region
  $region22: #{autoencoder_forward.1} parent=0 // pred_check
    _
  $region23: #{autoencoder_forward.1} parent=0 // pred_check_branch
    %79 = sbr.rel (0) target = $region25
  $region24: #{autoencoder_forward.1} parent=0 // pred_region
    _
  $region25: #{autoencoder_forward.1} parent=0 // pred_fallthru
    _
  // Predicated region
  $region26: #{autoencoder_forward.1} parent=0 // pred_check
    _
  $region27: #{autoencoder_forward.1} parent=0 // pred_check_branch
    %81 = sbr.rel (0) target = $region29
  $region28: #{autoencoder_forward.1} parent=0 // pred_region
    _
  $region29: #{autoencoder_forward.1} parent=0 // pred_fallthru
    _
  // Predicated region
  $region30: #{autoencoder_forward.1} parent=0 // pred_check
    _
  $region31: #{autoencoder_forward.1} parent=0 // pred_check_branch
    %83 = sbr.rel (0) target = $region33
  $region32: #{autoencoder_forward.1} parent=0 // pred_region
    _
  $region33: #{autoencoder_forward.1} parent=0 // pred_fallthru
    _
  // Predicated region
  $region34: #{autoencoder_forward.1} parent=0 // pred_check
    _
  $region35: #{autoencoder_forward.1} parent=0 // pred_check_branch
    %85 = sbr.rel (0) target = $region37
  $region36: #{autoencoder_forward.1} parent=0 // pred_region
    _
  $region37: #{autoencoder_forward.1} parent=0 // pred_fallthru
    _
  // Predicated region
  $region38: #{autoencoder_forward.1} parent=0 // pred_check
    _
  $region39: #{autoencoder_forward.1} parent=0 // pred_check_branch
    %87 = sbr.rel (0) target = $region41
  $region40: #{autoencoder_forward.1} parent=0 // pred_region
    _
  $region41: #{autoencoder_forward.1} parent=0 // pred_fallthru
    _
  // Predicated region
  $region42: #{autoencoder_forward.1} parent=0 // pred_check
    _
  $region43: #{autoencoder_forward.1} parent=0 // pred_check_branch
    %89 = sbr.rel (0) target = $region45
  $region44: #{autoencoder_forward.1} parent=0 // pred_region
    _
  $region45: #{autoencoder_forward.1} parent=0 // pred_fallthru
    _
  // Predicated region
  $region46: #{autoencoder_forward.1} parent=0 // pred_check
    _
  $region47: #{autoencoder_forward.1} parent=0 // pred_check_branch
    %91 = sbr.rel (0) target = $region49
  $region48: #{autoencoder_forward.1} parent=0 // pred_region
    _
  $region49: #{autoencoder_forward.1} parent=0 // pred_fallthru
    _
  // Predicated region
  $region50: #{autoencoder_forward.1} parent=0 // pred_check
    _
  $region51: #{autoencoder_forward.1} parent=0 // pred_check_branch
    %93 = sbr.rel (0) target = $region53
  $region52: #{autoencoder_forward.1} parent=0 // pred_region
    _
  $region53: #{autoencoder_forward.1} parent=0 // pred_fallthru
    _
  // Predicated region
  $region54: #{autoencoder_forward.1} parent=0 // pred_check
    _
  $region55: #{autoencoder_forward.1} parent=0 // pred_check_branch
    %95 = sbr.rel (0) target = $region57
  $region56: #{autoencoder_forward.1} parent=0 // pred_region
    _
  $region57: #{autoencoder_forward.1} parent=0 // pred_fallthru
    _
  // Predicated region
  $region58: #{autoencoder_forward.1} parent=0 // pred_check
    _
  $region59: #{autoencoder_forward.1} parent=0 // pred_check_branch
    %97 = sbr.rel (0) target = $region61
  $region60: #{autoencoder_forward.1} parent=0 // pred_region
    _
  $region61: #{autoencoder_forward.1} parent=0 // pred_fallthru
    _
  // Predicated region
  $region62: #{autoencoder_forward.1} parent=0 // pred_check
    _
  $region63: #{autoencoder_forward.1} parent=0 // pred_check_branch
    %99 = sbr.rel (0) target = $region65
  $region64: #{autoencoder_forward.1} parent=0 // pred_region
    _
  $region65: #{autoencoder_forward.1} parent=0 // pred_fallthru
    _
  // Predicated region
  $region66: #{autoencoder_forward.1} parent=0 // pred_check
    _
  $region67: #{autoencoder_forward.1} parent=0 // pred_check_branch
    %101 = sbr.rel (0) target = $region69
  $region68: #{autoencoder_forward.1} parent=0 // pred_region
    _
  $region69: #{autoencoder_forward.1} parent=0 // pred_fallthru
    _
  // Predicated region
  $region70: #{autoencoder_forward.1} parent=0 // pred_check
    _
  $region71: #{autoencoder_forward.1} parent=0 // pred_check_branch
    %103 = sbr.rel (0) target = $region73
  $region72: #{autoencoder_forward.1} parent=0 // pred_region
    _
  $region73: #{autoencoder_forward.1} parent=0 // pred_fallthru
    _
  // Predicated region
  $region74: #{autoencoder_forward.1} parent=0 // pred_check
    _
  $region75: #{autoencoder_forward.1} parent=0 // pred_check_branch
    %105 = sbr.rel (0) target = $region77
  $region76: #{autoencoder_forward.1} parent=0 // pred_region
    _
  $region77: #{autoencoder_forward.1} parent=0 // pred_fallthru
    _
  // Predicated region
  $region78: #{autoencoder_forward.1} parent=0 // pred_check
    _
  $region79: #{autoencoder_forward.1} parent=0 // pred_check_branch
    %107 = sbr.rel (0) target = $region81
  $region80: #{autoencoder_forward.1} parent=0 // pred_region
    _
  $region81: #{autoencoder_forward.1} parent=0 // pred_fallthru
    _
  // Predicated region
  $region82: #{autoencoder_forward.1} parent=0 // pred_check
    _
  $region83: #{autoencoder_forward.1} parent=0 // pred_check_branch
    %109 = sbr.rel (0) target = $region85
  $region84: #{autoencoder_forward.1} parent=0 // pred_region
    _
  $region85: #{autoencoder_forward.1} parent=0 // pred_fallthru
    _
  // Predicated region
  $region86: #{autoencoder_forward.1} parent=0 // pred_check
    _
  $region87: #{autoencoder_forward.1} parent=0 // pred_check_branch
    %111 = sbr.rel (0) target = $region89
  $region88: #{autoencoder_forward.1} parent=0 // pred_region
    _
  $region89: #{autoencoder_forward.1} parent=0 // pred_fallthru
    _
  // Predicated region
  $region90: #{autoencoder_forward.1} parent=0 // pred_check
    _
  $region91: #{autoencoder_forward.1} parent=0 // pred_check_branch
    %113 = sbr.rel (0) target = $region93
  $region92: #{autoencoder_forward.1} parent=0 // pred_region
    _
  $region93: #{autoencoder_forward.1} parent=0 // pred_fallthru
    _
  // Predicated region
  $region94: #{autoencoder_forward.1} parent=0 // pred_check
    _
  $region95: #{autoencoder_forward.1} parent=0 // pred_check_branch
    %115 = sbr.rel (0) target = $region97
  $region96: #{autoencoder_forward.1} parent=0 // pred_region
    _
  $region97: #{autoencoder_forward.1} parent=0 // pred_fallthru
    _
  // Predicated region
  $region98: #{autoencoder_forward.1} parent=0 // pred_check
    _
  $region99: #{autoencoder_forward.1} parent=0 // pred_check_branch
    %117 = sbr.rel (0) target = $region101
  $region100: #{autoencoder_forward.1} parent=0 // pred_region
    _
  $region101: #{autoencoder_forward.1} parent=0 // pred_fallthru
    _
  // Predicated region
  $region102: #{autoencoder_forward.1} parent=0 // pred_check
    _
  $region103: #{autoencoder_forward.1} parent=0 // pred_check_branch
    %119 = sbr.rel (0) target = $region105
  $region104: #{autoencoder_forward.1} parent=0 // pred_region
    _
  $region105: #{autoencoder_forward.1} parent=0 // pred_fallthru
    _
  // Predicated region
  $region106: #{autoencoder_forward.1} parent=0 // pred_check
    _
  $region107: #{autoencoder_forward.1} parent=0 // pred_check_branch
    %121 = sbr.rel (0) target = $region109
  $region108: #{autoencoder_forward.1} parent=0 // pred_region
    _
  $region109: #{autoencoder_forward.1} parent=0 // pred_fallthru
    _
  // Predicated region
  $region110: #{autoencoder_forward.1} parent=0 // pred_check
    _
  $region111: #{autoencoder_forward.1} parent=0 // pred_check_branch
    %123 = sbr.rel (0) target = $region113
  $region112: #{autoencoder_forward.1} parent=0 // pred_region
    _
  $region113: #{autoencoder_forward.1} parent=0 // pred_fallthru
    _
  // Predicated region
  $region114: #{autoencoder_forward.1} parent=0 // pred_check
    _
  $region115: #{autoencoder_forward.1} parent=0 // pred_check_branch
    %125 = sbr.rel (0) target = $region117
  $region116: #{autoencoder_forward.1} parent=0 // pred_region
    _
  $region117: #{autoencoder_forward.1} parent=0 // pred_fallthru
    _
  %v126 = vld [vmem:[%s1] sm:$0xff]
  %v127 = vld [vmem:[%s1 + $0x8] sm:$0xff]
  %v128 = vld [vmem:[%s1 + $0x10] sm:$0xff]
  %v129 = vld [vmem:[%s1 + $0x18] sm:$0xff]
  %v130 = vlaneseq
  %v131 = vshrl.u32 %v130, 7
  %v132 = vadd.s32 %v131, 8
  %v133 = vadd.s32 %v131, 16
  %v134 = vadd.s32 %v131, 24
  %vm135 = vcmp.lt.s32.totalorder %v131, 0
  %v136 = vsub.s32 0, %v131
  %v137 = vsel %vm135, %v136, %v131
  %v138 = vshrl.u32 %v137, 4
  %v139 = vand.u32 %v137, 15
  %v140 = vsub.s32 0, %v139
  %v141 = vsel %vm135, %v140, %v139
  %vm142 = vcmp.lt.s32.totalorder %v132, 0
  %v143 = vsub.s32 0, %v132
  %v144 = vsel %vm142, %v143, %v132
  %v145 = vshrl.u32 %v144, 4
  %v146 = vand.u32 %v144, 15
  %v147 = vsub.s32 0, %v146
  %v148 = vsel %vm142, %v147, %v146
  %vm149 = vcmp.lt.s32.totalorder %v133, 0
  %v150 = vsub.s32 0, %v133
  %v151 = vsel %vm149, %v150, %v133
  %v152 = vshrl.u32 %v151, 4
  %v153 = vand.u32 %v151, 15
  %v154 = vsub.s32 0, %v153
  %v155 = vsel %vm149, %v154, %v153
  %vm156 = vcmp.lt.s32.totalorder %v134, 0
  %v157 = vsub.s32 0, %v134
  %v158 = vsel %vm156, %v157, %v134
  %v159 = vshrl.u32 %v158, 4
  %v160 = vand.u32 %v158, 15
  %v161 = vsub.s32 0, %v160
  %v162 = vsel %vm156, %v161, %v160
  %vm163 = vcmp.ne.s32.totalorder %v141, 0
  %vm164 = vcmp.ne.s32.totalorder %v148, 0
  %vm165 = vcmp.ne.s32.totalorder %v155, 0
  %vm166 = vcmp.ne.s32.totalorder %v162, 0
  %vm167 = vcmp.lt.s32.totalorder %v141, 0
  %vm168 = vcmp.lt.s32.totalorder %v148, 0
  %vm169 = vcmp.lt.s32.totalorder %v155, 0
  %vm170 = vcmp.lt.s32.totalorder %v162, 0
  %vm171 = vmand %vm167, %vm163
  %vm172 = vmand %vm168, %vm164
  %vm173 = vmand %vm169, %vm165
  %vm174 = vmand %vm170, %vm166
  %v175 = vadd.s32 %v141, 16
  %v176 = vadd.s32 %v148, 16
  %v177 = vadd.s32 %v155, 16
  %v178 = vadd.s32 %v162, 16
  %v179 = vsel %vm171, %v175, %v141
  %v180 = vsel %vm172, %v176, %v148
  %v181 = vsel %vm173, %v177, %v155
  %v182 = vsel %vm174, %v178, %v162
  %vm183 = vcmp.ne.s32.totalorder %v179, 0
  %vm184 = vcmp.ne.s32.totalorder %v180, 0
  %vm185 = vcmp.ne.s32.totalorder %v181, 0
  %vm186 = vcmp.ne.s32.totalorder %v182, 0
  %vm187 = vcmp.ne.s32.totalorder %v179, 15
  %vm188 = vcmp.ne.s32.totalorder %v180, 15
  %vm189 = vcmp.ne.s32.totalorder %v181, 15
  %vm190 = vcmp.ne.s32.totalorder %v182, 15
  %vm195 = vcmask 1040384
  %v196 = vrot.slane %v126, 7
  %v197 = vrot.slane %v127, 7
  %v198 = vsel %vm195, %v196, %v197
  %v199 = vrot.slane %v128, 7
  %v200 = vsel %vm195, %v197, %v199
  %v201 = vrot.slane %v129, 7
  %v202 = vsel %vm195, %v199, %v201
  %v207 = vsel %vm195, 0.0, %v196
  %v208 = vsel %vm183, %v207, 0.0
  %v209 = vsel %vm184, %v198, 0.0
  %v210 = vsel %vm185, %v200, 0.0
  %v211 = vsel %vm186, %v202, 0.0
  %vm212 = vcmask 1046528
  %v213 = vrot.slane %v126, 1
  %v214 = vrot.slane %v127, 1
  %v215 = vsel %vm212, %v213, %v214
  %v216 = vrot.slane %v128, 1
  %v217 = vsel %vm212, %v214, %v216
  %v218 = vrot.slane %v129, 1
  %v219 = vsel %vm212, %v216, %v218
  %v224 = vsel %vm212, %v218, 0.0
  %v225 = vsel %vm187, %v215, 0.0
  %v226 = vsel %vm188, %v217, 0.0
  %v227 = vsel %vm189, %v219, 0.0
  %v228 = vsel %vm190, %v224, 0.0
  %v229 = vld [vmem:[%s3] sm:$0x7]
  %v230 = vld [vmem:[%s5] sm:$0x1]
  %231 = vrot.lane.b32.xlu0 %v126, 1
  %v232 = vpop.permute.xlu0 %231
  %233 = vrot.lane.b32.xlu0 %v127, 1
  %v234 = vpop.permute.xlu0 %233
  %235 = vrot.lane.b32.xlu0 %v128, 1
  %v236 = vpop.permute.xlu0 %235
  %237 = vrot.lane.b32.xlu0 %v129, 1
  %v238 = vpop.permute.xlu0 %237
  %247 = vrot.lane.b32.xlu0 %v225, 2
  %v248 = vpop.permute.xlu0 %247
  %249 = vrot.lane.b32.xlu0 %v226, 2
  %v250 = vpop.permute.xlu0 %249
  %251 = vrot.lane.b32.xlu0 %v227, 2
  %v252 = vpop.permute.xlu0 %251
  %253 = vrot.lane.b32.xlu0 %v228, 2
  %v254 = vpop.permute.xlu0 %253
  %vm259 = vcmask 7168
  %v260 = vsel %vm259, %v208, %v232
  %v261 = vsel %vm259, %v209, %v234
  %v262 = vsel %vm259, %v210, %v236
  %v263 = vsel %vm259, %v211, %v238
  %vm264 = vcmask 15360
  %v265 = vsel %vm264, %v260, %v248
  %v266 = vsel %vm264, %v261, %v250
  %v267 = vsel %vm264, %v262, %v252
  %v268 = vsel %vm264, %v263, %v254
  %v270 = vlaneseq
  %v271 = vshrl.u32 %v270, 7
  %v272 = vsub.s32 0, %v271
  %v273 = vrot.slane %v230, %v272
  %vm275 = vcmask 23552
  %v277 = vsel %vm275, %v265, 0
  %v280 = vsel %vm275, %v266, 0
  %v283 = vsel %vm275, %v267, 0
  %v286 = vsel %vm275, %v268, 0
  %vm288 = vcmask 1042432
  %v290 = vsel %vm288, %v229, 0
  %292 = vmatprep.subr.mxu0 0.0
  %v293 = vand.u32 %v290, 4294901760
  %294 = vmatpush1.msra.mxu0 %v293
  %295 = vmatprep.subr.mxu0 0.0
  %296 = vmatpush1.msra.mxu0 0.0
  %297 = vmatprep.subr.mxu0 0.0
  %298 = vmatpush1.msra.mxu0 0.0
  %299 = vmatprep.subr.mxu0 0.0
  %300 = vmatpush1.msra.mxu0 0.0
  %301 = vmatprep.subr.mxu0 0.0
  %302 = vmatpush1.msra.mxu0 0.0
  %303 = vmatprep.subr.mxu0 0.0
  %304 = vmatpush1.msra.mxu0 0.0
  %305 = vmatprep.subr.mxu0 0.0
  %306 = vmatpush1.msra.mxu0 0.0
  %307 = vmatprep.subr.mxu0 0.0
  %308 = vmatpush1.msra.mxu0 0.0
  %309 = vmatprep.subr.mxu0 0.0
  %310 = vmatpush1.msra.mxu0 0.0
  %311 = vmatprep.subr.mxu0 0.0
  %312 = vmatpush1.msra.mxu0 0.0
  %313 = vmatprep.subr.mxu0 0.0
  %314 = vmatpush1.msra.mxu0 0.0
  %315 = vmatprep.subr.mxu0 0.0
  %316 = vmatpush1.msra.mxu0 0.0
  %317 = vmatprep.subr.mxu0 0.0
  %318 = vmatpush1.msra.mxu0 0.0
  %319 = vmatprep.subr.mxu0 0.0
  %320 = vmatpush1.msra.mxu0 0.0
  %321 = vmatprep.subr.mxu0 0.0
  %322 = vmatpush1.msra.mxu0 0.0
  %323 = vmatprep.subr.mxu0 0.0
  %324 = vmatpush1.msra.mxu0 0.0
  %325 = vmatprep.subr.mxu0 0.0
  %326 = vmatpush1.msra.mxu0 0.0
  %327 = vmatprep.subr.mxu0 0.0
  %328 = vmatpush1.msra.mxu0 0.0
  %329 = vmatprep.subr.mxu0 0.0
  %330 = vmatpush1.msra.mxu0 0.0
  %331 = vmatprep.subr.mxu0 0.0
  %332 = vmatpush1.msra.mxu0 0.0
  %333 = vmatprep.subr.mxu0 0.0
  %334 = vmatpush1.msra.mxu0 0.0
  %335 = vmatprep.subr.mxu0 0.0
  %336 = vmatpush1.msra.mxu0 0.0
  %337 = vmatprep.subr.mxu0 0.0
  %338 = vmatpush1.msra.mxu0 0.0
  %339 = vmatprep.subr.mxu0 0.0
  %340 = vmatpush1.msra.mxu0 0.0
  %341 = vmatprep.subr.mxu0 0.0
  %342 = vmatpush1.msra.mxu0 0.0
  %343 = vmatprep.subr.mxu0 0.0
  %344 = vmatpush1.msra.mxu0 0.0
  %345 = vmatprep.subr.mxu0 0.0
  %346 = vmatpush1.msra.mxu0 0.0
  %347 = vmatprep.subr.mxu0 0.0
  %348 = vmatpush1.msra.mxu0 0.0
  %349 = vmatprep.subr.mxu0 0.0
  %350 = vmatpush1.msra.mxu0 0.0
  %351 = vmatprep.subr.mxu0 0.0
  %352 = vmatpush1.msra.mxu0 0.0
  %353 = vmatprep.subr.mxu0 0.0
  %354 = vmatpush1.msra.mxu0 0.0
  %355 = vmatprep.subr.mxu0 0.0
  %356 = vmatpush1.msra.mxu0 0.0
  %357 = vmatprep.mubr.f32.mxu0 0.0
  %v358 = vand.u32 %v277, 4294901760
  %v359 = vsub.f32 %v277, %v358
  %v360 = vand.u32 %v359, 4294901760
  %v361 = vsub.f32 %v359, %v360
  %v362 = vand.u32 %v361, 4294901760
  %363 = vmatmul.mubr.f32.gmra.mrb[0].mxu0 %v362
  %v364 = vpop.f32.mrb[0].mxu0
  %v365 = vadd.f32 %v273, %v364
  %v366 = vpop.f32.mrb[0].mxu0
  %367 = vmatprep.mubr.f32.mxu0 0.0
  %v368 = vand.u32 %v280, 4294901760
  %v369 = vsub.f32 %v280, %v368
  %v370 = vand.u32 %v369, 4294901760
  %v371 = vsub.f32 %v369, %v370
  %v372 = vand.u32 %v371, 4294901760
  %373 = vmatmul.mubr.f32.gmra.mrb[0].mxu0 %v372
  %v374 = vpop.f32.mrb[0].mxu0
  %v375 = vadd.f32 %v273, %v374
  %v376 = vpop.f32.mrb[0].mxu0
  %377 = vmatprep.mubr.f32.mxu0 0.0
  %v378 = vand.u32 %v283, 4294901760
  %v379 = vsub.f32 %v283, %v378
  %v380 = vand.u32 %v379, 4294901760
  %v381 = vsub.f32 %v379, %v380
  %v382 = vand.u32 %v381, 4294901760
  %383 = vmatmul.mubr.f32.gmra.mrb[0].mxu0 %v382
  %v384 = vpop.f32.mrb[0].mxu0
  %v385 = vadd.f32 %v273, %v384
  %v386 = vpop.f32.mrb[0].mxu0
  %387 = vmatprep.mubr.f32.mxu0 0.0
  %v388 = vand.u32 %v286, 4294901760
  %v389 = vsub.f32 %v286, %v388
  %v390 = vand.u32 %v389, 4294901760
  %v391 = vsub.f32 %v389, %v390
  %v392 = vand.u32 %v391, 4294901760
  %393 = vmatmul.mubr.f32.gmra.mrb[0].mxu0 %v392
  %v394 = vpop.f32.mrb[0].mxu0
  %v395 = vadd.f32 %v273, %v394
  %v396 = vpop.f32.mrb[0].mxu0
  %397 = vdwg.mxu0
  %398 = vmatprep.subr.mxu0 0.0
  %v399 = vand.u32 %v290, 4294901760
  %v400 = vsub.f32 %v290, %v399
  %v401 = vand.u32 %v400, 4294901760
  %v402 = vsub.f32 %v400, %v401
  %v403 = vand.u32 %v402, 4294901760
  %404 = vmatpush1.msra.mxu0 %v403
  %405 = vmatprep.subr.mxu0 0.0
  %406 = vmatpush1.msra.mxu0 0.0
  %407 = vmatprep.subr.mxu0 0.0
  %408 = vmatpush1.msra.mxu0 0.0
  %409 = vmatprep.subr.mxu0 0.0
  %410 = vmatpush1.msra.mxu0 0.0
  %411 = vmatprep.subr.mxu0 0.0
  %412 = vmatpush1.msra.mxu0 0.0
  %413 = vmatprep.subr.mxu0 0.0
  %414 = vmatpush1.msra.mxu0 0.0
  %415 = vmatprep.subr.mxu0 0.0
  %416 = vmatpush1.msra.mxu0 0.0
  %417 = vmatprep.subr.mxu0 0.0
  %418 = vmatpush1.msra.mxu0 0.0
  %419 = vmatprep.subr.mxu0 0.0
  %420 = vmatpush1.msra.mxu0 0.0
  %421 = vmatprep.subr.mxu0 0.0
  %422 = vmatpush1.msra.mxu0 0.0
  %423 = vmatprep.subr.mxu0 0.0
  %424 = vmatpush1.msra.mxu0 0.0
  %425 = vmatprep.subr.mxu0 0.0
  %426 = vmatpush1.msra.mxu0 0.0
  %427 = vmatprep.subr.mxu0 0.0
  %428 = vmatpush1.msra.mxu0 0.0
  %429 = vmatprep.subr.mxu0 0.0
  %430 = vmatpush1.msra.mxu0 0.0
  %431 = vmatprep.subr.mxu0 0.0
  %432 = vmatpush1.msra.mxu0 0.0
  %433 = vmatprep.subr.mxu0 0.0
  %434 = vmatpush1.msra.mxu0 0.0
  %435 = vmatprep.subr.mxu0 0.0
  %436 = vmatpush1.msra.mxu0 0.0
  %437 = vmatprep.subr.mxu0 0.0
  %438 = vmatpush1.msra.mxu0 0.0
  %439 = vmatprep.subr.mxu0 0.0
  %440 = vmatpush1.msra.mxu0 0.0
  %441 = vmatprep.subr.mxu0 0.0
  %442 = vmatpush1.msra.mxu0 0.0
  %443 = vmatprep.subr.mxu0 0.0
  %444 = vmatpush1.msra.mxu0 0.0
  %445 = vmatprep.subr.mxu0 0.0
  %446 = vmatpush1.msra.mxu0 0.0
  %447 = vmatprep.subr.mxu0 0.0
  %448 = vmatpush1.msra.mxu0 0.0
  %449 = vmatprep.subr.mxu0 0.0
  %450 = vmatpush1.msra.mxu0 0.0
  %451 = vmatprep.subr.mxu0 0.0
  %452 = vmatpush1.msra.mxu0 0.0
  %453 = vmatprep.subr.mxu0 0.0
  %454 = vmatpush1.msra.mxu0 0.0
  %455 = vmatprep.subr.mxu0 0.0
  %456 = vmatpush1.msra.mxu0 0.0
  %457 = vmatprep.subr.mxu0 0.0
  %458 = vmatpush1.msra.mxu0 0.0
  %459 = vmatprep.subr.mxu0 0.0
  %460 = vmatpush1.msra.mxu0 0.0
  %461 = vmatprep.subr.mxu0 0.0
  %462 = vmatpush1.msra.mxu0 0.0
  %463 = vmatprep.subr.mxu0 0.0
  %464 = vmatpush1.msra.mxu0 0.0
  %465 = vmatprep.subr.mxu0 0.0
  %466 = vmatpush1.msra.mxu0 0.0
  %467 = vmatprep.mubr.f32.mxu0 0.0
  %v468 = vand.u32 %v277, 4294901760
  %469 = vmatmul.mubr.f32.gmra.mrb[0].mxu0 %v468
  %v470 = vpop.f32.mrb[0].mxu0
  %v471 = vadd.f32 %v365, %v470
  %v472 = vpop.f32.mrb[0].mxu0
  %473 = vmatprep.mubr.f32.mxu0 0.0
  %v474 = vand.u32 %v280, 4294901760
  %475 = vmatmul.mubr.f32.gmra.mrb[0].mxu0 %v474
  %v476 = vpop.f32.mrb[0].mxu0
  %v477 = vadd.f32 %v375, %v476
  %v478 = vpop.f32.mrb[0].mxu0
  %479 = vmatprep.mubr.f32.mxu0 0.0
  %v480 = vand.u32 %v283, 4294901760
  %481 = vmatmul.mubr.f32.gmra.mrb[0].mxu0 %v480
  %v482 = vpop.f32.mrb[0].mxu0
  %v483 = vadd.f32 %v385, %v482
  %v484 = vpop.f32.mrb[0].mxu0
  %485 = vmatprep.mubr.f32.mxu0 0.0
  %v486 = vand.u32 %v286, 4294901760
  %487 = vmatmul.mubr.f32.gmra.mrb[0].mxu0 %v486
  %v488 = vpop.f32.mrb[0].mxu0
  %v489 = vadd.f32 %v395, %v488
  %v490 = vpop.f32.mrb[0].mxu0
  %491 = vdwg.mxu0
  %492 = vmatprep.subr.mxu0 0.0
  %v493 = vand.u32 %v290, 4294901760
  %v494 = vsub.f32 %v290, %v493
  %495 = vmatpush1.msra.mxu0 %v494
  %496 = vmatprep.subr.mxu0 0.0
  %497 = vmatpush1.msra.mxu0 0.0
  %498 = vmatprep.subr.mxu0 0.0
  %499 = vmatpush1.msra.mxu0 0.0
  %500 = vmatprep.subr.mxu0 0.0
  %501 = vmatpush1.msra.mxu0 0.0
  %502 = vmatprep.subr.mxu0 0.0
  %503 = vmatpush1.msra.mxu0 0.0
  %504 = vmatprep.subr.mxu0 0.0
  %505 = vmatpush1.msra.mxu0 0.0
  %506 = vmatprep.subr.mxu0 0.0
  %507 = vmatpush1.msra.mxu0 0.0
  %508 = vmatprep.subr.mxu0 0.0
  %509 = vmatpush1.msra.mxu0 0.0
  %510 = vmatprep.subr.mxu0 0.0
  %511 = vmatpush1.msra.mxu0 0.0
  %512 = vmatprep.subr.mxu0 0.0
  %513 = vmatpush1.msra.mxu0 0.0
  %514 = vmatprep.subr.mxu0 0.0
  %515 = vmatpush1.msra.mxu0 0.0
  %516 = vmatprep.subr.mxu0 0.0
  %517 = vmatpush1.msra.mxu0 0.0
  %518 = vmatprep.subr.mxu0 0.0
  %519 = vmatpush1.msra.mxu0 0.0
  %520 = vmatprep.subr.mxu0 0.0
  %521 = vmatpush1.msra.mxu0 0.0
  %522 = vmatprep.subr.mxu0 0.0
  %523 = vmatpush1.msra.mxu0 0.0
  %524 = vmatprep.subr.mxu0 0.0
  %525 = vmatpush1.msra.mxu0 0.0
  %526 = vmatprep.subr.mxu0 0.0
  %527 = vmatpush1.msra.mxu0 0.0
  %528 = vmatprep.subr.mxu0 0.0
  %529 = vmatpush1.msra.mxu0 0.0
  %530 = vmatprep.subr.mxu0 0.0
  %531 = vmatpush1.msra.mxu0 0.0
  %532 = vmatprep.subr.mxu0 0.0
  %533 = vmatpush1.msra.mxu0 0.0
  %534 = vmatprep.subr.mxu0 0.0
  %535 = vmatpush1.msra.mxu0 0.0
  %536 = vmatprep.subr.mxu0 0.0
  %537 = vmatpush1.msra.mxu0 0.0
  %538 = vmatprep.subr.mxu0 0.0
  %539 = vmatpush1.msra.mxu0 0.0
  %540 = vmatprep.subr.mxu0 0.0
  %541 = vmatpush1.msra.mxu0 0.0
  %542 = vmatprep.subr.mxu0 0.0
  %543 = vmatpush1.msra.mxu0 0.0
  %544 = vmatprep.subr.mxu0 0.0
  %545 = vmatpush1.msra.mxu0 0.0
  %546 = vmatprep.subr.mxu0 0.0
  %547 = vmatpush1.msra.mxu0 0.0
  %548 = vmatprep.subr.mxu0 0.0
  %549 = vmatpush1.msra.mxu0 0.0
  %550 = vmatprep.subr.mxu0 0.0
  %551 = vmatpush1.msra.mxu0 0.0
  %552 = vmatprep.subr.mxu0 0.0
  %553 = vmatpush1.msra.mxu0 0.0
  %554 = vmatprep.subr.mxu0 0.0
  %555 = vmatpush1.msra.mxu0 0.0
  %556 = vmatprep.subr.mxu0 0.0
  %557 = vmatpush1.msra.mxu0 0.0
  %558 = vmatprep.mubr.f32.mxu0 0.0
  %v559 = vand.u32 %v277, 4294901760
  %v560 = vsub.f32 %v277, %v559
  %561 = vmatmul.mubr.f32.gmra.mrb[0].mxu0 %v560
  %v562 = vpop.f32.mrb[0].mxu0
  %v563 = vadd.f32 %v471, %v562
  %v564 = vpop.f32.mrb[0].mxu0
  %565 = vmatprep.mubr.f32.mxu0 0.0
  %v566 = vand.u32 %v280, 4294901760
  %v567 = vsub.f32 %v280, %v566
  %568 = vmatmul.mubr.f32.gmra.mrb[0].mxu0 %v567
  %v569 = vpop.f32.mrb[0].mxu0
  %v570 = vadd.f32 %v477, %v569
  %v571 = vpop.f32.mrb[0].mxu0
  %572 = vmatprep.mubr.f32.mxu0 0.0
  %v573 = vand.u32 %v283, 4294901760
  %v574 = vsub.f32 %v283, %v573
  %575 = vmatmul.mubr.f32.gmra.mrb[0].mxu0 %v574
  %v576 = vpop.f32.mrb[0].mxu0
  %v577 = vadd.f32 %v483, %v576
  %v578 = vpop.f32.mrb[0].mxu0
  %579 = vmatprep.mubr.f32.mxu0 0.0
  %v580 = vand.u32 %v286, 4294901760
  %v581 = vsub.f32 %v286, %v580
  %582 = vmatmul.mubr.f32.gmra.mrb[0].mxu0 %v581
  %v583 = vpop.f32.mrb[0].mxu0
  %v584 = vadd.f32 %v489, %v583
  %v585 = vpop.f32.mrb[0].mxu0
  %586 = vdwg.mxu0
  %587 = vmatprep.subr.mxu0 0.0
  %v588 = vand.u32 %v290, 4294901760
  %589 = vmatpush1.msra.mxu0 %v588
  %590 = vmatprep.subr.mxu0 0.0
  %591 = vmatpush1.msra.mxu0 0.0
  %592 = vmatprep.subr.mxu0 0.0
  %593 = vmatpush1.msra.mxu0 0.0
  %594 = vmatprep.subr.mxu0 0.0
  %595 = vmatpush1.msra.mxu0 0.0
  %596 = vmatprep.subr.mxu0 0.0
  %597 = vmatpush1.msra.mxu0 0.0
  %598 = vmatprep.subr.mxu0 0.0
  %599 = vmatpush1.msra.mxu0 0.0
  %600 = vmatprep.subr.mxu0 0.0
  %601 = vmatpush1.msra.mxu0 0.0
  %602 = vmatprep.subr.mxu0 0.0
  %603 = vmatpush1.msra.mxu0 0.0
  %604 = vmatprep.subr.mxu0 0.0
  %605 = vmatpush1.msra.mxu0 0.0
  %606 = vmatprep.subr.mxu0 0.0
  %607 = vmatpush1.msra.mxu0 0.0
  %608 = vmatprep.subr.mxu0 0.0
  %609 = vmatpush1.msra.mxu0 0.0
  %610 = vmatprep.subr.mxu0 0.0
  %611 = vmatpush1.msra.mxu0 0.0
  %612 = vmatprep.subr.mxu0 0.0
  %613 = vmatpush1.msra.mxu0 0.0
  %614 = vmatprep.subr.mxu0 0.0
  %615 = vmatpush1.msra.mxu0 0.0
  %616 = vmatprep.subr.mxu0 0.0
  %617 = vmatpush1.msra.mxu0 0.0
  %618 = vmatprep.subr.mxu0 0.0
  %619 = vmatpush1.msra.mxu0 0.0
  %620 = vmatprep.subr.mxu0 0.0
  %621 = vmatpush1.msra.mxu0 0.0
  %622 = vmatprep.subr.mxu0 0.0
  %623 = vmatpush1.msra.mxu0 0.0
  %624 = vmatprep.subr.mxu0 0.0
  %625 = vmatpush1.msra.mxu0 0.0
  %626 = vmatprep.subr.mxu0 0.0
  %627 = vmatpush1.msra.mxu0 0.0
  %628 = vmatprep.subr.mxu0 0.0
  %629 = vmatpush1.msra.mxu0 0.0
  %630 = vmatprep.subr.mxu0 0.0
  %631 = vmatpush1.msra.mxu0 0.0
  %632 = vmatprep.subr.mxu0 0.0
  %633 = vmatpush1.msra.mxu0 0.0
  %634 = vmatprep.subr.mxu0 0.0
  %635 = vmatpush1.msra.mxu0 0.0
  %636 = vmatprep.subr.mxu0 0.0
  %637 = vmatpush1.msra.mxu0 0.0
  %638 = vmatprep.subr.mxu0 0.0
  %639 = vmatpush1.msra.mxu0 0.0
  %640 = vmatprep.subr.mxu0 0.0
  %641 = vmatpush1.msra.mxu0 0.0
  %642 = vmatprep.subr.mxu0 0.0
  %643 = vmatpush1.msra.mxu0 0.0
  %644 = vmatprep.subr.mxu0 0.0
  %645 = vmatpush1.msra.mxu0 0.0
  %646 = vmatprep.subr.mxu0 0.0
  %647 = vmatpush1.msra.mxu0 0.0
  %648 = vmatprep.subr.mxu0 0.0
  %649 = vmatpush1.msra.mxu0 0.0
  %650 = vmatprep.subr.mxu0 0.0
  %651 = vmatpush1.msra.mxu0 0.0
  %652 = vmatprep.mubr.f32.mxu0 0.0
  %v653 = vand.u32 %v277, 4294901760
  %v654 = vsub.f32 %v277, %v653
  %v655 = vand.u32 %v654, 4294901760
  %656 = vmatmul.mubr.f32.gmra.mrb[0].mxu0 %v655
  %v657 = vpop.f32.mrb[0].mxu0
  %v658 = vadd.f32 %v563, %v657
  %v659 = vpop.f32.mrb[0].mxu0
  %660 = vmatprep.mubr.f32.mxu0 0.0
  %v661 = vand.u32 %v280, 4294901760
  %v662 = vsub.f32 %v280, %v661
  %v663 = vand.u32 %v662, 4294901760
  %664 = vmatmul.mubr.f32.gmra.mrb[0].mxu0 %v663
  %v665 = vpop.f32.mrb[0].mxu0
  %v666 = vadd.f32 %v570, %v665
  %v667 = vpop.f32.mrb[0].mxu0
  %668 = vmatprep.mubr.f32.mxu0 0.0
  %v669 = vand.u32 %v283, 4294901760
  %v670 = vsub.f32 %v283, %v669
  %v671 = vand.u32 %v670, 4294901760
  %672 = vmatmul.mubr.f32.gmra.mrb[0].mxu0 %v671
  %v673 = vpop.f32.mrb[0].mxu0
  %v674 = vadd.f32 %v577, %v673
  %v675 = vpop.f32.mrb[0].mxu0
  %676 = vmatprep.mubr.f32.mxu0 0.0
  %v677 = vand.u32 %v286, 4294901760
  %v678 = vsub.f32 %v286, %v677
  %v679 = vand.u32 %v678, 4294901760
  %680 = vmatmul.mubr.f32.gmra.mrb[0].mxu0 %v679
  %v681 = vpop.f32.mrb[0].mxu0
  %v682 = vadd.f32 %v584, %v681
  %v683 = vpop.f32.mrb[0].mxu0
  %684 = vdwg.mxu0
  %685 = vmatprep.subr.mxu0 0.0
  %v686 = vand.u32 %v290, 4294901760
  %v687 = vsub.f32 %v290, %v686
  %v688 = vand.u32 %v687, 4294901760
  %689 = vmatpush1.msra.mxu0 %v688
  %690 = vmatprep.subr.mxu0 0.0
  %691 = vmatpush1.msra.mxu0 0.0
  %692 = vmatprep.subr.mxu0 0.0
  %693 = vmatpush1.msra.mxu0 0.0
  %694 = vmatprep.subr.mxu0 0.0
  %695 = vmatpush1.msra.mxu0 0.0
  %696 = vmatprep.subr.mxu0 0.0
  %697 = vmatpush1.msra.mxu0 0.0
  %698 = vmatprep.subr.mxu0 0.0
  %699 = vmatpush1.msra.mxu0 0.0
  %700 = vmatprep.subr.mxu0 0.0
  %701 = vmatpush1.msra.mxu0 0.0
  %702 = vmatprep.subr.mxu0 0.0
  %703 = vmatpush1.msra.mxu0 0.0
  %704 = vmatprep.subr.mxu0 0.0
  %705 = vmatpush1.msra.mxu0 0.0
  %706 = vmatprep.subr.mxu0 0.0
  %707 = vmatpush1.msra.mxu0 0.0
  %708 = vmatprep.subr.mxu0 0.0
  %709 = vmatpush1.msra.mxu0 0.0
  %710 = vmatprep.subr.mxu0 0.0
  %711 = vmatpush1.msra.mxu0 0.0
  %712 = vmatprep.subr.mxu0 0.0
  %713 = vmatpush1.msra.mxu0 0.0
  %714 = vmatprep.subr.mxu0 0.0
  %715 = vmatpush1.msra.mxu0 0.0
  %716 = vmatprep.subr.mxu0 0.0
  %717 = vmatpush1.msra.mxu0 0.0
  %718 = vmatprep.subr.mxu0 0.0
  %719 = vmatpush1.msra.mxu0 0.0
  %720 = vmatprep.subr.mxu0 0.0
  %721 = vmatpush1.msra.mxu0 0.0
  %722 = vmatprep.subr.mxu0 0.0
  %723 = vmatpush1.msra.mxu0 0.0
  %724 = vmatprep.subr.mxu0 0.0
  %725 = vmatpush1.msra.mxu0 0.0
  %726 = vmatprep.subr.mxu0 0.0
  %727 = vmatpush1.msra.mxu0 0.0
  %728 = vmatprep.subr.mxu0 0.0
  %729 = vmatpush1.msra.mxu0 0.0
  %730 = vmatprep.subr.mxu0 0.0
  %731 = vmatpush1.msra.mxu0 0.0
  %732 = vmatprep.subr.mxu0 0.0
  %733 = vmatpush1.msra.mxu0 0.0
  %734 = vmatprep.subr.mxu0 0.0
  %735 = vmatpush1.msra.mxu0 0.0
  %736 = vmatprep.subr.mxu0 0.0
  %737 = vmatpush1.msra.mxu0 0.0
  %738 = vmatprep.subr.mxu0 0.0
  %739 = vmatpush1.msra.mxu0 0.0
  %740 = vmatprep.subr.mxu0 0.0
  %741 = vmatpush1.msra.mxu0 0.0
  %742 = vmatprep.subr.mxu0 0.0
  %743 = vmatpush1.msra.mxu0 0.0
  %744 = vmatprep.subr.mxu0 0.0
  %745 = vmatpush1.msra.mxu0 0.0
  %746 = vmatprep.subr.mxu0 0.0
  %747 = vmatpush1.msra.mxu0 0.0
  %748 = vmatprep.subr.mxu0 0.0
  %749 = vmatpush1.msra.mxu0 0.0
  %750 = vmatprep.subr.mxu0 0.0
  %751 = vmatpush1.msra.mxu0 0.0
  %752 = vmatprep.mubr.f32.mxu0 0.0
  %v753 = vand.u32 %v277, 4294901760
  %754 = vmatmul.mubr.f32.gmra.mrb[0].mxu0 %v753
  %v755 = vpop.f32.mrb[0].mxu0
  %v756 = vadd.f32 %v658, %v755
  %v757 = vpop.f32.mrb[0].mxu0
  %758 = vmatprep.mubr.f32.mxu0 0.0
  %v759 = vand.u32 %v280, 4294901760
  %760 = vmatmul.mubr.f32.gmra.mrb[0].mxu0 %v759
  %v761 = vpop.f32.mrb[0].mxu0
  %v762 = vadd.f32 %v666, %v761
  %v763 = vpop.f32.mrb[0].mxu0
  %764 = vmatprep.mubr.f32.mxu0 0.0
  %v765 = vand.u32 %v283, 4294901760
  %766 = vmatmul.mubr.f32.gmra.mrb[0].mxu0 %v765
  %v767 = vpop.f32.mrb[0].mxu0
  %v768 = vadd.f32 %v674, %v767
  %v769 = vpop.f32.mrb[0].mxu0
  %770 = vmatprep.mubr.f32.mxu0 0.0
  %v771 = vand.u32 %v286, 4294901760
  %772 = vmatmul.mubr.f32.gmra.mrb[0].mxu0 %v771
  %v773 = vpop.f32.mrb[0].mxu0
  %v774 = vadd.f32 %v682, %v773
  %v775 = vpop.f32.mrb[0].mxu0
  %776 = vdwg.mxu0
  %777 = vmatprep.subr.mxu0 0.0
  %v778 = vand.u32 %v290, 4294901760
  %779 = vmatpush1.msra.mxu0 %v778
  %780 = vmatprep.subr.mxu0 0.0
  %781 = vmatpush1.msra.mxu0 0.0
  %782 = vmatprep.subr.mxu0 0.0
  %783 = vmatpush1.msra.mxu0 0.0
  %784 = vmatprep.subr.mxu0 0.0
  %785 = vmatpush1.msra.mxu0 0.0
  %786 = vmatprep.subr.mxu0 0.0
  %787 = vmatpush1.msra.mxu0 0.0
  %788 = vmatprep.subr.mxu0 0.0
  %789 = vmatpush1.msra.mxu0 0.0
  %790 = vmatprep.subr.mxu0 0.0
  %791 = vmatpush1.msra.mxu0 0.0
  %792 = vmatprep.subr.mxu0 0.0
  %793 = vmatpush1.msra.mxu0 0.0
  %794 = vmatprep.subr.mxu0 0.0
  %795 = vmatpush1.msra.mxu0 0.0
  %796 = vmatprep.subr.mxu0 0.0
  %797 = vmatpush1.msra.mxu0 0.0
  %798 = vmatprep.subr.mxu0 0.0
  %799 = vmatpush1.msra.mxu0 0.0
  %800 = vmatprep.subr.mxu0 0.0
  %801 = vmatpush1.msra.mxu0 0.0
  %802 = vmatprep.subr.mxu0 0.0
  %803 = vmatpush1.msra.mxu0 0.0
  %804 = vmatprep.subr.mxu0 0.0
  %805 = vmatpush1.msra.mxu0 0.0
  %806 = vmatprep.subr.mxu0 0.0
  %807 = vmatpush1.msra.mxu0 0.0
  %808 = vmatprep.subr.mxu0 0.0
  %809 = vmatpush1.msra.mxu0 0.0
  %810 = vmatprep.subr.mxu0 0.0
  %811 = vmatpush1.msra.mxu0 0.0
  %812 = vmatprep.subr.mxu0 0.0
  %813 = vmatpush1.msra.mxu0 0.0
  %814 = vmatprep.subr.mxu0 0.0
  %815 = vmatpush1.msra.mxu0 0.0
  %816 = vmatprep.subr.mxu0 0.0
  %817 = vmatpush1.msra.mxu0 0.0
  %818 = vmatprep.subr.mxu0 0.0
  %819 = vmatpush1.msra.mxu0 0.0
  %820 = vmatprep.subr.mxu0 0.0
  %821 = vmatpush1.msra.mxu0 0.0
  %822 = vmatprep.subr.mxu0 0.0
  %823 = vmatpush1.msra.mxu0 0.0
  %824 = vmatprep.subr.mxu0 0.0
  %825 = vmatpush1.msra.mxu0 0.0
  %826 = vmatprep.subr.mxu0 0.0
  %827 = vmatpush1.msra.mxu0 0.0
  %828 = vmatprep.subr.mxu0 0.0
  %829 = vmatpush1.msra.mxu0 0.0
  %830 = vmatprep.subr.mxu0 0.0
  %831 = vmatpush1.msra.mxu0 0.0
  %832 = vmatprep.subr.mxu0 0.0
  %833 = vmatpush1.msra.mxu0 0.0
  %834 = vmatprep.subr.mxu0 0.0
  %835 = vmatpush1.msra.mxu0 0.0
  %836 = vmatprep.subr.mxu0 0.0
  %837 = vmatpush1.msra.mxu0 0.0
  %838 = vmatprep.subr.mxu0 0.0
  %839 = vmatpush1.msra.mxu0 0.0
  %840 = vmatprep.subr.mxu0 0.0
  %841 = vmatpush1.msra.mxu0 0.0
  %842 = vmatprep.mubr.f32.mxu0 0.0
  %v843 = vand.u32 %v277, 4294901760
  %844 = vmatmul.mubr.f32.gmra.mrb[0].mxu0 %v843
  %v845 = vpop.f32.mrb[0].mxu0
  %v846 = vadd.f32 %v756, %v845
  %v847 = vpop.f32.mrb[0].mxu0
  %848 = vmatprep.mubr.f32.mxu0 0.0
  %v849 = vand.u32 %v280, 4294901760
  %850 = vmatmul.mubr.f32.gmra.mrb[0].mxu0 %v849
  %v851 = vpop.f32.mrb[0].mxu0
  %v852 = vadd.f32 %v762, %v851
  %v853 = vpop.f32.mrb[0].mxu0
  %854 = vmatprep.mubr.f32.mxu0 0.0
  %v855 = vand.u32 %v283, 4294901760
  %856 = vmatmul.mubr.f32.gmra.mrb[0].mxu0 %v855
  %v857 = vpop.f32.mrb[0].mxu0
  %v858 = vadd.f32 %v768, %v857
  %v859 = vpop.f32.mrb[0].mxu0
  %860 = vmatprep.mubr.f32.mxu0 0.0
  %v861 = vand.u32 %v286, 4294901760
  %862 = vmatmul.mubr.f32.gmra.mrb[0].mxu0 %v861
  %v863 = vpop.f32.mrb[0].mxu0
  %v864 = vadd.f32 %v774, %v863
  %v865 = vpop.f32.mrb[0].mxu0
  %866 = vdwg.mxu0
  %v871 = vrot.slane %v846, 7
  %v872 = vrot.slane %v852, 7
  %v873 = vsel %vm195, %v871, %v872
  %v874 = vrot.slane %v858, 7
  %v875 = vsel %vm195, %v872, %v874
  %v876 = vrot.slane %v864, 7
  %v877 = vsel %vm195, %v874, %v876
  %v882 = vsel %vm195, 0.0, %v871
  %v883 = vsel %vm183, %v882, 0.0
  %v884 = vsel %vm184, %v873, 0.0
  %v885 = vsel %vm185, %v875, 0.0
  %v886 = vsel %vm186, %v877, 0.0
  %v887 = vrot.slane %v846, 1
  %v888 = vrot.slane %v852, 1
  %v889 = vsel %vm212, %v887, %v888
  %v890 = vrot.slane %v858, 1
  %v891 = vsel %vm212, %v888, %v890
  %v892 = vrot.slane %v864, 1
  %v893 = vsel %vm212, %v890, %v892
  %v898 = vsel %vm212, %v892, 0.0
  %v899 = vsel %vm187, %v889, 0.0
  %v900 = vsel %vm188, %v891, 0.0
  %v901 = vsel %vm189, %v893, 0.0
  %v902 = vsel %vm190, %v898, 0.0
  %v903 = vld [vmem:[%s7] sm:$0xff]
  %v904 = vld [vmem:[%s7 + $0x8] sm:$0xff]
  %v905 = vld [vmem:[%s7 + $0x10] sm:$0xff]
  %v906 = vld [vmem:[%s7 + $0x18] sm:$0xff]
  %v907 = vld [vmem:[%s7 + $0x20] sm:$0xff]
  %v908 = vld [vmem:[%s7 + $0x28] sm:$0xff]
  %v909 = vld [vmem:[%s9] sm:$0x1]
  %910 = vrot.lane.b32.xlu0 %v846, 16
  %v911 = vpop.permute.xlu0 %910
  %912 = vrot.lane.b32.xlu0 %v852, 16
  %v913 = vpop.permute.xlu0 %912
  %914 = vrot.lane.b32.xlu0 %v858, 16
  %v915 = vpop.permute.xlu0 %914
  %916 = vrot.lane.b32.xlu0 %v864, 16
  %v917 = vpop.permute.xlu0 %916
  %926 = vrot.lane.b32.xlu0 %v899, 32
  %v927 = vpop.permute.xlu0 %926
  %928 = vrot.lane.b32.xlu0 %v900, 32
  %v929 = vpop.permute.xlu0 %928
  %930 = vrot.lane.b32.xlu0 %v901, 32
  %v931 = vpop.permute.xlu0 %930
  %932 = vrot.lane.b32.xlu0 %v902, 32
  %v933 = vpop.permute.xlu0 %932
  %vm938 = vcmask 130048
  %v939 = vsel %vm938, %v883, %v911
  %v940 = vsel %vm938, %v884, %v913
  %v941 = vsel %vm938, %v885, %v915
  %v942 = vsel %vm938, %v886, %v917
  %vm943 = vcmask 261120
  %v944 = vsel %vm943, %v939, %v927
  %v945 = vsel %vm943, %v940, %v929
  %v946 = vsel %vm943, %v941, %v931
  %v947 = vsel %vm943, %v942, %v933
  %v949 = vlaneseq
  %v950 = vshrl.u32 %v949, 7
  %v951 = vsub.s32 0, %v950
  %v952 = vrot.slane %v909, %v951
  %vm954 = vcmask 392192
  %v956 = vsel %vm954, %v944, 0
  %v959 = vsel %vm954, %v945, 0
  %v962 = vsel %vm954, %v946, 0
  %v965 = vsel %vm954, %v947, 0
  %967 = vmatprep.subr.mxu0 0.0
  %v968 = vand.u32 %v903, 4294901760
  %969 = vmatpush1.msra.mxu0 %v968
  %970 = vmatprep.subr.mxu0 0.0
  %v971 = vand.u32 %v904, 4294901760
  %972 = vmatpush1.msra.mxu0 %v971
  %973 = vmatprep.subr.mxu0 0.0
  %v974 = vand.u32 %v905, 4294901760
  %975 = vmatpush1.msra.mxu0 %v974
  %976 = vmatprep.subr.mxu0 0.0
  %v977 = vand.u32 %v906, 4294901760
  %978 = vmatpush1.msra.mxu0 %v977
  %979 = vmatprep.subr.mxu0 0.0
  %v980 = vand.u32 %v907, 4294901760
  %981 = vmatpush1.msra.mxu0 %v980
  %982 = vmatprep.subr.mxu0 0.0
  %v983 = vand.u32 %v908, 4294901760
  %984 = vmatpush1.msra.mxu0 %v983
  %985 = vmatprep.subr.mxu0 0.0
  %986 = vmatpush1.msra.mxu0 0.0
  %987 = vmatprep.subr.mxu0 0.0
  %988 = vmatpush1.msra.mxu0 0.0
  %989 = vmatprep.subr.mxu0 0.0
  %990 = vmatpush1.msra.mxu0 0.0
  %991 = vmatprep.subr.mxu0 0.0
  %992 = vmatpush1.msra.mxu0 0.0
  %993 = vmatprep.subr.mxu0 0.0
  %994 = vmatpush1.msra.mxu0 0.0
  %995 = vmatprep.subr.mxu0 0.0
  %996 = vmatpush1.msra.mxu0 0.0
  %997 = vmatprep.subr.mxu0 0.0
  %998 = vmatpush1.msra.mxu0 0.0
  %999 = vmatprep.subr.mxu0 0.0
  %1000 = vmatpush1.msra.mxu0 0.0
  %1001 = vmatprep.subr.mxu0 0.0
  %1002 = vmatpush1.msra.mxu0 0.0
  %1003 = vmatprep.subr.mxu0 0.0
  %1004 = vmatpush1.msra.mxu0 0.0
  %1005 = vmatprep.subr.mxu0 0.0
  %1006 = vmatpush1.msra.mxu0 0.0
  %1007 = vmatprep.subr.mxu0 0.0
  %1008 = vmatpush1.msra.mxu0 0.0
  %1009 = vmatprep.subr.mxu0 0.0
  %1010 = vmatpush1.msra.mxu0 0.0
  %1011 = vmatprep.subr.mxu0 0.0
  %1012 = vmatpush1.msra.mxu0 0.0
  %1013 = vmatprep.subr.mxu0 0.0
  %1014 = vmatpush1.msra.mxu0 0.0
  %1015 = vmatprep.subr.mxu0 0.0
  %1016 = vmatpush1.msra.mxu0 0.0
  %1017 = vmatprep.subr.mxu0 0.0
  %1018 = vmatpush1.msra.mxu0 0.0
  %1019 = vmatprep.subr.mxu0 0.0
  %1020 = vmatpush1.msra.mxu0 0.0
  %1021 = vmatprep.subr.mxu0 0.0
  %1022 = vmatpush1.msra.mxu0 0.0
  %1023 = vmatprep.subr.mxu0 0.0
  %1024 = vmatpush1.msra.mxu0 0.0
  %1025 = vmatprep.subr.mxu0 0.0
  %1026 = vmatpush1.msra.mxu0 0.0
  %1027 = vmatprep.subr.mxu0 0.0
  %1028 = vmatpush1.msra.mxu0 0.0
  %1029 = vmatprep.subr.mxu0 0.0
  %1030 = vmatpush1.msra.mxu0 0.0
  %1031 = vmatprep.subr.mxu0 0.0
  %1032 = vmatpush1.msra.mxu0 0.0
  %1033 = vmatprep.subr.mxu0 0.0
  %1034 = vmatpush1.msra.mxu0 0.0
  %1035 = vmatprep.subr.mxu0 0.0
  %1036 = vmatpush1.msra.mxu0 0.0
  %1037 = vmatprep.mubr.f32.mxu0 0.0
  %v1038 = vand.u32 %v956, 4294901760
  %v1039 = vsub.f32 %v956, %v1038
  %v1040 = vand.u32 %v1039, 4294901760
  %v1041 = vsub.f32 %v1039, %v1040
  %v1042 = vand.u32 %v1041, 4294901760
  %1043 = vmatmul.mubr.f32.gmra.mrb[0].mxu0 %v1042
  %v1044 = vpop.f32.mrb[0].mxu0
  %v1045 = vadd.f32 %v952, %v1044
  %v1046 = vpop.f32.mrb[0].mxu0
  %1047 = vmatprep.mubr.f32.mxu0 0.0
  %v1048 = vand.u32 %v959, 4294901760
  %v1049 = vsub.f32 %v959, %v1048
  %v1050 = vand.u32 %v1049, 4294901760
  %v1051 = vsub.f32 %v1049, %v1050
  %v1052 = vand.u32 %v1051, 4294901760
  %1053 = vmatmul.mubr.f32.gmra.mrb[0].mxu0 %v1052
  %v1054 = vpop.f32.mrb[0].mxu0
  %v1055 = vadd.f32 %v952, %v1054
  %v1056 = vpop.f32.mrb[0].mxu0
  %1057 = vmatprep.mubr.f32.mxu0 0.0
  %v1058 = vand.u32 %v962, 4294901760
  %v1059 = vsub.f32 %v962, %v1058
  %v1060 = vand.u32 %v1059, 4294901760
  %v1061 = vsub.f32 %v1059, %v1060
  %v1062 = vand.u32 %v1061, 4294901760
  %1063 = vmatmul.mubr.f32.gmra.mrb[0].mxu0 %v1062
  %v1064 = vpop.f32.mrb[0].mxu0
  %v1065 = vadd.f32 %v952, %v1064
  %v1066 = vpop.f32.mrb[0].mxu0
  %1067 = vmatprep.mubr.f32.mxu0 0.0
  %v1068 = vand.u32 %v965, 4294901760
  %v1069 = vsub.f32 %v965, %v1068
  %v1070 = vand.u32 %v1069, 4294901760
  %v1071 = vsub.f32 %v1069, %v1070
  %v1072 = vand.u32 %v1071, 4294901760
  %1073 = vmatmul.mubr.f32.gmra.mrb[0].mxu0 %v1072
  %v1074 = vpop.f32.mrb[0].mxu0
  %v1075 = vadd.f32 %v952, %v1074
  %v1076 = vpop.f32.mrb[0].mxu0
  %1077 = vdwg.mxu0
  %1078 = vmatprep.subr.mxu0 0.0
  %v1079 = vand.u32 %v903, 4294901760
  %v1080 = vsub.f32 %v903, %v1079
  %v1081 = vand.u32 %v1080, 4294901760
  %v1082 = vsub.f32 %v1080, %v1081
  %v1083 = vand.u32 %v1082, 4294901760
  %1084 = vmatpush1.msra.mxu0 %v1083
  %1085 = vmatprep.subr.mxu0 0.0
  %v1086 = vand.u32 %v904, 4294901760
  %v1087 = vsub.f32 %v904, %v1086
  %v1088 = vand.u32 %v1087, 4294901760
  %v1089 = vsub.f32 %v1087, %v1088
  %v1090 = vand.u32 %v1089, 4294901760
  %1091 = vmatpush1.msra.mxu0 %v1090
  %1092 = vmatprep.subr.mxu0 0.0
  %v1093 = vand.u32 %v905, 4294901760
  %v1094 = vsub.f32 %v905, %v1093
  %v1095 = vand.u32 %v1094, 4294901760
  %v1096 = vsub.f32 %v1094, %v1095
  %v1097 = vand.u32 %v1096, 4294901760
  %1098 = vmatpush1.msra.mxu0 %v1097
  %1099 = vmatprep.subr.mxu0 0.0
  %v1100 = vand.u32 %v906, 4294901760
  %v1101 = vsub.f32 %v906, %v1100
  %v1102 = vand.u32 %v1101, 4294901760
  %v1103 = vsub.f32 %v1101, %v1102
  %v1104 = vand.u32 %v1103, 4294901760
  %1105 = vmatpush1.msra.mxu0 %v1104
  %1106 = vmatprep.subr.mxu0 0.0
  %v1107 = vand.u32 %v907, 4294901760
  %v1108 = vsub.f32 %v907, %v1107
  %v1109 = vand.u32 %v1108, 4294901760
  %v1110 = vsub.f32 %v1108, %v1109
  %v1111 = vand.u32 %v1110, 4294901760
  %1112 = vmatpush1.msra.mxu0 %v1111
  %1113 = vmatprep.subr.mxu0 0.0
  %v1114 = vand.u32 %v908, 4294901760
  %v1115 = vsub.f32 %v908, %v1114
  %v1116 = vand.u32 %v1115, 4294901760
  %v1117 = vsub.f32 %v1115, %v1116
  %v1118 = vand.u32 %v1117, 4294901760
  %1119 = vmatpush1.msra.mxu0 %v1118
  %1120 = vmatprep.subr.mxu0 0.0
  %1121 = vmatpush1.msra.mxu0 0.0
  %1122 = vmatprep.subr.mxu0 0.0
  %1123 = vmatpush1.msra.mxu0 0.0
  %1124 = vmatprep.subr.mxu0 0.0
  %1125 = vmatpush1.msra.mxu0 0.0
  %1126 = vmatprep.subr.mxu0 0.0
  %1127 = vmatpush1.msra.mxu0 0.0
  %1128 = vmatprep.subr.mxu0 0.0
  %1129 = vmatpush1.msra.mxu0 0.0
  %1130 = vmatprep.subr.mxu0 0.0
  %1131 = vmatpush1.msra.mxu0 0.0
  %1132 = vmatprep.subr.mxu0 0.0
  %1133 = vmatpush1.msra.mxu0 0.0
  %1134 = vmatprep.subr.mxu0 0.0
  %1135 = vmatpush1.msra.mxu0 0.0
  %1136 = vmatprep.subr.mxu0 0.0
  %1137 = vmatpush1.msra.mxu0 0.0
  %1138 = vmatprep.subr.mxu0 0.0
  %1139 = vmatpush1.msra.mxu0 0.0
  %1140 = vmatprep.subr.mxu0 0.0
  %1141 = vmatpush1.msra.mxu0 0.0
  %1142 = vmatprep.subr.mxu0 0.0
  %1143 = vmatpush1.msra.mxu0 0.0
  %1144 = vmatprep.subr.mxu0 0.0
  %1145 = vmatpush1.msra.mxu0 0.0
  %1146 = vmatprep.subr.mxu0 0.0
  %1147 = vmatpush1.msra.mxu0 0.0
  %1148 = vmatprep.subr.mxu0 0.0
  %1149 = vmatpush1.msra.mxu0 0.0
  %1150 = vmatprep.subr.mxu0 0.0
  %1151 = vmatpush1.msra.mxu0 0.0
  %1152 = vmatprep.subr.mxu0 0.0
  %1153 = vmatpush1.msra.mxu0 0.0
  %1154 = vmatprep.subr.mxu0 0.0
  %1155 = vmatpush1.msra.mxu0 0.0
  %1156 = vmatprep.subr.mxu0 0.0
  %1157 = vmatpush1.msra.mxu0 0.0
  %1158 = vmatprep.subr.mxu0 0.0
  %1159 = vmatpush1.msra.mxu0 0.0
  %1160 = vmatprep.subr.mxu0 0.0
  %1161 = vmatpush1.msra.mxu0 0.0
  %1162 = vmatprep.subr.mxu0 0.0
  %1163 = vmatpush1.msra.mxu0 0.0
  %1164 = vmatprep.subr.mxu0 0.0
  %1165 = vmatpush1.msra.mxu0 0.0
  %1166 = vmatprep.subr.mxu0 0.0
  %1167 = vmatpush1.msra.mxu0 0.0
  %1168 = vmatprep.subr.mxu0 0.0
  %1169 = vmatpush1.msra.mxu0 0.0
  %1170 = vmatprep.subr.mxu0 0.0
  %1171 = vmatpush1.msra.mxu0 0.0
  %1172 = vmatprep.mubr.f32.mxu0 0.0
  %v1173 = vand.u32 %v956, 4294901760
  %1174 = vmatmul.mubr.f32.gmra.mrb[0].mxu0 %v1173
  %v1175 = vpop.f32.mrb[0].mxu0
  %v1176 = vadd.f32 %v1045, %v1175
  %v1177 = vpop.f32.mrb[0].mxu0
  %1178 = vmatprep.mubr.f32.mxu0 0.0
  %v1179 = vand.u32 %v959, 4294901760
  %1180 = vmatmul.mubr.f32.gmra.mrb[0].mxu0 %v1179
  %v1181 = vpop.f32.mrb[0].mxu0
  %v1182 = vadd.f32 %v1055, %v1181
  %v1183 = vpop.f32.mrb[0].mxu0
  %1184 = vmatprep.mubr.f32.mxu0 0.0
  %v1185 = vand.u32 %v962, 4294901760
  %1186 = vmatmul.mubr.f32.gmra.mrb[0].mxu0 %v1185
  %v1187 = vpop.f32.mrb[0].mxu0
  %v1188 = vadd.f32 %v1065, %v1187
  %v1189 = vpop.f32.mrb[0].mxu0
  %1190 = vmatprep.mubr.f32.mxu0 0.0
  %v1191 = vand.u32 %v965, 4294901760
  %1192 = vmatmul.mubr.f32.gmra.mrb[0].mxu0 %v1191
  %v1193 = vpop.f32.mrb[0].mxu0
  %v1194 = vadd.f32 %v1075, %v1193
  %v1195 = vpop.f32.mrb[0].mxu0
  %1196 = vdwg.mxu0
  %1197 = vmatprep.subr.mxu0 0.0
  %v1198 = vand.u32 %v903, 4294901760
  %v1199 = vsub.f32 %v903, %v1198
  %1200 = vmatpush1.msra.mxu0 %v1199
  %1201 = vmatprep.subr.mxu0 0.0
  %v1202 = vand.u32 %v904, 4294901760
  %v1203 = vsub.f32 %v904, %v1202
  %1204 = vmatpush1.msra.mxu0 %v1203
  %1205 = vmatprep.subr.mxu0 0.0
  %v1206 = vand.u32 %v905, 4294901760
  %v1207 = vsub.f32 %v905, %v1206
  %1208 = vmatpush1.msra.mxu0 %v1207
  %1209 = vmatprep.subr.mxu0 0.0
  %v1210 = vand.u32 %v906, 4294901760
  %v1211 = vsub.f32 %v906, %v1210
  %1212 = vmatpush1.msra.mxu0 %v1211
  %1213 = vmatprep.subr.mxu0 0.0
  %v1214 = vand.u32 %v907, 4294901760
  %v1215 = vsub.f32 %v907, %v1214
  %1216 = vmatpush1.msra.mxu0 %v1215
  %1217 = vmatprep.subr.mxu0 0.0
  %v1218 = vand.u32 %v908, 4294901760
  %v1219 = vsub.f32 %v908, %v1218
  %1220 = vmatpush1.msra.mxu0 %v1219
  %1221 = vmatprep.subr.mxu0 0.0
  %1222 = vmatpush1.msra.mxu0 0.0
  %1223 = vmatprep.subr.mxu0 0.0
  %1224 = vmatpush1.msra.mxu0 0.0
  %1225 = vmatprep.subr.mxu0 0.0
  %1226 = vmatpush1.msra.mxu0 0.0
  %1227 = vmatprep.subr.mxu0 0.0
  %1228 = vmatpush1.msra.mxu0 0.0
  %1229 = vmatprep.subr.mxu0 0.0
  %1230 = vmatpush1.msra.mxu0 0.0
  %1231 = vmatprep.subr.mxu0 0.0
  %1232 = vmatpush1.msra.mxu0 0.0
  %1233 = vmatprep.subr.mxu0 0.0
  %1234 = vmatpush1.msra.mxu0 0.0
  %1235 = vmatprep.subr.mxu0 0.0
  %1236 = vmatpush1.msra.mxu0 0.0
  %1237 = vmatprep.subr.mxu0 0.0
  %1238 = vmatpush1.msra.mxu0 0.0
  %1239 = vmatprep.subr.mxu0 0.0
  %1240 = vmatpush1.msra.mxu0 0.0
  %1241 = vmatprep.subr.mxu0 0.0
  %1242 = vmatpush1.msra.mxu0 0.0
  %1243 = vmatprep.subr.mxu0 0.0
  %1244 = vmatpush1.msra.mxu0 0.0
  %1245 = vmatprep.subr.mxu0 0.0
  %1246 = vmatpush1.msra.mxu0 0.0
  %1247 = vmatprep.subr.mxu0 0.0
  %1248 = vmatpush1.msra.mxu0 0.0
  %1249 = vmatprep.subr.mxu0 0.0
  %1250 = vmatpush1.msra.mxu0 0.0
  %1251 = vmatprep.subr.mxu0 0.0
  %1252 = vmatpush1.msra.mxu0 0.0
  %1253 = vmatprep.subr.mxu0 0.0
  %1254 = vmatpush1.msra.mxu0 0.0
  %1255 = vmatprep.subr.mxu0 0.0
  %1256 = vmatpush1.msra.mxu0 0.0
  %1257 = vmatprep.subr.mxu0 0.0
  %1258 = vmatpush1.msra.mxu0 0.0
  %1259 = vmatprep.subr.mxu0 0.0
  %1260 = vmatpush1.msra.mxu0 0.0
  %1261 = vmatprep.subr.mxu0 0.0
  %1262 = vmatpush1.msra.mxu0 0.0
  %1263 = vmatprep.subr.mxu0 0.0
  %1264 = vmatpush1.msra.mxu0 0.0
  %1265 = vmatprep.subr.mxu0 0.0
  %1266 = vmatpush1.msra.mxu0 0.0
  %1267 = vmatprep.subr.mxu0 0.0
  %1268 = vmatpush1.msra.mxu0 0.0
  %1269 = vmatprep.subr.mxu0 0.0
  %1270 = vmatpush1.msra.mxu0 0.0
  %1271 = vmatprep.subr.mxu0 0.0
  %1272 = vmatpush1.msra.mxu0 0.0
  %1273 = vmatprep.mubr.f32.mxu0 0.0
  %v1274 = vand.u32 %v956, 4294901760
  %v1275 = vsub.f32 %v956, %v1274
  %1276 = vmatmul.mubr.f32.gmra.mrb[0].mxu0 %v1275
  %v1277 = vpop.f32.mrb[0].mxu0
  %v1278 = vadd.f32 %v1176, %v1277
  %v1279 = vpop.f32.mrb[0].mxu0
  %1280 = vmatprep.mubr.f32.mxu0 0.0
  %v1281 = vand.u32 %v959, 4294901760
  %v1282 = vsub.f32 %v959, %v1281
  %1283 = vmatmul.mubr.f32.gmra.mrb[0].mxu0 %v1282
  %v1284 = vpop.f32.mrb[0].mxu0
  %v1285 = vadd.f32 %v1182, %v1284
  %v1286 = vpop.f32.mrb[0].mxu0
  %1287 = vmatprep.mubr.f32.mxu0 0.0
  %v1288 = vand.u32 %v962, 4294901760
  %v1289 = vsub.f32 %v962, %v1288
  %1290 = vmatmul.mubr.f32.gmra.mrb[0].mxu0 %v1289
  %v1291 = vpop.f32.mrb[0].mxu0
  %v1292 = vadd.f32 %v1188, %v1291
  %v1293 = vpop.f32.mrb[0].mxu0
  %1294 = vmatprep.mubr.f32.mxu0 0.0
  %v1295 = vand.u32 %v965, 4294901760
  %v1296 = vsub.f32 %v965, %v1295
  %1297 = vmatmul.mubr.f32.gmra.mrb[0].mxu0 %v1296
  %v1298 = vpop.f32.mrb[0].mxu0
  %v1299 = vadd.f32 %v1194, %v1298
  %v1300 = vpop.f32.mrb[0].mxu0
  %1301 = vdwg.mxu0
  %1302 = vmatprep.subr.mxu0 0.0
  %v1303 = vand.u32 %v903, 4294901760
  %1304 = vmatpush1.msra.mxu0 %v1303
  %1305 = vmatprep.subr.mxu0 0.0
  %v1306 = vand.u32 %v904, 4294901760
  %1307 = vmatpush1.msra.mxu0 %v1306
  %1308 = vmatprep.subr.mxu0 0.0
  %v1309 = vand.u32 %v905, 4294901760
  %1310 = vmatpush1.msra.mxu0 %v1309
  %1311 = vmatprep.subr.mxu0 0.0
  %v1312 = vand.u32 %v906, 4294901760
  %1313 = vmatpush1.msra.mxu0 %v1312
  %1314 = vmatprep.subr.mxu0 0.0
  %v1315 = vand.u32 %v907, 4294901760
  %1316 = vmatpush1.msra.mxu0 %v1315
  %1317 = vmatprep.subr.mxu0 0.0
  %v1318 = vand.u32 %v908, 4294901760
  %1319 = vmatpush1.msra.mxu0 %v1318
  %1320 = vmatprep.subr.mxu0 0.0
  %1321 = vmatpush1.msra.mxu0 0.0
  %1322 = vmatprep.subr.mxu0 0.0
  %1323 = vmatpush1.msra.mxu0 0.0
  %1324 = vmatprep.subr.mxu0 0.0
  %1325 = vmatpush1.msra.mxu0 0.0
  %1326 = vmatprep.subr.mxu0 0.0
  %1327 = vmatpush1.msra.mxu0 0.0
  %1328 = vmatprep.subr.mxu0 0.0
  %1329 = vmatpush1.msra.mxu0 0.0
  %1330 = vmatprep.subr.mxu0 0.0
  %1331 = vmatpush1.msra.mxu0 0.0
  %1332 = vmatprep.subr.mxu0 0.0
  %1333 = vmatpush1.msra.mxu0 0.0
  %1334 = vmatprep.subr.mxu0 0.0
  %1335 = vmatpush1.msra.mxu0 0.0
  %1336 = vmatprep.subr.mxu0 0.0
  %1337 = vmatpush1.msra.mxu0 0.0
  %1338 = vmatprep.subr.mxu0 0.0
  %1339 = vmatpush1.msra.mxu0 0.0
  %1340 = vmatprep.subr.mxu0 0.0
  %1341 = vmatpush1.msra.mxu0 0.0
  %1342 = vmatprep.subr.mxu0 0.0
  %1343 = vmatpush1.msra.mxu0 0.0
  %1344 = vmatprep.subr.mxu0 0.0
  %1345 = vmatpush1.msra.mxu0 0.0
  %1346 = vmatprep.subr.mxu0 0.0
  %1347 = vmatpush1.msra.mxu0 0.0
  %1348 = vmatprep.subr.mxu0 0.0
  %1349 = vmatpush1.msra.mxu0 0.0
  %1350 = vmatprep.subr.mxu0 0.0
  %1351 = vmatpush1.msra.mxu0 0.0
  %1352 = vmatprep.subr.mxu0 0.0
  %1353 = vmatpush1.msra.mxu0 0.0
  %1354 = vmatprep.subr.mxu0 0.0
  %1355 = vmatpush1.msra.mxu0 0.0
  %1356 = vmatprep.subr.mxu0 0.0
  %1357 = vmatpush1.msra.mxu0 0.0
  %1358 = vmatprep.subr.mxu0 0.0
  %1359 = vmatpush1.msra.mxu0 0.0
  %1360 = vmatprep.subr.mxu0 0.0
  %1361 = vmatpush1.msra.mxu0 0.0
  %1362 = vmatprep.subr.mxu0 0.0
  %1363 = vmatpush1.msra.mxu0 0.0
  %1364 = vmatprep.subr.mxu0 0.0
  %1365 = vmatpush1.msra.mxu0 0.0
  %1366 = vmatprep.subr.mxu0 0.0
  %1367 = vmatpush1.msra.mxu0 0.0
  %1368 = vmatprep.subr.mxu0 0.0
  %1369 = vmatpush1.msra.mxu0 0.0
  %1370 = vmatprep.subr.mxu0 0.0
  %1371 = vmatpush1.msra.mxu0 0.0
  %1372 = vmatprep.mubr.f32.mxu0 0.0
  %v1373 = vand.u32 %v956, 4294901760
  %v1374 = vsub.f32 %v956, %v1373
  %v1375 = vand.u32 %v1374, 4294901760
  %1376 = vmatmul.mubr.f32.gmra.mrb[0].mxu0 %v1375
  %v1377 = vpop.f32.mrb[0].mxu0
  %v1378 = vadd.f32 %v1278, %v1377
  %v1379 = vpop.f32.mrb[0].mxu0
  %1380 = vmatprep.mubr.f32.mxu0 0.0
  %v1381 = vand.u32 %v959, 4294901760
  %v1382 = vsub.f32 %v959, %v1381
  %v1383 = vand.u32 %v1382, 4294901760
  %1384 = vmatmul.mubr.f32.gmra.mrb[0].mxu0 %v1383
  %v1385 = vpop.f32.mrb[0].mxu0
  %v1386 = vadd.f32 %v1285, %v1385
  %v1387 = vpop.f32.mrb[0].mxu0
  %1388 = vmatprep.mubr.f32.mxu0 0.0
  %v1389 = vand.u32 %v962, 4294901760
  %v1390 = vsub.f32 %v962, %v1389
  %v1391 = vand.u32 %v1390, 4294901760
  %1392 = vmatmul.mubr.f32.gmra.mrb[0].mxu0 %v1391
  %v1393 = vpop.f32.mrb[0].mxu0
  %v1394 = vadd.f32 %v1292, %v1393
  %v1395 = vpop.f32.mrb[0].mxu0
  %1396 = vmatprep.mubr.f32.mxu0 0.0
  %v1397 = vand.u32 %v965, 4294901760
  %v1398 = vsub.f32 %v965, %v1397
  %v1399 = vand.u32 %v1398, 4294901760
  %1400 = vmatmul.mubr.f32.gmra.mrb[0].mxu0 %v1399
  %v1401 = vpop.f32.mrb[0].mxu0
  %v1402 = vadd.f32 %v1299, %v1401
  %v1403 = vpop.f32.mrb[0].mxu0
  %1404 = vdwg.mxu0
  %1405 = vmatprep.subr.mxu0 0.0
  %v1406 = vand.u32 %v903, 4294901760
  %v1407 = vsub.f32 %v903, %v1406
  %v1408 = vand.u32 %v1407, 4294901760
  %1409 = vmatpush1.msra.mxu0 %v1408
  %1410 = vmatprep.subr.mxu0 0.0
  %v1411 = vand.u32 %v904, 4294901760
  %v1412 = vsub.f32 %v904, %v1411
  %v1413 = vand.u32 %v1412, 4294901760
  %1414 = vmatpush1.msra.mxu0 %v1413
  %1415 = vmatprep.subr.mxu0 0.0
  %v1416 = vand.u32 %v905, 4294901760
  %v1417 = vsub.f32 %v905, %v1416
  %v1418 = vand.u32 %v1417, 4294901760
  %1419 = vmatpush1.msra.mxu0 %v1418
  %1420 = vmatprep.subr.mxu0 0.0
  %v1421 = vand.u32 %v906, 4294901760
  %v1422 = vsub.f32 %v906, %v1421
  %v1423 = vand.u32 %v1422, 4294901760
  %1424 = vmatpush1.msra.mxu0 %v1423
  %1425 = vmatprep.subr.mxu0 0.0
  %v1426 = vand.u32 %v907, 4294901760
  %v1427 = vsub.f32 %v907, %v1426
  %v1428 = vand.u32 %v1427, 4294901760
  %1429 = vmatpush1.msra.mxu0 %v1428
  %1430 = vmatprep.subr.mxu0 0.0
  %v1431 = vand.u32 %v908, 4294901760
  %v1432 = vsub.f32 %v908, %v1431
  %v1433 = vand.u32 %v1432, 4294901760
  %1434 = vmatpush1.msra.mxu0 %v1433
  %1435 = vmatprep.subr.mxu0 0.0
  %1436 = vmatpush1.msra.mxu0 0.0
  %1437 = vmatprep.subr.mxu0 0.0
  %1438 = vmatpush1.msra.mxu0 0.0
  %1439 = vmatprep.subr.mxu0 0.0
  %1440 = vmatpush1.msra.mxu0 0.0
  %1441 = vmatprep.subr.mxu0 0.0
  %1442 = vmatpush1.msra.mxu0 0.0
  %1443 = vmatprep.subr.mxu0 0.0
  %1444 = vmatpush1.msra.mxu0 0.0
  %1445 = vmatprep.subr.mxu0 0.0
  %1446 = vmatpush1.msra.mxu0 0.0
  %1447 = vmatprep.subr.mxu0 0.0
  %1448 = vmatpush1.msra.mxu0 0.0
  %1449 = vmatprep.subr.mxu0 0.0
  %1450 = vmatpush1.msra.mxu0 0.0
  %1451 = vmatprep.subr.mxu0 0.0
  %1452 = vmatpush1.msra.mxu0 0.0
  %1453 = vmatprep.subr.mxu0 0.0
  %1454 = vmatpush1.msra.mxu0 0.0
  %1455 = vmatprep.subr.mxu0 0.0
  %1456 = vmatpush1.msra.mxu0 0.0
  %1457 = vmatprep.subr.mxu0 0.0
  %1458 = vmatpush1.msra.mxu0 0.0
  %1459 = vmatprep.subr.mxu0 0.0
  %1460 = vmatpush1.msra.mxu0 0.0
  %1461 = vmatprep.subr.mxu0 0.0
  %1462 = vmatpush1.msra.mxu0 0.0
  %1463 = vmatprep.subr.mxu0 0.0
  %1464 = vmatpush1.msra.mxu0 0.0
  %1465 = vmatprep.subr.mxu0 0.0
  %1466 = vmatpush1.msra.mxu0 0.0
  %1467 = vmatprep.subr.mxu0 0.0
  %1468 = vmatpush1.msra.mxu0 0.0
  %1469 = vmatprep.subr.mxu0 0.0
  %1470 = vmatpush1.msra.mxu0 0.0
  %1471 = vmatprep.subr.mxu0 0.0
  %1472 = vmatpush1.msra.mxu0 0.0
  %1473 = vmatprep.subr.mxu0 0.0
  %1474 = vmatpush1.msra.mxu0 0.0
  %1475 = vmatprep.subr.mxu0 0.0
  %1476 = vmatpush1.msra.mxu0 0.0
  %1477 = vmatprep.subr.mxu0 0.0
  %1478 = vmatpush1.msra.mxu0 0.0
  %1479 = vmatprep.subr.mxu0 0.0
  %1480 = vmatpush1.msra.mxu0 0.0
  %1481 = vmatprep.subr.mxu0 0.0
  %1482 = vmatpush1.msra.mxu0 0.0
  %1483 = vmatprep.subr.mxu0 0.0
  %1484 = vmatpush1.msra.mxu0 0.0
  %1485 = vmatprep.subr.mxu0 0.0
  %1486 = vmatpush1.msra.mxu0 0.0
  %1487 = vmatprep.mubr.f32.mxu0 0.0
  %v1488 = vand.u32 %v956, 4294901760
  %1489 = vmatmul.mubr.f32.gmra.mrb[0].mxu0 %v1488
  %v1490 = vpop.f32.mrb[0].mxu0
  %v1491 = vadd.f32 %v1378, %v1490
  %v1492 = vpop.f32.mrb[0].mxu0
  %1493 = vmatprep.mubr.f32.mxu0 0.0
  %v1494 = vand.u32 %v959, 4294901760
  %1495 = vmatmul.mubr.f32.gmra.mrb[0].mxu0 %v1494
  %v1496 = vpop.f32.mrb[0].mxu0
  %v1497 = vadd.f32 %v1386, %v1496
  %v1498 = vpop.f32.mrb[0].mxu0
  %1499 = vmatprep.mubr.f32.mxu0 0.0
  %v1500 = vand.u32 %v962, 4294901760
  %1501 = vmatmul.mubr.f32.gmra.mrb[0].mxu0 %v1500
  %v1502 = vpop.f32.mrb[0].mxu0
  %v1503 = vadd.f32 %v1394, %v1502
  %v1504 = vpop.f32.mrb[0].mxu0
  %1505 = vmatprep.mubr.f32.mxu0 0.0
  %v1506 = vand.u32 %v965, 4294901760
  %1507 = vmatmul.mubr.f32.gmra.mrb[0].mxu0 %v1506
  %v1508 = vpop.f32.mrb[0].mxu0
  %v1509 = vadd.f32 %v1402, %v1508
  %v1510 = vpop.f32.mrb[0].mxu0
  %1511 = vdwg.mxu0
  %1512 = vmatprep.subr.mxu0 0.0
  %v1513 = vand.u32 %v903, 4294901760
  %1514 = vmatpush1.msra.mxu0 %v1513
  %1515 = vmatprep.subr.mxu0 0.0
  %v1516 = vand.u32 %v904, 4294901760
  %1517 = vmatpush1.msra.mxu0 %v1516
  %1518 = vmatprep.subr.mxu0 0.0
  %v1519 = vand.u32 %v905, 4294901760
  %1520 = vmatpush1.msra.mxu0 %v1519
  %1521 = vmatprep.subr.mxu0 0.0
  %v1522 = vand.u32 %v906, 4294901760
  %1523 = vmatpush1.msra.mxu0 %v1522
  %1524 = vmatprep.subr.mxu0 0.0
  %v1525 = vand.u32 %v907, 4294901760
  %1526 = vmatpush1.msra.mxu0 %v1525
  %1527 = vmatprep.subr.mxu0 0.0
  %v1528 = vand.u32 %v908, 4294901760
  %1529 = vmatpush1.msra.mxu0 %v1528
  %1530 = vmatprep.subr.mxu0 0.0
  %1531 = vmatpush1.msra.mxu0 0.0
  %1532 = vmatprep.subr.mxu0 0.0
  %1533 = vmatpush1.msra.mxu0 0.0
  %1534 = vmatprep.subr.mxu0 0.0
  %1535 = vmatpush1.msra.mxu0 0.0
  %1536 = vmatprep.subr.mxu0 0.0
  %1537 = vmatpush1.msra.mxu0 0.0
  %1538 = vmatprep.subr.mxu0 0.0
  %1539 = vmatpush1.msra.mxu0 0.0
  %1540 = vmatprep.subr.mxu0 0.0
  %1541 = vmatpush1.msra.mxu0 0.0
  %1542 = vmatprep.subr.mxu0 0.0
  %1543 = vmatpush1.msra.mxu0 0.0
  %1544 = vmatprep.subr.mxu0 0.0
  %1545 = vmatpush1.msra.mxu0 0.0
  %1546 = vmatprep.subr.mxu0 0.0
  %1547 = vmatpush1.msra.mxu0 0.0
  %1548 = vmatprep.subr.mxu0 0.0
  %1549 = vmatpush1.msra.mxu0 0.0
  %1550 = vmatprep.subr.mxu0 0.0
  %1551 = vmatpush1.msra.mxu0 0.0
  %1552 = vmatprep.subr.mxu0 0.0
  %1553 = vmatpush1.msra.mxu0 0.0
  %1554 = vmatprep.subr.mxu0 0.0
  %1555 = vmatpush1.msra.mxu0 0.0
  %1556 = vmatprep.subr.mxu0 0.0
  %1557 = vmatpush1.msra.mxu0 0.0
  %1558 = vmatprep.subr.mxu0 0.0
  %1559 = vmatpush1.msra.mxu0 0.0
  %1560 = vmatprep.subr.mxu0 0.0
  %1561 = vmatpush1.msra.mxu0 0.0
  %1562 = vmatprep.subr.mxu0 0.0
  %1563 = vmatpush1.msra.mxu0 0.0
  %1564 = vmatprep.subr.mxu0 0.0
  %1565 = vmatpush1.msra.mxu0 0.0
  %1566 = vmatprep.subr.mxu0 0.0
  %1567 = vmatpush1.msra.mxu0 0.0
  %1568 = vmatprep.subr.mxu0 0.0
  %1569 = vmatpush1.msra.mxu0 0.0
  %1570 = vmatprep.subr.mxu0 0.0
  %1571 = vmatpush1.msra.mxu0 0.0
  %1572 = vmatprep.subr.mxu0 0.0
  %1573 = vmatpush1.msra.mxu0 0.0
  %1574 = vmatprep.subr.mxu0 0.0
  %1575 = vmatpush1.msra.mxu0 0.0
  %1576 = vmatprep.subr.mxu0 0.0
  %1577 = vmatpush1.msra.mxu0 0.0
  %1578 = vmatprep.subr.mxu0 0.0
  %1579 = vmatpush1.msra.mxu0 0.0
  %1580 = vmatprep.subr.mxu0 0.0
  %1581 = vmatpush1.msra.mxu0 0.0
  %1582 = vmatprep.mubr.f32.mxu0 0.0
  %v1583 = vand.u32 %v956, 4294901760
  %1584 = vmatmul.mubr.f32.gmra.mrb[0].mxu0 %v1583
  %v1585 = vpop.f32.mrb[0].mxu0
  %v1586 = vadd.f32 %v1491, %v1585
  %v1587 = vpop.f32.mrb[0].mxu0
  %1588 = vmatprep.mubr.f32.mxu0 0.0
  %v1589 = vand.u32 %v959, 4294901760
  %1590 = vmatmul.mubr.f32.gmra.mrb[0].mxu0 %v1589
  %v1591 = vpop.f32.mrb[0].mxu0
  %v1592 = vadd.f32 %v1497, %v1591
  %v1593 = vpop.f32.mrb[0].mxu0
  %1594 = vmatprep.mubr.f32.mxu0 0.0
  %v1595 = vand.u32 %v962, 4294901760
  %1596 = vmatmul.mubr.f32.gmra.mrb[0].mxu0 %v1595
  %v1597 = vpop.f32.mrb[0].mxu0
  %v1598 = vadd.f32 %v1503, %v1597
  %v1599 = vpop.f32.mrb[0].mxu0
  %1600 = vmatprep.mubr.f32.mxu0 0.0
  %v1601 = vand.u32 %v965, 4294901760
  %1602 = vmatmul.mubr.f32.gmra.mrb[0].mxu0 %v1601
  %v1603 = vpop.f32.mrb[0].mxu0
  %v1604 = vadd.f32 %v1509, %v1603
  %v1605 = vpop.f32.mrb[0].mxu0
  %1606 = vdwg.mxu0
  %v1607 = vmax.f32 %v1586, 0.0
  %v1608 = vmax.f32 %v1592, 0.0
  %v1609 = vmax.f32 %v1598, 0.0
  %v1610 = vmax.f32 %v1604, 0.0
  %v1615 = vrot.slane %v1607, 7
  %v1616 = vrot.slane %v1608, 7
  %v1617 = vsel %vm195, %v1615, %v1616
  %v1618 = vrot.slane %v1609, 7
  %v1619 = vsel %vm195, %v1616, %v1618
  %v1620 = vrot.slane %v1610, 7
  %v1621 = vsel %vm195, %v1618, %v1620
  %v1626 = vsel %vm195, 0.0, %v1615
  %v1627 = vsel %vm183, %v1626, 0.0
  %v1628 = vsel %vm184, %v1617, 0.0
  %v1629 = vsel %vm185, %v1619, 0.0
  %v1630 = vsel %vm186, %v1621, 0.0
  %v1631 = vrot.slane %v1607, 1
  %v1632 = vrot.slane %v1608, 1
  %v1633 = vsel %vm212, %v1631, %v1632
  %v1634 = vrot.slane %v1609, 1
  %v1635 = vsel %vm212, %v1632, %v1634
  %v1636 = vrot.slane %v1610, 1
  %v1637 = vsel %vm212, %v1634, %v1636
  %v1642 = vsel %vm212, %v1636, 0.0
  %v1643 = vsel %vm187, %v1633, 0.0
  %v1644 = vsel %vm188, %v1635, 0.0
  %v1645 = vsel %vm189, %v1637, 0.0
  %v1646 = vsel %vm190, %v1642, 0.0
  %v1647 = vld [vmem:[%s11] sm:$0xff]
  %v1648 = vld [vmem:[%s11 + $0x8] sm:$0xff]
  %v1649 = vld [vmem:[%s11 + $0x10] sm:$0xff]
  %v1650 = vld [vmem:[%s11 + $0x18] sm:$0xff]
  %v1651 = vld [vmem:[%s11 + $0x20] sm:$0xff]
  %v1652 = vld [vmem:[%s11 + $0x28] sm:$0xff]
  %v1653 = vld [vmem:[%s13] sm:$0x1]
  %1654 = vrot.lane.b32.xlu0 %v1607, 16
  %v1655 = vpop.permute.xlu0 %1654
  %1656 = vrot.lane.b32.xlu0 %v1608, 16
  %v1657 = vpop.permute.xlu0 %1656
  %1658 = vrot.lane.b32.xlu0 %v1609, 16
  %v1659 = vpop.permute.xlu0 %1658
  %1660 = vrot.lane.b32.xlu0 %v1610, 16
  %v1661 = vpop.permute.xlu0 %1660
  %1670 = vrot.lane.b32.xlu0 %v1643, 32
  %v1671 = vpop.permute.xlu0 %1670
  %1672 = vrot.lane.b32.xlu0 %v1644, 32
  %v1673 = vpop.permute.xlu0 %1672
  %1674 = vrot.lane.b32.xlu0 %v1645, 32
  %v1675 = vpop.permute.xlu0 %1674
  %1676 = vrot.lane.b32.xlu0 %v1646, 32
  %v1677 = vpop.permute.xlu0 %1676
  %v1682 = vsel %vm938, %v1627, %v1655
  %v1683 = vsel %vm938, %v1628, %v1657
  %v1684 = vsel %vm938, %v1629, %v1659
  %v1685 = vsel %vm938, %v1630, %v1661
  %v1686 = vsel %vm943, %v1682, %v1671
  %v1687 = vsel %vm943, %v1683, %v1673
  %v1688 = vsel %vm943, %v1684, %v1675
  %v1689 = vsel %vm943, %v1685, %v1677
  %v1691 = vlaneseq
  %v1692 = vshrl.u32 %v1691, 7
  %v1693 = vsub.s32 0, %v1692
  %v1694 = vrot.slane %v1653, %v1693
  %v1697 = vsel %vm954, %v1686, 0
  %v1700 = vsel %vm954, %v1687, 0
  %v1703 = vsel %vm954, %v1688, 0
  %v1706 = vsel %vm954, %v1689, 0
  %1708 = vmatprep.subr.mxu0 0.0
  %v1709 = vand.u32 %v1647, 4294901760
  %1710 = vmatpush1.msra.mxu0 %v1709
  %1711 = vmatprep.subr.mxu0 0.0
  %v1712 = vand.u32 %v1648, 4294901760
  %1713 = vmatpush1.msra.mxu0 %v1712
  %1714 = vmatprep.subr.mxu0 0.0
  %v1715 = vand.u32 %v1649, 4294901760
  %1716 = vmatpush1.msra.mxu0 %v1715
  %1717 = vmatprep.subr.mxu0 0.0
  %v1718 = vand.u32 %v1650, 4294901760
  %1719 = vmatpush1.msra.mxu0 %v1718
  %1720 = vmatprep.subr.mxu0 0.0
  %v1721 = vand.u32 %v1651, 4294901760
  %1722 = vmatpush1.msra.mxu0 %v1721
  %1723 = vmatprep.subr.mxu0 0.0
  %v1724 = vand.u32 %v1652, 4294901760
  %1725 = vmatpush1.msra.mxu0 %v1724
  %1726 = vmatprep.subr.mxu0 0.0
  %1727 = vmatpush1.msra.mxu0 0.0
  %1728 = vmatprep.subr.mxu0 0.0
  %1729 = vmatpush1.msra.mxu0 0.0
  %1730 = vmatprep.subr.mxu0 0.0
  %1731 = vmatpush1.msra.mxu0 0.0
  %1732 = vmatprep.subr.mxu0 0.0
  %1733 = vmatpush1.msra.mxu0 0.0
  %1734 = vmatprep.subr.mxu0 0.0
  %1735 = vmatpush1.msra.mxu0 0.0
  %1736 = vmatprep.subr.mxu0 0.0
  %1737 = vmatpush1.msra.mxu0 0.0
  %1738 = vmatprep.subr.mxu0 0.0
  %1739 = vmatpush1.msra.mxu0 0.0
  %1740 = vmatprep.subr.mxu0 0.0
  %1741 = vmatpush1.msra.mxu0 0.0
  %1742 = vmatprep.subr.mxu0 0.0
  %1743 = vmatpush1.msra.mxu0 0.0
  %1744 = vmatprep.subr.mxu0 0.0
  %1745 = vmatpush1.msra.mxu0 0.0
  %1746 = vmatprep.subr.mxu0 0.0
  %1747 = vmatpush1.msra.mxu0 0.0
  %1748 = vmatprep.subr.mxu0 0.0
  %1749 = vmatpush1.msra.mxu0 0.0
  %1750 = vmatprep.subr.mxu0 0.0
  %1751 = vmatpush1.msra.mxu0 0.0
  %1752 = vmatprep.subr.mxu0 0.0
  %1753 = vmatpush1.msra.mxu0 0.0
  %1754 = vmatprep.subr.mxu0 0.0
  %1755 = vmatpush1.msra.mxu0 0.0
  %1756 = vmatprep.subr.mxu0 0.0
  %1757 = vmatpush1.msra.mxu0 0.0
  %1758 = vmatprep.subr.mxu0 0.0
  %1759 = vmatpush1.msra.mxu0 0.0
  %1760 = vmatprep.subr.mxu0 0.0
  %1761 = vmatpush1.msra.mxu0 0.0
  %1762 = vmatprep.subr.mxu0 0.0
  %1763 = vmatpush1.msra.mxu0 0.0
  %1764 = vmatprep.subr.mxu0 0.0
  %1765 = vmatpush1.msra.mxu0 0.0
  %1766 = vmatprep.subr.mxu0 0.0
  %1767 = vmatpush1.msra.mxu0 0.0
  %1768 = vmatprep.subr.mxu0 0.0
  %1769 = vmatpush1.msra.mxu0 0.0
  %1770 = vmatprep.subr.mxu0 0.0
  %1771 = vmatpush1.msra.mxu0 0.0
  %1772 = vmatprep.subr.mxu0 0.0
  %1773 = vmatpush1.msra.mxu0 0.0
  %1774 = vmatprep.subr.mxu0 0.0
  %1775 = vmatpush1.msra.mxu0 0.0
  %1776 = vmatprep.subr.mxu0 0.0
  %1777 = vmatpush1.msra.mxu0 0.0
  %1778 = vmatprep.mubr.f32.mxu0 0.0
  %v1779 = vand.u32 %v1697, 4294901760
  %v1780 = vsub.f32 %v1697, %v1779
  %v1781 = vand.u32 %v1780, 4294901760
  %v1782 = vsub.f32 %v1780, %v1781
  %v1783 = vand.u32 %v1782, 4294901760
  %1784 = vmatmul.mubr.f32.gmra.mrb[0].mxu0 %v1783
  %v1785 = vpop.f32.mrb[0].mxu0
  %v1786 = vadd.f32 %v1694, %v1785
  %v1787 = vpop.f32.mrb[0].mxu0
  %1788 = vmatprep.mubr.f32.mxu0 0.0
  %v1789 = vand.u32 %v1700, 4294901760
  %v1790 = vsub.f32 %v1700, %v1789
  %v1791 = vand.u32 %v1790, 4294901760
  %v1792 = vsub.f32 %v1790, %v1791
  %v1793 = vand.u32 %v1792, 4294901760
  %1794 = vmatmul.mubr.f32.gmra.mrb[0].mxu0 %v1793
  %v1795 = vpop.f32.mrb[0].mxu0
  %v1796 = vadd.f32 %v1694, %v1795
  %v1797 = vpop.f32.mrb[0].mxu0
  %1798 = vmatprep.mubr.f32.mxu0 0.0
  %v1799 = vand.u32 %v1703, 4294901760
  %v1800 = vsub.f32 %v1703, %v1799
  %v1801 = vand.u32 %v1800, 4294901760
  %v1802 = vsub.f32 %v1800, %v1801
  %v1803 = vand.u32 %v1802, 4294901760
  %1804 = vmatmul.mubr.f32.gmra.mrb[0].mxu0 %v1803
  %v1805 = vpop.f32.mrb[0].mxu0
  %v1806 = vadd.f32 %v1694, %v1805
  %v1807 = vpop.f32.mrb[0].mxu0
  %1808 = vmatprep.mubr.f32.mxu0 0.0
  %v1809 = vand.u32 %v1706, 4294901760
  %v1810 = vsub.f32 %v1706, %v1809
  %v1811 = vand.u32 %v1810, 4294901760
  %v1812 = vsub.f32 %v1810, %v1811
  %v1813 = vand.u32 %v1812, 4294901760
  %1814 = vmatmul.mubr.f32.gmra.mrb[0].mxu0 %v1813
  %v1815 = vpop.f32.mrb[0].mxu0
  %v1816 = vadd.f32 %v1694, %v1815
  %v1817 = vpop.f32.mrb[0].mxu0
  %1818 = vdwg.mxu0
  %1819 = vmatprep.subr.mxu0 0.0
  %v1820 = vand.u32 %v1647, 4294901760
  %v1821 = vsub.f32 %v1647, %v1820
  %v1822 = vand.u32 %v1821, 4294901760
  %v1823 = vsub.f32 %v1821, %v1822
  %v1824 = vand.u32 %v1823, 4294901760
  %1825 = vmatpush1.msra.mxu0 %v1824
  %1826 = vmatprep.subr.mxu0 0.0
  %v1827 = vand.u32 %v1648, 4294901760
  %v1828 = vsub.f32 %v1648, %v1827
  %v1829 = vand.u32 %v1828, 4294901760
  %v1830 = vsub.f32 %v1828, %v1829
  %v1831 = vand.u32 %v1830, 4294901760
  %1832 = vmatpush1.msra.mxu0 %v1831
  %1833 = vmatprep.subr.mxu0 0.0
  %v1834 = vand.u32 %v1649, 4294901760
  %v1835 = vsub.f32 %v1649, %v1834
  %v1836 = vand.u32 %v1835, 4294901760
  %v1837 = vsub.f32 %v1835, %v1836
  %v1838 = vand.u32 %v1837, 4294901760
  %1839 = vmatpush1.msra.mxu0 %v1838
  %1840 = vmatprep.subr.mxu0 0.0
  %v1841 = vand.u32 %v1650, 4294901760
  %v1842 = vsub.f32 %v1650, %v1841
  %v1843 = vand.u32 %v1842, 4294901760
  %v1844 = vsub.f32 %v1842, %v1843
  %v1845 = vand.u32 %v1844, 4294901760
  %1846 = vmatpush1.msra.mxu0 %v1845
  %1847 = vmatprep.subr.mxu0 0.0
  %v1848 = vand.u32 %v1651, 4294901760
  %v1849 = vsub.f32 %v1651, %v1848
  %v1850 = vand.u32 %v1849, 4294901760
  %v1851 = vsub.f32 %v1849, %v1850
  %v1852 = vand.u32 %v1851, 4294901760
  %1853 = vmatpush1.msra.mxu0 %v1852
  %1854 = vmatprep.subr.mxu0 0.0
  %v1855 = vand.u32 %v1652, 4294901760
  %v1856 = vsub.f32 %v1652, %v1855
  %v1857 = vand.u32 %v1856, 4294901760
  %v1858 = vsub.f32 %v1856, %v1857
  %v1859 = vand.u32 %v1858, 4294901760
  %1860 = vmatpush1.msra.mxu0 %v1859
  %1861 = vmatprep.subr.mxu0 0.0
  %1862 = vmatpush1.msra.mxu0 0.0
  %1863 = vmatprep.subr.mxu0 0.0
  %1864 = vmatpush1.msra.mxu0 0.0
  %1865 = vmatprep.subr.mxu0 0.0
  %1866 = vmatpush1.msra.mxu0 0.0
  %1867 = vmatprep.subr.mxu0 0.0
  %1868 = vmatpush1.msra.mxu0 0.0
  %1869 = vmatprep.subr.mxu0 0.0
  %1870 = vmatpush1.msra.mxu0 0.0
  %1871 = vmatprep.subr.mxu0 0.0
  %1872 = vmatpush1.msra.mxu0 0.0
  %1873 = vmatprep.subr.mxu0 0.0
  %1874 = vmatpush1.msra.mxu0 0.0
  %1875 = vmatprep.subr.mxu0 0.0
  %1876 = vmatpush1.msra.mxu0 0.0
  %1877 = vmatprep.subr.mxu0 0.0
  %1878 = vmatpush1.msra.mxu0 0.0
  %1879 = vmatprep.subr.mxu0 0.0
  %1880 = vmatpush1.msra.mxu0 0.0
  %1881 = vmatprep.subr.mxu0 0.0
  %1882 = vmatpush1.msra.mxu0 0.0
  %1883 = vmatprep.subr.mxu0 0.0
  %1884 = vmatpush1.msra.mxu0 0.0
  %1885 = vmatprep.subr.mxu0 0.0
  %1886 = vmatpush1.msra.mxu0 0.0
  %1887 = vmatprep.subr.mxu0 0.0
  %1888 = vmatpush1.msra.mxu0 0.0
  %1889 = vmatprep.subr.mxu0 0.0
  %1890 = vmatpush1.msra.mxu0 0.0
  %1891 = vmatprep.subr.mxu0 0.0
  %1892 = vmatpush1.msra.mxu0 0.0
  %1893 = vmatprep.subr.mxu0 0.0
  %1894 = vmatpush1.msra.mxu0 0.0
  %1895 = vmatprep.subr.mxu0 0.0
  %1896 = vmatpush1.msra.mxu0 0.0
  %1897 = vmatprep.subr.mxu0 0.0
  %1898 = vmatpush1.msra.mxu0 0.0
  %1899 = vmatprep.subr.mxu0 0.0
  %1900 = vmatpush1.msra.mxu0 0.0
  %1901 = vmatprep.subr.mxu0 0.0
  %1902 = vmatpush1.msra.mxu0 0.0
  %1903 = vmatprep.subr.mxu0 0.0
  %1904 = vmatpush1.msra.mxu0 0.0
  %1905 = vmatprep.subr.mxu0 0.0
  %1906 = vmatpush1.msra.mxu0 0.0
  %1907 = vmatprep.subr.mxu0 0.0
  %1908 = vmatpush1.msra.mxu0 0.0
  %1909 = vmatprep.subr.mxu0 0.0
  %1910 = vmatpush1.msra.mxu0 0.0
  %1911 = vmatprep.subr.mxu0 0.0
  %1912 = vmatpush1.msra.mxu0 0.0
  %1913 = vmatprep.mubr.f32.mxu0 0.0
  %v1914 = vand.u32 %v1697, 4294901760
  %1915 = vmatmul.mubr.f32.gmra.mrb[0].mxu0 %v1914
  %v1916 = vpop.f32.mrb[0].mxu0
  %v1917 = vadd.f32 %v1786, %v1916
  %v1918 = vpop.f32.mrb[0].mxu0
  %1919 = vmatprep.mubr.f32.mxu0 0.0
  %v1920 = vand.u32 %v1700, 4294901760
  %1921 = vmatmul.mubr.f32.gmra.mrb[0].mxu0 %v1920
  %v1922 = vpop.f32.mrb[0].mxu0
  %v1923 = vadd.f32 %v1796, %v1922
  %v1924 = vpop.f32.mrb[0].mxu0
  %1925 = vmatprep.mubr.f32.mxu0 0.0
  %v1926 = vand.u32 %v1703, 4294901760
  %1927 = vmatmul.mubr.f32.gmra.mrb[0].mxu0 %v1926
  %v1928 = vpop.f32.mrb[0].mxu0
  %v1929 = vadd.f32 %v1806, %v1928
  %v1930 = vpop.f32.mrb[0].mxu0
  %1931 = vmatprep.mubr.f32.mxu0 0.0
  %v1932 = vand.u32 %v1706, 4294901760
  %1933 = vmatmul.mubr.f32.gmra.mrb[0].mxu0 %v1932
  %v1934 = vpop.f32.mrb[0].mxu0
  %v1935 = vadd.f32 %v1816, %v1934
  %v1936 = vpop.f32.mrb[0].mxu0
  %1937 = vdwg.mxu0
  %1938 = vmatprep.subr.mxu0 0.0
  %v1939 = vand.u32 %v1647, 4294901760
  %v1940 = vsub.f32 %v1647, %v1939
  %1941 = vmatpush1.msra.mxu0 %v1940
  %1942 = vmatprep.subr.mxu0 0.0
  %v1943 = vand.u32 %v1648, 4294901760
  %v1944 = vsub.f32 %v1648, %v1943
  %1945 = vmatpush1.msra.mxu0 %v1944
  %1946 = vmatprep.subr.mxu0 0.0
  %v1947 = vand.u32 %v1649, 4294901760
  %v1948 = vsub.f32 %v1649, %v1947
  %1949 = vmatpush1.msra.mxu0 %v1948
  %1950 = vmatprep.subr.mxu0 0.0
  %v1951 = vand.u32 %v1650, 4294901760
  %v1952 = vsub.f32 %v1650, %v1951
  %1953 = vmatpush1.msra.mxu0 %v1952
  %1954 = vmatprep.subr.mxu0 0.0
  %v1955 = vand.u32 %v1651, 4294901760
  %v1956 = vsub.f32 %v1651, %v1955
  %1957 = vmatpush1.msra.mxu0 %v1956
  %1958 = vmatprep.subr.mxu0 0.0
  %v1959 = vand.u32 %v1652, 4294901760
  %v1960 = vsub.f32 %v1652, %v1959
  %1961 = vmatpush1.msra.mxu0 %v1960
  %1962 = vmatprep.subr.mxu0 0.0
  %1963 = vmatpush1.msra.mxu0 0.0
  %1964 = vmatprep.subr.mxu0 0.0
  %1965 = vmatpush1.msra.mxu0 0.0
  %1966 = vmatprep.subr.mxu0 0.0
  %1967 = vmatpush1.msra.mxu0 0.0
  %1968 = vmatprep.subr.mxu0 0.0
  %1969 = vmatpush1.msra.mxu0 0.0
  %1970 = vmatprep.subr.mxu0 0.0
  %1971 = vmatpush1.msra.mxu0 0.0
  %1972 = vmatprep.subr.mxu0 0.0
  %1973 = vmatpush1.msra.mxu0 0.0
  %1974 = vmatprep.subr.mxu0 0.0
  %1975 = vmatpush1.msra.mxu0 0.0
  %1976 = vmatprep.subr.mxu0 0.0
  %1977 = vmatpush1.msra.mxu0 0.0
  %1978 = vmatprep.subr.mxu0 0.0
  %1979 = vmatpush1.msra.mxu0 0.0
  %1980 = vmatprep.subr.mxu0 0.0
  %1981 = vmatpush1.msra.mxu0 0.0
  %1982 = vmatprep.subr.mxu0 0.0
  %1983 = vmatpush1.msra.mxu0 0.0
  %1984 = vmatprep.subr.mxu0 0.0
  %1985 = vmatpush1.msra.mxu0 0.0
  %1986 = vmatprep.subr.mxu0 0.0
  %1987 = vmatpush1.msra.mxu0 0.0
  %1988 = vmatprep.subr.mxu0 0.0
  %1989 = vmatpush1.msra.mxu0 0.0
  %1990 = vmatprep.subr.mxu0 0.0
  %1991 = vmatpush1.msra.mxu0 0.0
  %1992 = vmatprep.subr.mxu0 0.0
  %1993 = vmatpush1.msra.mxu0 0.0
  %1994 = vmatprep.subr.mxu0 0.0
  %1995 = vmatpush1.msra.mxu0 0.0
  %1996 = vmatprep.subr.mxu0 0.0
  %1997 = vmatpush1.msra.mxu0 0.0
  %1998 = vmatprep.subr.mxu0 0.0
  %1999 = vmatpush1.msra.mxu0 0.0
  %2000 = vmatprep.subr.mxu0 0.0
  %2001 = vmatpush1.msra.mxu0 0.0
  %2002 = vmatprep.subr.mxu0 0.0
  %2003 = vmatpush1.msra.mxu0 0.0
  %2004 = vmatprep.subr.mxu0 0.0
  %2005 = vmatpush1.msra.mxu0 0.0
  %2006 = vmatprep.subr.mxu0 0.0
  %2007 = vmatpush1.msra.mxu0 0.0
  %2008 = vmatprep.subr.mxu0 0.0
  %2009 = vmatpush1.msra.mxu0 0.0
  %2010 = vmatprep.subr.mxu0 0.0
  %2011 = vmatpush1.msra.mxu0 0.0
  %2012 = vmatprep.subr.mxu0 0.0
  %2013 = vmatpush1.msra.mxu0 0.0
  %2014 = vmatprep.mubr.f32.mxu0 0.0
  %v2015 = vand.u32 %v1697, 4294901760
  %v2016 = vsub.f32 %v1697, %v2015
  %2017 = vmatmul.mubr.f32.gmra.mrb[0].mxu0 %v2016
  %v2018 = vpop.f32.mrb[0].mxu0
  %v2019 = vadd.f32 %v1917, %v2018
  %v2020 = vpop.f32.mrb[0].mxu0
  %2021 = vmatprep.mubr.f32.mxu0 0.0
  %v2022 = vand.u32 %v1700, 4294901760
  %v2023 = vsub.f32 %v1700, %v2022
  %2024 = vmatmul.mubr.f32.gmra.mrb[0].mxu0 %v2023
  %v2025 = vpop.f32.mrb[0].mxu0
  %v2026 = vadd.f32 %v1923, %v2025
  %v2027 = vpop.f32.mrb[0].mxu0
  %2028 = vmatprep.mubr.f32.mxu0 0.0
  %v2029 = vand.u32 %v1703, 4294901760
  %v2030 = vsub.f32 %v1703, %v2029
  %2031 = vmatmul.mubr.f32.gmra.mrb[0].mxu0 %v2030
  %v2032 = vpop.f32.mrb[0].mxu0
  %v2033 = vadd.f32 %v1929, %v2032
  %v2034 = vpop.f32.mrb[0].mxu0
  %2035 = vmatprep.mubr.f32.mxu0 0.0
  %v2036 = vand.u32 %v1706, 4294901760
  %v2037 = vsub.f32 %v1706, %v2036
  %2038 = vmatmul.mubr.f32.gmra.mrb[0].mxu0 %v2037
  %v2039 = vpop.f32.mrb[0].mxu0
  %v2040 = vadd.f32 %v1935, %v2039
  %v2041 = vpop.f32.mrb[0].mxu0
  %2042 = vdwg.mxu0
  %2043 = vmatprep.subr.mxu0 0.0
  %v2044 = vand.u32 %v1647, 4294901760
  %2045 = vmatpush1.msra.mxu0 %v2044
  %2046 = vmatprep.subr.mxu0 0.0
  %v2047 = vand.u32 %v1648, 4294901760
  %2048 = vmatpush1.msra.mxu0 %v2047
  %2049 = vmatprep.subr.mxu0 0.0
  %v2050 = vand.u32 %v1649, 4294901760
  %2051 = vmatpush1.msra.mxu0 %v2050
  %2052 = vmatprep.subr.mxu0 0.0
  %v2053 = vand.u32 %v1650, 4294901760
  %2054 = vmatpush1.msra.mxu0 %v2053
  %2055 = vmatprep.subr.mxu0 0.0
  %v2056 = vand.u32 %v1651, 4294901760
  %2057 = vmatpush1.msra.mxu0 %v2056
  %2058 = vmatprep.subr.mxu0 0.0
  %v2059 = vand.u32 %v1652, 4294901760
  %2060 = vmatpush1.msra.mxu0 %v2059
  %2061 = vmatprep.subr.mxu0 0.0
  %2062 = vmatpush1.msra.mxu0 0.0
  %2063 = vmatprep.subr.mxu0 0.0
  %2064 = vmatpush1.msra.mxu0 0.0
  %2065 = vmatprep.subr.mxu0 0.0
  %2066 = vmatpush1.msra.mxu0 0.0
  %2067 = vmatprep.subr.mxu0 0.0
  %2068 = vmatpush1.msra.mxu0 0.0
  %2069 = vmatprep.subr.mxu0 0.0
  %2070 = vmatpush1.msra.mxu0 0.0
  %2071 = vmatprep.subr.mxu0 0.0
  %2072 = vmatpush1.msra.mxu0 0.0
  %2073 = vmatprep.subr.mxu0 0.0
  %2074 = vmatpush1.msra.mxu0 0.0
  %2075 = vmatprep.subr.mxu0 0.0
  %2076 = vmatpush1.msra.mxu0 0.0
  %2077 = vmatprep.subr.mxu0 0.0
  %2078 = vmatpush1.msra.mxu0 0.0
  %2079 = vmatprep.subr.mxu0 0.0
  %2080 = vmatpush1.msra.mxu0 0.0
  %2081 = vmatprep.subr.mxu0 0.0
  %2082 = vmatpush1.msra.mxu0 0.0
  %2083 = vmatprep.subr.mxu0 0.0
  %2084 = vmatpush1.msra.mxu0 0.0
  %2085 = vmatprep.subr.mxu0 0.0
  %2086 = vmatpush1.msra.mxu0 0.0
  %2087 = vmatprep.subr.mxu0 0.0
  %2088 = vmatpush1.msra.mxu0 0.0
  %2089 = vmatprep.subr.mxu0 0.0
  %2090 = vmatpush1.msra.mxu0 0.0
  %2091 = vmatprep.subr.mxu0 0.0
  %2092 = vmatpush1.msra.mxu0 0.0
  %2093 = vmatprep.subr.mxu0 0.0
  %2094 = vmatpush1.msra.mxu0 0.0
  %2095 = vmatprep.subr.mxu0 0.0
  %2096 = vmatpush1.msra.mxu0 0.0
  %2097 = vmatprep.subr.mxu0 0.0
  %2098 = vmatpush1.msra.mxu0 0.0
  %2099 = vmatprep.subr.mxu0 0.0
  %2100 = vmatpush1.msra.mxu0 0.0
  %2101 = vmatprep.subr.mxu0 0.0
  %2102 = vmatpush1.msra.mxu0 0.0
  %2103 = vmatprep.subr.mxu0 0.0
  %2104 = vmatpush1.msra.mxu0 0.0
  %2105 = vmatprep.subr.mxu0 0.0
  %2106 = vmatpush1.msra.mxu0 0.0
  %2107 = vmatprep.subr.mxu0 0.0
  %2108 = vmatpush1.msra.mxu0 0.0
  %2109 = vmatprep.subr.mxu0 0.0
  %2110 = vmatpush1.msra.mxu0 0.0
  %2111 = vmatprep.subr.mxu0 0.0
  %2112 = vmatpush1.msra.mxu0 0.0
  %2113 = vmatprep.mubr.f32.mxu0 0.0
  %v2114 = vand.u32 %v1697, 4294901760
  %v2115 = vsub.f32 %v1697, %v2114
  %v2116 = vand.u32 %v2115, 4294901760
  %2117 = vmatmul.mubr.f32.gmra.mrb[0].mxu0 %v2116
  %v2118 = vpop.f32.mrb[0].mxu0
  %v2119 = vadd.f32 %v2019, %v2118
  %v2120 = vpop.f32.mrb[0].mxu0
  %2121 = vmatprep.mubr.f32.mxu0 0.0
  %v2122 = vand.u32 %v1700, 4294901760
  %v2123 = vsub.f32 %v1700, %v2122
  %v2124 = vand.u32 %v2123, 4294901760
  %2125 = vmatmul.mubr.f32.gmra.mrb[0].mxu0 %v2124
  %v2126 = vpop.f32.mrb[0].mxu0
  %v2127 = vadd.f32 %v2026, %v2126
  %v2128 = vpop.f32.mrb[0].mxu0
  %2129 = vmatprep.mubr.f32.mxu0 0.0
  %v2130 = vand.u32 %v1703, 4294901760
  %v2131 = vsub.f32 %v1703, %v2130
  %v2132 = vand.u32 %v2131, 4294901760
  %2133 = vmatmul.mubr.f32.gmra.mrb[0].mxu0 %v2132
  %v2134 = vpop.f32.mrb[0].mxu0
  %v2135 = vadd.f32 %v2033, %v2134
  %v2136 = vpop.f32.mrb[0].mxu0
  %2137 = vmatprep.mubr.f32.mxu0 0.0
  %v2138 = vand.u32 %v1706, 4294901760
  %v2139 = vsub.f32 %v1706, %v2138
  %v2140 = vand.u32 %v2139, 4294901760
  %2141 = vmatmul.mubr.f32.gmra.mrb[0].mxu0 %v2140
  %v2142 = vpop.f32.mrb[0].mxu0
  %v2143 = vadd.f32 %v2040, %v2142
  %v2144 = vpop.f32.mrb[0].mxu0
  %2145 = vdwg.mxu0
  %2146 = vmatprep.subr.mxu0 0.0
  %v2147 = vand.u32 %v1647, 4294901760
  %v2148 = vsub.f32 %v1647, %v2147
  %v2149 = vand.u32 %v2148, 4294901760
  %2150 = vmatpush1.msra.mxu0 %v2149
  %2151 = vmatprep.subr.mxu0 0.0
  %v2152 = vand.u32 %v1648, 4294901760
  %v2153 = vsub.f32 %v1648, %v2152
  %v2154 = vand.u32 %v2153, 4294901760
  %2155 = vmatpush1.msra.mxu0 %v2154
  %2156 = vmatprep.subr.mxu0 0.0
  %v2157 = vand.u32 %v1649, 4294901760
  %v2158 = vsub.f32 %v1649, %v2157
  %v2159 = vand.u32 %v2158, 4294901760
  %2160 = vmatpush1.msra.mxu0 %v2159
  %2161 = vmatprep.subr.mxu0 0.0
  %v2162 = vand.u32 %v1650, 4294901760
  %v2163 = vsub.f32 %v1650, %v2162
  %v2164 = vand.u32 %v2163, 4294901760
  %2165 = vmatpush1.msra.mxu0 %v2164
  %2166 = vmatprep.subr.mxu0 0.0
  %v2167 = vand.u32 %v1651, 4294901760
  %v2168 = vsub.f32 %v1651, %v2167
  %v2169 = vand.u32 %v2168, 4294901760
  %2170 = vmatpush1.msra.mxu0 %v2169
  %2171 = vmatprep.subr.mxu0 0.0
  %v2172 = vand.u32 %v1652, 4294901760
  %v2173 = vsub.f32 %v1652, %v2172
  %v2174 = vand.u32 %v2173, 4294901760
  %2175 = vmatpush1.msra.mxu0 %v2174
  %2176 = vmatprep.subr.mxu0 0.0
  %2177 = vmatpush1.msra.mxu0 0.0
  %2178 = vmatprep.subr.mxu0 0.0
  %2179 = vmatpush1.msra.mxu0 0.0
  %2180 = vmatprep.subr.mxu0 0.0
  %2181 = vmatpush1.msra.mxu0 0.0
  %2182 = vmatprep.subr.mxu0 0.0
  %2183 = vmatpush1.msra.mxu0 0.0
  %2184 = vmatprep.subr.mxu0 0.0
  %2185 = vmatpush1.msra.mxu0 0.0
  %2186 = vmatprep.subr.mxu0 0.0
  %2187 = vmatpush1.msra.mxu0 0.0
  %2188 = vmatprep.subr.mxu0 0.0
  %2189 = vmatpush1.msra.mxu0 0.0
  %2190 = vmatprep.subr.mxu0 0.0
  %2191 = vmatpush1.msra.mxu0 0.0
  %2192 = vmatprep.subr.mxu0 0.0
  %2193 = vmatpush1.msra.mxu0 0.0
  %2194 = vmatprep.subr.mxu0 0.0
  %2195 = vmatpush1.msra.mxu0 0.0
  %2196 = vmatprep.subr.mxu0 0.0
  %2197 = vmatpush1.msra.mxu0 0.0
  %2198 = vmatprep.subr.mxu0 0.0
  %2199 = vmatpush1.msra.mxu0 0.0
  %2200 = vmatprep.subr.mxu0 0.0
  %2201 = vmatpush1.msra.mxu0 0.0
  %2202 = vmatprep.subr.mxu0 0.0
  %2203 = vmatpush1.msra.mxu0 0.0
  %2204 = vmatprep.subr.mxu0 0.0
  %2205 = vmatpush1.msra.mxu0 0.0
  %2206 = vmatprep.subr.mxu0 0.0
  %2207 = vmatpush1.msra.mxu0 0.0
  %2208 = vmatprep.subr.mxu0 0.0
  %2209 = vmatpush1.msra.mxu0 0.0
  %2210 = vmatprep.subr.mxu0 0.0
  %2211 = vmatpush1.msra.mxu0 0.0
  %2212 = vmatprep.subr.mxu0 0.0
  %2213 = vmatpush1.msra.mxu0 0.0
  %2214 = vmatprep.subr.mxu0 0.0
  %2215 = vmatpush1.msra.mxu0 0.0
  %2216 = vmatprep.subr.mxu0 0.0
  %2217 = vmatpush1.msra.mxu0 0.0
  %2218 = vmatprep.subr.mxu0 0.0
  %2219 = vmatpush1.msra.mxu0 0.0
  %2220 = vmatprep.subr.mxu0 0.0
  %2221 = vmatpush1.msra.mxu0 0.0
  %2222 = vmatprep.subr.mxu0 0.0
  %2223 = vmatpush1.msra.mxu0 0.0
  %2224 = vmatprep.subr.mxu0 0.0
  %2225 = vmatpush1.msra.mxu0 0.0
  %2226 = vmatprep.subr.mxu0 0.0
  %2227 = vmatpush1.msra.mxu0 0.0
  %2228 = vmatprep.mubr.f32.mxu0 0.0
  %v2229 = vand.u32 %v1697, 4294901760
  %2230 = vmatmul.mubr.f32.gmra.mrb[0].mxu0 %v2229
  %v2231 = vpop.f32.mrb[0].mxu0
  %v2232 = vadd.f32 %v2119, %v2231
  %v2233 = vpop.f32.mrb[0].mxu0
  %2234 = vmatprep.mubr.f32.mxu0 0.0
  %v2235 = vand.u32 %v1700, 4294901760
  %2236 = vmatmul.mubr.f32.gmra.mrb[0].mxu0 %v2235
  %v2237 = vpop.f32.mrb[0].mxu0
  %v2238 = vadd.f32 %v2127, %v2237
  %v2239 = vpop.f32.mrb[0].mxu0
  %2240 = vmatprep.mubr.f32.mxu0 0.0
  %v2241 = vand.u32 %v1703, 4294901760
  %2242 = vmatmul.mubr.f32.gmra.mrb[0].mxu0 %v2241
  %v2243 = vpop.f32.mrb[0].mxu0
  %v2244 = vadd.f32 %v2135, %v2243
  %v2245 = vpop.f32.mrb[0].mxu0
  %2246 = vmatprep.mubr.f32.mxu0 0.0
  %v2247 = vand.u32 %v1706, 4294901760
  %2248 = vmatmul.mubr.f32.gmra.mrb[0].mxu0 %v2247
  %v2249 = vpop.f32.mrb[0].mxu0
  %v2250 = vadd.f32 %v2143, %v2249
  %v2251 = vpop.f32.mrb[0].mxu0
  %2252 = vdwg.mxu0
  %2253 = vmatprep.subr.mxu0 0.0
  %v2254 = vand.u32 %v1647, 4294901760
  %2255 = vmatpush1.msra.mxu0 %v2254
  %2256 = vmatprep.subr.mxu0 0.0
  %v2257 = vand.u32 %v1648, 4294901760
  %2258 = vmatpush1.msra.mxu0 %v2257
  %2259 = vmatprep.subr.mxu0 0.0
  %v2260 = vand.u32 %v1649, 4294901760
  %2261 = vmatpush1.msra.mxu0 %v2260
  %2262 = vmatprep.subr.mxu0 0.0
  %v2263 = vand.u32 %v1650, 4294901760
  %2264 = vmatpush1.msra.mxu0 %v2263
  %2265 = vmatprep.subr.mxu0 0.0
  %v2266 = vand.u32 %v1651, 4294901760
  %2267 = vmatpush1.msra.mxu0 %v2266
  %2268 = vmatprep.subr.mxu0 0.0
  %v2269 = vand.u32 %v1652, 4294901760
  %2270 = vmatpush1.msra.mxu0 %v2269
  %2271 = vmatprep.subr.mxu0 0.0
  %2272 = vmatpush1.msra.mxu0 0.0
  %2273 = vmatprep.subr.mxu0 0.0
  %2274 = vmatpush1.msra.mxu0 0.0
  %2275 = vmatprep.subr.mxu0 0.0
  %2276 = vmatpush1.msra.mxu0 0.0
  %2277 = vmatprep.subr.mxu0 0.0
  %2278 = vmatpush1.msra.mxu0 0.0
  %2279 = vmatprep.subr.mxu0 0.0
  %2280 = vmatpush1.msra.mxu0 0.0
  %2281 = vmatprep.subr.mxu0 0.0
  %2282 = vmatpush1.msra.mxu0 0.0
  %2283 = vmatprep.subr.mxu0 0.0
  %2284 = vmatpush1.msra.mxu0 0.0
  %2285 = vmatprep.subr.mxu0 0.0
  %2286 = vmatpush1.msra.mxu0 0.0
  %2287 = vmatprep.subr.mxu0 0.0
  %2288 = vmatpush1.msra.mxu0 0.0
  %2289 = vmatprep.subr.mxu0 0.0
  %2290 = vmatpush1.msra.mxu0 0.0
  %2291 = vmatprep.subr.mxu0 0.0
  %2292 = vmatpush1.msra.mxu0 0.0
  %2293 = vmatprep.subr.mxu0 0.0
  %2294 = vmatpush1.msra.mxu0 0.0
  %2295 = vmatprep.subr.mxu0 0.0
  %2296 = vmatpush1.msra.mxu0 0.0
  %2297 = vmatprep.subr.mxu0 0.0
  %2298 = vmatpush1.msra.mxu0 0.0
  %2299 = vmatprep.subr.mxu0 0.0
  %2300 = vmatpush1.msra.mxu0 0.0
  %2301 = vmatprep.subr.mxu0 0.0
  %2302 = vmatpush1.msra.mxu0 0.0
  %2303 = vmatprep.subr.mxu0 0.0
  %2304 = vmatpush1.msra.mxu0 0.0
  %2305 = vmatprep.subr.mxu0 0.0
  %2306 = vmatpush1.msra.mxu0 0.0
  %2307 = vmatprep.subr.mxu0 0.0
  %2308 = vmatpush1.msra.mxu0 0.0
  %2309 = vmatprep.subr.mxu0 0.0
  %2310 = vmatpush1.msra.mxu0 0.0
  %2311 = vmatprep.subr.mxu0 0.0
  %2312 = vmatpush1.msra.mxu0 0.0
  %2313 = vmatprep.subr.mxu0 0.0
  %2314 = vmatpush1.msra.mxu0 0.0
  %2315 = vmatprep.subr.mxu0 0.0
  %2316 = vmatpush1.msra.mxu0 0.0
  %2317 = vmatprep.subr.mxu0 0.0
  %2318 = vmatpush1.msra.mxu0 0.0
  %2319 = vmatprep.subr.mxu0 0.0
  %2320 = vmatpush1.msra.mxu0 0.0
  %2321 = vmatprep.subr.mxu0 0.0
  %2322 = vmatpush1.msra.mxu0 0.0
  %2323 = vmatprep.mubr.f32.mxu0 0.0
  %v2324 = vand.u32 %v1697, 4294901760
  %2325 = vmatmul.mubr.f32.gmra.mrb[0].mxu0 %v2324
  %v2326 = vpop.f32.mrb[0].mxu0
  %v2327 = vadd.f32 %v2232, %v2326
  %v2328 = vpop.f32.mrb[0].mxu0
  %2329 = vmatprep.mubr.f32.mxu0 0.0
  %v2330 = vand.u32 %v1700, 4294901760
  %2331 = vmatmul.mubr.f32.gmra.mrb[0].mxu0 %v2330
  %v2332 = vpop.f32.mrb[0].mxu0
  %v2333 = vadd.f32 %v2238, %v2332
  %v2334 = vpop.f32.mrb[0].mxu0
  %2335 = vmatprep.mubr.f32.mxu0 0.0
  %v2336 = vand.u32 %v1703, 4294901760
  %2337 = vmatmul.mubr.f32.gmra.mrb[0].mxu0 %v2336
  %v2338 = vpop.f32.mrb[0].mxu0
  %v2339 = vadd.f32 %v2244, %v2338
  %v2340 = vpop.f32.mrb[0].mxu0
  %2341 = vmatprep.mubr.f32.mxu0 0.0
  %v2342 = vand.u32 %v1706, 4294901760
  %2343 = vmatmul.mubr.f32.gmra.mrb[0].mxu0 %v2342
  %v2344 = vpop.f32.mrb[0].mxu0
  %v2345 = vadd.f32 %v2250, %v2344
  %v2346 = vpop.f32.mrb[0].mxu0
  %2347 = vdwg.mxu0
  %v2348 = vld [vmem:[%s15] sm:$0xff]
  %v2349 = vld [vmem:[%s15 + $0x8] sm:$0xff]
  %v2351 = vsel %vm943, %v2348, 0
  %v2354 = vsel %vm943, %v2349, 0
  %2356 = vmatprep.subr.mxu0 0.0
  %v2357 = vand.u32 %v2327, 4294901760
  %2358 = vmatpush1.msra.mxu0 %v2357
  %2359 = vmatprep.subr.mxu0 0.0
  %v2360 = vand.u32 %v2333, 4294901760
  %2361 = vmatpush1.msra.mxu0 %v2360
  %2362 = vmatprep.subr.mxu0 0.0
  %v2363 = vand.u32 %v2339, 4294901760
  %2364 = vmatpush1.msra.mxu0 %v2363
  %2365 = vmatprep.subr.mxu0 0.0
  %v2366 = vand.u32 %v2345, 4294901760
  %2367 = vmatpush1.msra.mxu0 %v2366
  %2368 = vmatprep.subr.mxu0 0.0
  %2369 = vmatpush1.msra.mxu0 0.0
  %2370 = vmatprep.subr.mxu0 0.0
  %2371 = vmatpush1.msra.mxu0 0.0
  %2372 = vmatprep.subr.mxu0 0.0
  %2373 = vmatpush1.msra.mxu0 0.0
  %2374 = vmatprep.subr.mxu0 0.0
  %2375 = vmatpush1.msra.mxu0 0.0
  %2376 = vmatprep.subr.mxu0 0.0
  %2377 = vmatpush1.msra.mxu0 0.0
  %2378 = vmatprep.subr.mxu0 0.0
  %2379 = vmatpush1.msra.mxu0 0.0
  %2380 = vmatprep.subr.mxu0 0.0
  %2381 = vmatpush1.msra.mxu0 0.0
  %2382 = vmatprep.subr.mxu0 0.0
  %2383 = vmatpush1.msra.mxu0 0.0
  %2384 = vmatprep.subr.mxu0 0.0
  %2385 = vmatpush1.msra.mxu0 0.0
  %2386 = vmatprep.subr.mxu0 0.0
  %2387 = vmatpush1.msra.mxu0 0.0
  %2388 = vmatprep.subr.mxu0 0.0
  %2389 = vmatpush1.msra.mxu0 0.0
  %2390 = vmatprep.subr.mxu0 0.0
  %2391 = vmatpush1.msra.mxu0 0.0
  %2392 = vmatprep.subr.mxu0 0.0
  %2393 = vmatpush1.msra.mxu0 0.0
  %2394 = vmatprep.subr.mxu0 0.0
  %2395 = vmatpush1.msra.mxu0 0.0
  %2396 = vmatprep.subr.mxu0 0.0
  %2397 = vmatpush1.msra.mxu0 0.0
  %2398 = vmatprep.subr.mxu0 0.0
  %2399 = vmatpush1.msra.mxu0 0.0
  %2400 = vmatprep.subr.mxu0 0.0
  %2401 = vmatpush1.msra.mxu0 0.0
  %2402 = vmatprep.subr.mxu0 0.0
  %2403 = vmatpush1.msra.mxu0 0.0
  %2404 = vmatprep.subr.mxu0 0.0
  %2405 = vmatpush1.msra.mxu0 0.0
  %2406 = vmatprep.subr.mxu0 0.0
  %2407 = vmatpush1.msra.mxu0 0.0
  %2408 = vmatprep.subr.mxu0 0.0
  %2409 = vmatpush1.msra.mxu0 0.0
  %2410 = vmatprep.subr.mxu0 0.0
  %2411 = vmatpush1.msra.mxu0 0.0
  %2412 = vmatprep.subr.mxu0 0.0
  %2413 = vmatpush1.msra.mxu0 0.0
  %2414 = vmatprep.subr.mxu0 0.0
  %2415 = vmatpush1.msra.mxu0 0.0
  %2416 = vmatprep.subr.mxu0 0.0
  %2417 = vmatpush1.msra.mxu0 0.0
  %2418 = vmatprep.subr.mxu0 0.0
  %2419 = vmatpush1.msra.mxu0 0.0
  %2420 = vmatprep.subr.mxu0 0.0
  %2421 = vmatpush1.msra.mxu0 0.0
  %2422 = vmatprep.subr.mxu0 0.0
  %2423 = vmatpush1.msra.mxu0 0.0
  %2424 = vmatprep.mubr.f32.mxu0 0.0
  %v2425 = vand.u32 %v2351, 4294901760
  %v2426 = vsub.f32 %v2351, %v2425
  %v2427 = vand.u32 %v2426, 4294901760
  %v2428 = vsub.f32 %v2426, %v2427
  %v2429 = vand.u32 %v2428, 4294901760
  %2430 = vmatmul.mubr.f32.gmra.mrb[0].mxu0 %v2429
  %v2431 = vpop.f32.mrb[0].mxu0
  %v2432 = vadd.f32 0.0, %v2431
  %v2433 = vpop.f32.mrb[0].mxu0
  %2434 = vmatprep.mubr.f32.mxu0 0.0
  %v2435 = vand.u32 %v2354, 4294901760
  %v2436 = vsub.f32 %v2354, %v2435
  %v2437 = vand.u32 %v2436, 4294901760
  %v2438 = vsub.f32 %v2436, %v2437
  %v2439 = vand.u32 %v2438, 4294901760
  %2440 = vmatmul.mubr.f32.gmra.mrb[0].mxu0 %v2439
  %v2441 = vpop.f32.mrb[0].mxu0
  %v2442 = vadd.f32 0.0, %v2441
  %v2443 = vpop.f32.mrb[0].mxu0
  %2444 = vdwg.mxu0
  %2445 = vmatprep.subr.mxu0 0.0
  %v2446 = vand.u32 %v2327, 4294901760
  %v2447 = vsub.f32 %v2327, %v2446
  %v2448 = vand.u32 %v2447, 4294901760
  %v2449 = vsub.f32 %v2447, %v2448
  %v2450 = vand.u32 %v2449, 4294901760
  %2451 = vmatpush1.msra.mxu0 %v2450
  %2452 = vmatprep.subr.mxu0 0.0
  %v2453 = vand.u32 %v2333, 4294901760
  %v2454 = vsub.f32 %v2333, %v2453
  %v2455 = vand.u32 %v2454, 4294901760
  %v2456 = vsub.f32 %v2454, %v2455
  %v2457 = vand.u32 %v2456, 4294901760
  %2458 = vmatpush1.msra.mxu0 %v2457
  %2459 = vmatprep.subr.mxu0 0.0
  %v2460 = vand.u32 %v2339, 4294901760
  %v2461 = vsub.f32 %v2339, %v2460
  %v2462 = vand.u32 %v2461, 4294901760
  %v2463 = vsub.f32 %v2461, %v2462
  %v2464 = vand.u32 %v2463, 4294901760
  %2465 = vmatpush1.msra.mxu0 %v2464
  %2466 = vmatprep.subr.mxu0 0.0
  %v2467 = vand.u32 %v2345, 4294901760
  %v2468 = vsub.f32 %v2345, %v2467
  %v2469 = vand.u32 %v2468, 4294901760
  %v2470 = vsub.f32 %v2468, %v2469
  %v2471 = vand.u32 %v2470, 4294901760
  %2472 = vmatpush1.msra.mxu0 %v2471
  %2473 = vmatprep.subr.mxu0 0.0
  %2474 = vmatpush1.msra.mxu0 0.0
  %2475 = vmatprep.subr.mxu0 0.0
  %2476 = vmatpush1.msra.mxu0 0.0
  %2477 = vmatprep.subr.mxu0 0.0
  %2478 = vmatpush1.msra.mxu0 0.0
  %2479 = vmatprep.subr.mxu0 0.0
  %2480 = vmatpush1.msra.mxu0 0.0
  %2481 = vmatprep.subr.mxu0 0.0
  %2482 = vmatpush1.msra.mxu0 0.0
  %2483 = vmatprep.subr.mxu0 0.0
  %2484 = vmatpush1.msra.mxu0 0.0
  %2485 = vmatprep.subr.mxu0 0.0
  %2486 = vmatpush1.msra.mxu0 0.0
  %2487 = vmatprep.subr.mxu0 0.0
  %2488 = vmatpush1.msra.mxu0 0.0
  %2489 = vmatprep.subr.mxu0 0.0
  %2490 = vmatpush1.msra.mxu0 0.0
  %2491 = vmatprep.subr.mxu0 0.0
  %2492 = vmatpush1.msra.mxu0 0.0
  %2493 = vmatprep.subr.mxu0 0.0
  %2494 = vmatpush1.msra.mxu0 0.0
  %2495 = vmatprep.subr.mxu0 0.0
  %2496 = vmatpush1.msra.mxu0 0.0
  %2497 = vmatprep.subr.mxu0 0.0
  %2498 = vmatpush1.msra.mxu0 0.0
  %2499 = vmatprep.subr.mxu0 0.0
  %2500 = vmatpush1.msra.mxu0 0.0
  %2501 = vmatprep.subr.mxu0 0.0
  %2502 = vmatpush1.msra.mxu0 0.0
  %2503 = vmatprep.subr.mxu0 0.0
  %2504 = vmatpush1.msra.mxu0 0.0
  %2505 = vmatprep.subr.mxu0 0.0
  %2506 = vmatpush1.msra.mxu0 0.0
  %2507 = vmatprep.subr.mxu0 0.0
  %2508 = vmatpush1.msra.mxu0 0.0
  %2509 = vmatprep.subr.mxu0 0.0
  %2510 = vmatpush1.msra.mxu0 0.0
  %2511 = vmatprep.subr.mxu0 0.0
  %2512 = vmatpush1.msra.mxu0 0.0
  %2513 = vmatprep.subr.mxu0 0.0
  %2514 = vmatpush1.msra.mxu0 0.0
  %2515 = vmatprep.subr.mxu0 0.0
  %2516 = vmatpush1.msra.mxu0 0.0
  %2517 = vmatprep.subr.mxu0 0.0
  %2518 = vmatpush1.msra.mxu0 0.0
  %2519 = vmatprep.subr.mxu0 0.0
  %2520 = vmatpush1.msra.mxu0 0.0
  %2521 = vmatprep.subr.mxu0 0.0
  %2522 = vmatpush1.msra.mxu0 0.0
  %2523 = vmatprep.subr.mxu0 0.0
  %2524 = vmatpush1.msra.mxu0 0.0
  %2525 = vmatprep.subr.mxu0 0.0
  %2526 = vmatpush1.msra.mxu0 0.0
  %2527 = vmatprep.subr.mxu0 0.0
  %2528 = vmatpush1.msra.mxu0 0.0
  %2529 = vmatprep.mubr.f32.mxu0 0.0
  %v2530 = vand.u32 %v2351, 4294901760
  %2531 = vmatmul.mubr.f32.gmra.mrb[0].mxu0 %v2530
  %v2532 = vpop.f32.mrb[0].mxu0
  %v2533 = vadd.f32 %v2432, %v2532
  %v2534 = vpop.f32.mrb[0].mxu0
  %2535 = vmatprep.mubr.f32.mxu0 0.0
  %v2536 = vand.u32 %v2354, 4294901760
  %2537 = vmatmul.mubr.f32.gmra.mrb[0].mxu0 %v2536
  %v2538 = vpop.f32.mrb[0].mxu0
  %v2539 = vadd.f32 %v2442, %v2538
  %v2540 = vpop.f32.mrb[0].mxu0
  %2541 = vdwg.mxu0
  %2542 = vmatprep.subr.mxu0 0.0
  %v2543 = vand.u32 %v2327, 4294901760
  %v2544 = vsub.f32 %v2327, %v2543
  %2545 = vmatpush1.msra.mxu0 %v2544
  %2546 = vmatprep.subr.mxu0 0.0
  %v2547 = vand.u32 %v2333, 4294901760
  %v2548 = vsub.f32 %v2333, %v2547
  %2549 = vmatpush1.msra.mxu0 %v2548
  %2550 = vmatprep.subr.mxu0 0.0
  %v2551 = vand.u32 %v2339, 4294901760
  %v2552 = vsub.f32 %v2339, %v2551
  %2553 = vmatpush1.msra.mxu0 %v2552
  %2554 = vmatprep.subr.mxu0 0.0
  %v2555 = vand.u32 %v2345, 4294901760
  %v2556 = vsub.f32 %v2345, %v2555
  %2557 = vmatpush1.msra.mxu0 %v2556
  %2558 = vmatprep.subr.mxu0 0.0
  %2559 = vmatpush1.msra.mxu0 0.0
  %2560 = vmatprep.subr.mxu0 0.0
  %2561 = vmatpush1.msra.mxu0 0.0
  %2562 = vmatprep.subr.mxu0 0.0
  %2563 = vmatpush1.msra.mxu0 0.0
  %2564 = vmatprep.subr.mxu0 0.0
  %2565 = vmatpush1.msra.mxu0 0.0
  %2566 = vmatprep.subr.mxu0 0.0
  %2567 = vmatpush1.msra.mxu0 0.0
  %2568 = vmatprep.subr.mxu0 0.0
  %2569 = vmatpush1.msra.mxu0 0.0
  %2570 = vmatprep.subr.mxu0 0.0
  %2571 = vmatpush1.msra.mxu0 0.0
  %2572 = vmatprep.subr.mxu0 0.0
  %2573 = vmatpush1.msra.mxu0 0.0
  %2574 = vmatprep.subr.mxu0 0.0
  %2575 = vmatpush1.msra.mxu0 0.0
  %2576 = vmatprep.subr.mxu0 0.0
  %2577 = vmatpush1.msra.mxu0 0.0
  %2578 = vmatprep.subr.mxu0 0.0
  %2579 = vmatpush1.msra.mxu0 0.0
  %2580 = vmatprep.subr.mxu0 0.0
  %2581 = vmatpush1.msra.mxu0 0.0
  %2582 = vmatprep.subr.mxu0 0.0
  %2583 = vmatpush1.msra.mxu0 0.0
  %2584 = vmatprep.subr.mxu0 0.0
  %2585 = vmatpush1.msra.mxu0 0.0
  %2586 = vmatprep.subr.mxu0 0.0
  %2587 = vmatpush1.msra.mxu0 0.0
  %2588 = vmatprep.subr.mxu0 0.0
  %2589 = vmatpush1.msra.mxu0 0.0
  %2590 = vmatprep.subr.mxu0 0.0
  %2591 = vmatpush1.msra.mxu0 0.0
  %2592 = vmatprep.subr.mxu0 0.0
  %2593 = vmatpush1.msra.mxu0 0.0
  %2594 = vmatprep.subr.mxu0 0.0
  %2595 = vmatpush1.msra.mxu0 0.0
  %2596 = vmatprep.subr.mxu0 0.0
  %2597 = vmatpush1.msra.mxu0 0.0
  %2598 = vmatprep.subr.mxu0 0.0
  %2599 = vmatpush1.msra.mxu0 0.0
  %2600 = vmatprep.subr.mxu0 0.0
  %2601 = vmatpush1.msra.mxu0 0.0
  %2602 = vmatprep.subr.mxu0 0.0
  %2603 = vmatpush1.msra.mxu0 0.0
  %2604 = vmatprep.subr.mxu0 0.0
  %2605 = vmatpush1.msra.mxu0 0.0
  %2606 = vmatprep.subr.mxu0 0.0
  %2607 = vmatpush1.msra.mxu0 0.0
  %2608 = vmatprep.subr.mxu0 0.0
  %2609 = vmatpush1.msra.mxu0 0.0
  %2610 = vmatprep.subr.mxu0 0.0
  %2611 = vmatpush1.msra.mxu0 0.0
  %2612 = vmatprep.subr.mxu0 0.0
  %2613 = vmatpush1.msra.mxu0 0.0
  %2614 = vmatprep.mubr.f32.mxu0 0.0
  %v2615 = vand.u32 %v2351, 4294901760
  %v2616 = vsub.f32 %v2351, %v2615
  %2617 = vmatmul.mubr.f32.gmra.mrb[0].mxu0 %v2616
  %v2618 = vpop.f32.mrb[0].mxu0
  %v2619 = vadd.f32 %v2533, %v2618
  %v2620 = vpop.f32.mrb[0].mxu0
  %2621 = vmatprep.mubr.f32.mxu0 0.0
  %v2622 = vand.u32 %v2354, 4294901760
  %v2623 = vsub.f32 %v2354, %v2622
  %2624 = vmatmul.mubr.f32.gmra.mrb[0].mxu0 %v2623
  %v2625 = vpop.f32.mrb[0].mxu0
  %v2626 = vadd.f32 %v2539, %v2625
  %v2627 = vpop.f32.mrb[0].mxu0
  %2628 = vdwg.mxu0
  %2629 = vmatprep.subr.mxu0 0.0
  %v2630 = vand.u32 %v2327, 4294901760
  %2631 = vmatpush1.msra.mxu0 %v2630
  %2632 = vmatprep.subr.mxu0 0.0
  %v2633 = vand.u32 %v2333, 4294901760
  %2634 = vmatpush1.msra.mxu0 %v2633
  %2635 = vmatprep.subr.mxu0 0.0
  %v2636 = vand.u32 %v2339, 4294901760
  %2637 = vmatpush1.msra.mxu0 %v2636
  %2638 = vmatprep.subr.mxu0 0.0
  %v2639 = vand.u32 %v2345, 4294901760
  %2640 = vmatpush1.msra.mxu0 %v2639
  %2641 = vmatprep.subr.mxu0 0.0
  %2642 = vmatpush1.msra.mxu0 0.0
  %2643 = vmatprep.subr.mxu0 0.0
  %2644 = vmatpush1.msra.mxu0 0.0
  %2645 = vmatprep.subr.mxu0 0.0
  %2646 = vmatpush1.msra.mxu0 0.0
  %2647 = vmatprep.subr.mxu0 0.0
  %2648 = vmatpush1.msra.mxu0 0.0
  %2649 = vmatprep.subr.mxu0 0.0
  %2650 = vmatpush1.msra.mxu0 0.0
  %2651 = vmatprep.subr.mxu0 0.0
  %2652 = vmatpush1.msra.mxu0 0.0
  %2653 = vmatprep.subr.mxu0 0.0
  %2654 = vmatpush1.msra.mxu0 0.0
  %2655 = vmatprep.subr.mxu0 0.0
  %2656 = vmatpush1.msra.mxu0 0.0
  %2657 = vmatprep.subr.mxu0 0.0
  %2658 = vmatpush1.msra.mxu0 0.0
  %2659 = vmatprep.subr.mxu0 0.0
  %2660 = vmatpush1.msra.mxu0 0.0
  %2661 = vmatprep.subr.mxu0 0.0
  %2662 = vmatpush1.msra.mxu0 0.0
  %2663 = vmatprep.subr.mxu0 0.0
  %2664 = vmatpush1.msra.mxu0 0.0
  %2665 = vmatprep.subr.mxu0 0.0
  %2666 = vmatpush1.msra.mxu0 0.0
  %2667 = vmatprep.subr.mxu0 0.0
  %2668 = vmatpush1.msra.mxu0 0.0
  %2669 = vmatprep.subr.mxu0 0.0
  %2670 = vmatpush1.msra.mxu0 0.0
  %2671 = vmatprep.subr.mxu0 0.0
  %2672 = vmatpush1.msra.mxu0 0.0
  %2673 = vmatprep.subr.mxu0 0.0
  %2674 = vmatpush1.msra.mxu0 0.0
  %2675 = vmatprep.subr.mxu0 0.0
  %2676 = vmatpush1.msra.mxu0 0.0
  %2677 = vmatprep.subr.mxu0 0.0
  %2678 = vmatpush1.msra.mxu0 0.0
  %2679 = vmatprep.subr.mxu0 0.0
  %2680 = vmatpush1.msra.mxu0 0.0
  %2681 = vmatprep.subr.mxu0 0.0
  %2682 = vmatpush1.msra.mxu0 0.0
  %2683 = vmatprep.subr.mxu0 0.0
  %2684 = vmatpush1.msra.mxu0 0.0
  %2685 = vmatprep.subr.mxu0 0.0
  %2686 = vmatpush1.msra.mxu0 0.0
  %2687 = vmatprep.subr.mxu0 0.0
  %2688 = vmatpush1.msra.mxu0 0.0
  %2689 = vmatprep.subr.mxu0 0.0
  %2690 = vmatpush1.msra.mxu0 0.0
  %2691 = vmatprep.subr.mxu0 0.0
  %2692 = vmatpush1.msra.mxu0 0.0
  %2693 = vmatprep.subr.mxu0 0.0
  %2694 = vmatpush1.msra.mxu0 0.0
  %2695 = vmatprep.subr.mxu0 0.0
  %2696 = vmatpush1.msra.mxu0 0.0
  %2697 = vmatprep.mubr.f32.mxu0 0.0
  %v2698 = vand.u32 %v2351, 4294901760
  %v2699 = vsub.f32 %v2351, %v2698
  %v2700 = vand.u32 %v2699, 4294901760
  %2701 = vmatmul.mubr.f32.gmra.mrb[0].mxu0 %v2700
  %v2702 = vpop.f32.mrb[0].mxu0
  %v2703 = vadd.f32 %v2619, %v2702
  %v2704 = vpop.f32.mrb[0].mxu0
  %2705 = vmatprep.mubr.f32.mxu0 0.0
  %v2706 = vand.u32 %v2354, 4294901760
  %v2707 = vsub.f32 %v2354, %v2706
  %v2708 = vand.u32 %v2707, 4294901760
  %2709 = vmatmul.mubr.f32.gmra.mrb[0].mxu0 %v2708
  %v2710 = vpop.f32.mrb[0].mxu0
  %v2711 = vadd.f32 %v2626, %v2710
  %v2712 = vpop.f32.mrb[0].mxu0
  %2713 = vdwg.mxu0
  %2714 = vmatprep.subr.mxu0 0.0
  %v2715 = vand.u32 %v2327, 4294901760
  %v2716 = vsub.f32 %v2327, %v2715
  %v2717 = vand.u32 %v2716, 4294901760
  %2718 = vmatpush1.msra.mxu0 %v2717
  %2719 = vmatprep.subr.mxu0 0.0
  %v2720 = vand.u32 %v2333, 4294901760
  %v2721 = vsub.f32 %v2333, %v2720
  %v2722 = vand.u32 %v2721, 4294901760
  %2723 = vmatpush1.msra.mxu0 %v2722
  %2724 = vmatprep.subr.mxu0 0.0
  %v2725 = vand.u32 %v2339, 4294901760
  %v2726 = vsub.f32 %v2339, %v2725
  %v2727 = vand.u32 %v2726, 4294901760
  %2728 = vmatpush1.msra.mxu0 %v2727
  %2729 = vmatprep.subr.mxu0 0.0
  %v2730 = vand.u32 %v2345, 4294901760
  %v2731 = vsub.f32 %v2345, %v2730
  %v2732 = vand.u32 %v2731, 4294901760
  %2733 = vmatpush1.msra.mxu0 %v2732
  %2734 = vmatprep.subr.mxu0 0.0
  %2735 = vmatpush1.msra.mxu0 0.0
  %2736 = vmatprep.subr.mxu0 0.0
  %2737 = vmatpush1.msra.mxu0 0.0
  %2738 = vmatprep.subr.mxu0 0.0
  %2739 = vmatpush1.msra.mxu0 0.0
  %2740 = vmatprep.subr.mxu0 0.0
  %2741 = vmatpush1.msra.mxu0 0.0
  %2742 = vmatprep.subr.mxu0 0.0
  %2743 = vmatpush1.msra.mxu0 0.0
  %2744 = vmatprep.subr.mxu0 0.0
  %2745 = vmatpush1.msra.mxu0 0.0
  %2746 = vmatprep.subr.mxu0 0.0
  %2747 = vmatpush1.msra.mxu0 0.0
  %2748 = vmatprep.subr.mxu0 0.0
  %2749 = vmatpush1.msra.mxu0 0.0
  %2750 = vmatprep.subr.mxu0 0.0
  %2751 = vmatpush1.msra.mxu0 0.0
  %2752 = vmatprep.subr.mxu0 0.0
  %2753 = vmatpush1.msra.mxu0 0.0
  %2754 = vmatprep.subr.mxu0 0.0
  %2755 = vmatpush1.msra.mxu0 0.0
  %2756 = vmatprep.subr.mxu0 0.0
  %2757 = vmatpush1.msra.mxu0 0.0
  %2758 = vmatprep.subr.mxu0 0.0
  %2759 = vmatpush1.msra.mxu0 0.0
  %2760 = vmatprep.subr.mxu0 0.0
  %2761 = vmatpush1.msra.mxu0 0.0
  %2762 = vmatprep.subr.mxu0 0.0
  %2763 = vmatpush1.msra.mxu0 0.0
  %2764 = vmatprep.subr.mxu0 0.0
  %2765 = vmatpush1.msra.mxu0 0.0
  %2766 = vmatprep.subr.mxu0 0.0
  %2767 = vmatpush1.msra.mxu0 0.0
  %2768 = vmatprep.subr.mxu0 0.0
  %2769 = vmatpush1.msra.mxu0 0.0
  %2770 = vmatprep.subr.mxu0 0.0
  %2771 = vmatpush1.msra.mxu0 0.0
  %2772 = vmatprep.subr.mxu0 0.0
  %2773 = vmatpush1.msra.mxu0 0.0
  %2774 = vmatprep.subr.mxu0 0.0
  %2775 = vmatpush1.msra.mxu0 0.0
  %2776 = vmatprep.subr.mxu0 0.0
  %2777 = vmatpush1.msra.mxu0 0.0
  %2778 = vmatprep.subr.mxu0 0.0
  %2779 = vmatpush1.msra.mxu0 0.0
  %2780 = vmatprep.subr.mxu0 0.0
  %2781 = vmatpush1.msra.mxu0 0.0
  %2782 = vmatprep.subr.mxu0 0.0
  %2783 = vmatpush1.msra.mxu0 0.0
  %2784 = vmatprep.subr.mxu0 0.0
  %2785 = vmatpush1.msra.mxu0 0.0
  %2786 = vmatprep.subr.mxu0 0.0
  %2787 = vmatpush1.msra.mxu0 0.0
  %2788 = vmatprep.subr.mxu0 0.0
  %2789 = vmatpush1.msra.mxu0 0.0
  %2790 = vmatprep.mubr.f32.mxu0 0.0
  %v2791 = vand.u32 %v2351, 4294901760
  %2792 = vmatmul.mubr.f32.gmra.mrb[0].mxu0 %v2791
  %v2793 = vpop.f32.mrb[0].mxu0
  %v2794 = vadd.f32 %v2703, %v2793
  %v2795 = vpop.f32.mrb[0].mxu0
  %2796 = vmatprep.mubr.f32.mxu0 0.0
  %v2797 = vand.u32 %v2354, 4294901760
  %2798 = vmatmul.mubr.f32.gmra.mrb[0].mxu0 %v2797
  %v2799 = vpop.f32.mrb[0].mxu0
  %v2800 = vadd.f32 %v2711, %v2799
  %v2801 = vpop.f32.mrb[0].mxu0
  %2802 = vdwg.mxu0
  %2803 = vmatprep.subr.mxu0 0.0
  %v2804 = vand.u32 %v2327, 4294901760
  %2805 = vmatpush1.msra.mxu0 %v2804
  %2806 = vmatprep.subr.mxu0 0.0
  %v2807 = vand.u32 %v2333, 4294901760
  %2808 = vmatpush1.msra.mxu0 %v2807
  %2809 = vmatprep.subr.mxu0 0.0
  %v2810 = vand.u32 %v2339, 4294901760
  %2811 = vmatpush1.msra.mxu0 %v2810
  %2812 = vmatprep.subr.mxu0 0.0
  %v2813 = vand.u32 %v2345, 4294901760
  %2814 = vmatpush1.msra.mxu0 %v2813
  %2815 = vmatprep.subr.mxu0 0.0
  %2816 = vmatpush1.msra.mxu0 0.0
  %2817 = vmatprep.subr.mxu0 0.0
  %2818 = vmatpush1.msra.mxu0 0.0
  %2819 = vmatprep.subr.mxu0 0.0
  %2820 = vmatpush1.msra.mxu0 0.0
  %2821 = vmatprep.subr.mxu0 0.0
  %2822 = vmatpush1.msra.mxu0 0.0
  %2823 = vmatprep.subr.mxu0 0.0
  %2824 = vmatpush1.msra.mxu0 0.0
  %2825 = vmatprep.subr.mxu0 0.0
  %2826 = vmatpush1.msra.mxu0 0.0
  %2827 = vmatprep.subr.mxu0 0.0
  %2828 = vmatpush1.msra.mxu0 0.0
  %2829 = vmatprep.subr.mxu0 0.0
  %2830 = vmatpush1.msra.mxu0 0.0
  %2831 = vmatprep.subr.mxu0 0.0
  %2832 = vmatpush1.msra.mxu0 0.0
  %2833 = vmatprep.subr.mxu0 0.0
  %2834 = vmatpush1.msra.mxu0 0.0
  %2835 = vmatprep.subr.mxu0 0.0
  %2836 = vmatpush1.msra.mxu0 0.0
  %2837 = vmatprep.subr.mxu0 0.0
  %2838 = vmatpush1.msra.mxu0 0.0
  %2839 = vmatprep.subr.mxu0 0.0
  %2840 = vmatpush1.msra.mxu0 0.0
  %2841 = vmatprep.subr.mxu0 0.0
  %2842 = vmatpush1.msra.mxu0 0.0
  %2843 = vmatprep.subr.mxu0 0.0
  %2844 = vmatpush1.msra.mxu0 0.0
  %2845 = vmatprep.subr.mxu0 0.0
  %2846 = vmatpush1.msra.mxu0 0.0
  %2847 = vmatprep.subr.mxu0 0.0
  %2848 = vmatpush1.msra.mxu0 0.0
  %2849 = vmatprep.subr.mxu0 0.0
  %2850 = vmatpush1.msra.mxu0 0.0
  %2851 = vmatprep.subr.mxu0 0.0
  %2852 = vmatpush1.msra.mxu0 0.0
  %2853 = vmatprep.subr.mxu0 0.0
  %2854 = vmatpush1.msra.mxu0 0.0
  %2855 = vmatprep.subr.mxu0 0.0
  %2856 = vmatpush1.msra.mxu0 0.0
  %2857 = vmatprep.subr.mxu0 0.0
  %2858 = vmatpush1.msra.mxu0 0.0
  %2859 = vmatprep.subr.mxu0 0.0
  %2860 = vmatpush1.msra.mxu0 0.0
  %2861 = vmatprep.subr.mxu0 0.0
  %2862 = vmatpush1.msra.mxu0 0.0
  %2863 = vmatprep.subr.mxu0 0.0
  %2864 = vmatpush1.msra.mxu0 0.0
  %2865 = vmatprep.subr.mxu0 0.0
  %2866 = vmatpush1.msra.mxu0 0.0
  %2867 = vmatprep.subr.mxu0 0.0
  %2868 = vmatpush1.msra.mxu0 0.0
  %2869 = vmatprep.subr.mxu0 0.0
  %2870 = vmatpush1.msra.mxu0 0.0
  %2871 = vmatprep.mubr.f32.mxu0 0.0
  %v2872 = vand.u32 %v2351, 4294901760
  %2873 = vmatmul.mubr.f32.gmra.mrb[0].mxu0 %v2872
  %v2874 = vpop.f32.mrb[0].mxu0
  %v2875 = vadd.f32 %v2794, %v2874
  %v2876 = vpop.f32.mrb[0].mxu0
  %2877 = vmatprep.mubr.f32.mxu0 0.0
  %v2878 = vand.u32 %v2354, 4294901760
  %2879 = vmatmul.mubr.f32.gmra.mrb[0].mxu0 %v2878
  %v2880 = vpop.f32.mrb[0].mxu0
  %v2881 = vadd.f32 %v2800, %v2880
  %v2882 = vpop.f32.mrb[0].mxu0
  %2883 = vdwg.mxu0
  %vm2884 = vcmp.lt.s32.totalorder %v131, 0
  %v2885 = vsub.s32 0, %v131
  %v2886 = vsel %vm2884, %v2885, %v131
  %v2887 = vshrl.u32 %v2886, 3
  %v2888 = vand.u32 %v2886, 7
  %v2889 = vsub.s32 0, %v2888
  %v2890 = vsel %vm2884, %v2889, %v2888
  %vm2891 = vcmp.lt.s32.totalorder %v132, 0
  %v2892 = vsub.s32 0, %v132
  %v2893 = vsel %vm2891, %v2892, %v132
  %v2894 = vshrl.u32 %v2893, 3
  %v2895 = vand.u32 %v2893, 7
  %v2896 = vsub.s32 0, %v2895
  %v2897 = vsel %vm2891, %v2896, %v2895
  %vm2898 = vcmp.ne.s32.totalorder %v2890, 0
  %vm2899 = vcmp.ne.s32.totalorder %v2897, 0
  %vm2900 = vcmp.lt.s32.totalorder %v2890, 0
  %vm2901 = vcmp.lt.s32.totalorder %v2897, 0
  %vm2902 = vmand %vm2900, %vm2898
  %vm2903 = vmand %vm2901, %vm2899
  %v2904 = vadd.s32 %v2890, 8
  %v2905 = vadd.s32 %v2897, 8
  %v2906 = vsel %vm2902, %v2904, %v2890
  %v2907 = vsel %vm2903, %v2905, %v2897
  %vm2908 = vcmp.ne.s32.totalorder %v2906, 0
  %vm2909 = vcmp.ne.s32.totalorder %v2907, 0
  %vm2910 = vcmp.ne.s32.totalorder %v2906, 7
  %vm2911 = vcmp.ne.s32.totalorder %v2907, 7
  %v2914 = vrot.slane %v2875, 7
  %v2915 = vrot.slane %v2881, 7
  %v2916 = vsel %vm195, %v2914, %v2915
  %v2919 = vsel %vm195, 0.0, %v2914
  %v2920 = vsel %vm2908, %v2919, 0.0
  %v2921 = vsel %vm2909, %v2916, 0.0
  %v2922 = vrot.slane %v2875, 1
  %v2923 = vrot.slane %v2881, 1
  %v2924 = vsel %vm212, %v2922, %v2923
  %v2927 = vsel %vm212, %v2923, 0.0
  %v2928 = vsel %vm2910, %v2924, 0.0
  %v2929 = vsel %vm2911, %v2927, 0.0
  %v2930 = vld [vmem:[%s17] sm:$0xff]
  %v2931 = vld [vmem:[%s17 + $0x8] sm:$0xff]
  %v2932 = vld [vmem:[%s17 + $0x10] sm:$0xff]
  %v2933 = vld [vmem:[%s17 + $0x18] sm:$0xff]
  %v2934 = vld [vmem:[%s17 + $0x20] sm:$0xff]
  %v2935 = vld [vmem:[%s17 + $0x28] sm:$0xff]
  %v2936 = vld [vmem:[%s19] sm:$0x1]
  %2937 = vrot.lane.b32.xlu0 %v2875, 16
  %v2938 = vpop.permute.xlu0 %2937
  %2939 = vrot.lane.b32.xlu0 %v2881, 16
  %v2940 = vpop.permute.xlu0 %2939
  %2945 = vrot.lane.b32.xlu0 %v2928, 32
  %v2946 = vpop.permute.xlu0 %2945
  %2947 = vrot.lane.b32.xlu0 %v2929, 32
  %v2948 = vpop.permute.xlu0 %2947
  %v2951 = vsel %vm938, %v2920, %v2938
  %v2952 = vsel %vm938, %v2921, %v2940
  %v2953 = vsel %vm943, %v2951, %v2946
  %v2954 = vsel %vm943, %v2952, %v2948
  %v2956 = vlaneseq
  %v2957 = vshrl.u32 %v2956, 7
  %v2958 = vsub.s32 0, %v2957
  %v2959 = vrot.slane %v2936, %v2958
  %v2962 = vsel %vm954, %v2953, 0
  %v2965 = vsel %vm954, %v2954, 0
  %2967 = vmatprep.subr.mxu0 0.0
  %v2968 = vand.u32 %v2930, 4294901760
  %2969 = vmatpush1.msra.mxu0 %v2968
  %2970 = vmatprep.subr.mxu0 0.0
  %v2971 = vand.u32 %v2931, 4294901760
  %2972 = vmatpush1.msra.mxu0 %v2971
  %2973 = vmatprep.subr.mxu0 0.0
  %v2974 = vand.u32 %v2932, 4294901760
  %2975 = vmatpush1.msra.mxu0 %v2974
  %2976 = vmatprep.subr.mxu0 0.0
  %v2977 = vand.u32 %v2933, 4294901760
  %2978 = vmatpush1.msra.mxu0 %v2977
  %2979 = vmatprep.subr.mxu0 0.0
  %v2980 = vand.u32 %v2934, 4294901760
  %2981 = vmatpush1.msra.mxu0 %v2980
  %2982 = vmatprep.subr.mxu0 0.0
  %v2983 = vand.u32 %v2935, 4294901760
  %2984 = vmatpush1.msra.mxu0 %v2983
  %2985 = vmatprep.subr.mxu0 0.0
  %2986 = vmatpush1.msra.mxu0 0.0
  %2987 = vmatprep.subr.mxu0 0.0
  %2988 = vmatpush1.msra.mxu0 0.0
  %2989 = vmatprep.subr.mxu0 0.0
  %2990 = vmatpush1.msra.mxu0 0.0
  %2991 = vmatprep.subr.mxu0 0.0
  %2992 = vmatpush1.msra.mxu0 0.0
  %2993 = vmatprep.subr.mxu0 0.0
  %2994 = vmatpush1.msra.mxu0 0.0
  %2995 = vmatprep.subr.mxu0 0.0
  %2996 = vmatpush1.msra.mxu0 0.0
  %2997 = vmatprep.subr.mxu0 0.0
  %2998 = vmatpush1.msra.mxu0 0.0
  %2999 = vmatprep.subr.mxu0 0.0
  %3000 = vmatpush1.msra.mxu0 0.0
  %3001 = vmatprep.subr.mxu0 0.0
  %3002 = vmatpush1.msra.mxu0 0.0
  %3003 = vmatprep.subr.mxu0 0.0
  %3004 = vmatpush1.msra.mxu0 0.0
  %3005 = vmatprep.subr.mxu0 0.0
  %3006 = vmatpush1.msra.mxu0 0.0
  %3007 = vmatprep.subr.mxu0 0.0
  %3008 = vmatpush1.msra.mxu0 0.0
  %3009 = vmatprep.subr.mxu0 0.0
  %3010 = vmatpush1.msra.mxu0 0.0
  %3011 = vmatprep.subr.mxu0 0.0
  %3012 = vmatpush1.msra.mxu0 0.0
  %3013 = vmatprep.subr.mxu0 0.0
  %3014 = vmatpush1.msra.mxu0 0.0
  %3015 = vmatprep.subr.mxu0 0.0
  %3016 = vmatpush1.msra.mxu0 0.0
  %3017 = vmatprep.subr.mxu0 0.0
  %3018 = vmatpush1.msra.mxu0 0.0
  %3019 = vmatprep.subr.mxu0 0.0
  %3020 = vmatpush1.msra.mxu0 0.0
  %3021 = vmatprep.subr.mxu0 0.0
  %3022 = vmatpush1.msra.mxu0 0.0
  %3023 = vmatprep.subr.mxu0 0.0
  %3024 = vmatpush1.msra.mxu0 0.0
  %3025 = vmatprep.subr.mxu0 0.0
  %3026 = vmatpush1.msra.mxu0 0.0
  %3027 = vmatprep.subr.mxu0 0.0
  %3028 = vmatpush1.msra.mxu0 0.0
  %3029 = vmatprep.subr.mxu0 0.0
  %3030 = vmatpush1.msra.mxu0 0.0
  %3031 = vmatprep.subr.mxu0 0.0
  %3032 = vmatpush1.msra.mxu0 0.0
  %3033 = vmatprep.subr.mxu0 0.0
  %3034 = vmatpush1.msra.mxu0 0.0
  %3035 = vmatprep.subr.mxu0 0.0
  %3036 = vmatpush1.msra.mxu0 0.0
  %3037 = vmatprep.mubr.f32.mxu0 0.0
  %v3038 = vand.u32 %v2962, 4294901760
  %v3039 = vsub.f32 %v2962, %v3038
  %v3040 = vand.u32 %v3039, 4294901760
  %v3041 = vsub.f32 %v3039, %v3040
  %v3042 = vand.u32 %v3041, 4294901760
  %3043 = vmatmul.mubr.f32.gmra.mrb[0].mxu0 %v3042
  %v3044 = vpop.f32.mrb[0].mxu0
  %v3045 = vadd.f32 %v2959, %v3044
  %v3046 = vpop.f32.mrb[0].mxu0
  %3047 = vmatprep.mubr.f32.mxu0 0.0
  %v3048 = vand.u32 %v2965, 4294901760
  %v3049 = vsub.f32 %v2965, %v3048
  %v3050 = vand.u32 %v3049, 4294901760
  %v3051 = vsub.f32 %v3049, %v3050
  %v3052 = vand.u32 %v3051, 4294901760
  %3053 = vmatmul.mubr.f32.gmra.mrb[0].mxu0 %v3052
  %v3054 = vpop.f32.mrb[0].mxu0
  %v3055 = vadd.f32 %v2959, %v3054
  %v3056 = vpop.f32.mrb[0].mxu0
  %3057 = vdwg.mxu0
  %3058 = vmatprep.subr.mxu0 0.0
  %v3059 = vand.u32 %v2930, 4294901760
  %v3060 = vsub.f32 %v2930, %v3059
  %v3061 = vand.u32 %v3060, 4294901760
  %v3062 = vsub.f32 %v3060, %v3061
  %v3063 = vand.u32 %v3062, 4294901760
  %3064 = vmatpush1.msra.mxu0 %v3063
  %3065 = vmatprep.subr.mxu0 0.0
  %v3066 = vand.u32 %v2931, 4294901760
  %v3067 = vsub.f32 %v2931, %v3066
  %v3068 = vand.u32 %v3067, 4294901760
  %v3069 = vsub.f32 %v3067, %v3068
  %v3070 = vand.u32 %v3069, 4294901760
  %3071 = vmatpush1.msra.mxu0 %v3070
  %3072 = vmatprep.subr.mxu0 0.0
  %v3073 = vand.u32 %v2932, 4294901760
  %v3074 = vsub.f32 %v2932, %v3073
  %v3075 = vand.u32 %v3074, 4294901760
  %v3076 = vsub.f32 %v3074, %v3075
  %v3077 = vand.u32 %v3076, 4294901760
  %3078 = vmatpush1.msra.mxu0 %v3077
  %3079 = vmatprep.subr.mxu0 0.0
  %v3080 = vand.u32 %v2933, 4294901760
  %v3081 = vsub.f32 %v2933, %v3080
  %v3082 = vand.u32 %v3081, 4294901760
  %v3083 = vsub.f32 %v3081, %v3082
  %v3084 = vand.u32 %v3083, 4294901760
  %3085 = vmatpush1.msra.mxu0 %v3084
  %3086 = vmatprep.subr.mxu0 0.0
  %v3087 = vand.u32 %v2934, 4294901760
  %v3088 = vsub.f32 %v2934, %v3087
  %v3089 = vand.u32 %v3088, 4294901760
  %v3090 = vsub.f32 %v3088, %v3089
  %v3091 = vand.u32 %v3090, 4294901760
  %3092 = vmatpush1.msra.mxu0 %v3091
  %3093 = vmatprep.subr.mxu0 0.0
  %v3094 = vand.u32 %v2935, 4294901760
  %v3095 = vsub.f32 %v2935, %v3094
  %v3096 = vand.u32 %v3095, 4294901760
  %v3097 = vsub.f32 %v3095, %v3096
  %v3098 = vand.u32 %v3097, 4294901760
  %3099 = vmatpush1.msra.mxu0 %v3098
  %3100 = vmatprep.subr.mxu0 0.0
  %3101 = vmatpush1.msra.mxu0 0.0
  %3102 = vmatprep.subr.mxu0 0.0
  %3103 = vmatpush1.msra.mxu0 0.0
  %3104 = vmatprep.subr.mxu0 0.0
  %3105 = vmatpush1.msra.mxu0 0.0
  %3106 = vmatprep.subr.mxu0 0.0
  %3107 = vmatpush1.msra.mxu0 0.0
  %3108 = vmatprep.subr.mxu0 0.0
  %3109 = vmatpush1.msra.mxu0 0.0
  %3110 = vmatprep.subr.mxu0 0.0
  %3111 = vmatpush1.msra.mxu0 0.0
  %3112 = vmatprep.subr.mxu0 0.0
  %3113 = vmatpush1.msra.mxu0 0.0
  %3114 = vmatprep.subr.mxu0 0.0
  %3115 = vmatpush1.msra.mxu0 0.0
  %3116 = vmatprep.subr.mxu0 0.0
  %3117 = vmatpush1.msra.mxu0 0.0
  %3118 = vmatprep.subr.mxu0 0.0
  %3119 = vmatpush1.msra.mxu0 0.0
  %3120 = vmatprep.subr.mxu0 0.0
  %3121 = vmatpush1.msra.mxu0 0.0
  %3122 = vmatprep.subr.mxu0 0.0
  %3123 = vmatpush1.msra.mxu0 0.0
  %3124 = vmatprep.subr.mxu0 0.0
  %3125 = vmatpush1.msra.mxu0 0.0
  %3126 = vmatprep.subr.mxu0 0.0
  %3127 = vmatpush1.msra.mxu0 0.0
  %3128 = vmatprep.subr.mxu0 0.0
  %3129 = vmatpush1.msra.mxu0 0.0
  %3130 = vmatprep.subr.mxu0 0.0
  %3131 = vmatpush1.msra.mxu0 0.0
  %3132 = vmatprep.subr.mxu0 0.0
  %3133 = vmatpush1.msra.mxu0 0.0
  %3134 = vmatprep.subr.mxu0 0.0
  %3135 = vmatpush1.msra.mxu0 0.0
  %3136 = vmatprep.subr.mxu0 0.0
  %3137 = vmatpush1.msra.mxu0 0.0
  %3138 = vmatprep.subr.mxu0 0.0
  %3139 = vmatpush1.msra.mxu0 0.0
  %3140 = vmatprep.subr.mxu0 0.0
  %3141 = vmatpush1.msra.mxu0 0.0
  %3142 = vmatprep.subr.mxu0 0.0
  %3143 = vmatpush1.msra.mxu0 0.0
  %3144 = vmatprep.subr.mxu0 0.0
  %3145 = vmatpush1.msra.mxu0 0.0
  %3146 = vmatprep.subr.mxu0 0.0
  %3147 = vmatpush1.msra.mxu0 0.0
  %3148 = vmatprep.subr.mxu0 0.0
  %3149 = vmatpush1.msra.mxu0 0.0
  %3150 = vmatprep.subr.mxu0 0.0
  %3151 = vmatpush1.msra.mxu0 0.0
  %3152 = vmatprep.mubr.f32.mxu0 0.0
  %v3153 = vand.u32 %v2962, 4294901760
  %3154 = vmatmul.mubr.f32.gmra.mrb[0].mxu0 %v3153
  %v3155 = vpop.f32.mrb[0].mxu0
  %v3156 = vadd.f32 %v3045, %v3155
  %v3157 = vpop.f32.mrb[0].mxu0
  %3158 = vmatprep.mubr.f32.mxu0 0.0
  %v3159 = vand.u32 %v2965, 4294901760
  %3160 = vmatmul.mubr.f32.gmra.mrb[0].mxu0 %v3159
  %v3161 = vpop.f32.mrb[0].mxu0
  %v3162 = vadd.f32 %v3055, %v3161
  %v3163 = vpop.f32.mrb[0].mxu0
  %3164 = vdwg.mxu0
  %3165 = vmatprep.subr.mxu0 0.0
  %v3166 = vand.u32 %v2930, 4294901760
  %v3167 = vsub.f32 %v2930, %v3166
  %3168 = vmatpush1.msra.mxu0 %v3167
  %3169 = vmatprep.subr.mxu0 0.0
  %v3170 = vand.u32 %v2931, 4294901760
  %v3171 = vsub.f32 %v2931, %v3170
  %3172 = vmatpush1.msra.mxu0 %v3171
  %3173 = vmatprep.subr.mxu0 0.0
  %v3174 = vand.u32 %v2932, 4294901760
  %v3175 = vsub.f32 %v2932, %v3174
  %3176 = vmatpush1.msra.mxu0 %v3175
  %3177 = vmatprep.subr.mxu0 0.0
  %v3178 = vand.u32 %v2933, 4294901760
  %v3179 = vsub.f32 %v2933, %v3178
  %3180 = vmatpush1.msra.mxu0 %v3179
  %3181 = vmatprep.subr.mxu0 0.0
  %v3182 = vand.u32 %v2934, 4294901760
  %v3183 = vsub.f32 %v2934, %v3182
  %3184 = vmatpush1.msra.mxu0 %v3183
  %3185 = vmatprep.subr.mxu0 0.0
  %v3186 = vand.u32 %v2935, 4294901760
  %v3187 = vsub.f32 %v2935, %v3186
  %3188 = vmatpush1.msra.mxu0 %v3187
  %3189 = vmatprep.subr.mxu0 0.0
  %3190 = vmatpush1.msra.mxu0 0.0
  %3191 = vmatprep.subr.mxu0 0.0
  %3192 = vmatpush1.msra.mxu0 0.0
  %3193 = vmatprep.subr.mxu0 0.0
  %3194 = vmatpush1.msra.mxu0 0.0
  %3195 = vmatprep.subr.mxu0 0.0
  %3196 = vmatpush1.msra.mxu0 0.0
  %3197 = vmatprep.subr.mxu0 0.0
  %3198 = vmatpush1.msra.mxu0 0.0
  %3199 = vmatprep.subr.mxu0 0.0
  %3200 = vmatpush1.msra.mxu0 0.0
  %3201 = vmatprep.subr.mxu0 0.0
  %3202 = vmatpush1.msra.mxu0 0.0
  %3203 = vmatprep.subr.mxu0 0.0
  %3204 = vmatpush1.msra.mxu0 0.0
  %3205 = vmatprep.subr.mxu0 0.0
  %3206 = vmatpush1.msra.mxu0 0.0
  %3207 = vmatprep.subr.mxu0 0.0
  %3208 = vmatpush1.msra.mxu0 0.0
  %3209 = vmatprep.subr.mxu0 0.0
  %3210 = vmatpush1.msra.mxu0 0.0
  %3211 = vmatprep.subr.mxu0 0.0
  %3212 = vmatpush1.msra.mxu0 0.0
  %3213 = vmatprep.subr.mxu0 0.0
  %3214 = vmatpush1.msra.mxu0 0.0
  %3215 = vmatprep.subr.mxu0 0.0
  %3216 = vmatpush1.msra.mxu0 0.0
  %3217 = vmatprep.subr.mxu0 0.0
  %3218 = vmatpush1.msra.mxu0 0.0
  %3219 = vmatprep.subr.mxu0 0.0
  %3220 = vmatpush1.msra.mxu0 0.0
  %3221 = vmatprep.subr.mxu0 0.0
  %3222 = vmatpush1.msra.mxu0 0.0
  %3223 = vmatprep.subr.mxu0 0.0
  %3224 = vmatpush1.msra.mxu0 0.0
  %3225 = vmatprep.subr.mxu0 0.0
  %3226 = vmatpush1.msra.mxu0 0.0
  %3227 = vmatprep.subr.mxu0 0.0
  %3228 = vmatpush1.msra.mxu0 0.0
  %3229 = vmatprep.subr.mxu0 0.0
  %3230 = vmatpush1.msra.mxu0 0.0
  %3231 = vmatprep.subr.mxu0 0.0
  %3232 = vmatpush1.msra.mxu0 0.0
  %3233 = vmatprep.subr.mxu0 0.0
  %3234 = vmatpush1.msra.mxu0 0.0
  %3235 = vmatprep.subr.mxu0 0.0
  %3236 = vmatpush1.msra.mxu0 0.0
  %3237 = vmatprep.subr.mxu0 0.0
  %3238 = vmatpush1.msra.mxu0 0.0
  %3239 = vmatprep.subr.mxu0 0.0
  %3240 = vmatpush1.msra.mxu0 0.0
  %3241 = vmatprep.mubr.f32.mxu0 0.0
  %v3242 = vand.u32 %v2962, 4294901760
  %v3243 = vsub.f32 %v2962, %v3242
  %3244 = vmatmul.mubr.f32.gmra.mrb[0].mxu0 %v3243
  %v3245 = vpop.f32.mrb[0].mxu0
  %v3246 = vadd.f32 %v3156, %v3245
  %v3247 = vpop.f32.mrb[0].mxu0
  %3248 = vmatprep.mubr.f32.mxu0 0.0
  %v3249 = vand.u32 %v2965, 4294901760
  %v3250 = vsub.f32 %v2965, %v3249
  %3251 = vmatmul.mubr.f32.gmra.mrb[0].mxu0 %v3250
  %v3252 = vpop.f32.mrb[0].mxu0
  %v3253 = vadd.f32 %v3162, %v3252
  %v3254 = vpop.f32.mrb[0].mxu0
  %3255 = vdwg.mxu0
  %3256 = vmatprep.subr.mxu0 0.0
  %v3257 = vand.u32 %v2930, 4294901760
  %3258 = vmatpush1.msra.mxu0 %v3257
  %3259 = vmatprep.subr.mxu0 0.0
  %v3260 = vand.u32 %v2931, 4294901760
  %3261 = vmatpush1.msra.mxu0 %v3260
  %3262 = vmatprep.subr.mxu0 0.0
  %v3263 = vand.u32 %v2932, 4294901760
  %3264 = vmatpush1.msra.mxu0 %v3263
  %3265 = vmatprep.subr.mxu0 0.0
  %v3266 = vand.u32 %v2933, 4294901760
  %3267 = vmatpush1.msra.mxu0 %v3266
  %3268 = vmatprep.subr.mxu0 0.0
  %v3269 = vand.u32 %v2934, 4294901760
  %3270 = vmatpush1.msra.mxu0 %v3269
  %3271 = vmatprep.subr.mxu0 0.0
  %v3272 = vand.u32 %v2935, 4294901760
  %3273 = vmatpush1.msra.mxu0 %v3272
  %3274 = vmatprep.subr.mxu0 0.0
  %3275 = vmatpush1.msra.mxu0 0.0
  %3276 = vmatprep.subr.mxu0 0.0
  %3277 = vmatpush1.msra.mxu0 0.0
  %3278 = vmatprep.subr.mxu0 0.0
  %3279 = vmatpush1.msra.mxu0 0.0
  %3280 = vmatprep.subr.mxu0 0.0
  %3281 = vmatpush1.msra.mxu0 0.0
  %3282 = vmatprep.subr.mxu0 0.0
  %3283 = vmatpush1.msra.mxu0 0.0
  %3284 = vmatprep.subr.mxu0 0.0
  %3285 = vmatpush1.msra.mxu0 0.0
  %3286 = vmatprep.subr.mxu0 0.0
  %3287 = vmatpush1.msra.mxu0 0.0
  %3288 = vmatprep.subr.mxu0 0.0
  %3289 = vmatpush1.msra.mxu0 0.0
  %3290 = vmatprep.subr.mxu0 0.0
  %3291 = vmatpush1.msra.mxu0 0.0
  %3292 = vmatprep.subr.mxu0 0.0
  %3293 = vmatpush1.msra.mxu0 0.0
  %3294 = vmatprep.subr.mxu0 0.0
  %3295 = vmatpush1.msra.mxu0 0.0
  %3296 = vmatprep.subr.mxu0 0.0
  %3297 = vmatpush1.msra.mxu0 0.0
  %3298 = vmatprep.subr.mxu0 0.0
  %3299 = vmatpush1.msra.mxu0 0.0
  %3300 = vmatprep.subr.mxu0 0.0
  %3301 = vmatpush1.msra.mxu0 0.0
  %3302 = vmatprep.subr.mxu0 0.0
  %3303 = vmatpush1.msra.mxu0 0.0
  %3304 = vmatprep.subr.mxu0 0.0
  %3305 = vmatpush1.msra.mxu0 0.0
  %3306 = vmatprep.subr.mxu0 0.0
  %3307 = vmatpush1.msra.mxu0 0.0
  %3308 = vmatprep.subr.mxu0 0.0
  %3309 = vmatpush1.msra.mxu0 0.0
  %3310 = vmatprep.subr.mxu0 0.0
  %3311 = vmatpush1.msra.mxu0 0.0
  %3312 = vmatprep.subr.mxu0 0.0
  %3313 = vmatpush1.msra.mxu0 0.0
  %3314 = vmatprep.subr.mxu0 0.0
  %3315 = vmatpush1.msra.mxu0 0.0
  %3316 = vmatprep.subr.mxu0 0.0
  %3317 = vmatpush1.msra.mxu0 0.0
  %3318 = vmatprep.subr.mxu0 0.0
  %3319 = vmatpush1.msra.mxu0 0.0
  %3320 = vmatprep.subr.mxu0 0.0
  %3321 = vmatpush1.msra.mxu0 0.0
  %3322 = vmatprep.subr.mxu0 0.0
  %3323 = vmatpush1.msra.mxu0 0.0
  %3324 = vmatprep.subr.mxu0 0.0
  %3325 = vmatpush1.msra.mxu0 0.0
  %3326 = vmatprep.mubr.f32.mxu0 0.0
  %v3327 = vand.u32 %v2962, 4294901760
  %v3328 = vsub.f32 %v2962, %v3327
  %v3329 = vand.u32 %v3328, 4294901760
  %3330 = vmatmul.mubr.f32.gmra.mrb[0].mxu0 %v3329
  %v3331 = vpop.f32.mrb[0].mxu0
  %v3332 = vadd.f32 %v3246, %v3331
  %v3333 = vpop.f32.mrb[0].mxu0
  %3334 = vmatprep.mubr.f32.mxu0 0.0
  %v3335 = vand.u32 %v2965, 4294901760
  %v3336 = vsub.f32 %v2965, %v3335
  %v3337 = vand.u32 %v3336, 4294901760
  %3338 = vmatmul.mubr.f32.gmra.mrb[0].mxu0 %v3337
  %v3339 = vpop.f32.mrb[0].mxu0
  %v3340 = vadd.f32 %v3253, %v3339
  %v3341 = vpop.f32.mrb[0].mxu0
  %3342 = vdwg.mxu0
  %3343 = vmatprep.subr.mxu0 0.0
  %v3344 = vand.u32 %v2930, 4294901760
  %v3345 = vsub.f32 %v2930, %v3344
  %v3346 = vand.u32 %v3345, 4294901760
  %3347 = vmatpush1.msra.mxu0 %v3346
  %3348 = vmatprep.subr.mxu0 0.0
  %v3349 = vand.u32 %v2931, 4294901760
  %v3350 = vsub.f32 %v2931, %v3349
  %v3351 = vand.u32 %v3350, 4294901760
  %3352 = vmatpush1.msra.mxu0 %v3351
  %3353 = vmatprep.subr.mxu0 0.0
  %v3354 = vand.u32 %v2932, 4294901760
  %v3355 = vsub.f32 %v2932, %v3354
  %v3356 = vand.u32 %v3355, 4294901760
  %3357 = vmatpush1.msra.mxu0 %v3356
  %3358 = vmatprep.subr.mxu0 0.0
  %v3359 = vand.u32 %v2933, 4294901760
  %v3360 = vsub.f32 %v2933, %v3359
  %v3361 = vand.u32 %v3360, 4294901760
  %3362 = vmatpush1.msra.mxu0 %v3361
  %3363 = vmatprep.subr.mxu0 0.0
  %v3364 = vand.u32 %v2934, 4294901760
  %v3365 = vsub.f32 %v2934, %v3364
  %v3366 = vand.u32 %v3365, 4294901760
  %3367 = vmatpush1.msra.mxu0 %v3366
  %3368 = vmatprep.subr.mxu0 0.0
  %v3369 = vand.u32 %v2935, 4294901760
  %v3370 = vsub.f32 %v2935, %v3369
  %v3371 = vand.u32 %v3370, 4294901760
  %3372 = vmatpush1.msra.mxu0 %v3371
  %3373 = vmatprep.subr.mxu0 0.0
  %3374 = vmatpush1.msra.mxu0 0.0
  %3375 = vmatprep.subr.mxu0 0.0
  %3376 = vmatpush1.msra.mxu0 0.0
  %3377 = vmatprep.subr.mxu0 0.0
  %3378 = vmatpush1.msra.mxu0 0.0
  %3379 = vmatprep.subr.mxu0 0.0
  %3380 = vmatpush1.msra.mxu0 0.0
  %3381 = vmatprep.subr.mxu0 0.0
  %3382 = vmatpush1.msra.mxu0 0.0
  %3383 = vmatprep.subr.mxu0 0.0
  %3384 = vmatpush1.msra.mxu0 0.0
  %3385 = vmatprep.subr.mxu0 0.0
  %3386 = vmatpush1.msra.mxu0 0.0
  %3387 = vmatprep.subr.mxu0 0.0
  %3388 = vmatpush1.msra.mxu0 0.0
  %3389 = vmatprep.subr.mxu0 0.0
  %3390 = vmatpush1.msra.mxu0 0.0
  %3391 = vmatprep.subr.mxu0 0.0
  %3392 = vmatpush1.msra.mxu0 0.0
  %3393 = vmatprep.subr.mxu0 0.0
  %3394 = vmatpush1.msra.mxu0 0.0
  %3395 = vmatprep.subr.mxu0 0.0
  %3396 = vmatpush1.msra.mxu0 0.0
  %3397 = vmatprep.subr.mxu0 0.0
  %3398 = vmatpush1.msra.mxu0 0.0
  %3399 = vmatprep.subr.mxu0 0.0
  %3400 = vmatpush1.msra.mxu0 0.0
  %3401 = vmatprep.subr.mxu0 0.0
  %3402 = vmatpush1.msra.mxu0 0.0
  %3403 = vmatprep.subr.mxu0 0.0
  %3404 = vmatpush1.msra.mxu0 0.0
  %3405 = vmatprep.subr.mxu0 0.0
  %3406 = vmatpush1.msra.mxu0 0.0
  %3407 = vmatprep.subr.mxu0 0.0
  %3408 = vmatpush1.msra.mxu0 0.0
  %3409 = vmatprep.subr.mxu0 0.0
  %3410 = vmatpush1.msra.mxu0 0.0
  %3411 = vmatprep.subr.mxu0 0.0
  %3412 = vmatpush1.msra.mxu0 0.0
  %3413 = vmatprep.subr.mxu0 0.0
  %3414 = vmatpush1.msra.mxu0 0.0
  %3415 = vmatprep.subr.mxu0 0.0
  %3416 = vmatpush1.msra.mxu0 0.0
  %3417 = vmatprep.subr.mxu0 0.0
  %3418 = vmatpush1.msra.mxu0 0.0
  %3419 = vmatprep.subr.mxu0 0.0
  %3420 = vmatpush1.msra.mxu0 0.0
  %3421 = vmatprep.subr.mxu0 0.0
  %3422 = vmatpush1.msra.mxu0 0.0
  %3423 = vmatprep.subr.mxu0 0.0
  %3424 = vmatpush1.msra.mxu0 0.0
  %3425 = vmatprep.mubr.f32.mxu0 0.0
  %v3426 = vand.u32 %v2962, 4294901760
  %3427 = vmatmul.mubr.f32.gmra.mrb[0].mxu0 %v3426
  %v3428 = vpop.f32.mrb[0].mxu0
  %v3429 = vadd.f32 %v3332, %v3428
  %v3430 = vpop.f32.mrb[0].mxu0
  %3431 = vmatprep.mubr.f32.mxu0 0.0
  %v3432 = vand.u32 %v2965, 4294901760
  %3433 = vmatmul.mubr.f32.gmra.mrb[0].mxu0 %v3432
  %v3434 = vpop.f32.mrb[0].mxu0
  %v3435 = vadd.f32 %v3340, %v3434
  %v3436 = vpop.f32.mrb[0].mxu0
  %3437 = vdwg.mxu0
  %3438 = vmatprep.subr.mxu0 0.0
  %v3439 = vand.u32 %v2930, 4294901760
  %3440 = vmatpush1.msra.mxu0 %v3439
  %3441 = vmatprep.subr.mxu0 0.0
  %v3442 = vand.u32 %v2931, 4294901760
  %3443 = vmatpush1.msra.mxu0 %v3442
  %3444 = vmatprep.subr.mxu0 0.0
  %v3445 = vand.u32 %v2932, 4294901760
  %3446 = vmatpush1.msra.mxu0 %v3445
  %3447 = vmatprep.subr.mxu0 0.0
  %v3448 = vand.u32 %v2933, 4294901760
  %3449 = vmatpush1.msra.mxu0 %v3448
  %3450 = vmatprep.subr.mxu0 0.0
  %v3451 = vand.u32 %v2934, 4294901760
  %3452 = vmatpush1.msra.mxu0 %v3451
  %3453 = vmatprep.subr.mxu0 0.0
  %v3454 = vand.u32 %v2935, 4294901760
  %3455 = vmatpush1.msra.mxu0 %v3454
  %3456 = vmatprep.subr.mxu0 0.0
  %3457 = vmatpush1.msra.mxu0 0.0
  %3458 = vmatprep.subr.mxu0 0.0
  %3459 = vmatpush1.msra.mxu0 0.0
  %3460 = vmatprep.subr.mxu0 0.0
  %3461 = vmatpush1.msra.mxu0 0.0
  %3462 = vmatprep.subr.mxu0 0.0
  %3463 = vmatpush1.msra.mxu0 0.0
  %3464 = vmatprep.subr.mxu0 0.0
  %3465 = vmatpush1.msra.mxu0 0.0
  %3466 = vmatprep.subr.mxu0 0.0
  %3467 = vmatpush1.msra.mxu0 0.0
  %3468 = vmatprep.subr.mxu0 0.0
  %3469 = vmatpush1.msra.mxu0 0.0
  %3470 = vmatprep.subr.mxu0 0.0
  %3471 = vmatpush1.msra.mxu0 0.0
  %3472 = vmatprep.subr.mxu0 0.0
  %3473 = vmatpush1.msra.mxu0 0.0
  %3474 = vmatprep.subr.mxu0 0.0
  %3475 = vmatpush1.msra.mxu0 0.0
  %3476 = vmatprep.subr.mxu0 0.0
  %3477 = vmatpush1.msra.mxu0 0.0
  %3478 = vmatprep.subr.mxu0 0.0
  %3479 = vmatpush1.msra.mxu0 0.0
  %3480 = vmatprep.subr.mxu0 0.0
  %3481 = vmatpush1.msra.mxu0 0.0
  %3482 = vmatprep.subr.mxu0 0.0
  %3483 = vmatpush1.msra.mxu0 0.0
  %3484 = vmatprep.subr.mxu0 0.0
  %3485 = vmatpush1.msra.mxu0 0.0
  %3486 = vmatprep.subr.mxu0 0.0
  %3487 = vmatpush1.msra.mxu0 0.0
  %3488 = vmatprep.subr.mxu0 0.0
  %3489 = vmatpush1.msra.mxu0 0.0
  %3490 = vmatprep.subr.mxu0 0.0
  %3491 = vmatpush1.msra.mxu0 0.0
  %3492 = vmatprep.subr.mxu0 0.0
  %3493 = vmatpush1.msra.mxu0 0.0
  %3494 = vmatprep.subr.mxu0 0.0
  %3495 = vmatpush1.msra.mxu0 0.0
  %3496 = vmatprep.subr.mxu0 0.0
  %3497 = vmatpush1.msra.mxu0 0.0
  %3498 = vmatprep.subr.mxu0 0.0
  %3499 = vmatpush1.msra.mxu0 0.0
  %3500 = vmatprep.subr.mxu0 0.0
  %3501 = vmatpush1.msra.mxu0 0.0
  %3502 = vmatprep.subr.mxu0 0.0
  %3503 = vmatpush1.msra.mxu0 0.0
  %3504 = vmatprep.subr.mxu0 0.0
  %3505 = vmatpush1.msra.mxu0 0.0
  %3506 = vmatprep.subr.mxu0 0.0
  %3507 = vmatpush1.msra.mxu0 0.0
  %3508 = vmatprep.mubr.f32.mxu0 0.0
  %v3509 = vand.u32 %v2962, 4294901760
  %3510 = vmatmul.mubr.f32.gmra.mrb[0].mxu0 %v3509
  %v3511 = vpop.f32.mrb[0].mxu0
  %v3512 = vadd.f32 %v3429, %v3511
  %v3513 = vpop.f32.mrb[0].mxu0
  %3514 = vmatprep.mubr.f32.mxu0 0.0
  %v3515 = vand.u32 %v2965, 4294901760
  %3516 = vmatmul.mubr.f32.gmra.mrb[0].mxu0 %v3515
  %v3517 = vpop.f32.mrb[0].mxu0
  %v3518 = vadd.f32 %v3435, %v3517
  %v3519 = vpop.f32.mrb[0].mxu0
  %3520 = vdwg.mxu0
  %v3521 = vmax.f32 %v3512, 0.0
  %v3522 = vmax.f32 %v3518, 0.0
  %v3525 = vrot.slane %v3521, 7
  %v3526 = vrot.slane %v3522, 7
  %v3527 = vsel %vm195, %v3525, %v3526
  %v3530 = vsel %vm195, 0.0, %v3525
  %v3531 = vsel %vm2908, %v3530, 0.0
  %v3532 = vsel %vm2909, %v3527, 0.0
  %v3533 = vrot.slane %v3521, 1
  %v3534 = vrot.slane %v3522, 1
  %v3535 = vsel %vm212, %v3533, %v3534
  %v3538 = vsel %vm212, %v3534, 0.0
  %v3539 = vsel %vm2910, %v3535, 0.0
  %v3540 = vsel %vm2911, %v3538, 0.0
  %v3541 = vld [vmem:[%s21] sm:$0xff]
  %v3542 = vld [vmem:[%s21 + $0x8] sm:$0xff]
  %v3543 = vld [vmem:[%s21 + $0x10] sm:$0xff]
  %v3544 = vld [vmem:[%s21 + $0x18] sm:$0xff]
  %v3545 = vld [vmem:[%s21 + $0x20] sm:$0xff]
  %v3546 = vld [vmem:[%s21 + $0x28] sm:$0xff]
  %v3547 = vld [vmem:[%s23] sm:$0x1]
  %3548 = vrot.lane.b32.xlu0 %v3521, 16
  %v3549 = vpop.permute.xlu0 %3548
  %3550 = vrot.lane.b32.xlu0 %v3522, 16
  %v3551 = vpop.permute.xlu0 %3550
  %3556 = vrot.lane.b32.xlu0 %v3539, 32
  %v3557 = vpop.permute.xlu0 %3556
  %3558 = vrot.lane.b32.xlu0 %v3540, 32
  %v3559 = vpop.permute.xlu0 %3558
  %v3562 = vsel %vm938, %v3531, %v3549
  %v3563 = vsel %vm938, %v3532, %v3551
  %v3564 = vsel %vm943, %v3562, %v3557
  %v3565 = vsel %vm943, %v3563, %v3559
  %v3567 = vlaneseq
  %v3568 = vshrl.u32 %v3567, 7
  %v3569 = vsub.s32 0, %v3568
  %v3570 = vrot.slane %v3547, %v3569
  %v3573 = vsel %vm954, %v3564, 0
  %v3576 = vsel %vm954, %v3565, 0
  %3578 = vmatprep.subr.mxu0 0.0
  %v3579 = vand.u32 %v3541, 4294901760
  %3580 = vmatpush1.msra.mxu0 %v3579
  %3581 = vmatprep.subr.mxu0 0.0
  %v3582 = vand.u32 %v3542, 4294901760
  %3583 = vmatpush1.msra.mxu0 %v3582
  %3584 = vmatprep.subr.mxu0 0.0
  %v3585 = vand.u32 %v3543, 4294901760
  %3586 = vmatpush1.msra.mxu0 %v3585
  %3587 = vmatprep.subr.mxu0 0.0
  %v3588 = vand.u32 %v3544, 4294901760
  %3589 = vmatpush1.msra.mxu0 %v3588
  %3590 = vmatprep.subr.mxu0 0.0
  %v3591 = vand.u32 %v3545, 4294901760
  %3592 = vmatpush1.msra.mxu0 %v3591
  %3593 = vmatprep.subr.mxu0 0.0
  %v3594 = vand.u32 %v3546, 4294901760
  %3595 = vmatpush1.msra.mxu0 %v3594
  %3596 = vmatprep.subr.mxu0 0.0
  %3597 = vmatpush1.msra.mxu0 0.0
  %3598 = vmatprep.subr.mxu0 0.0
  %3599 = vmatpush1.msra.mxu0 0.0
  %3600 = vmatprep.subr.mxu0 0.0
  %3601 = vmatpush1.msra.mxu0 0.0
  %3602 = vmatprep.subr.mxu0 0.0
  %3603 = vmatpush1.msra.mxu0 0.0
  %3604 = vmatprep.subr.mxu0 0.0
  %3605 = vmatpush1.msra.mxu0 0.0
  %3606 = vmatprep.subr.mxu0 0.0
  %3607 = vmatpush1.msra.mxu0 0.0
  %3608 = vmatprep.subr.mxu0 0.0
  %3609 = vmatpush1.msra.mxu0 0.0
  %3610 = vmatprep.subr.mxu0 0.0
  %3611 = vmatpush1.msra.mxu0 0.0
  %3612 = vmatprep.subr.mxu0 0.0
  %3613 = vmatpush1.msra.mxu0 0.0
  %3614 = vmatprep.subr.mxu0 0.0
  %3615 = vmatpush1.msra.mxu0 0.0
  %3616 = vmatprep.subr.mxu0 0.0
  %3617 = vmatpush1.msra.mxu0 0.0
  %3618 = vmatprep.subr.mxu0 0.0
  %3619 = vmatpush1.msra.mxu0 0.0
  %3620 = vmatprep.subr.mxu0 0.0
  %3621 = vmatpush1.msra.mxu0 0.0
  %3622 = vmatprep.subr.mxu0 0.0
  %3623 = vmatpush1.msra.mxu0 0.0
  %3624 = vmatprep.subr.mxu0 0.0
  %3625 = vmatpush1.msra.mxu0 0.0
  %3626 = vmatprep.subr.mxu0 0.0
  %3627 = vmatpush1.msra.mxu0 0.0
  %3628 = vmatprep.subr.mxu0 0.0
  %3629 = vmatpush1.msra.mxu0 0.0
  %3630 = vmatprep.subr.mxu0 0.0
  %3631 = vmatpush1.msra.mxu0 0.0
  %3632 = vmatprep.subr.mxu0 0.0
  %3633 = vmatpush1.msra.mxu0 0.0
  %3634 = vmatprep.subr.mxu0 0.0
  %3635 = vmatpush1.msra.mxu0 0.0
  %3636 = vmatprep.subr.mxu0 0.0
  %3637 = vmatpush1.msra.mxu0 0.0
  %3638 = vmatprep.subr.mxu0 0.0
  %3639 = vmatpush1.msra.mxu0 0.0
  %3640 = vmatprep.subr.mxu0 0.0
  %3641 = vmatpush1.msra.mxu0 0.0
  %3642 = vmatprep.subr.mxu0 0.0
  %3643 = vmatpush1.msra.mxu0 0.0
  %3644 = vmatprep.subr.mxu0 0.0
  %3645 = vmatpush1.msra.mxu0 0.0
  %3646 = vmatprep.subr.mxu0 0.0
  %3647 = vmatpush1.msra.mxu0 0.0
  %3648 = vmatprep.mubr.f32.mxu0 0.0
  %v3649 = vand.u32 %v3573, 4294901760
  %v3650 = vsub.f32 %v3573, %v3649
  %v3651 = vand.u32 %v3650, 4294901760
  %v3652 = vsub.f32 %v3650, %v3651
  %v3653 = vand.u32 %v3652, 4294901760
  %3654 = vmatmul.mubr.f32.gmra.mrb[0].mxu0 %v3653
  %v3655 = vpop.f32.mrb[0].mxu0
  %v3656 = vadd.f32 %v3570, %v3655
  %v3657 = vpop.f32.mrb[0].mxu0
  %3658 = vmatprep.mubr.f32.mxu0 0.0
  %v3659 = vand.u32 %v3576, 4294901760
  %v3660 = vsub.f32 %v3576, %v3659
  %v3661 = vand.u32 %v3660, 4294901760
  %v3662 = vsub.f32 %v3660, %v3661
  %v3663 = vand.u32 %v3662, 4294901760
  %3664 = vmatmul.mubr.f32.gmra.mrb[0].mxu0 %v3663
  %v3665 = vpop.f32.mrb[0].mxu0
  %v3666 = vadd.f32 %v3570, %v3665
  %v3667 = vpop.f32.mrb[0].mxu0
  %3668 = vdwg.mxu0
  %3669 = vmatprep.subr.mxu0 0.0
  %v3670 = vand.u32 %v3541, 4294901760
  %v3671 = vsub.f32 %v3541, %v3670
  %v3672 = vand.u32 %v3671, 4294901760
  %v3673 = vsub.f32 %v3671, %v3672
  %v3674 = vand.u32 %v3673, 4294901760
  %3675 = vmatpush1.msra.mxu0 %v3674
  %3676 = vmatprep.subr.mxu0 0.0
  %v3677 = vand.u32 %v3542, 4294901760
  %v3678 = vsub.f32 %v3542, %v3677
  %v3679 = vand.u32 %v3678, 4294901760
  %v3680 = vsub.f32 %v3678, %v3679
  %v3681 = vand.u32 %v3680, 4294901760
  %3682 = vmatpush1.msra.mxu0 %v3681
  %3683 = vmatprep.subr.mxu0 0.0
  %v3684 = vand.u32 %v3543, 4294901760
  %v3685 = vsub.f32 %v3543, %v3684
  %v3686 = vand.u32 %v3685, 4294901760
  %v3687 = vsub.f32 %v3685, %v3686
  %v3688 = vand.u32 %v3687, 4294901760
  %3689 = vmatpush1.msra.mxu0 %v3688
  %3690 = vmatprep.subr.mxu0 0.0
  %v3691 = vand.u32 %v3544, 4294901760
  %v3692 = vsub.f32 %v3544, %v3691
  %v3693 = vand.u32 %v3692, 4294901760
  %v3694 = vsub.f32 %v3692, %v3693
  %v3695 = vand.u32 %v3694, 4294901760
  %3696 = vmatpush1.msra.mxu0 %v3695
  %3697 = vmatprep.subr.mxu0 0.0
  %v3698 = vand.u32 %v3545, 4294901760
  %v3699 = vsub.f32 %v3545, %v3698
  %v3700 = vand.u32 %v3699, 4294901760
  %v3701 = vsub.f32 %v3699, %v3700
  %v3702 = vand.u32 %v3701, 4294901760
  %3703 = vmatpush1.msra.mxu0 %v3702
  %3704 = vmatprep.subr.mxu0 0.0
  %v3705 = vand.u32 %v3546, 4294901760
  %v3706 = vsub.f32 %v3546, %v3705
  %v3707 = vand.u32 %v3706, 4294901760
  %v3708 = vsub.f32 %v3706, %v3707
  %v3709 = vand.u32 %v3708, 4294901760
  %3710 = vmatpush1.msra.mxu0 %v3709
  %3711 = vmatprep.subr.mxu0 0.0
  %3712 = vmatpush1.msra.mxu0 0.0
  %3713 = vmatprep.subr.mxu0 0.0
  %3714 = vmatpush1.msra.mxu0 0.0
  %3715 = vmatprep.subr.mxu0 0.0
  %3716 = vmatpush1.msra.mxu0 0.0
  %3717 = vmatprep.subr.mxu0 0.0
  %3718 = vmatpush1.msra.mxu0 0.0
  %3719 = vmatprep.subr.mxu0 0.0
  %3720 = vmatpush1.msra.mxu0 0.0
  %3721 = vmatprep.subr.mxu0 0.0
  %3722 = vmatpush1.msra.mxu0 0.0
  %3723 = vmatprep.subr.mxu0 0.0
  %3724 = vmatpush1.msra.mxu0 0.0
  %3725 = vmatprep.subr.mxu0 0.0
  %3726 = vmatpush1.msra.mxu0 0.0
  %3727 = vmatprep.subr.mxu0 0.0
  %3728 = vmatpush1.msra.mxu0 0.0
  %3729 = vmatprep.subr.mxu0 0.0
  %3730 = vmatpush1.msra.mxu0 0.0
  %3731 = vmatprep.subr.mxu0 0.0
  %3732 = vmatpush1.msra.mxu0 0.0
  %3733 = vmatprep.subr.mxu0 0.0
  %3734 = vmatpush1.msra.mxu0 0.0
  %3735 = vmatprep.subr.mxu0 0.0
  %3736 = vmatpush1.msra.mxu0 0.0
  %3737 = vmatprep.subr.mxu0 0.0
  %3738 = vmatpush1.msra.mxu0 0.0
  %3739 = vmatprep.subr.mxu0 0.0
  %3740 = vmatpush1.msra.mxu0 0.0
  %3741 = vmatprep.subr.mxu0 0.0
  %3742 = vmatpush1.msra.mxu0 0.0
  %3743 = vmatprep.subr.mxu0 0.0
  %3744 = vmatpush1.msra.mxu0 0.0
  %3745 = vmatprep.subr.mxu0 0.0
  %3746 = vmatpush1.msra.mxu0 0.0
  %3747 = vmatprep.subr.mxu0 0.0
  %3748 = vmatpush1.msra.mxu0 0.0
  %3749 = vmatprep.subr.mxu0 0.0
  %3750 = vmatpush1.msra.mxu0 0.0
  %3751 = vmatprep.subr.mxu0 0.0
  %3752 = vmatpush1.msra.mxu0 0.0
  %3753 = vmatprep.subr.mxu0 0.0
  %3754 = vmatpush1.msra.mxu0 0.0
  %3755 = vmatprep.subr.mxu0 0.0
  %3756 = vmatpush1.msra.mxu0 0.0
  %3757 = vmatprep.subr.mxu0 0.0
  %3758 = vmatpush1.msra.mxu0 0.0
  %3759 = vmatprep.subr.mxu0 0.0
  %3760 = vmatpush1.msra.mxu0 0.0
  %3761 = vmatprep.subr.mxu0 0.0
  %3762 = vmatpush1.msra.mxu0 0.0
  %3763 = vmatprep.mubr.f32.mxu0 0.0
  %v3764 = vand.u32 %v3573, 4294901760
  %3765 = vmatmul.mubr.f32.gmra.mrb[0].mxu0 %v3764
  %v3766 = vpop.f32.mrb[0].mxu0
  %v3767 = vadd.f32 %v3656, %v3766
  %v3768 = vpop.f32.mrb[0].mxu0
  %3769 = vmatprep.mubr.f32.mxu0 0.0
  %v3770 = vand.u32 %v3576, 4294901760
  %3771 = vmatmul.mubr.f32.gmra.mrb[0].mxu0 %v3770
  %v3772 = vpop.f32.mrb[0].mxu0
  %v3773 = vadd.f32 %v3666, %v3772
  %v3774 = vpop.f32.mrb[0].mxu0
  %3775 = vdwg.mxu0
  %3776 = vmatprep.subr.mxu0 0.0
  %v3777 = vand.u32 %v3541, 4294901760
  %v3778 = vsub.f32 %v3541, %v3777
  %3779 = vmatpush1.msra.mxu0 %v3778
  %3780 = vmatprep.subr.mxu0 0.0
  %v3781 = vand.u32 %v3542, 4294901760
  %v3782 = vsub.f32 %v3542, %v3781
  %3783 = vmatpush1.msra.mxu0 %v3782
  %3784 = vmatprep.subr.mxu0 0.0
  %v3785 = vand.u32 %v3543, 4294901760
  %v3786 = vsub.f32 %v3543, %v3785
  %3787 = vmatpush1.msra.mxu0 %v3786
  %3788 = vmatprep.subr.mxu0 0.0
  %v3789 = vand.u32 %v3544, 4294901760
  %v3790 = vsub.f32 %v3544, %v3789
  %3791 = vmatpush1.msra.mxu0 %v3790
  %3792 = vmatprep.subr.mxu0 0.0
  %v3793 = vand.u32 %v3545, 4294901760
  %v3794 = vsub.f32 %v3545, %v3793
  %3795 = vmatpush1.msra.mxu0 %v3794
  %3796 = vmatprep.subr.mxu0 0.0
  %v3797 = vand.u32 %v3546, 4294901760
  %v3798 = vsub.f32 %v3546, %v3797
  %3799 = vmatpush1.msra.mxu0 %v3798
  %3800 = vmatprep.subr.mxu0 0.0
  %3801 = vmatpush1.msra.mxu0 0.0
  %3802 = vmatprep.subr.mxu0 0.0
  %3803 = vmatpush1.msra.mxu0 0.0
  %3804 = vmatprep.subr.mxu0 0.0
  %3805 = vmatpush1.msra.mxu0 0.0
  %3806 = vmatprep.subr.mxu0 0.0
  %3807 = vmatpush1.msra.mxu0 0.0
  %3808 = vmatprep.subr.mxu0 0.0
  %3809 = vmatpush1.msra.mxu0 0.0
  %3810 = vmatprep.subr.mxu0 0.0
  %3811 = vmatpush1.msra.mxu0 0.0
  %3812 = vmatprep.subr.mxu0 0.0
  %3813 = vmatpush1.msra.mxu0 0.0
  %3814 = vmatprep.subr.mxu0 0.0
  %3815 = vmatpush1.msra.mxu0 0.0
  %3816 = vmatprep.subr.mxu0 0.0
  %3817 = vmatpush1.msra.mxu0 0.0
  %3818 = vmatprep.subr.mxu0 0.0
  %3819 = vmatpush1.msra.mxu0 0.0
  %3820 = vmatprep.subr.mxu0 0.0
  %3821 = vmatpush1.msra.mxu0 0.0
  %3822 = vmatprep.subr.mxu0 0.0
  %3823 = vmatpush1.msra.mxu0 0.0
  %3824 = vmatprep.subr.mxu0 0.0
  %3825 = vmatpush1.msra.mxu0 0.0
  %3826 = vmatprep.subr.mxu0 0.0
  %3827 = vmatpush1.msra.mxu0 0.0
  %3828 = vmatprep.subr.mxu0 0.0
  %3829 = vmatpush1.msra.mxu0 0.0
  %3830 = vmatprep.subr.mxu0 0.0
  %3831 = vmatpush1.msra.mxu0 0.0
  %3832 = vmatprep.subr.mxu0 0.0
  %3833 = vmatpush1.msra.mxu0 0.0
  %3834 = vmatprep.subr.mxu0 0.0
  %3835 = vmatpush1.msra.mxu0 0.0
  %3836 = vmatprep.subr.mxu0 0.0
  %3837 = vmatpush1.msra.mxu0 0.0
  %3838 = vmatprep.subr.mxu0 0.0
  %3839 = vmatpush1.msra.mxu0 0.0
  %3840 = vmatprep.subr.mxu0 0.0
  %3841 = vmatpush1.msra.mxu0 0.0
  %3842 = vmatprep.subr.mxu0 0.0
  %3843 = vmatpush1.msra.mxu0 0.0
  %3844 = vmatprep.subr.mxu0 0.0
  %3845 = vmatpush1.msra.mxu0 0.0
  %3846 = vmatprep.subr.mxu0 0.0
  %3847 = vmatpush1.msra.mxu0 0.0
  %3848 = vmatprep.subr.mxu0 0.0
  %3849 = vmatpush1.msra.mxu0 0.0
  %3850 = vmatprep.subr.mxu0 0.0
  %3851 = vmatpush1.msra.mxu0 0.0
  %3852 = vmatprep.mubr.f32.mxu0 0.0
  %v3853 = vand.u32 %v3573, 4294901760
  %v3854 = vsub.f32 %v3573, %v3853
  %3855 = vmatmul.mubr.f32.gmra.mrb[0].mxu0 %v3854
  %v3856 = vpop.f32.mrb[0].mxu0
  %v3857 = vadd.f32 %v3767, %v3856
  %v3858 = vpop.f32.mrb[0].mxu0
  %3859 = vmatprep.mubr.f32.mxu0 0.0
  %v3860 = vand.u32 %v3576, 4294901760
  %v3861 = vsub.f32 %v3576, %v3860
  %3862 = vmatmul.mubr.f32.gmra.mrb[0].mxu0 %v3861
  %v3863 = vpop.f32.mrb[0].mxu0
  %v3864 = vadd.f32 %v3773, %v3863
  %v3865 = vpop.f32.mrb[0].mxu0
  %3866 = vdwg.mxu0
  %3867 = vmatprep.subr.mxu0 0.0
  %v3868 = vand.u32 %v3541, 4294901760
  %3869 = vmatpush1.msra.mxu0 %v3868
  %3870 = vmatprep.subr.mxu0 0.0
  %v3871 = vand.u32 %v3542, 4294901760
  %3872 = vmatpush1.msra.mxu0 %v3871
  %3873 = vmatprep.subr.mxu0 0.0
  %v3874 = vand.u32 %v3543, 4294901760
  %3875 = vmatpush1.msra.mxu0 %v3874
  %3876 = vmatprep.subr.mxu0 0.0
  %v3877 = vand.u32 %v3544, 4294901760
  %3878 = vmatpush1.msra.mxu0 %v3877
  %3879 = vmatprep.subr.mxu0 0.0
  %v3880 = vand.u32 %v3545, 4294901760
  %3881 = vmatpush1.msra.mxu0 %v3880
  %3882 = vmatprep.subr.mxu0 0.0
  %v3883 = vand.u32 %v3546, 4294901760
  %3884 = vmatpush1.msra.mxu0 %v3883
  %3885 = vmatprep.subr.mxu0 0.0
  %3886 = vmatpush1.msra.mxu0 0.0
  %3887 = vmatprep.subr.mxu0 0.0
  %3888 = vmatpush1.msra.mxu0 0.0
  %3889 = vmatprep.subr.mxu0 0.0
  %3890 = vmatpush1.msra.mxu0 0.0
  %3891 = vmatprep.subr.mxu0 0.0
  %3892 = vmatpush1.msra.mxu0 0.0
  %3893 = vmatprep.subr.mxu0 0.0
  %3894 = vmatpush1.msra.mxu0 0.0
  %3895 = vmatprep.subr.mxu0 0.0
  %3896 = vmatpush1.msra.mxu0 0.0
  %3897 = vmatprep.subr.mxu0 0.0
  %3898 = vmatpush1.msra.mxu0 0.0
  %3899 = vmatprep.subr.mxu0 0.0
  %3900 = vmatpush1.msra.mxu0 0.0
  %3901 = vmatprep.subr.mxu0 0.0
  %3902 = vmatpush1.msra.mxu0 0.0
  %3903 = vmatprep.subr.mxu0 0.0
  %3904 = vmatpush1.msra.mxu0 0.0
  %3905 = vmatprep.subr.mxu0 0.0
  %3906 = vmatpush1.msra.mxu0 0.0
  %3907 = vmatprep.subr.mxu0 0.0
  %3908 = vmatpush1.msra.mxu0 0.0
  %3909 = vmatprep.subr.mxu0 0.0
  %3910 = vmatpush1.msra.mxu0 0.0
  %3911 = vmatprep.subr.mxu0 0.0
  %3912 = vmatpush1.msra.mxu0 0.0
  %3913 = vmatprep.subr.mxu0 0.0
  %3914 = vmatpush1.msra.mxu0 0.0
  %3915 = vmatprep.subr.mxu0 0.0
  %3916 = vmatpush1.msra.mxu0 0.0
  %3917 = vmatprep.subr.mxu0 0.0
  %3918 = vmatpush1.msra.mxu0 0.0
  %3919 = vmatprep.subr.mxu0 0.0
  %3920 = vmatpush1.msra.mxu0 0.0
  %3921 = vmatprep.subr.mxu0 0.0
  %3922 = vmatpush1.msra.mxu0 0.0
  %3923 = vmatprep.subr.mxu0 0.0
  %3924 = vmatpush1.msra.mxu0 0.0
  %3925 = vmatprep.subr.mxu0 0.0
  %3926 = vmatpush1.msra.mxu0 0.0
  %3927 = vmatprep.subr.mxu0 0.0
  %3928 = vmatpush1.msra.mxu0 0.0
  %3929 = vmatprep.subr.mxu0 0.0
  %3930 = vmatpush1.msra.mxu0 0.0
  %3931 = vmatprep.subr.mxu0 0.0
  %3932 = vmatpush1.msra.mxu0 0.0
  %3933 = vmatprep.subr.mxu0 0.0
  %3934 = vmatpush1.msra.mxu0 0.0
  %3935 = vmatprep.subr.mxu0 0.0
  %3936 = vmatpush1.msra.mxu0 0.0
  %3937 = vmatprep.mubr.f32.mxu0 0.0
  %v3938 = vand.u32 %v3573, 4294901760
  %v3939 = vsub.f32 %v3573, %v3938
  %v3940 = vand.u32 %v3939, 4294901760
  %3941 = vmatmul.mubr.f32.gmra.mrb[0].mxu0 %v3940
  %v3942 = vpop.f32.mrb[0].mxu0
  %v3943 = vadd.f32 %v3857, %v3942
  %v3944 = vpop.f32.mrb[0].mxu0
  %3945 = vmatprep.mubr.f32.mxu0 0.0
  %v3946 = vand.u32 %v3576, 4294901760
  %v3947 = vsub.f32 %v3576, %v3946
  %v3948 = vand.u32 %v3947, 4294901760
  %3949 = vmatmul.mubr.f32.gmra.mrb[0].mxu0 %v3948
  %v3950 = vpop.f32.mrb[0].mxu0
  %v3951 = vadd.f32 %v3864, %v3950
  %v3952 = vpop.f32.mrb[0].mxu0
  %3953 = vdwg.mxu0
  %3954 = vmatprep.subr.mxu0 0.0
  %v3955 = vand.u32 %v3541, 4294901760
  %v3956 = vsub.f32 %v3541, %v3955
  %v3957 = vand.u32 %v3956, 4294901760
  %3958 = vmatpush1.msra.mxu0 %v3957
  %3959 = vmatprep.subr.mxu0 0.0
  %v3960 = vand.u32 %v3542, 4294901760
  %v3961 = vsub.f32 %v3542, %v3960
  %v3962 = vand.u32 %v3961, 4294901760
  %3963 = vmatpush1.msra.mxu0 %v3962
  %3964 = vmatprep.subr.mxu0 0.0
  %v3965 = vand.u32 %v3543, 4294901760
  %v3966 = vsub.f32 %v3543, %v3965
  %v3967 = vand.u32 %v3966, 4294901760
  %3968 = vmatpush1.msra.mxu0 %v3967
  %3969 = vmatprep.subr.mxu0 0.0
  %v3970 = vand.u32 %v3544, 4294901760
  %v3971 = vsub.f32 %v3544, %v3970
  %v3972 = vand.u32 %v3971, 4294901760
  %3973 = vmatpush1.msra.mxu0 %v3972
  %3974 = vmatprep.subr.mxu0 0.0
  %v3975 = vand.u32 %v3545, 4294901760
  %v3976 = vsub.f32 %v3545, %v3975
  %v3977 = vand.u32 %v3976, 4294901760
  %3978 = vmatpush1.msra.mxu0 %v3977
  %3979 = vmatprep.subr.mxu0 0.0
  %v3980 = vand.u32 %v3546, 4294901760
  %v3981 = vsub.f32 %v3546, %v3980
  %v3982 = vand.u32 %v3981, 4294901760
  %3983 = vmatpush1.msra.mxu0 %v3982
  %3984 = vmatprep.subr.mxu0 0.0
  %3985 = vmatpush1.msra.mxu0 0.0
  %3986 = vmatprep.subr.mxu0 0.0
  %3987 = vmatpush1.msra.mxu0 0.0
  %3988 = vmatprep.subr.mxu0 0.0
  %3989 = vmatpush1.msra.mxu0 0.0
  %3990 = vmatprep.subr.mxu0 0.0
  %3991 = vmatpush1.msra.mxu0 0.0
  %3992 = vmatprep.subr.mxu0 0.0
  %3993 = vmatpush1.msra.mxu0 0.0
  %3994 = vmatprep.subr.mxu0 0.0
  %3995 = vmatpush1.msra.mxu0 0.0
  %3996 = vmatprep.subr.mxu0 0.0
  %3997 = vmatpush1.msra.mxu0 0.0
  %3998 = vmatprep.subr.mxu0 0.0
  %3999 = vmatpush1.msra.mxu0 0.0
  %4000 = vmatprep.subr.mxu0 0.0
  %4001 = vmatpush1.msra.mxu0 0.0
  %4002 = vmatprep.subr.mxu0 0.0
  %4003 = vmatpush1.msra.mxu0 0.0
  %4004 = vmatprep.subr.mxu0 0.0
  %4005 = vmatpush1.msra.mxu0 0.0
  %4006 = vmatprep.subr.mxu0 0.0
  %4007 = vmatpush1.msra.mxu0 0.0
  %4008 = vmatprep.subr.mxu0 0.0
  %4009 = vmatpush1.msra.mxu0 0.0
  %4010 = vmatprep.subr.mxu0 0.0
  %4011 = vmatpush1.msra.mxu0 0.0
  %4012 = vmatprep.subr.mxu0 0.0
  %4013 = vmatpush1.msra.mxu0 0.0
  %4014 = vmatprep.subr.mxu0 0.0
  %4015 = vmatpush1.msra.mxu0 0.0
  %4016 = vmatprep.subr.mxu0 0.0
  %4017 = vmatpush1.msra.mxu0 0.0
  %4018 = vmatprep.subr.mxu0 0.0
  %4019 = vmatpush1.msra.mxu0 0.0
  %4020 = vmatprep.subr.mxu0 0.0
  %4021 = vmatpush1.msra.mxu0 0.0
  %4022 = vmatprep.subr.mxu0 0.0
  %4023 = vmatpush1.msra.mxu0 0.0
  %4024 = vmatprep.subr.mxu0 0.0
  %4025 = vmatpush1.msra.mxu0 0.0
  %4026 = vmatprep.subr.mxu0 0.0
  %4027 = vmatpush1.msra.mxu0 0.0
  %4028 = vmatprep.subr.mxu0 0.0
  %4029 = vmatpush1.msra.mxu0 0.0
  %4030 = vmatprep.subr.mxu0 0.0
  %4031 = vmatpush1.msra.mxu0 0.0
  %4032 = vmatprep.subr.mxu0 0.0
  %4033 = vmatpush1.msra.mxu0 0.0
  %4034 = vmatprep.subr.mxu0 0.0
  %4035 = vmatpush1.msra.mxu0 0.0
  %4036 = vmatprep.mubr.f32.mxu0 0.0
  %v4037 = vand.u32 %v3573, 4294901760
  %4038 = vmatmul.mubr.f32.gmra.mrb[0].mxu0 %v4037
  %v4039 = vpop.f32.mrb[0].mxu0
  %v4040 = vadd.f32 %v3943, %v4039
  %v4041 = vpop.f32.mrb[0].mxu0
  %4042 = vmatprep.mubr.f32.mxu0 0.0
  %v4043 = vand.u32 %v3576, 4294901760
  %4044 = vmatmul.mubr.f32.gmra.mrb[0].mxu0 %v4043
  %v4045 = vpop.f32.mrb[0].mxu0
  %v4046 = vadd.f32 %v3951, %v4045
  %v4047 = vpop.f32.mrb[0].mxu0
  %4048 = vdwg.mxu0
  %4049 = vmatprep.subr.mxu0 0.0
  %v4050 = vand.u32 %v3541, 4294901760
  %4051 = vmatpush1.msra.mxu0 %v4050
  %4052 = vmatprep.subr.mxu0 0.0
  %v4053 = vand.u32 %v3542, 4294901760
  %4054 = vmatpush1.msra.mxu0 %v4053
  %4055 = vmatprep.subr.mxu0 0.0
  %v4056 = vand.u32 %v3543, 4294901760
  %4057 = vmatpush1.msra.mxu0 %v4056
  %4058 = vmatprep.subr.mxu0 0.0
  %v4059 = vand.u32 %v3544, 4294901760
  %4060 = vmatpush1.msra.mxu0 %v4059
  %4061 = vmatprep.subr.mxu0 0.0
  %v4062 = vand.u32 %v3545, 4294901760
  %4063 = vmatpush1.msra.mxu0 %v4062
  %4064 = vmatprep.subr.mxu0 0.0
  %v4065 = vand.u32 %v3546, 4294901760
  %4066 = vmatpush1.msra.mxu0 %v4065
  %4067 = vmatprep.subr.mxu0 0.0
  %4068 = vmatpush1.msra.mxu0 0.0
  %4069 = vmatprep.subr.mxu0 0.0
  %4070 = vmatpush1.msra.mxu0 0.0
  %4071 = vmatprep.subr.mxu0 0.0
  %4072 = vmatpush1.msra.mxu0 0.0
  %4073 = vmatprep.subr.mxu0 0.0
  %4074 = vmatpush1.msra.mxu0 0.0
  %4075 = vmatprep.subr.mxu0 0.0
  %4076 = vmatpush1.msra.mxu0 0.0
  %4077 = vmatprep.subr.mxu0 0.0
  %4078 = vmatpush1.msra.mxu0 0.0
  %4079 = vmatprep.subr.mxu0 0.0
  %4080 = vmatpush1.msra.mxu0 0.0
  %4081 = vmatprep.subr.mxu0 0.0
  %4082 = vmatpush1.msra.mxu0 0.0
  %4083 = vmatprep.subr.mxu0 0.0
  %4084 = vmatpush1.msra.mxu0 0.0
  %4085 = vmatprep.subr.mxu0 0.0
  %4086 = vmatpush1.msra.mxu0 0.0
  %4087 = vmatprep.subr.mxu0 0.0
  %4088 = vmatpush1.msra.mxu0 0.0
  %4089 = vmatprep.subr.mxu0 0.0
  %4090 = vmatpush1.msra.mxu0 0.0
  %4091 = vmatprep.subr.mxu0 0.0
  %4092 = vmatpush1.msra.mxu0 0.0
  %4093 = vmatprep.subr.mxu0 0.0
  %4094 = vmatpush1.msra.mxu0 0.0
  %4095 = vmatprep.subr.mxu0 0.0
  %4096 = vmatpush1.msra.mxu0 0.0
  %4097 = vmatprep.subr.mxu0 0.0
  %4098 = vmatpush1.msra.mxu0 0.0
  %4099 = vmatprep.subr.mxu0 0.0
  %4100 = vmatpush1.msra.mxu0 0.0
  %4101 = vmatprep.subr.mxu0 0.0
  %4102 = vmatpush1.msra.mxu0 0.0
  %4103 = vmatprep.subr.mxu0 0.0
  %4104 = vmatpush1.msra.mxu0 0.0
  %4105 = vmatprep.subr.mxu0 0.0
  %4106 = vmatpush1.msra.mxu0 0.0
  %4107 = vmatprep.subr.mxu0 0.0
  %4108 = vmatpush1.msra.mxu0 0.0
  %4109 = vmatprep.subr.mxu0 0.0
  %4110 = vmatpush1.msra.mxu0 0.0
  %4111 = vmatprep.subr.mxu0 0.0
  %4112 = vmatpush1.msra.mxu0 0.0
  %4113 = vmatprep.subr.mxu0 0.0
  %4114 = vmatpush1.msra.mxu0 0.0
  %4115 = vmatprep.subr.mxu0 0.0
  %4116 = vmatpush1.msra.mxu0 0.0
  %4117 = vmatprep.subr.mxu0 0.0
  %4118 = vmatpush1.msra.mxu0 0.0
  %4119 = vmatprep.mubr.f32.mxu0 0.0
  %v4120 = vand.u32 %v3573, 4294901760
  %4121 = vmatmul.mubr.f32.gmra.mrb[0].mxu0 %v4120
  %v4122 = vpop.f32.mrb[0].mxu0
  %v4123 = vadd.f32 %v4040, %v4122
  %v4124 = vpop.f32.mrb[0].mxu0
  %4125 = vmatprep.mubr.f32.mxu0 0.0
  %v4126 = vand.u32 %v3576, 4294901760
  %4127 = vmatmul.mubr.f32.gmra.mrb[0].mxu0 %v4126
  %v4128 = vpop.f32.mrb[0].mxu0
  %v4129 = vadd.f32 %v4046, %v4128
  %v4130 = vpop.f32.mrb[0].mxu0
  %4131 = vdwg.mxu0
  %v4132 = vld [vmem:[%s25] sm:$0xff]
  %v4134 = vsel %vm938, %v4132, 0
  %4136 = vmatprep.subr.mxu0 0.0
  %v4137 = vand.u32 %v4123, 4294901760
  %4138 = vmatpush1.msra.mxu0 %v4137
  %4139 = vmatprep.subr.mxu0 0.0
  %v4140 = vand.u32 %v4129, 4294901760
  %4141 = vmatpush1.msra.mxu0 %v4140
  %4142 = vmatprep.subr.mxu0 0.0
  %4143 = vmatpush1.msra.mxu0 0.0
  %4144 = vmatprep.subr.mxu0 0.0
  %4145 = vmatpush1.msra.mxu0 0.0
  %4146 = vmatprep.subr.mxu0 0.0
  %4147 = vmatpush1.msra.mxu0 0.0
  %4148 = vmatprep.subr.mxu0 0.0
  %4149 = vmatpush1.msra.mxu0 0.0
  %4150 = vmatprep.subr.mxu0 0.0
  %4151 = vmatpush1.msra.mxu0 0.0
  %4152 = vmatprep.subr.mxu0 0.0
  %4153 = vmatpush1.msra.mxu0 0.0
  %4154 = vmatprep.subr.mxu0 0.0
  %4155 = vmatpush1.msra.mxu0 0.0
  %4156 = vmatprep.subr.mxu0 0.0
  %4157 = vmatpush1.msra.mxu0 0.0
  %4158 = vmatprep.subr.mxu0 0.0
  %4159 = vmatpush1.msra.mxu0 0.0
  %4160 = vmatprep.subr.mxu0 0.0
  %4161 = vmatpush1.msra.mxu0 0.0
  %4162 = vmatprep.subr.mxu0 0.0
  %4163 = vmatpush1.msra.mxu0 0.0
  %4164 = vmatprep.subr.mxu0 0.0
  %4165 = vmatpush1.msra.mxu0 0.0
  %4166 = vmatprep.subr.mxu0 0.0
  %4167 = vmatpush1.msra.mxu0 0.0
  %4168 = vmatprep.subr.mxu0 0.0
  %4169 = vmatpush1.msra.mxu0 0.0
  %4170 = vmatprep.subr.mxu0 0.0
  %4171 = vmatpush1.msra.mxu0 0.0
  %4172 = vmatprep.subr.mxu0 0.0
  %4173 = vmatpush1.msra.mxu0 0.0
  %4174 = vmatprep.subr.mxu0 0.0
  %4175 = vmatpush1.msra.mxu0 0.0
  %4176 = vmatprep.subr.mxu0 0.0
  %4177 = vmatpush1.msra.mxu0 0.0
  %4178 = vmatprep.subr.mxu0 0.0
  %4179 = vmatpush1.msra.mxu0 0.0
  %4180 = vmatprep.subr.mxu0 0.0
  %4181 = vmatpush1.msra.mxu0 0.0
  %4182 = vmatprep.subr.mxu0 0.0
  %4183 = vmatpush1.msra.mxu0 0.0
  %4184 = vmatprep.subr.mxu0 0.0
  %4185 = vmatpush1.msra.mxu0 0.0
  %4186 = vmatprep.subr.mxu0 0.0
  %4187 = vmatpush1.msra.mxu0 0.0
  %4188 = vmatprep.subr.mxu0 0.0
  %4189 = vmatpush1.msra.mxu0 0.0
  %4190 = vmatprep.subr.mxu0 0.0
  %4191 = vmatpush1.msra.mxu0 0.0
  %4192 = vmatprep.subr.mxu0 0.0
  %4193 = vmatpush1.msra.mxu0 0.0
  %4194 = vmatprep.subr.mxu0 0.0
  %4195 = vmatpush1.msra.mxu0 0.0
  %4196 = vmatprep.subr.mxu0 0.0
  %4197 = vmatpush1.msra.mxu0 0.0
  %4198 = vmatprep.subr.mxu0 0.0
  %4199 = vmatpush1.msra.mxu0 0.0
  %4200 = vmatprep.subr.mxu0 0.0
  %4201 = vmatpush1.msra.mxu0 0.0
  %4202 = vmatprep.mubr.f32.mxu0 0.0
  %v4203 = vand.u32 %v4134, 4294901760
  %v4204 = vsub.f32 %v4134, %v4203
  %v4205 = vand.u32 %v4204, 4294901760
  %v4206 = vsub.f32 %v4204, %v4205
  %v4207 = vand.u32 %v4206, 4294901760
  %4208 = vmatmul.mubr.f32.gmra.mrb[0].mxu0 %v4207
  %v4209 = vpop.f32.mrb[0].mxu0
  %v4210 = vadd.f32 0.0, %v4209
  %v4211 = vpop.f32.mrb[0].mxu0
  %4212 = vdwg.mxu0
  %4213 = vmatprep.subr.mxu0 0.0
  %v4214 = vand.u32 %v4123, 4294901760
  %v4215 = vsub.f32 %v4123, %v4214
  %v4216 = vand.u32 %v4215, 4294901760
  %v4217 = vsub.f32 %v4215, %v4216
  %v4218 = vand.u32 %v4217, 4294901760
  %4219 = vmatpush1.msra.mxu0 %v4218
  %4220 = vmatprep.subr.mxu0 0.0
  %v4221 = vand.u32 %v4129, 4294901760
  %v4222 = vsub.f32 %v4129, %v4221
  %v4223 = vand.u32 %v4222, 4294901760
  %v4224 = vsub.f32 %v4222, %v4223
  %v4225 = vand.u32 %v4224, 4294901760
  %4226 = vmatpush1.msra.mxu0 %v4225
  %4227 = vmatprep.subr.mxu0 0.0
  %4228 = vmatpush1.msra.mxu0 0.0
  %4229 = vmatprep.subr.mxu0 0.0
  %4230 = vmatpush1.msra.mxu0 0.0
  %4231 = vmatprep.subr.mxu0 0.0
  %4232 = vmatpush1.msra.mxu0 0.0
  %4233 = vmatprep.subr.mxu0 0.0
  %4234 = vmatpush1.msra.mxu0 0.0
  %4235 = vmatprep.subr.mxu0 0.0
  %4236 = vmatpush1.msra.mxu0 0.0
  %4237 = vmatprep.subr.mxu0 0.0
  %4238 = vmatpush1.msra.mxu0 0.0
  %4239 = vmatprep.subr.mxu0 0.0
  %4240 = vmatpush1.msra.mxu0 0.0
  %4241 = vmatprep.subr.mxu0 0.0
  %4242 = vmatpush1.msra.mxu0 0.0
  %4243 = vmatprep.subr.mxu0 0.0
  %4244 = vmatpush1.msra.mxu0 0.0
  %4245 = vmatprep.subr.mxu0 0.0
  %4246 = vmatpush1.msra.mxu0 0.0
  %4247 = vmatprep.subr.mxu0 0.0
  %4248 = vmatpush1.msra.mxu0 0.0
  %4249 = vmatprep.subr.mxu0 0.0
  %4250 = vmatpush1.msra.mxu0 0.0
  %4251 = vmatprep.subr.mxu0 0.0
  %4252 = vmatpush1.msra.mxu0 0.0
  %4253 = vmatprep.subr.mxu0 0.0
  %4254 = vmatpush1.msra.mxu0 0.0
  %4255 = vmatprep.subr.mxu0 0.0
  %4256 = vmatpush1.msra.mxu0 0.0
  %4257 = vmatprep.subr.mxu0 0.0
  %4258 = vmatpush1.msra.mxu0 0.0
  %4259 = vmatprep.subr.mxu0 0.0
  %4260 = vmatpush1.msra.mxu0 0.0
  %4261 = vmatprep.subr.mxu0 0.0
  %4262 = vmatpush1.msra.mxu0 0.0
  %4263 = vmatprep.subr.mxu0 0.0
  %4264 = vmatpush1.msra.mxu0 0.0
  %4265 = vmatprep.subr.mxu0 0.0
  %4266 = vmatpush1.msra.mxu0 0.0
  %4267 = vmatprep.subr.mxu0 0.0
  %4268 = vmatpush1.msra.mxu0 0.0
  %4269 = vmatprep.subr.mxu0 0.0
  %4270 = vmatpush1.msra.mxu0 0.0
  %4271 = vmatprep.subr.mxu0 0.0
  %4272 = vmatpush1.msra.mxu0 0.0
  %4273 = vmatprep.subr.mxu0 0.0
  %4274 = vmatpush1.msra.mxu0 0.0
  %4275 = vmatprep.subr.mxu0 0.0
  %4276 = vmatpush1.msra.mxu0 0.0
  %4277 = vmatprep.subr.mxu0 0.0
  %4278 = vmatpush1.msra.mxu0 0.0
  %4279 = vmatprep.subr.mxu0 0.0
  %4280 = vmatpush1.msra.mxu0 0.0
  %4281 = vmatprep.subr.mxu0 0.0
  %4282 = vmatpush1.msra.mxu0 0.0
  %4283 = vmatprep.subr.mxu0 0.0
  %4284 = vmatpush1.msra.mxu0 0.0
  %4285 = vmatprep.subr.mxu0 0.0
  %4286 = vmatpush1.msra.mxu0 0.0
  %4287 = vmatprep.mubr.f32.mxu0 0.0
  %v4288 = vand.u32 %v4134, 4294901760
  %4289 = vmatmul.mubr.f32.gmra.mrb[0].mxu0 %v4288
  %v4290 = vpop.f32.mrb[0].mxu0
  %v4291 = vadd.f32 %v4210, %v4290
  %v4292 = vpop.f32.mrb[0].mxu0
  %4293 = vdwg.mxu0
  %4294 = vmatprep.subr.mxu0 0.0
  %v4295 = vand.u32 %v4123, 4294901760
  %v4296 = vsub.f32 %v4123, %v4295
  %4297 = vmatpush1.msra.mxu0 %v4296
  %4298 = vmatprep.subr.mxu0 0.0
  %v4299 = vand.u32 %v4129, 4294901760
  %v4300 = vsub.f32 %v4129, %v4299
  %4301 = vmatpush1.msra.mxu0 %v4300
  %4302 = vmatprep.subr.mxu0 0.0
  %4303 = vmatpush1.msra.mxu0 0.0
  %4304 = vmatprep.subr.mxu0 0.0
  %4305 = vmatpush1.msra.mxu0 0.0
  %4306 = vmatprep.subr.mxu0 0.0
  %4307 = vmatpush1.msra.mxu0 0.0
  %4308 = vmatprep.subr.mxu0 0.0
  %4309 = vmatpush1.msra.mxu0 0.0
  %4310 = vmatprep.subr.mxu0 0.0
  %4311 = vmatpush1.msra.mxu0 0.0
  %4312 = vmatprep.subr.mxu0 0.0
  %4313 = vmatpush1.msra.mxu0 0.0
  %4314 = vmatprep.subr.mxu0 0.0
  %4315 = vmatpush1.msra.mxu0 0.0
  %4316 = vmatprep.subr.mxu0 0.0
  %4317 = vmatpush1.msra.mxu0 0.0
  %4318 = vmatprep.subr.mxu0 0.0
  %4319 = vmatpush1.msra.mxu0 0.0
  %4320 = vmatprep.subr.mxu0 0.0
  %4321 = vmatpush1.msra.mxu0 0.0
  %4322 = vmatprep.subr.mxu0 0.0
  %4323 = vmatpush1.msra.mxu0 0.0
  %4324 = vmatprep.subr.mxu0 0.0
  %4325 = vmatpush1.msra.mxu0 0.0
  %4326 = vmatprep.subr.mxu0 0.0
  %4327 = vmatpush1.msra.mxu0 0.0
  %4328 = vmatprep.subr.mxu0 0.0
  %4329 = vmatpush1.msra.mxu0 0.0
  %4330 = vmatprep.subr.mxu0 0.0
  %4331 = vmatpush1.msra.mxu0 0.0
  %4332 = vmatprep.subr.mxu0 0.0
  %4333 = vmatpush1.msra.mxu0 0.0
  %4334 = vmatprep.subr.mxu0 0.0
  %4335 = vmatpush1.msra.mxu0 0.0
  %4336 = vmatprep.subr.mxu0 0.0
  %4337 = vmatpush1.msra.mxu0 0.0
  %4338 = vmatprep.subr.mxu0 0.0
  %4339 = vmatpush1.msra.mxu0 0.0
  %4340 = vmatprep.subr.mxu0 0.0
  %4341 = vmatpush1.msra.mxu0 0.0
  %4342 = vmatprep.subr.mxu0 0.0
  %4343 = vmatpush1.msra.mxu0 0.0
  %4344 = vmatprep.subr.mxu0 0.0
  %4345 = vmatpush1.msra.mxu0 0.0
  %4346 = vmatprep.subr.mxu0 0.0
  %4347 = vmatpush1.msra.mxu0 0.0
  %4348 = vmatprep.subr.mxu0 0.0
  %4349 = vmatpush1.msra.mxu0 0.0
  %4350 = vmatprep.subr.mxu0 0.0
  %4351 = vmatpush1.msra.mxu0 0.0
  %4352 = vmatprep.subr.mxu0 0.0
  %4353 = vmatpush1.msra.mxu0 0.0
  %4354 = vmatprep.subr.mxu0 0.0
  %4355 = vmatpush1.msra.mxu0 0.0
  %4356 = vmatprep.subr.mxu0 0.0
  %4357 = vmatpush1.msra.mxu0 0.0
  %4358 = vmatprep.subr.mxu0 0.0
  %4359 = vmatpush1.msra.mxu0 0.0
  %4360 = vmatprep.subr.mxu0 0.0
  %4361 = vmatpush1.msra.mxu0 0.0
  %4362 = vmatprep.mubr.f32.mxu0 0.0
  %v4363 = vand.u32 %v4134, 4294901760
  %v4364 = vsub.f32 %v4134, %v4363
  %4365 = vmatmul.mubr.f32.gmra.mrb[0].mxu0 %v4364
  %v4366 = vpop.f32.mrb[0].mxu0
  %v4367 = vadd.f32 %v4291, %v4366
  %v4368 = vpop.f32.mrb[0].mxu0
  %4369 = vdwg.mxu0
  %4370 = vmatprep.subr.mxu0 0.0
  %v4371 = vand.u32 %v4123, 4294901760
  %4372 = vmatpush1.msra.mxu0 %v4371
  %4373 = vmatprep.subr.mxu0 0.0
  %v4374 = vand.u32 %v4129, 4294901760
  %4375 = vmatpush1.msra.mxu0 %v4374
  %4376 = vmatprep.subr.mxu0 0.0
  %4377 = vmatpush1.msra.mxu0 0.0
  %4378 = vmatprep.subr.mxu0 0.0
  %4379 = vmatpush1.msra.mxu0 0.0
  %4380 = vmatprep.subr.mxu0 0.0
  %4381 = vmatpush1.msra.mxu0 0.0
  %4382 = vmatprep.subr.mxu0 0.0
  %4383 = vmatpush1.msra.mxu0 0.0
  %4384 = vmatprep.subr.mxu0 0.0
  %4385 = vmatpush1.msra.mxu0 0.0
  %4386 = vmatprep.subr.mxu0 0.0
  %4387 = vmatpush1.msra.mxu0 0.0
  %4388 = vmatprep.subr.mxu0 0.0
  %4389 = vmatpush1.msra.mxu0 0.0
  %4390 = vmatprep.subr.mxu0 0.0
  %4391 = vmatpush1.msra.mxu0 0.0
  %4392 = vmatprep.subr.mxu0 0.0
  %4393 = vmatpush1.msra.mxu0 0.0
  %4394 = vmatprep.subr.mxu0 0.0
  %4395 = vmatpush1.msra.mxu0 0.0
  %4396 = vmatprep.subr.mxu0 0.0
  %4397 = vmatpush1.msra.mxu0 0.0
  %4398 = vmatprep.subr.mxu0 0.0
  %4399 = vmatpush1.msra.mxu0 0.0
  %4400 = vmatprep.subr.mxu0 0.0
  %4401 = vmatpush1.msra.mxu0 0.0
  %4402 = vmatprep.subr.mxu0 0.0
  %4403 = vmatpush1.msra.mxu0 0.0
  %4404 = vmatprep.subr.mxu0 0.0
  %4405 = vmatpush1.msra.mxu0 0.0
  %4406 = vmatprep.subr.mxu0 0.0
  %4407 = vmatpush1.msra.mxu0 0.0
  %4408 = vmatprep.subr.mxu0 0.0
  %4409 = vmatpush1.msra.mxu0 0.0
  %4410 = vmatprep.subr.mxu0 0.0
  %4411 = vmatpush1.msra.mxu0 0.0
  %4412 = vmatprep.subr.mxu0 0.0
  %4413 = vmatpush1.msra.mxu0 0.0
  %4414 = vmatprep.subr.mxu0 0.0
  %4415 = vmatpush1.msra.mxu0 0.0
  %4416 = vmatprep.subr.mxu0 0.0
  %4417 = vmatpush1.msra.mxu0 0.0
  %4418 = vmatprep.subr.mxu0 0.0
  %4419 = vmatpush1.msra.mxu0 0.0
  %4420 = vmatprep.subr.mxu0 0.0
  %4421 = vmatpush1.msra.mxu0 0.0
  %4422 = vmatprep.subr.mxu0 0.0
  %4423 = vmatpush1.msra.mxu0 0.0
  %4424 = vmatprep.subr.mxu0 0.0
  %4425 = vmatpush1.msra.mxu0 0.0
  %4426 = vmatprep.subr.mxu0 0.0
  %4427 = vmatpush1.msra.mxu0 0.0
  %4428 = vmatprep.subr.mxu0 0.0
  %4429 = vmatpush1.msra.mxu0 0.0
  %4430 = vmatprep.subr.mxu0 0.0
  %4431 = vmatpush1.msra.mxu0 0.0
  %4432 = vmatprep.subr.mxu0 0.0
  %4433 = vmatpush1.msra.mxu0 0.0
  %4434 = vmatprep.subr.mxu0 0.0
  %4435 = vmatpush1.msra.mxu0 0.0
  %4436 = vmatprep.mubr.f32.mxu0 0.0
  %v4437 = vand.u32 %v4134, 4294901760
  %v4438 = vsub.f32 %v4134, %v4437
  %v4439 = vand.u32 %v4438, 4294901760
  %4440 = vmatmul.mubr.f32.gmra.mrb[0].mxu0 %v4439
  %v4441 = vpop.f32.mrb[0].mxu0
  %v4442 = vadd.f32 %v4367, %v4441
  %v4443 = vpop.f32.mrb[0].mxu0
  %4444 = vdwg.mxu0
  %4445 = vmatprep.subr.mxu0 0.0
  %v4446 = vand.u32 %v4123, 4294901760
  %v4447 = vsub.f32 %v4123, %v4446
  %v4448 = vand.u32 %v4447, 4294901760
  %4449 = vmatpush1.msra.mxu0 %v4448
  %4450 = vmatprep.subr.mxu0 0.0
  %v4451 = vand.u32 %v4129, 4294901760
  %v4452 = vsub.f32 %v4129, %v4451
  %v4453 = vand.u32 %v4452, 4294901760
  %4454 = vmatpush1.msra.mxu0 %v4453
  %4455 = vmatprep.subr.mxu0 0.0
  %4456 = vmatpush1.msra.mxu0 0.0
  %4457 = vmatprep.subr.mxu0 0.0
  %4458 = vmatpush1.msra.mxu0 0.0
  %4459 = vmatprep.subr.mxu0 0.0
  %4460 = vmatpush1.msra.mxu0 0.0
  %4461 = vmatprep.subr.mxu0 0.0
  %4462 = vmatpush1.msra.mxu0 0.0
  %4463 = vmatprep.subr.mxu0 0.0
  %4464 = vmatpush1.msra.mxu0 0.0
  %4465 = vmatprep.subr.mxu0 0.0
  %4466 = vmatpush1.msra.mxu0 0.0
  %4467 = vmatprep.subr.mxu0 0.0
  %4468 = vmatpush1.msra.mxu0 0.0
  %4469 = vmatprep.subr.mxu0 0.0
  %4470 = vmatpush1.msra.mxu0 0.0
  %4471 = vmatprep.subr.mxu0 0.0
  %4472 = vmatpush1.msra.mxu0 0.0
  %4473 = vmatprep.subr.mxu0 0.0
  %4474 = vmatpush1.msra.mxu0 0.0
  %4475 = vmatprep.subr.mxu0 0.0
  %4476 = vmatpush1.msra.mxu0 0.0
  %4477 = vmatprep.subr.mxu0 0.0
  %4478 = vmatpush1.msra.mxu0 0.0
  %4479 = vmatprep.subr.mxu0 0.0
  %4480 = vmatpush1.msra.mxu0 0.0
  %4481 = vmatprep.subr.mxu0 0.0
  %4482 = vmatpush1.msra.mxu0 0.0
  %4483 = vmatprep.subr.mxu0 0.0
  %4484 = vmatpush1.msra.mxu0 0.0
  %4485 = vmatprep.subr.mxu0 0.0
  %4486 = vmatpush1.msra.mxu0 0.0
  %4487 = vmatprep.subr.mxu0 0.0
  %4488 = vmatpush1.msra.mxu0 0.0
  %4489 = vmatprep.subr.mxu0 0.0
  %4490 = vmatpush1.msra.mxu0 0.0
  %4491 = vmatprep.subr.mxu0 0.0
  %4492 = vmatpush1.msra.mxu0 0.0
  %4493 = vmatprep.subr.mxu0 0.0
  %4494 = vmatpush1.msra.mxu0 0.0
  %4495 = vmatprep.subr.mxu0 0.0
  %4496 = vmatpush1.msra.mxu0 0.0
  %4497 = vmatprep.subr.mxu0 0.0
  %4498 = vmatpush1.msra.mxu0 0.0
  %4499 = vmatprep.subr.mxu0 0.0
  %4500 = vmatpush1.msra.mxu0 0.0
  %4501 = vmatprep.subr.mxu0 0.0
  %4502 = vmatpush1.msra.mxu0 0.0
  %4503 = vmatprep.subr.mxu0 0.0
  %4504 = vmatpush1.msra.mxu0 0.0
  %4505 = vmatprep.subr.mxu0 0.0
  %4506 = vmatpush1.msra.mxu0 0.0
  %4507 = vmatprep.subr.mxu0 0.0
  %4508 = vmatpush1.msra.mxu0 0.0
  %4509 = vmatprep.subr.mxu0 0.0
  %4510 = vmatpush1.msra.mxu0 0.0
  %4511 = vmatprep.subr.mxu0 0.0
  %4512 = vmatpush1.msra.mxu0 0.0
  %4513 = vmatprep.subr.mxu0 0.0
  %4514 = vmatpush1.msra.mxu0 0.0
  %4515 = vmatprep.mubr.f32.mxu0 0.0
  %v4516 = vand.u32 %v4134, 4294901760
  %4517 = vmatmul.mubr.f32.gmra.mrb[0].mxu0 %v4516
  %v4518 = vpop.f32.mrb[0].mxu0
  %v4519 = vadd.f32 %v4442, %v4518
  %v4520 = vpop.f32.mrb[0].mxu0
  %4521 = vdwg.mxu0
  %4522 = vmatprep.subr.mxu0 0.0
  %v4523 = vand.u32 %v4123, 4294901760
  %4524 = vmatpush1.msra.mxu0 %v4523
  %4525 = vmatprep.subr.mxu0 0.0
  %v4526 = vand.u32 %v4129, 4294901760
  %4527 = vmatpush1.msra.mxu0 %v4526
  %4528 = vmatprep.subr.mxu0 0.0
  %4529 = vmatpush1.msra.mxu0 0.0
  %4530 = vmatprep.subr.mxu0 0.0
  %4531 = vmatpush1.msra.mxu0 0.0
  %4532 = vmatprep.subr.mxu0 0.0
  %4533 = vmatpush1.msra.mxu0 0.0
  %4534 = vmatprep.subr.mxu0 0.0
  %4535 = vmatpush1.msra.mxu0 0.0
  %4536 = vmatprep.subr.mxu0 0.0
  %4537 = vmatpush1.msra.mxu0 0.0
  %4538 = vmatprep.subr.mxu0 0.0
  %4539 = vmatpush1.msra.mxu0 0.0
  %4540 = vmatprep.subr.mxu0 0.0
  %4541 = vmatpush1.msra.mxu0 0.0
  %4542 = vmatprep.subr.mxu0 0.0
  %4543 = vmatpush1.msra.mxu0 0.0
  %4544 = vmatprep.subr.mxu0 0.0
  %4545 = vmatpush1.msra.mxu0 0.0
  %4546 = vmatprep.subr.mxu0 0.0
  %4547 = vmatpush1.msra.mxu0 0.0
  %4548 = vmatprep.subr.mxu0 0.0
  %4549 = vmatpush1.msra.mxu0 0.0
  %4550 = vmatprep.subr.mxu0 0.0
  %4551 = vmatpush1.msra.mxu0 0.0
  %4552 = vmatprep.subr.mxu0 0.0
  %4553 = vmatpush1.msra.mxu0 0.0
  %4554 = vmatprep.subr.mxu0 0.0
  %4555 = vmatpush1.msra.mxu0 0.0
  %4556 = vmatprep.subr.mxu0 0.0
  %4557 = vmatpush1.msra.mxu0 0.0
  %4558 = vmatprep.subr.mxu0 0.0
  %4559 = vmatpush1.msra.mxu0 0.0
  %4560 = vmatprep.subr.mxu0 0.0
  %4561 = vmatpush1.msra.mxu0 0.0
  %4562 = vmatprep.subr.mxu0 0.0
  %4563 = vmatpush1.msra.mxu0 0.0
  %4564 = vmatprep.subr.mxu0 0.0
  %4565 = vmatpush1.msra.mxu0 0.0
  %4566 = vmatprep.subr.mxu0 0.0
  %4567 = vmatpush1.msra.mxu0 0.0
  %4568 = vmatprep.subr.mxu0 0.0
  %4569 = vmatpush1.msra.mxu0 0.0
  %4570 = vmatprep.subr.mxu0 0.0
  %4571 = vmatpush1.msra.mxu0 0.0
  %4572 = vmatprep.subr.mxu0 0.0
  %4573 = vmatpush1.msra.mxu0 0.0
  %4574 = vmatprep.subr.mxu0 0.0
  %4575 = vmatpush1.msra.mxu0 0.0
  %4576 = vmatprep.subr.mxu0 0.0
  %4577 = vmatpush1.msra.mxu0 0.0
  %4578 = vmatprep.subr.mxu0 0.0
  %4579 = vmatpush1.msra.mxu0 0.0
  %4580 = vmatprep.subr.mxu0 0.0
  %4581 = vmatpush1.msra.mxu0 0.0
  %4582 = vmatprep.subr.mxu0 0.0
  %4583 = vmatpush1.msra.mxu0 0.0
  %4584 = vmatprep.subr.mxu0 0.0
  %4585 = vmatpush1.msra.mxu0 0.0
  %4586 = vmatprep.subr.mxu0 0.0
  %4587 = vmatpush1.msra.mxu0 0.0
  %4588 = vmatprep.mubr.f32.mxu0 0.0
  %v4589 = vand.u32 %v4134, 4294901760
  %4590 = vmatmul.mubr.f32.gmra.mrb[0].mxu0 %v4589
  %v4591 = vpop.f32.mrb[0].mxu0
  %v4592 = vadd.f32 %v4519, %v4591
  %v4593 = vpop.f32.mrb[0].mxu0
  %4594 = vdwg.mxu0
  %vm4595 = vcmp.lt.s32.totalorder %v131, 0
  %v4596 = vsub.s32 0, %v131
  %v4597 = vsel %vm4595, %v4596, %v131
  %v4598 = vshrl.u32 %v4597, 2
  %v4599 = vand.u32 %v4597, 3
  %v4600 = vsub.s32 0, %v4599
  %v4601 = vsel %vm4595, %v4600, %v4599
  %vm4602 = vcmp.ne.s32.totalorder %v4601, 0
  %vm4603 = vcmp.lt.s32.totalorder %v4601, 0
  %vm4604 = vmand %vm4603, %vm4602
  %v4605 = vadd.s32 %v4601, 4
  %v4606 = vsel %vm4604, %v4605, %v4601
  %vm4607 = vcmp.ne.s32.totalorder %v4606, 0
  %vm4608 = vcmp.ne.s32.totalorder %v4606, 3
  %v4610 = vrot.slane %v4592, 7
  %v4612 = vsel %vm195, 0.0, %v4610
  %v4613 = vsel %vm4607, %v4612, 0.0
  %v4614 = vrot.slane %v4592, 1
  %v4616 = vsel %vm212, %v4614, 0.0
  %v4617 = vsel %vm4608, %v4616, 0.0
  %v4618 = vld [vmem:[%s27] sm:$0xff]
  %v4619 = vld [vmem:[%s27 + $0x8] sm:$0xff]
  %v4620 = vld [vmem:[%s27 + $0x10] sm:$0xff]
  %v4621 = vld [vmem:[%s27 + $0x18] sm:$0xff]
  %v4622 = vld [vmem:[%s27 + $0x20] sm:$0xff]
  %v4623 = vld [vmem:[%s27 + $0x28] sm:$0xff]
  %v4624 = vld [vmem:[#allocation2] sm:$0x1]
  %4625 = vrot.lane.b32.xlu0 %v4592, 16
  %v4626 = vpop.permute.xlu0 %4625
  %4629 = vrot.lane.b32.xlu0 %v4617, 32
  %v4630 = vpop.permute.xlu0 %4629
  %v4632 = vsel %vm938, %v4613, %v4626
  %v4633 = vsel %vm943, %v4632, %v4630
  %v4635 = vlaneseq
  %v4636 = vshrl.u32 %v4635, 7
  %v4637 = vsub.s32 0, %v4636
  %v4638 = vrot.slane %v4624, %v4637
  %v4641 = vsel %vm954, %v4633, 0
  %4643 = vmatprep.subr.mxu0 0.0
  %v4644 = vand.u32 %v4618, 4294901760
  %4645 = vmatpush1.msra.mxu0 %v4644
  %4646 = vmatprep.subr.mxu0 0.0
  %v4647 = vand.u32 %v4619, 4294901760
  %4648 = vmatpush1.msra.mxu0 %v4647
  %4649 = vmatprep.subr.mxu0 0.0
  %v4650 = vand.u32 %v4620, 4294901760
  %4651 = vmatpush1.msra.mxu0 %v4650
  %4652 = vmatprep.subr.mxu0 0.0
  %v4653 = vand.u32 %v4621, 4294901760
  %4654 = vmatpush1.msra.mxu0 %v4653
  %4655 = vmatprep.subr.mxu0 0.0
  %v4656 = vand.u32 %v4622, 4294901760
  %4657 = vmatpush1.msra.mxu0 %v4656
  %4658 = vmatprep.subr.mxu0 0.0
  %v4659 = vand.u32 %v4623, 4294901760
  %4660 = vmatpush1.msra.mxu0 %v4659
  %4661 = vmatprep.subr.mxu0 0.0
  %4662 = vmatpush1.msra.mxu0 0.0
  %4663 = vmatprep.subr.mxu0 0.0
  %4664 = vmatpush1.msra.mxu0 0.0
  %4665 = vmatprep.subr.mxu0 0.0
  %4666 = vmatpush1.msra.mxu0 0.0
  %4667 = vmatprep.subr.mxu0 0.0
  %4668 = vmatpush1.msra.mxu0 0.0
  %4669 = vmatprep.subr.mxu0 0.0
  %4670 = vmatpush1.msra.mxu0 0.0
  %4671 = vmatprep.subr.mxu0 0.0
  %4672 = vmatpush1.msra.mxu0 0.0
  %4673 = vmatprep.subr.mxu0 0.0
  %4674 = vmatpush1.msra.mxu0 0.0
  %4675 = vmatprep.subr.mxu0 0.0
  %4676 = vmatpush1.msra.mxu0 0.0
  %4677 = vmatprep.subr.mxu0 0.0
  %4678 = vmatpush1.msra.mxu0 0.0
  %4679 = vmatprep.subr.mxu0 0.0
  %4680 = vmatpush1.msra.mxu0 0.0
  %4681 = vmatprep.subr.mxu0 0.0
  %4682 = vmatpush1.msra.mxu0 0.0
  %4683 = vmatprep.subr.mxu0 0.0
  %4684 = vmatpush1.msra.mxu0 0.0
  %4685 = vmatprep.subr.mxu0 0.0
  %4686 = vmatpush1.msra.mxu0 0.0
  %4687 = vmatprep.subr.mxu0 0.0
  %4688 = vmatpush1.msra.mxu0 0.0
  %4689 = vmatprep.subr.mxu0 0.0
  %4690 = vmatpush1.msra.mxu0 0.0
  %4691 = vmatprep.subr.mxu0 0.0
  %4692 = vmatpush1.msra.mxu0 0.0
  %4693 = vmatprep.subr.mxu0 0.0
  %4694 = vmatpush1.msra.mxu0 0.0
  %4695 = vmatprep.subr.mxu0 0.0
  %4696 = vmatpush1.msra.mxu0 0.0
  %4697 = vmatprep.subr.mxu0 0.0
  %4698 = vmatpush1.msra.mxu0 0.0
  %4699 = vmatprep.subr.mxu0 0.0
  %4700 = vmatpush1.msra.mxu0 0.0
  %4701 = vmatprep.subr.mxu0 0.0
  %4702 = vmatpush1.msra.mxu0 0.0
  %4703 = vmatprep.subr.mxu0 0.0
  %4704 = vmatpush1.msra.mxu0 0.0
  %4705 = vmatprep.subr.mxu0 0.0
  %4706 = vmatpush1.msra.mxu0 0.0
  %4707 = vmatprep.subr.mxu0 0.0
  %4708 = vmatpush1.msra.mxu0 0.0
  %4709 = vmatprep.subr.mxu0 0.0
  %4710 = vmatpush1.msra.mxu0 0.0
  %4711 = vmatprep.subr.mxu0 0.0
  %4712 = vmatpush1.msra.mxu0 0.0
  %4713 = vmatprep.mubr.f32.mxu0 0.0
  %v4714 = vand.u32 %v4641, 4294901760
  %v4715 = vsub.f32 %v4641, %v4714
  %v4716 = vand.u32 %v4715, 4294901760
  %v4717 = vsub.f32 %v4715, %v4716
  %v4718 = vand.u32 %v4717, 4294901760
  %4719 = vmatmul.mubr.f32.gmra.mrb[0].mxu0 %v4718
  %v4720 = vpop.f32.mrb[0].mxu0
  %v4721 = vadd.f32 %v4638, %v4720
  %v4722 = vpop.f32.mrb[0].mxu0
  %4723 = vdwg.mxu0
  %4724 = vmatprep.subr.mxu0 0.0
  %v4725 = vand.u32 %v4618, 4294901760
  %v4726 = vsub.f32 %v4618, %v4725
  %v4727 = vand.u32 %v4726, 4294901760
  %v4728 = vsub.f32 %v4726, %v4727
  %v4729 = vand.u32 %v4728, 4294901760
  %4730 = vmatpush1.msra.mxu0 %v4729
  %4731 = vmatprep.subr.mxu0 0.0
  %v4732 = vand.u32 %v4619, 4294901760
  %v4733 = vsub.f32 %v4619, %v4732
  %v4734 = vand.u32 %v4733, 4294901760
  %v4735 = vsub.f32 %v4733, %v4734
  %v4736 = vand.u32 %v4735, 4294901760
  %4737 = vmatpush1.msra.mxu0 %v4736
  %4738 = vmatprep.subr.mxu0 0.0
  %v4739 = vand.u32 %v4620, 4294901760
  %v4740 = vsub.f32 %v4620, %v4739
  %v4741 = vand.u32 %v4740, 4294901760
  %v4742 = vsub.f32 %v4740, %v4741
  %v4743 = vand.u32 %v4742, 4294901760
  %4744 = vmatpush1.msra.mxu0 %v4743
  %4745 = vmatprep.subr.mxu0 0.0
  %v4746 = vand.u32 %v4621, 4294901760
  %v4747 = vsub.f32 %v4621, %v4746
  %v4748 = vand.u32 %v4747, 4294901760
  %v4749 = vsub.f32 %v4747, %v4748
  %v4750 = vand.u32 %v4749, 4294901760
  %4751 = vmatpush1.msra.mxu0 %v4750
  %4752 = vmatprep.subr.mxu0 0.0
  %v4753 = vand.u32 %v4622, 4294901760
  %v4754 = vsub.f32 %v4622, %v4753
  %v4755 = vand.u32 %v4754, 4294901760
  %v4756 = vsub.f32 %v4754, %v4755
  %v4757 = vand.u32 %v4756, 4294901760
  %4758 = vmatpush1.msra.mxu0 %v4757
  %4759 = vmatprep.subr.mxu0 0.0
  %v4760 = vand.u32 %v4623, 4294901760
  %v4761 = vsub.f32 %v4623, %v4760
  %v4762 = vand.u32 %v4761, 4294901760
  %v4763 = vsub.f32 %v4761, %v4762
  %v4764 = vand.u32 %v4763, 4294901760
  %4765 = vmatpush1.msra.mxu0 %v4764
  %4766 = vmatprep.subr.mxu0 0.0
  %4767 = vmatpush1.msra.mxu0 0.0
  %4768 = vmatprep.subr.mxu0 0.0
  %4769 = vmatpush1.msra.mxu0 0.0
  %4770 = vmatprep.subr.mxu0 0.0
  %4771 = vmatpush1.msra.mxu0 0.0
  %4772 = vmatprep.subr.mxu0 0.0
  %4773 = vmatpush1.msra.mxu0 0.0
  %4774 = vmatprep.subr.mxu0 0.0
  %4775 = vmatpush1.msra.mxu0 0.0
  %4776 = vmatprep.subr.mxu0 0.0
  %4777 = vmatpush1.msra.mxu0 0.0
  %4778 = vmatprep.subr.mxu0 0.0
  %4779 = vmatpush1.msra.mxu0 0.0
  %4780 = vmatprep.subr.mxu0 0.0
  %4781 = vmatpush1.msra.mxu0 0.0
  %4782 = vmatprep.subr.mxu0 0.0
  %4783 = vmatpush1.msra.mxu0 0.0
  %4784 = vmatprep.subr.mxu0 0.0
  %4785 = vmatpush1.msra.mxu0 0.0
  %4786 = vmatprep.subr.mxu0 0.0
  %4787 = vmatpush1.msra.mxu0 0.0
  %4788 = vmatprep.subr.mxu0 0.0
  %4789 = vmatpush1.msra.mxu0 0.0
  %4790 = vmatprep.subr.mxu0 0.0
  %4791 = vmatpush1.msra.mxu0 0.0
  %4792 = vmatprep.subr.mxu0 0.0
  %4793 = vmatpush1.msra.mxu0 0.0
  %4794 = vmatprep.subr.mxu0 0.0
  %4795 = vmatpush1.msra.mxu0 0.0
  %4796 = vmatprep.subr.mxu0 0.0
  %4797 = vmatpush1.msra.mxu0 0.0
  %4798 = vmatprep.subr.mxu0 0.0
  %4799 = vmatpush1.msra.mxu0 0.0
  %4800 = vmatprep.subr.mxu0 0.0
  %4801 = vmatpush1.msra.mxu0 0.0
  %4802 = vmatprep.subr.mxu0 0.0
  %4803 = vmatpush1.msra.mxu0 0.0
  %4804 = vmatprep.subr.mxu0 0.0
  %4805 = vmatpush1.msra.mxu0 0.0
  %4806 = vmatprep.subr.mxu0 0.0
  %4807 = vmatpush1.msra.mxu0 0.0
  %4808 = vmatprep.subr.mxu0 0.0
  %4809 = vmatpush1.msra.mxu0 0.0
  %4810 = vmatprep.subr.mxu0 0.0
  %4811 = vmatpush1.msra.mxu0 0.0
  %4812 = vmatprep.subr.mxu0 0.0
  %4813 = vmatpush1.msra.mxu0 0.0
  %4814 = vmatprep.subr.mxu0 0.0
  %4815 = vmatpush1.msra.mxu0 0.0
  %4816 = vmatprep.subr.mxu0 0.0
  %4817 = vmatpush1.msra.mxu0 0.0
  %4818 = vmatprep.mubr.f32.mxu0 0.0
  %v4819 = vand.u32 %v4641, 4294901760
  %4820 = vmatmul.mubr.f32.gmra.mrb[0].mxu0 %v4819
  %v4821 = vpop.f32.mrb[0].mxu0
  %v4822 = vadd.f32 %v4721, %v4821
  %v4823 = vpop.f32.mrb[0].mxu0
  %4824 = vdwg.mxu0
  %4825 = vmatprep.subr.mxu0 0.0
  %v4826 = vand.u32 %v4618, 4294901760
  %v4827 = vsub.f32 %v4618, %v4826
  %4828 = vmatpush1.msra.mxu0 %v4827
  %4829 = vmatprep.subr.mxu0 0.0
  %v4830 = vand.u32 %v4619, 4294901760
  %v4831 = vsub.f32 %v4619, %v4830
  %4832 = vmatpush1.msra.mxu0 %v4831
  %4833 = vmatprep.subr.mxu0 0.0
  %v4834 = vand.u32 %v4620, 4294901760
  %v4835 = vsub.f32 %v4620, %v4834
  %4836 = vmatpush1.msra.mxu0 %v4835
  %4837 = vmatprep.subr.mxu0 0.0
  %v4838 = vand.u32 %v4621, 4294901760
  %v4839 = vsub.f32 %v4621, %v4838
  %4840 = vmatpush1.msra.mxu0 %v4839
  %4841 = vmatprep.subr.mxu0 0.0
  %v4842 = vand.u32 %v4622, 4294901760
  %v4843 = vsub.f32 %v4622, %v4842
  %4844 = vmatpush1.msra.mxu0 %v4843
  %4845 = vmatprep.subr.mxu0 0.0
  %v4846 = vand.u32 %v4623, 4294901760
  %v4847 = vsub.f32 %v4623, %v4846
  %4848 = vmatpush1.msra.mxu0 %v4847
  %4849 = vmatprep.subr.mxu0 0.0
  %4850 = vmatpush1.msra.mxu0 0.0
  %4851 = vmatprep.subr.mxu0 0.0
  %4852 = vmatpush1.msra.mxu0 0.0
  %4853 = vmatprep.subr.mxu0 0.0
  %4854 = vmatpush1.msra.mxu0 0.0
  %4855 = vmatprep.subr.mxu0 0.0
  %4856 = vmatpush1.msra.mxu0 0.0
  %4857 = vmatprep.subr.mxu0 0.0
  %4858 = vmatpush1.msra.mxu0 0.0
  %4859 = vmatprep.subr.mxu0 0.0
  %4860 = vmatpush1.msra.mxu0 0.0
  %4861 = vmatprep.subr.mxu0 0.0
  %4862 = vmatpush1.msra.mxu0 0.0
  %4863 = vmatprep.subr.mxu0 0.0
  %4864 = vmatpush1.msra.mxu0 0.0
  %4865 = vmatprep.subr.mxu0 0.0
  %4866 = vmatpush1.msra.mxu0 0.0
  %4867 = vmatprep.subr.mxu0 0.0
  %4868 = vmatpush1.msra.mxu0 0.0
  %4869 = vmatprep.subr.mxu0 0.0
  %4870 = vmatpush1.msra.mxu0 0.0
  %4871 = vmatprep.subr.mxu0 0.0
  %4872 = vmatpush1.msra.mxu0 0.0
  %4873 = vmatprep.subr.mxu0 0.0
  %4874 = vmatpush1.msra.mxu0 0.0
  %4875 = vmatprep.subr.mxu0 0.0
  %4876 = vmatpush1.msra.mxu0 0.0
  %4877 = vmatprep.subr.mxu0 0.0
  %4878 = vmatpush1.msra.mxu0 0.0
  %4879 = vmatprep.subr.mxu0 0.0
  %4880 = vmatpush1.msra.mxu0 0.0
  %4881 = vmatprep.subr.mxu0 0.0
  %4882 = vmatpush1.msra.mxu0 0.0
  %4883 = vmatprep.subr.mxu0 0.0
  %4884 = vmatpush1.msra.mxu0 0.0
  %4885 = vmatprep.subr.mxu0 0.0
  %4886 = vmatpush1.msra.mxu0 0.0
  %4887 = vmatprep.subr.mxu0 0.0
  %4888 = vmatpush1.msra.mxu0 0.0
  %4889 = vmatprep.subr.mxu0 0.0
  %4890 = vmatpush1.msra.mxu0 0.0
  %4891 = vmatprep.subr.mxu0 0.0
  %4892 = vmatpush1.msra.mxu0 0.0
  %4893 = vmatprep.subr.mxu0 0.0
  %4894 = vmatpush1.msra.mxu0 0.0
  %4895 = vmatprep.subr.mxu0 0.0
  %4896 = vmatpush1.msra.mxu0 0.0
  %4897 = vmatprep.subr.mxu0 0.0
  %4898 = vmatpush1.msra.mxu0 0.0
  %4899 = vmatprep.subr.mxu0 0.0
  %4900 = vmatpush1.msra.mxu0 0.0
  %4901 = vmatprep.mubr.f32.mxu0 0.0
  %v4902 = vand.u32 %v4641, 4294901760
  %v4903 = vsub.f32 %v4641, %v4902
  %4904 = vmatmul.mubr.f32.gmra.mrb[0].mxu0 %v4903
  %v4905 = vpop.f32.mrb[0].mxu0
  %v4906 = vadd.f32 %v4822, %v4905
  %v4907 = vpop.f32.mrb[0].mxu0
  %4908 = vdwg.mxu0
  %4909 = vmatprep.subr.mxu0 0.0
  %v4910 = vand.u32 %v4618, 4294901760
  %4911 = vmatpush1.msra.mxu0 %v4910
  %4912 = vmatprep.subr.mxu0 0.0
  %v4913 = vand.u32 %v4619, 4294901760
  %4914 = vmatpush1.msra.mxu0 %v4913
  %4915 = vmatprep.subr.mxu0 0.0
  %v4916 = vand.u32 %v4620, 4294901760
  %4917 = vmatpush1.msra.mxu0 %v4916
  %4918 = vmatprep.subr.mxu0 0.0
  %v4919 = vand.u32 %v4621, 4294901760
  %4920 = vmatpush1.msra.mxu0 %v4919
  %4921 = vmatprep.subr.mxu0 0.0
  %v4922 = vand.u32 %v4622, 4294901760
  %4923 = vmatpush1.msra.mxu0 %v4922
  %4924 = vmatprep.subr.mxu0 0.0
  %v4925 = vand.u32 %v4623, 4294901760
  %4926 = vmatpush1.msra.mxu0 %v4925
  %4927 = vmatprep.subr.mxu0 0.0
  %4928 = vmatpush1.msra.mxu0 0.0
  %4929 = vmatprep.subr.mxu0 0.0
  %4930 = vmatpush1.msra.mxu0 0.0
  %4931 = vmatprep.subr.mxu0 0.0
  %4932 = vmatpush1.msra.mxu0 0.0
  %4933 = vmatprep.subr.mxu0 0.0
  %4934 = vmatpush1.msra.mxu0 0.0
  %4935 = vmatprep.subr.mxu0 0.0
  %4936 = vmatpush1.msra.mxu0 0.0
  %4937 = vmatprep.subr.mxu0 0.0
  %4938 = vmatpush1.msra.mxu0 0.0
  %4939 = vmatprep.subr.mxu0 0.0
  %4940 = vmatpush1.msra.mxu0 0.0
  %4941 = vmatprep.subr.mxu0 0.0
  %4942 = vmatpush1.msra.mxu0 0.0
  %4943 = vmatprep.subr.mxu0 0.0
  %4944 = vmatpush1.msra.mxu0 0.0
  %4945 = vmatprep.subr.mxu0 0.0
  %4946 = vmatpush1.msra.mxu0 0.0
  %4947 = vmatprep.subr.mxu0 0.0
  %4948 = vmatpush1.msra.mxu0 0.0
  %4949 = vmatprep.subr.mxu0 0.0
  %4950 = vmatpush1.msra.mxu0 0.0
  %4951 = vmatprep.subr.mxu0 0.0
  %4952 = vmatpush1.msra.mxu0 0.0
  %4953 = vmatprep.subr.mxu0 0.0
  %4954 = vmatpush1.msra.mxu0 0.0
  %4955 = vmatprep.subr.mxu0 0.0
  %4956 = vmatpush1.msra.mxu0 0.0
  %4957 = vmatprep.subr.mxu0 0.0
  %4958 = vmatpush1.msra.mxu0 0.0
  %4959 = vmatprep.subr.mxu0 0.0
  %4960 = vmatpush1.msra.mxu0 0.0
  %4961 = vmatprep.subr.mxu0 0.0
  %4962 = vmatpush1.msra.mxu0 0.0
  %4963 = vmatprep.subr.mxu0 0.0
  %4964 = vmatpush1.msra.mxu0 0.0
  %4965 = vmatprep.subr.mxu0 0.0
  %4966 = vmatpush1.msra.mxu0 0.0
  %4967 = vmatprep.subr.mxu0 0.0
  %4968 = vmatpush1.msra.mxu0 0.0
  %4969 = vmatprep.subr.mxu0 0.0
  %4970 = vmatpush1.msra.mxu0 0.0
  %4971 = vmatprep.subr.mxu0 0.0
  %4972 = vmatpush1.msra.mxu0 0.0
  %4973 = vmatprep.subr.mxu0 0.0
  %4974 = vmatpush1.msra.mxu0 0.0
  %4975 = vmatprep.subr.mxu0 0.0
  %4976 = vmatpush1.msra.mxu0 0.0
  %4977 = vmatprep.subr.mxu0 0.0
  %4978 = vmatpush1.msra.mxu0 0.0
  %4979 = vmatprep.mubr.f32.mxu0 0.0
  %v4980 = vand.u32 %v4641, 4294901760
  %v4981 = vsub.f32 %v4641, %v4980
  %v4982 = vand.u32 %v4981, 4294901760
  %4983 = vmatmul.mubr.f32.gmra.mrb[0].mxu0 %v4982
  %v4984 = vpop.f32.mrb[0].mxu0
  %v4985 = vadd.f32 %v4906, %v4984
  %v4986 = vpop.f32.mrb[0].mxu0
  %4987 = vdwg.mxu0
  %4988 = vmatprep.subr.mxu0 0.0
  %v4989 = vand.u32 %v4618, 4294901760
  %v4990 = vsub.f32 %v4618, %v4989
  %v4991 = vand.u32 %v4990, 4294901760
  %4992 = vmatpush1.msra.mxu0 %v4991
  %4993 = vmatprep.subr.mxu0 0.0
  %v4994 = vand.u32 %v4619, 4294901760
  %v4995 = vsub.f32 %v4619, %v4994
  %v4996 = vand.u32 %v4995, 4294901760
  %4997 = vmatpush1.msra.mxu0 %v4996
  %4998 = vmatprep.subr.mxu0 0.0
  %v4999 = vand.u32 %v4620, 4294901760
  %v5000 = vsub.f32 %v4620, %v4999
  %v5001 = vand.u32 %v5000, 4294901760
  %5002 = vmatpush1.msra.mxu0 %v5001
  %5003 = vmatprep.subr.mxu0 0.0
  %v5004 = vand.u32 %v4621, 4294901760
  %v5005 = vsub.f32 %v4621, %v5004
  %v5006 = vand.u32 %v5005, 4294901760
  %5007 = vmatpush1.msra.mxu0 %v5006
  %5008 = vmatprep.subr.mxu0 0.0
  %v5009 = vand.u32 %v4622, 4294901760
  %v5010 = vsub.f32 %v4622, %v5009
  %v5011 = vand.u32 %v5010, 4294901760
  %5012 = vmatpush1.msra.mxu0 %v5011
  %5013 = vmatprep.subr.mxu0 0.0
  %v5014 = vand.u32 %v4623, 4294901760
  %v5015 = vsub.f32 %v4623, %v5014
  %v5016 = vand.u32 %v5015, 4294901760
  %5017 = vmatpush1.msra.mxu0 %v5016
  %5018 = vmatprep.subr.mxu0 0.0
  %5019 = vmatpush1.msra.mxu0 0.0
  %5020 = vmatprep.subr.mxu0 0.0
  %5021 = vmatpush1.msra.mxu0 0.0
  %5022 = vmatprep.subr.mxu0 0.0
  %5023 = vmatpush1.msra.mxu0 0.0
  %5024 = vmatprep.subr.mxu0 0.0
  %5025 = vmatpush1.msra.mxu0 0.0
  %5026 = vmatprep.subr.mxu0 0.0
  %5027 = vmatpush1.msra.mxu0 0.0
  %5028 = vmatprep.subr.mxu0 0.0
  %5029 = vmatpush1.msra.mxu0 0.0
  %5030 = vmatprep.subr.mxu0 0.0
  %5031 = vmatpush1.msra.mxu0 0.0
  %5032 = vmatprep.subr.mxu0 0.0
  %5033 = vmatpush1.msra.mxu0 0.0
  %5034 = vmatprep.subr.mxu0 0.0
  %5035 = vmatpush1.msra.mxu0 0.0
  %5036 = vmatprep.subr.mxu0 0.0
  %5037 = vmatpush1.msra.mxu0 0.0
  %5038 = vmatprep.subr.mxu0 0.0
  %5039 = vmatpush1.msra.mxu0 0.0
  %5040 = vmatprep.subr.mxu0 0.0
  %5041 = vmatpush1.msra.mxu0 0.0
  %5042 = vmatprep.subr.mxu0 0.0
  %5043 = vmatpush1.msra.mxu0 0.0
  %5044 = vmatprep.subr.mxu0 0.0
  %5045 = vmatpush1.msra.mxu0 0.0
  %5046 = vmatprep.subr.mxu0 0.0
  %5047 = vmatpush1.msra.mxu0 0.0
  %5048 = vmatprep.subr.mxu0 0.0
  %5049 = vmatpush1.msra.mxu0 0.0
  %5050 = vmatprep.subr.mxu0 0.0
  %5051 = vmatpush1.msra.mxu0 0.0
  %5052 = vmatprep.subr.mxu0 0.0
  %5053 = vmatpush1.msra.mxu0 0.0
  %5054 = vmatprep.subr.mxu0 0.0
  %5055 = vmatpush1.msra.mxu0 0.0
  %5056 = vmatprep.subr.mxu0 0.0
  %5057 = vmatpush1.msra.mxu0 0.0
  %5058 = vmatprep.subr.mxu0 0.0
  %5059 = vmatpush1.msra.mxu0 0.0
  %5060 = vmatprep.subr.mxu0 0.0
  %5061 = vmatpush1.msra.mxu0 0.0
  %5062 = vmatprep.subr.mxu0 0.0
  %5063 = vmatpush1.msra.mxu0 0.0
  %5064 = vmatprep.subr.mxu0 0.0
  %5065 = vmatpush1.msra.mxu0 0.0
  %5066 = vmatprep.subr.mxu0 0.0
  %5067 = vmatpush1.msra.mxu0 0.0
  %5068 = vmatprep.subr.mxu0 0.0
  %5069 = vmatpush1.msra.mxu0 0.0
  %5070 = vmatprep.mubr.f32.mxu0 0.0
  %v5071 = vand.u32 %v4641, 4294901760
  %5072 = vmatmul.mubr.f32.gmra.mrb[0].mxu0 %v5071
  %v5073 = vpop.f32.mrb[0].mxu0
  %v5074 = vadd.f32 %v4985, %v5073
  %v5075 = vpop.f32.mrb[0].mxu0
  %5076 = vdwg.mxu0
  %5077 = vmatprep.subr.mxu0 0.0
  %v5078 = vand.u32 %v4618, 4294901760
  %5079 = vmatpush1.msra.mxu0 %v5078
  %5080 = vmatprep.subr.mxu0 0.0
  %v5081 = vand.u32 %v4619, 4294901760
  %5082 = vmatpush1.msra.mxu0 %v5081
  %5083 = vmatprep.subr.mxu0 0.0
  %v5084 = vand.u32 %v4620, 4294901760
  %5085 = vmatpush1.msra.mxu0 %v5084
  %5086 = vmatprep.subr.mxu0 0.0
  %v5087 = vand.u32 %v4621, 4294901760
  %5088 = vmatpush1.msra.mxu0 %v5087
  %5089 = vmatprep.subr.mxu0 0.0
  %v5090 = vand.u32 %v4622, 4294901760
  %5091 = vmatpush1.msra.mxu0 %v5090
  %5092 = vmatprep.subr.mxu0 0.0
  %v5093 = vand.u32 %v4623, 4294901760
  %5094 = vmatpush1.msra.mxu0 %v5093
  %5095 = vmatprep.subr.mxu0 0.0
  %5096 = vmatpush1.msra.mxu0 0.0
  %5097 = vmatprep.subr.mxu0 0.0
  %5098 = vmatpush1.msra.mxu0 0.0
  %5099 = vmatprep.subr.mxu0 0.0
  %5100 = vmatpush1.msra.mxu0 0.0
  %5101 = vmatprep.subr.mxu0 0.0
  %5102 = vmatpush1.msra.mxu0 0.0
  %5103 = vmatprep.subr.mxu0 0.0
  %5104 = vmatpush1.msra.mxu0 0.0
  %5105 = vmatprep.subr.mxu0 0.0
  %5106 = vmatpush1.msra.mxu0 0.0
  %5107 = vmatprep.subr.mxu0 0.0
  %5108 = vmatpush1.msra.mxu0 0.0
  %5109 = vmatprep.subr.mxu0 0.0
  %5110 = vmatpush1.msra.mxu0 0.0
  %5111 = vmatprep.subr.mxu0 0.0
  %5112 = vmatpush1.msra.mxu0 0.0
  %5113 = vmatprep.subr.mxu0 0.0
  %5114 = vmatpush1.msra.mxu0 0.0
  %5115 = vmatprep.subr.mxu0 0.0
  %5116 = vmatpush1.msra.mxu0 0.0
  %5117 = vmatprep.subr.mxu0 0.0
  %5118 = vmatpush1.msra.mxu0 0.0
  %5119 = vmatprep.subr.mxu0 0.0
  %5120 = vmatpush1.msra.mxu0 0.0
  %5121 = vmatprep.subr.mxu0 0.0
  %5122 = vmatpush1.msra.mxu0 0.0
  %5123 = vmatprep.subr.mxu0 0.0
  %5124 = vmatpush1.msra.mxu0 0.0
  %5125 = vmatprep.subr.mxu0 0.0
  %5126 = vmatpush1.msra.mxu0 0.0
  %5127 = vmatprep.subr.mxu0 0.0
  %5128 = vmatpush1.msra.mxu0 0.0
  %5129 = vmatprep.subr.mxu0 0.0
  %5130 = vmatpush1.msra.mxu0 0.0
  %5131 = vmatprep.subr.mxu0 0.0
  %5132 = vmatpush1.msra.mxu0 0.0
  %5133 = vmatprep.subr.mxu0 0.0
  %5134 = vmatpush1.msra.mxu0 0.0
  %5135 = vmatprep.subr.mxu0 0.0
  %5136 = vmatpush1.msra.mxu0 0.0
  %5137 = vmatprep.subr.mxu0 0.0
  %5138 = vmatpush1.msra.mxu0 0.0
  %5139 = vmatprep.subr.mxu0 0.0
  %5140 = vmatpush1.msra.mxu0 0.0
  %5141 = vmatprep.subr.mxu0 0.0
  %5142 = vmatpush1.msra.mxu0 0.0
  %5143 = vmatprep.subr.mxu0 0.0
  %5144 = vmatpush1.msra.mxu0 0.0
  %5145 = vmatprep.subr.mxu0 0.0
  %5146 = vmatpush1.msra.mxu0 0.0
  %5147 = vmatprep.mubr.f32.mxu0 0.0
  %v5148 = vand.u32 %v4641, 4294901760
  %5149 = vmatmul.mubr.f32.gmra.mrb[0].mxu0 %v5148
  %v5150 = vpop.f32.mrb[0].mxu0
  %v5151 = vadd.f32 %v5074, %v5150
  %v5152 = vpop.f32.mrb[0].mxu0
  %5153 = vdwg.mxu0
  %v5155 = vrot.slane %v5151, 7
  %v5157 = vsel %vm195, 0.0, %v5155
  %v5158 = vsel %vm4607, %v5157, 0.0
  %v5159 = vrot.slane %v5151, 1
  %v5161 = vsel %vm212, %v5159, 0.0
  %v5162 = vsel %vm4608, %v5161, 0.0
  %v5163 = vld [vmem:[%s31] sm:$0x7]
  %v5164 = vld [vmem:[%s33] sm:$0x3]
  %v5165 = vld [vmem:[%s35] sm:$0x1]
  %v5166 = vld [vmem:[%s37] sm:$0xff]
  %v5167 = vld [vmem:[%s37 + $0x8] sm:$0xff]
  %5168 = vrot.lane.b32.xlu0 %v5151, 1
  %v5169 = vpop.permute.xlu0 %5168
  %5172 = vrot.lane.b32.xlu0 %v5162, 2
  %v5173 = vpop.permute.xlu0 %5172
  %v5175 = vsel %vm259, %v5158, %v5169
  %v5176 = vsel %vm264, %v5175, %v5173
  %v5178 = vsel %vm275, %v5176, 0
  %v5181 = vsel %vm288, %v5163, 0
  %5183 = vmatprep.subr.mxu0 0.0
  %v5184 = vand.u32 %v5181, 4294901760
  %5185 = vmatpush1.msra.mxu0 %v5184
  %5186 = vmatprep.subr.mxu0 0.0
  %5187 = vmatpush1.msra.mxu0 0.0
  %5188 = vmatprep.subr.mxu0 0.0
  %5189 = vmatpush1.msra.mxu0 0.0
  %5190 = vmatprep.subr.mxu0 0.0
  %5191 = vmatpush1.msra.mxu0 0.0
  %5192 = vmatprep.subr.mxu0 0.0
  %5193 = vmatpush1.msra.mxu0 0.0
  %5194 = vmatprep.subr.mxu0 0.0
  %5195 = vmatpush1.msra.mxu0 0.0
  %5196 = vmatprep.subr.mxu0 0.0
  %5197 = vmatpush1.msra.mxu0 0.0
  %5198 = vmatprep.subr.mxu0 0.0
  %5199 = vmatpush1.msra.mxu0 0.0
  %5200 = vmatprep.subr.mxu0 0.0
  %5201 = vmatpush1.msra.mxu0 0.0
  %5202 = vmatprep.subr.mxu0 0.0
  %5203 = vmatpush1.msra.mxu0 0.0
  %5204 = vmatprep.subr.mxu0 0.0
  %5205 = vmatpush1.msra.mxu0 0.0
  %5206 = vmatprep.subr.mxu0 0.0
  %5207 = vmatpush1.msra.mxu0 0.0
  %5208 = vmatprep.subr.mxu0 0.0
  %5209 = vmatpush1.msra.mxu0 0.0
  %5210 = vmatprep.subr.mxu0 0.0
  %5211 = vmatpush1.msra.mxu0 0.0
  %5212 = vmatprep.subr.mxu0 0.0
  %5213 = vmatpush1.msra.mxu0 0.0
  %5214 = vmatprep.subr.mxu0 0.0
  %5215 = vmatpush1.msra.mxu0 0.0
  %5216 = vmatprep.subr.mxu0 0.0
  %5217 = vmatpush1.msra.mxu0 0.0
  %5218 = vmatprep.subr.mxu0 0.0
  %5219 = vmatpush1.msra.mxu0 0.0
  %5220 = vmatprep.subr.mxu0 0.0
  %5221 = vmatpush1.msra.mxu0 0.0
  %5222 = vmatprep.subr.mxu0 0.0
  %5223 = vmatpush1.msra.mxu0 0.0
  %5224 = vmatprep.subr.mxu0 0.0
  %5225 = vmatpush1.msra.mxu0 0.0
  %5226 = vmatprep.subr.mxu0 0.0
  %5227 = vmatpush1.msra.mxu0 0.0
  %5228 = vmatprep.subr.mxu0 0.0
  %5229 = vmatpush1.msra.mxu0 0.0
  %5230 = vmatprep.subr.mxu0 0.0
  %5231 = vmatpush1.msra.mxu0 0.0
  %5232 = vmatprep.subr.mxu0 0.0
  %5233 = vmatpush1.msra.mxu0 0.0
  %5234 = vmatprep.subr.mxu0 0.0
  %5235 = vmatpush1.msra.mxu0 0.0
  %5236 = vmatprep.subr.mxu0 0.0
  %5237 = vmatpush1.msra.mxu0 0.0
  %5238 = vmatprep.subr.mxu0 0.0
  %5239 = vmatpush1.msra.mxu0 0.0
  %5240 = vmatprep.subr.mxu0 0.0
  %5241 = vmatpush1.msra.mxu0 0.0
  %5242 = vmatprep.subr.mxu0 0.0
  %5243 = vmatpush1.msra.mxu0 0.0
  %5244 = vmatprep.subr.mxu0 0.0
  %5245 = vmatpush1.msra.mxu0 0.0
  %5246 = vmatprep.subr.mxu0 0.0
  %5247 = vmatpush1.msra.mxu0 0.0
  %5248 = vmatprep.mubr.f32.mxu0 0.0
  %v5249 = vand.u32 %v5178, 4294901760
  %v5250 = vsub.f32 %v5178, %v5249
  %v5251 = vand.u32 %v5250, 4294901760
  %v5252 = vsub.f32 %v5250, %v5251
  %v5253 = vand.u32 %v5252, 4294901760
  %5254 = vmatmul.mubr.f32.gmra.mrb[0].mxu0 %v5253
  %v5255 = vpop.f32.mrb[0].mxu0
  %v5256 = vadd.f32 0.0, %v5255
  %v5257 = vpop.f32.mrb[0].mxu0
  %5258 = vdwg.mxu0
  %5259 = vmatprep.subr.mxu0 0.0
  %v5260 = vand.u32 %v5181, 4294901760
  %v5261 = vsub.f32 %v5181, %v5260
  %v5262 = vand.u32 %v5261, 4294901760
  %v5263 = vsub.f32 %v5261, %v5262
  %v5264 = vand.u32 %v5263, 4294901760
  %5265 = vmatpush1.msra.mxu0 %v5264
  %5266 = vmatprep.subr.mxu0 0.0
  %5267 = vmatpush1.msra.mxu0 0.0
  %5268 = vmatprep.subr.mxu0 0.0
  %5269 = vmatpush1.msra.mxu0 0.0
  %5270 = vmatprep.subr.mxu0 0.0
  %5271 = vmatpush1.msra.mxu0 0.0
  %5272 = vmatprep.subr.mxu0 0.0
  %5273 = vmatpush1.msra.mxu0 0.0
  %5274 = vmatprep.subr.mxu0 0.0
  %5275 = vmatpush1.msra.mxu0 0.0
  %5276 = vmatprep.subr.mxu0 0.0
  %5277 = vmatpush1.msra.mxu0 0.0
  %5278 = vmatprep.subr.mxu0 0.0
  %5279 = vmatpush1.msra.mxu0 0.0
  %5280 = vmatprep.subr.mxu0 0.0
  %5281 = vmatpush1.msra.mxu0 0.0
  %5282 = vmatprep.subr.mxu0 0.0
  %5283 = vmatpush1.msra.mxu0 0.0
  %5284 = vmatprep.subr.mxu0 0.0
  %5285 = vmatpush1.msra.mxu0 0.0
  %5286 = vmatprep.subr.mxu0 0.0
  %5287 = vmatpush1.msra.mxu0 0.0
  %5288 = vmatprep.subr.mxu0 0.0
  %5289 = vmatpush1.msra.mxu0 0.0
  %5290 = vmatprep.subr.mxu0 0.0
  %5291 = vmatpush1.msra.mxu0 0.0
  %5292 = vmatprep.subr.mxu0 0.0
  %5293 = vmatpush1.msra.mxu0 0.0
  %5294 = vmatprep.subr.mxu0 0.0
  %5295 = vmatpush1.msra.mxu0 0.0
  %5296 = vmatprep.subr.mxu0 0.0
  %5297 = vmatpush1.msra.mxu0 0.0
  %5298 = vmatprep.subr.mxu0 0.0
  %5299 = vmatpush1.msra.mxu0 0.0
  %5300 = vmatprep.subr.mxu0 0.0
  %5301 = vmatpush1.msra.mxu0 0.0
  %5302 = vmatprep.subr.mxu0 0.0
  %5303 = vmatpush1.msra.mxu0 0.0
  %5304 = vmatprep.subr.mxu0 0.0
  %5305 = vmatpush1.msra.mxu0 0.0
  %5306 = vmatprep.subr.mxu0 0.0
  %5307 = vmatpush1.msra.mxu0 0.0
  %5308 = vmatprep.subr.mxu0 0.0
  %5309 = vmatpush1.msra.mxu0 0.0
  %5310 = vmatprep.subr.mxu0 0.0
  %5311 = vmatpush1.msra.mxu0 0.0
  %5312 = vmatprep.subr.mxu0 0.0
  %5313 = vmatpush1.msra.mxu0 0.0
  %5314 = vmatprep.subr.mxu0 0.0
  %5315 = vmatpush1.msra.mxu0 0.0
  %5316 = vmatprep.subr.mxu0 0.0
  %5317 = vmatpush1.msra.mxu0 0.0
  %5318 = vmatprep.subr.mxu0 0.0
  %5319 = vmatpush1.msra.mxu0 0.0
  %5320 = vmatprep.subr.mxu0 0.0
  %5321 = vmatpush1.msra.mxu0 0.0
  %5322 = vmatprep.subr.mxu0 0.0
  %5323 = vmatpush1.msra.mxu0 0.0
  %5324 = vmatprep.subr.mxu0 0.0
  %5325 = vmatpush1.msra.mxu0 0.0
  %5326 = vmatprep.subr.mxu0 0.0
  %5327 = vmatpush1.msra.mxu0 0.0
  %5328 = vmatprep.mubr.f32.mxu0 0.0
  %v5329 = vand.u32 %v5178, 4294901760
  %5330 = vmatmul.mubr.f32.gmra.mrb[0].mxu0 %v5329
  %v5331 = vpop.f32.mrb[0].mxu0
  %v5332 = vadd.f32 %v5256, %v5331
  %v5333 = vpop.f32.mrb[0].mxu0
  %5334 = vdwg.mxu0
  %5335 = vmatprep.subr.mxu0 0.0
  %v5336 = vand.u32 %v5181, 4294901760
  %v5337 = vsub.f32 %v5181, %v5336
  %5338 = vmatpush1.msra.mxu0 %v5337
  %5339 = vmatprep.subr.mxu0 0.0
  %5340 = vmatpush1.msra.mxu0 0.0
  %5341 = vmatprep.subr.mxu0 0.0
  %5342 = vmatpush1.msra.mxu0 0.0
  %5343 = vmatprep.subr.mxu0 0.0
  %5344 = vmatpush1.msra.mxu0 0.0
  %5345 = vmatprep.subr.mxu0 0.0
  %5346 = vmatpush1.msra.mxu0 0.0
  %5347 = vmatprep.subr.mxu0 0.0
  %5348 = vmatpush1.msra.mxu0 0.0
  %5349 = vmatprep.subr.mxu0 0.0
  %5350 = vmatpush1.msra.mxu0 0.0
  %5351 = vmatprep.subr.mxu0 0.0
  %5352 = vmatpush1.msra.mxu0 0.0
  %5353 = vmatprep.subr.mxu0 0.0
  %5354 = vmatpush1.msra.mxu0 0.0
  %5355 = vmatprep.subr.mxu0 0.0
  %5356 = vmatpush1.msra.mxu0 0.0
  %5357 = vmatprep.subr.mxu0 0.0
  %5358 = vmatpush1.msra.mxu0 0.0
  %5359 = vmatprep.subr.mxu0 0.0
  %5360 = vmatpush1.msra.mxu0 0.0
  %5361 = vmatprep.subr.mxu0 0.0
  %5362 = vmatpush1.msra.mxu0 0.0
  %5363 = vmatprep.subr.mxu0 0.0
  %5364 = vmatpush1.msra.mxu0 0.0
  %5365 = vmatprep.subr.mxu0 0.0
  %5366 = vmatpush1.msra.mxu0 0.0
  %5367 = vmatprep.subr.mxu0 0.0
  %5368 = vmatpush1.msra.mxu0 0.0
  %5369 = vmatprep.subr.mxu0 0.0
  %5370 = vmatpush1.msra.mxu0 0.0
  %5371 = vmatprep.subr.mxu0 0.0
  %5372 = vmatpush1.msra.mxu0 0.0
  %5373 = vmatprep.subr.mxu0 0.0
  %5374 = vmatpush1.msra.mxu0 0.0
  %5375 = vmatprep.subr.mxu0 0.0
  %5376 = vmatpush1.msra.mxu0 0.0
  %5377 = vmatprep.subr.mxu0 0.0
  %5378 = vmatpush1.msra.mxu0 0.0
  %5379 = vmatprep.subr.mxu0 0.0
  %5380 = vmatpush1.msra.mxu0 0.0
  %5381 = vmatprep.subr.mxu0 0.0
  %5382 = vmatpush1.msra.mxu0 0.0
  %5383 = vmatprep.subr.mxu0 0.0
  %5384 = vmatpush1.msra.mxu0 0.0
  %5385 = vmatprep.subr.mxu0 0.0
  %5386 = vmatpush1.msra.mxu0 0.0
  %5387 = vmatprep.subr.mxu0 0.0
  %5388 = vmatpush1.msra.mxu0 0.0
  %5389 = vmatprep.subr.mxu0 0.0
  %5390 = vmatpush1.msra.mxu0 0.0
  %5391 = vmatprep.subr.mxu0 0.0
  %5392 = vmatpush1.msra.mxu0 0.0
  %5393 = vmatprep.subr.mxu0 0.0
  %5394 = vmatpush1.msra.mxu0 0.0
  %5395 = vmatprep.subr.mxu0 0.0
  %5396 = vmatpush1.msra.mxu0 0.0
  %5397 = vmatprep.subr.mxu0 0.0
  %5398 = vmatpush1.msra.mxu0 0.0
  %5399 = vmatprep.subr.mxu0 0.0
  %5400 = vmatpush1.msra.mxu0 0.0
  %5401 = vmatprep.mubr.f32.mxu0 0.0
  %v5402 = vand.u32 %v5178, 4294901760
  %v5403 = vsub.f32 %v5178, %v5402
  %5404 = vmatmul.mubr.f32.gmra.mrb[0].mxu0 %v5403
  %v5405 = vpop.f32.mrb[0].mxu0
  %v5406 = vadd.f32 %v5332, %v5405
  %v5407 = vpop.f32.mrb[0].mxu0
  %5408 = vdwg.mxu0
  %5409 = vmatprep.subr.mxu0 0.0
  %v5410 = vand.u32 %v5181, 4294901760
  %5411 = vmatpush1.msra.mxu0 %v5410
  %5412 = vmatprep.subr.mxu0 0.0
  %5413 = vmatpush1.msra.mxu0 0.0
  %5414 = vmatprep.subr.mxu0 0.0
  %5415 = vmatpush1.msra.mxu0 0.0
  %5416 = vmatprep.subr.mxu0 0.0
  %5417 = vmatpush1.msra.mxu0 0.0
  %5418 = vmatprep.subr.mxu0 0.0
  %5419 = vmatpush1.msra.mxu0 0.0
  %5420 = vmatprep.subr.mxu0 0.0
  %5421 = vmatpush1.msra.mxu0 0.0
  %5422 = vmatprep.subr.mxu0 0.0
  %5423 = vmatpush1.msra.mxu0 0.0
  %5424 = vmatprep.subr.mxu0 0.0
  %5425 = vmatpush1.msra.mxu0 0.0
  %5426 = vmatprep.subr.mxu0 0.0
  %5427 = vmatpush1.msra.mxu0 0.0
  %5428 = vmatprep.subr.mxu0 0.0
  %5429 = vmatpush1.msra.mxu0 0.0
  %5430 = vmatprep.subr.mxu0 0.0
  %5431 = vmatpush1.msra.mxu0 0.0
  %5432 = vmatprep.subr.mxu0 0.0
  %5433 = vmatpush1.msra.mxu0 0.0
  %5434 = vmatprep.subr.mxu0 0.0
  %5435 = vmatpush1.msra.mxu0 0.0
  %5436 = vmatprep.subr.mxu0 0.0
  %5437 = vmatpush1.msra.mxu0 0.0
  %5438 = vmatprep.subr.mxu0 0.0
  %5439 = vmatpush1.msra.mxu0 0.0
  %5440 = vmatprep.subr.mxu0 0.0
  %5441 = vmatpush1.msra.mxu0 0.0
  %5442 = vmatprep.subr.mxu0 0.0
  %5443 = vmatpush1.msra.mxu0 0.0
  %5444 = vmatprep.subr.mxu0 0.0
  %5445 = vmatpush1.msra.mxu0 0.0
  %5446 = vmatprep.subr.mxu0 0.0
  %5447 = vmatpush1.msra.mxu0 0.0
  %5448 = vmatprep.subr.mxu0 0.0
  %5449 = vmatpush1.msra.mxu0 0.0
  %5450 = vmatprep.subr.mxu0 0.0
  %5451 = vmatpush1.msra.mxu0 0.0
  %5452 = vmatprep.subr.mxu0 0.0
  %5453 = vmatpush1.msra.mxu0 0.0
  %5454 = vmatprep.subr.mxu0 0.0
  %5455 = vmatpush1.msra.mxu0 0.0
  %5456 = vmatprep.subr.mxu0 0.0
  %5457 = vmatpush1.msra.mxu0 0.0
  %5458 = vmatprep.subr.mxu0 0.0
  %5459 = vmatpush1.msra.mxu0 0.0
  %5460 = vmatprep.subr.mxu0 0.0
  %5461 = vmatpush1.msra.mxu0 0.0
  %5462 = vmatprep.subr.mxu0 0.0
  %5463 = vmatpush1.msra.mxu0 0.0
  %5464 = vmatprep.subr.mxu0 0.0
  %5465 = vmatpush1.msra.mxu0 0.0
  %5466 = vmatprep.subr.mxu0 0.0
  %5467 = vmatpush1.msra.mxu0 0.0
  %5468 = vmatprep.subr.mxu0 0.0
  %5469 = vmatpush1.msra.mxu0 0.0
  %5470 = vmatprep.subr.mxu0 0.0
  %5471 = vmatpush1.msra.mxu0 0.0
  %5472 = vmatprep.subr.mxu0 0.0
  %5473 = vmatpush1.msra.mxu0 0.0
  %5474 = vmatprep.mubr.f32.mxu0 0.0
  %v5475 = vand.u32 %v5178, 4294901760
  %v5476 = vsub.f32 %v5178, %v5475
  %v5477 = vand.u32 %v5476, 4294901760
  %5478 = vmatmul.mubr.f32.gmra.mrb[0].mxu0 %v5477
  %v5479 = vpop.f32.mrb[0].mxu0
  %v5480 = vadd.f32 %v5406, %v5479
  %v5481 = vpop.f32.mrb[0].mxu0
  %5482 = vdwg.mxu0
  %5483 = vmatprep.subr.mxu0 0.0
  %v5484 = vand.u32 %v5181, 4294901760
  %v5485 = vsub.f32 %v5181, %v5484
  %v5486 = vand.u32 %v5485, 4294901760
  %5487 = vmatpush1.msra.mxu0 %v5486
  %5488 = vmatprep.subr.mxu0 0.0
  %5489 = vmatpush1.msra.mxu0 0.0
  %5490 = vmatprep.subr.mxu0 0.0
  %5491 = vmatpush1.msra.mxu0 0.0
  %5492 = vmatprep.subr.mxu0 0.0
  %5493 = vmatpush1.msra.mxu0 0.0
  %5494 = vmatprep.subr.mxu0 0.0
  %5495 = vmatpush1.msra.mxu0 0.0
  %5496 = vmatprep.subr.mxu0 0.0
  %5497 = vmatpush1.msra.mxu0 0.0
  %5498 = vmatprep.subr.mxu0 0.0
  %5499 = vmatpush1.msra.mxu0 0.0
  %5500 = vmatprep.subr.mxu0 0.0
  %5501 = vmatpush1.msra.mxu0 0.0
  %5502 = vmatprep.subr.mxu0 0.0
  %5503 = vmatpush1.msra.mxu0 0.0
  %5504 = vmatprep.subr.mxu0 0.0
  %5505 = vmatpush1.msra.mxu0 0.0
  %5506 = vmatprep.subr.mxu0 0.0
  %5507 = vmatpush1.msra.mxu0 0.0
  %5508 = vmatprep.subr.mxu0 0.0
  %5509 = vmatpush1.msra.mxu0 0.0
  %5510 = vmatprep.subr.mxu0 0.0
  %5511 = vmatpush1.msra.mxu0 0.0
  %5512 = vmatprep.subr.mxu0 0.0
  %5513 = vmatpush1.msra.mxu0 0.0
  %5514 = vmatprep.subr.mxu0 0.0
  %5515 = vmatpush1.msra.mxu0 0.0
  %5516 = vmatprep.subr.mxu0 0.0
  %5517 = vmatpush1.msra.mxu0 0.0
  %5518 = vmatprep.subr.mxu0 0.0
  %5519 = vmatpush1.msra.mxu0 0.0
  %5520 = vmatprep.subr.mxu0 0.0
  %5521 = vmatpush1.msra.mxu0 0.0
  %5522 = vmatprep.subr.mxu0 0.0
  %5523 = vmatpush1.msra.mxu0 0.0
  %5524 = vmatprep.subr.mxu0 0.0
  %5525 = vmatpush1.msra.mxu0 0.0
  %5526 = vmatprep.subr.mxu0 0.0
  %5527 = vmatpush1.msra.mxu0 0.0
  %5528 = vmatprep.subr.mxu0 0.0
  %5529 = vmatpush1.msra.mxu0 0.0
  %5530 = vmatprep.subr.mxu0 0.0
  %5531 = vmatpush1.msra.mxu0 0.0
  %5532 = vmatprep.subr.mxu0 0.0
  %5533 = vmatpush1.msra.mxu0 0.0
  %5534 = vmatprep.subr.mxu0 0.0
  %5535 = vmatpush1.msra.mxu0 0.0
  %5536 = vmatprep.subr.mxu0 0.0
  %5537 = vmatpush1.msra.mxu0 0.0
  %5538 = vmatprep.subr.mxu0 0.0
  %5539 = vmatpush1.msra.mxu0 0.0
  %5540 = vmatprep.subr.mxu0 0.0
  %5541 = vmatpush1.msra.mxu0 0.0
  %5542 = vmatprep.subr.mxu0 0.0
  %5543 = vmatpush1.msra.mxu0 0.0
  %5544 = vmatprep.subr.mxu0 0.0
  %5545 = vmatpush1.msra.mxu0 0.0
  %5546 = vmatprep.subr.mxu0 0.0
  %5547 = vmatpush1.msra.mxu0 0.0
  %5548 = vmatprep.subr.mxu0 0.0
  %5549 = vmatpush1.msra.mxu0 0.0
  %5550 = vmatprep.mubr.f32.mxu0 0.0
  %v5551 = vand.u32 %v5178, 4294901760
  %5552 = vmatmul.mubr.f32.gmra.mrb[0].mxu0 %v5551
  %v5553 = vpop.f32.mrb[0].mxu0
  %v5554 = vadd.f32 %v5480, %v5553
  %v5555 = vpop.f32.mrb[0].mxu0
  %5556 = vdwg.mxu0
  %5557 = vmatprep.subr.mxu0 0.0
  %v5558 = vand.u32 %v5181, 4294901760
  %5559 = vmatpush1.msra.mxu0 %v5558
  %5560 = vmatprep.subr.mxu0 0.0
  %5561 = vmatpush1.msra.mxu0 0.0
  %5562 = vmatprep.subr.mxu0 0.0
  %5563 = vmatpush1.msra.mxu0 0.0
  %5564 = vmatprep.subr.mxu0 0.0
  %5565 = vmatpush1.msra.mxu0 0.0
  %5566 = vmatprep.subr.mxu0 0.0
  %5567 = vmatpush1.msra.mxu0 0.0
  %5568 = vmatprep.subr.mxu0 0.0
  %5569 = vmatpush1.msra.mxu0 0.0
  %5570 = vmatprep.subr.mxu0 0.0
  %5571 = vmatpush1.msra.mxu0 0.0
  %5572 = vmatprep.subr.mxu0 0.0
  %5573 = vmatpush1.msra.mxu0 0.0
  %5574 = vmatprep.subr.mxu0 0.0
  %5575 = vmatpush1.msra.mxu0 0.0
  %5576 = vmatprep.subr.mxu0 0.0
  %5577 = vmatpush1.msra.mxu0 0.0
  %5578 = vmatprep.subr.mxu0 0.0
  %5579 = vmatpush1.msra.mxu0 0.0
  %5580 = vmatprep.subr.mxu0 0.0
  %5581 = vmatpush1.msra.mxu0 0.0
  %5582 = vmatprep.subr.mxu0 0.0
  %5583 = vmatpush1.msra.mxu0 0.0
  %5584 = vmatprep.subr.mxu0 0.0
  %5585 = vmatpush1.msra.mxu0 0.0
  %5586 = vmatprep.subr.mxu0 0.0
  %5587 = vmatpush1.msra.mxu0 0.0
  %5588 = vmatprep.subr.mxu0 0.0
  %5589 = vmatpush1.msra.mxu0 0.0
  %5590 = vmatprep.subr.mxu0 0.0
  %5591 = vmatpush1.msra.mxu0 0.0
  %5592 = vmatprep.subr.mxu0 0.0
  %5593 = vmatpush1.msra.mxu0 0.0
  %5594 = vmatprep.subr.mxu0 0.0
  %5595 = vmatpush1.msra.mxu0 0.0
  %5596 = vmatprep.subr.mxu0 0.0
  %5597 = vmatpush1.msra.mxu0 0.0
  %5598 = vmatprep.subr.mxu0 0.0
  %5599 = vmatpush1.msra.mxu0 0.0
  %5600 = vmatprep.subr.mxu0 0.0
  %5601 = vmatpush1.msra.mxu0 0.0
  %5602 = vmatprep.subr.mxu0 0.0
  %5603 = vmatpush1.msra.mxu0 0.0
  %5604 = vmatprep.subr.mxu0 0.0
  %5605 = vmatpush1.msra.mxu0 0.0
  %5606 = vmatprep.subr.mxu0 0.0
  %5607 = vmatpush1.msra.mxu0 0.0
  %5608 = vmatprep.subr.mxu0 0.0
  %5609 = vmatpush1.msra.mxu0 0.0
  %5610 = vmatprep.subr.mxu0 0.0
  %5611 = vmatpush1.msra.mxu0 0.0
  %5612 = vmatprep.subr.mxu0 0.0
  %5613 = vmatpush1.msra.mxu0 0.0
  %5614 = vmatprep.subr.mxu0 0.0
  %5615 = vmatpush1.msra.mxu0 0.0
  %5616 = vmatprep.subr.mxu0 0.0
  %5617 = vmatpush1.msra.mxu0 0.0
  %5618 = vmatprep.subr.mxu0 0.0
  %5619 = vmatpush1.msra.mxu0 0.0
  %5620 = vmatprep.subr.mxu0 0.0
  %5621 = vmatpush1.msra.mxu0 0.0
  %5622 = vmatprep.mubr.f32.mxu0 0.0
  %v5623 = vand.u32 %v5178, 4294901760
  %5624 = vmatmul.mubr.f32.gmra.mrb[0].mxu0 %v5623
  %v5625 = vpop.f32.mrb[0].mxu0
  %v5626 = vadd.f32 %v5554, %v5625
  %v5627 = vpop.f32.mrb[0].mxu0
  %5628 = vdwg.mxu0
  %5629 = vrot.lane.b32.xlu0 %v5162, 1
  %v5630 = vpop.permute.xlu0 %5629
  %v5632 = vsel %vm259, %v5151, %v5630
  %v5634 = vsel %vm264, %v5632, 0
  %vm5636 = vcmask 1041408
  %v5638 = vsel %vm5636, %v5164, 0
  %5640 = vmatprep.subr.mxu0 0.0
  %v5641 = vand.u32 %v5638, 4294901760
  %5642 = vmatpush1.msra.mxu0 %v5641
  %5643 = vmatprep.subr.mxu0 0.0
  %5644 = vmatpush1.msra.mxu0 0.0
  %5645 = vmatprep.subr.mxu0 0.0
  %5646 = vmatpush1.msra.mxu0 0.0
  %5647 = vmatprep.subr.mxu0 0.0
  %5648 = vmatpush1.msra.mxu0 0.0
  %5649 = vmatprep.subr.mxu0 0.0
  %5650 = vmatpush1.msra.mxu0 0.0
  %5651 = vmatprep.subr.mxu0 0.0
  %5652 = vmatpush1.msra.mxu0 0.0
  %5653 = vmatprep.subr.mxu0 0.0
  %5654 = vmatpush1.msra.mxu0 0.0
  %5655 = vmatprep.subr.mxu0 0.0
  %5656 = vmatpush1.msra.mxu0 0.0
  %5657 = vmatprep.subr.mxu0 0.0
  %5658 = vmatpush1.msra.mxu0 0.0
  %5659 = vmatprep.subr.mxu0 0.0
  %5660 = vmatpush1.msra.mxu0 0.0
  %5661 = vmatprep.subr.mxu0 0.0
  %5662 = vmatpush1.msra.mxu0 0.0
  %5663 = vmatprep.subr.mxu0 0.0
  %5664 = vmatpush1.msra.mxu0 0.0
  %5665 = vmatprep.subr.mxu0 0.0
  %5666 = vmatpush1.msra.mxu0 0.0
  %5667 = vmatprep.subr.mxu0 0.0
  %5668 = vmatpush1.msra.mxu0 0.0
  %5669 = vmatprep.subr.mxu0 0.0
  %5670 = vmatpush1.msra.mxu0 0.0
  %5671 = vmatprep.subr.mxu0 0.0
  %5672 = vmatpush1.msra.mxu0 0.0
  %5673 = vmatprep.subr.mxu0 0.0
  %5674 = vmatpush1.msra.mxu0 0.0
  %5675 = vmatprep.subr.mxu0 0.0
  %5676 = vmatpush1.msra.mxu0 0.0
  %5677 = vmatprep.subr.mxu0 0.0
  %5678 = vmatpush1.msra.mxu0 0.0
  %5679 = vmatprep.subr.mxu0 0.0
  %5680 = vmatpush1.msra.mxu0 0.0
  %5681 = vmatprep.subr.mxu0 0.0
  %5682 = vmatpush1.msra.mxu0 0.0
  %5683 = vmatprep.subr.mxu0 0.0
  %5684 = vmatpush1.msra.mxu0 0.0
  %5685 = vmatprep.subr.mxu0 0.0
  %5686 = vmatpush1.msra.mxu0 0.0
  %5687 = vmatprep.subr.mxu0 0.0
  %5688 = vmatpush1.msra.mxu0 0.0
  %5689 = vmatprep.subr.mxu0 0.0
  %5690 = vmatpush1.msra.mxu0 0.0
  %5691 = vmatprep.subr.mxu0 0.0
  %5692 = vmatpush1.msra.mxu0 0.0
  %5693 = vmatprep.subr.mxu0 0.0
  %5694 = vmatpush1.msra.mxu0 0.0
  %5695 = vmatprep.subr.mxu0 0.0
  %5696 = vmatpush1.msra.mxu0 0.0
  %5697 = vmatprep.subr.mxu0 0.0
  %5698 = vmatpush1.msra.mxu0 0.0
  %5699 = vmatprep.subr.mxu0 0.0
  %5700 = vmatpush1.msra.mxu0 0.0
  %5701 = vmatprep.subr.mxu0 0.0
  %5702 = vmatpush1.msra.mxu0 0.0
  %5703 = vmatprep.subr.mxu0 0.0
  %5704 = vmatpush1.msra.mxu0 0.0
  %5705 = vmatprep.mubr.f32.mxu0 0.0
  %v5706 = vand.u32 %v5634, 4294901760
  %v5707 = vsub.f32 %v5634, %v5706
  %v5708 = vand.u32 %v5707, 4294901760
  %v5709 = vsub.f32 %v5707, %v5708
  %v5710 = vand.u32 %v5709, 4294901760
  %5711 = vmatmul.mubr.f32.gmra.mrb[0].mxu0 %v5710
  %v5712 = vpop.f32.mrb[0].mxu0
  %v5713 = vadd.f32 0.0, %v5712
  %v5714 = vpop.f32.mrb[0].mxu0
  %5715 = vdwg.mxu0
  %5716 = vmatprep.subr.mxu0 0.0
  %v5717 = vand.u32 %v5638, 4294901760
  %v5718 = vsub.f32 %v5638, %v5717
  %v5719 = vand.u32 %v5718, 4294901760
  %v5720 = vsub.f32 %v5718, %v5719
  %v5721 = vand.u32 %v5720, 4294901760
  %5722 = vmatpush1.msra.mxu0 %v5721
  %5723 = vmatprep.subr.mxu0 0.0
  %5724 = vmatpush1.msra.mxu0 0.0
  %5725 = vmatprep.subr.mxu0 0.0
  %5726 = vmatpush1.msra.mxu0 0.0
  %5727 = vmatprep.subr.mxu0 0.0
  %5728 = vmatpush1.msra.mxu0 0.0
  %5729 = vmatprep.subr.mxu0 0.0
  %5730 = vmatpush1.msra.mxu0 0.0
  %5731 = vmatprep.subr.mxu0 0.0
  %5732 = vmatpush1.msra.mxu0 0.0
  %5733 = vmatprep.subr.mxu0 0.0
  %5734 = vmatpush1.msra.mxu0 0.0
  %5735 = vmatprep.subr.mxu0 0.0
  %5736 = vmatpush1.msra.mxu0 0.0
  %5737 = vmatprep.subr.mxu0 0.0
  %5738 = vmatpush1.msra.mxu0 0.0
  %5739 = vmatprep.subr.mxu0 0.0
  %5740 = vmatpush1.msra.mxu0 0.0
  %5741 = vmatprep.subr.mxu0 0.0
  %5742 = vmatpush1.msra.mxu0 0.0
  %5743 = vmatprep.subr.mxu0 0.0
  %5744 = vmatpush1.msra.mxu0 0.0
  %5745 = vmatprep.subr.mxu0 0.0
  %5746 = vmatpush1.msra.mxu0 0.0
  %5747 = vmatprep.subr.mxu0 0.0
  %5748 = vmatpush1.msra.mxu0 0.0
  %5749 = vmatprep.subr.mxu0 0.0
  %5750 = vmatpush1.msra.mxu0 0.0
  %5751 = vmatprep.subr.mxu0 0.0
  %5752 = vmatpush1.msra.mxu0 0.0
  %5753 = vmatprep.subr.mxu0 0.0
  %5754 = vmatpush1.msra.mxu0 0.0
  %5755 = vmatprep.subr.mxu0 0.0
  %5756 = vmatpush1.msra.mxu0 0.0
  %5757 = vmatprep.subr.mxu0 0.0
  %5758 = vmatpush1.msra.mxu0 0.0
  %5759 = vmatprep.subr.mxu0 0.0
  %5760 = vmatpush1.msra.mxu0 0.0
  %5761 = vmatprep.subr.mxu0 0.0
  %5762 = vmatpush1.msra.mxu0 0.0
  %5763 = vmatprep.subr.mxu0 0.0
  %5764 = vmatpush1.msra.mxu0 0.0
  %5765 = vmatprep.subr.mxu0 0.0
  %5766 = vmatpush1.msra.mxu0 0.0
  %5767 = vmatprep.subr.mxu0 0.0
  %5768 = vmatpush1.msra.mxu0 0.0
  %5769 = vmatprep.subr.mxu0 0.0
  %5770 = vmatpush1.msra.mxu0 0.0
  %5771 = vmatprep.subr.mxu0 0.0
  %5772 = vmatpush1.msra.mxu0 0.0
  %5773 = vmatprep.subr.mxu0 0.0
  %5774 = vmatpush1.msra.mxu0 0.0
  %5775 = vmatprep.subr.mxu0 0.0
  %5776 = vmatpush1.msra.mxu0 0.0
  %5777 = vmatprep.subr.mxu0 0.0
  %5778 = vmatpush1.msra.mxu0 0.0
  %5779 = vmatprep.subr.mxu0 0.0
  %5780 = vmatpush1.msra.mxu0 0.0
  %5781 = vmatprep.subr.mxu0 0.0
  %5782 = vmatpush1.msra.mxu0 0.0
  %5783 = vmatprep.subr.mxu0 0.0
  %5784 = vmatpush1.msra.mxu0 0.0
  %5785 = vmatprep.mubr.f32.mxu0 0.0
  %v5786 = vand.u32 %v5634, 4294901760
  %5787 = vmatmul.mubr.f32.gmra.mrb[0].mxu0 %v5786
  %v5788 = vpop.f32.mrb[0].mxu0
  %v5789 = vadd.f32 %v5713, %v5788
  %v5790 = vpop.f32.mrb[0].mxu0
  %5791 = vdwg.mxu0
  %5792 = vmatprep.subr.mxu0 0.0
  %v5793 = vand.u32 %v5638, 4294901760
  %v5794 = vsub.f32 %v5638, %v5793
  %5795 = vmatpush1.msra.mxu0 %v5794
  %5796 = vmatprep.subr.mxu0 0.0
  %5797 = vmatpush1.msra.mxu0 0.0
  %5798 = vmatprep.subr.mxu0 0.0
  %5799 = vmatpush1.msra.mxu0 0.0
  %5800 = vmatprep.subr.mxu0 0.0
  %5801 = vmatpush1.msra.mxu0 0.0
  %5802 = vmatprep.subr.mxu0 0.0
  %5803 = vmatpush1.msra.mxu0 0.0
  %5804 = vmatprep.subr.mxu0 0.0
  %5805 = vmatpush1.msra.mxu0 0.0
  %5806 = vmatprep.subr.mxu0 0.0
  %5807 = vmatpush1.msra.mxu0 0.0
  %5808 = vmatprep.subr.mxu0 0.0
  %5809 = vmatpush1.msra.mxu0 0.0
  %5810 = vmatprep.subr.mxu0 0.0
  %5811 = vmatpush1.msra.mxu0 0.0
  %5812 = vmatprep.subr.mxu0 0.0
  %5813 = vmatpush1.msra.mxu0 0.0
  %5814 = vmatprep.subr.mxu0 0.0
  %5815 = vmatpush1.msra.mxu0 0.0
  %5816 = vmatprep.subr.mxu0 0.0
  %5817 = vmatpush1.msra.mxu0 0.0
  %5818 = vmatprep.subr.mxu0 0.0
  %5819 = vmatpush1.msra.mxu0 0.0
  %5820 = vmatprep.subr.mxu0 0.0
  %5821 = vmatpush1.msra.mxu0 0.0
  %5822 = vmatprep.subr.mxu0 0.0
  %5823 = vmatpush1.msra.mxu0 0.0
  %5824 = vmatprep.subr.mxu0 0.0
  %5825 = vmatpush1.msra.mxu0 0.0
  %5826 = vmatprep.subr.mxu0 0.0
  %5827 = vmatpush1.msra.mxu0 0.0
  %5828 = vmatprep.subr.mxu0 0.0
  %5829 = vmatpush1.msra.mxu0 0.0
  %5830 = vmatprep.subr.mxu0 0.0
  %5831 = vmatpush1.msra.mxu0 0.0
  %5832 = vmatprep.subr.mxu0 0.0
  %5833 = vmatpush1.msra.mxu0 0.0
  %5834 = vmatprep.subr.mxu0 0.0
  %5835 = vmatpush1.msra.mxu0 0.0
  %5836 = vmatprep.subr.mxu0 0.0
  %5837 = vmatpush1.msra.mxu0 0.0
  %5838 = vmatprep.subr.mxu0 0.0
  %5839 = vmatpush1.msra.mxu0 0.0
  %5840 = vmatprep.subr.mxu0 0.0
  %5841 = vmatpush1.msra.mxu0 0.0
  %5842 = vmatprep.subr.mxu0 0.0
  %5843 = vmatpush1.msra.mxu0 0.0
  %5844 = vmatprep.subr.mxu0 0.0
  %5845 = vmatpush1.msra.mxu0 0.0
  %5846 = vmatprep.subr.mxu0 0.0
  %5847 = vmatpush1.msra.mxu0 0.0
  %5848 = vmatprep.subr.mxu0 0.0
  %5849 = vmatpush1.msra.mxu0 0.0
  %5850 = vmatprep.subr.mxu0 0.0
  %5851 = vmatpush1.msra.mxu0 0.0
  %5852 = vmatprep.subr.mxu0 0.0
  %5853 = vmatpush1.msra.mxu0 0.0
  %5854 = vmatprep.subr.mxu0 0.0
  %5855 = vmatpush1.msra.mxu0 0.0
  %5856 = vmatprep.subr.mxu0 0.0
  %5857 = vmatpush1.msra.mxu0 0.0
  %5858 = vmatprep.mubr.f32.mxu0 0.0
  %v5859 = vand.u32 %v5634, 4294901760
  %v5860 = vsub.f32 %v5634, %v5859
  %5861 = vmatmul.mubr.f32.gmra.mrb[0].mxu0 %v5860
  %v5862 = vpop.f32.mrb[0].mxu0
  %v5863 = vadd.f32 %v5789, %v5862
  %v5864 = vpop.f32.mrb[0].mxu0
  %5865 = vdwg.mxu0
  %5866 = vmatprep.subr.mxu0 0.0
  %v5867 = vand.u32 %v5638, 4294901760
  %5868 = vmatpush1.msra.mxu0 %v5867
  %5869 = vmatprep.subr.mxu0 0.0
  %5870 = vmatpush1.msra.mxu0 0.0
  %5871 = vmatprep.subr.mxu0 0.0
  %5872 = vmatpush1.msra.mxu0 0.0
  %5873 = vmatprep.subr.mxu0 0.0
  %5874 = vmatpush1.msra.mxu0 0.0
  %5875 = vmatprep.subr.mxu0 0.0
  %5876 = vmatpush1.msra.mxu0 0.0
  %5877 = vmatprep.subr.mxu0 0.0
  %5878 = vmatpush1.msra.mxu0 0.0
  %5879 = vmatprep.subr.mxu0 0.0
  %5880 = vmatpush1.msra.mxu0 0.0
  %5881 = vmatprep.subr.mxu0 0.0
  %5882 = vmatpush1.msra.mxu0 0.0
  %5883 = vmatprep.subr.mxu0 0.0
  %5884 = vmatpush1.msra.mxu0 0.0
  %5885 = vmatprep.subr.mxu0 0.0
  %5886 = vmatpush1.msra.mxu0 0.0
  %5887 = vmatprep.subr.mxu0 0.0
  %5888 = vmatpush1.msra.mxu0 0.0
  %5889 = vmatprep.subr.mxu0 0.0
  %5890 = vmatpush1.msra.mxu0 0.0
  %5891 = vmatprep.subr.mxu0 0.0
  %5892 = vmatpush1.msra.mxu0 0.0
  %5893 = vmatprep.subr.mxu0 0.0
  %5894 = vmatpush1.msra.mxu0 0.0
  %5895 = vmatprep.subr.mxu0 0.0
  %5896 = vmatpush1.msra.mxu0 0.0
  %5897 = vmatprep.subr.mxu0 0.0
  %5898 = vmatpush1.msra.mxu0 0.0
  %5899 = vmatprep.subr.mxu0 0.0
  %5900 = vmatpush1.msra.mxu0 0.0
  %5901 = vmatprep.subr.mxu0 0.0
  %5902 = vmatpush1.msra.mxu0 0.0
  %5903 = vmatprep.subr.mxu0 0.0
  %5904 = vmatpush1.msra.mxu0 0.0
  %5905 = vmatprep.subr.mxu0 0.0
  %5906 = vmatpush1.msra.mxu0 0.0
  %5907 = vmatprep.subr.mxu0 0.0
  %5908 = vmatpush1.msra.mxu0 0.0
  %5909 = vmatprep.subr.mxu0 0.0
  %5910 = vmatpush1.msra.mxu0 0.0
  %5911 = vmatprep.subr.mxu0 0.0
  %5912 = vmatpush1.msra.mxu0 0.0
  %5913 = vmatprep.subr.mxu0 0.0
  %5914 = vmatpush1.msra.mxu0 0.0
  %5915 = vmatprep.subr.mxu0 0.0
  %5916 = vmatpush1.msra.mxu0 0.0
  %5917 = vmatprep.subr.mxu0 0.0
  %5918 = vmatpush1.msra.mxu0 0.0
  %5919 = vmatprep.subr.mxu0 0.0
  %5920 = vmatpush1.msra.mxu0 0.0
  %5921 = vmatprep.subr.mxu0 0.0
  %5922 = vmatpush1.msra.mxu0 0.0
  %5923 = vmatprep.subr.mxu0 0.0
  %5924 = vmatpush1.msra.mxu0 0.0
  %5925 = vmatprep.subr.mxu0 0.0
  %5926 = vmatpush1.msra.mxu0 0.0
  %5927 = vmatprep.subr.mxu0 0.0
  %5928 = vmatpush1.msra.mxu0 0.0
  %5929 = vmatprep.subr.mxu0 0.0
  %5930 = vmatpush1.msra.mxu0 0.0
  %5931 = vmatprep.mubr.f32.mxu0 0.0
  %v5932 = vand.u32 %v5634, 4294901760
  %v5933 = vsub.f32 %v5634, %v5932
  %v5934 = vand.u32 %v5933, 4294901760
  %5935 = vmatmul.mubr.f32.gmra.mrb[0].mxu0 %v5934
  %v5936 = vpop.f32.mrb[0].mxu0
  %v5937 = vadd.f32 %v5863, %v5936
  %v5938 = vpop.f32.mrb[0].mxu0
  %5939 = vdwg.mxu0
  %5940 = vmatprep.subr.mxu0 0.0
  %v5941 = vand.u32 %v5638, 4294901760
  %v5942 = vsub.f32 %v5638, %v5941
  %v5943 = vand.u32 %v5942, 4294901760
  %5944 = vmatpush1.msra.mxu0 %v5943
  %5945 = vmatprep.subr.mxu0 0.0
  %5946 = vmatpush1.msra.mxu0 0.0
  %5947 = vmatprep.subr.mxu0 0.0
  %5948 = vmatpush1.msra.mxu0 0.0
  %5949 = vmatprep.subr.mxu0 0.0
  %5950 = vmatpush1.msra.mxu0 0.0
  %5951 = vmatprep.subr.mxu0 0.0
  %5952 = vmatpush1.msra.mxu0 0.0
  %5953 = vmatprep.subr.mxu0 0.0
  %5954 = vmatpush1.msra.mxu0 0.0
  %5955 = vmatprep.subr.mxu0 0.0
  %5956 = vmatpush1.msra.mxu0 0.0
  %5957 = vmatprep.subr.mxu0 0.0
  %5958 = vmatpush1.msra.mxu0 0.0
  %5959 = vmatprep.subr.mxu0 0.0
  %5960 = vmatpush1.msra.mxu0 0.0
  %5961 = vmatprep.subr.mxu0 0.0
  %5962 = vmatpush1.msra.mxu0 0.0
  %5963 = vmatprep.subr.mxu0 0.0
  %5964 = vmatpush1.msra.mxu0 0.0
  %5965 = vmatprep.subr.mxu0 0.0
  %5966 = vmatpush1.msra.mxu0 0.0
  %5967 = vmatprep.subr.mxu0 0.0
  %5968 = vmatpush1.msra.mxu0 0.0
  %5969 = vmatprep.subr.mxu0 0.0
  %5970 = vmatpush1.msra.mxu0 0.0
  %5971 = vmatprep.subr.mxu0 0.0
  %5972 = vmatpush1.msra.mxu0 0.0
  %5973 = vmatprep.subr.mxu0 0.0
  %5974 = vmatpush1.msra.mxu0 0.0
  %5975 = vmatprep.subr.mxu0 0.0
  %5976 = vmatpush1.msra.mxu0 0.0
  %5977 = vmatprep.subr.mxu0 0.0
  %5978 = vmatpush1.msra.mxu0 0.0
  %5979 = vmatprep.subr.mxu0 0.0
  %5980 = vmatpush1.msra.mxu0 0.0
  %5981 = vmatprep.subr.mxu0 0.0
  %5982 = vmatpush1.msra.mxu0 0.0
  %5983 = vmatprep.subr.mxu0 0.0
  %5984 = vmatpush1.msra.mxu0 0.0
  %5985 = vmatprep.subr.mxu0 0.0
  %5986 = vmatpush1.msra.mxu0 0.0
  %5987 = vmatprep.subr.mxu0 0.0
  %5988 = vmatpush1.msra.mxu0 0.0
  %5989 = vmatprep.subr.mxu0 0.0
  %5990 = vmatpush1.msra.mxu0 0.0
  %5991 = vmatprep.subr.mxu0 0.0
  %5992 = vmatpush1.msra.mxu0 0.0
  %5993 = vmatprep.subr.mxu0 0.0
  %5994 = vmatpush1.msra.mxu0 0.0
  %5995 = vmatprep.subr.mxu0 0.0
  %5996 = vmatpush1.msra.mxu0 0.0
  %5997 = vmatprep.subr.mxu0 0.0
  %5998 = vmatpush1.msra.mxu0 0.0
  %5999 = vmatprep.subr.mxu0 0.0
  %6000 = vmatpush1.msra.mxu0 0.0
  %6001 = vmatprep.subr.mxu0 0.0
  %6002 = vmatpush1.msra.mxu0 0.0
  %6003 = vmatprep.subr.mxu0 0.0
  %6004 = vmatpush1.msra.mxu0 0.0
  %6005 = vmatprep.subr.mxu0 0.0
  %6006 = vmatpush1.msra.mxu0 0.0
  %6007 = vmatprep.mubr.f32.mxu0 0.0
  %v6008 = vand.u32 %v5634, 4294901760
  %6009 = vmatmul.mubr.f32.gmra.mrb[0].mxu0 %v6008
  %v6010 = vpop.f32.mrb[0].mxu0
  %v6011 = vadd.f32 %v5937, %v6010
  %v6012 = vpop.f32.mrb[0].mxu0
  %6013 = vdwg.mxu0
  %6014 = vmatprep.subr.mxu0 0.0
  %v6015 = vand.u32 %v5638, 4294901760
  %6016 = vmatpush1.msra.mxu0 %v6015
  %6017 = vmatprep.subr.mxu0 0.0
  %6018 = vmatpush1.msra.mxu0 0.0
  %6019 = vmatprep.subr.mxu0 0.0
  %6020 = vmatpush1.msra.mxu0 0.0
  %6021 = vmatprep.subr.mxu0 0.0
  %6022 = vmatpush1.msra.mxu0 0.0
  %6023 = vmatprep.subr.mxu0 0.0
  %6024 = vmatpush1.msra.mxu0 0.0
  %6025 = vmatprep.subr.mxu0 0.0
  %6026 = vmatpush1.msra.mxu0 0.0
  %6027 = vmatprep.subr.mxu0 0.0
  %6028 = vmatpush1.msra.mxu0 0.0
  %6029 = vmatprep.subr.mxu0 0.0
  %6030 = vmatpush1.msra.mxu0 0.0
  %6031 = vmatprep.subr.mxu0 0.0
  %6032 = vmatpush1.msra.mxu0 0.0
  %6033 = vmatprep.subr.mxu0 0.0
  %6034 = vmatpush1.msra.mxu0 0.0
  %6035 = vmatprep.subr.mxu0 0.0
  %6036 = vmatpush1.msra.mxu0 0.0
  %6037 = vmatprep.subr.mxu0 0.0
  %6038 = vmatpush1.msra.mxu0 0.0
  %6039 = vmatprep.subr.mxu0 0.0
  %6040 = vmatpush1.msra.mxu0 0.0
  %6041 = vmatprep.subr.mxu0 0.0
  %6042 = vmatpush1.msra.mxu0 0.0
  %6043 = vmatprep.subr.mxu0 0.0
  %6044 = vmatpush1.msra.mxu0 0.0
  %6045 = vmatprep.subr.mxu0 0.0
  %6046 = vmatpush1.msra.mxu0 0.0
  %6047 = vmatprep.subr.mxu0 0.0
  %6048 = vmatpush1.msra.mxu0 0.0
  %6049 = vmatprep.subr.mxu0 0.0
  %6050 = vmatpush1.msra.mxu0 0.0
  %6051 = vmatprep.subr.mxu0 0.0
  %6052 = vmatpush1.msra.mxu0 0.0
  %6053 = vmatprep.subr.mxu0 0.0
  %6054 = vmatpush1.msra.mxu0 0.0
  %6055 = vmatprep.subr.mxu0 0.0
  %6056 = vmatpush1.msra.mxu0 0.0
  %6057 = vmatprep.subr.mxu0 0.0
  %6058 = vmatpush1.msra.mxu0 0.0
  %6059 = vmatprep.subr.mxu0 0.0
  %6060 = vmatpush1.msra.mxu0 0.0
  %6061 = vmatprep.subr.mxu0 0.0
  %6062 = vmatpush1.msra.mxu0 0.0
  %6063 = vmatprep.subr.mxu0 0.0
  %6064 = vmatpush1.msra.mxu0 0.0
  %6065 = vmatprep.subr.mxu0 0.0
  %6066 = vmatpush1.msra.mxu0 0.0
  %6067 = vmatprep.subr.mxu0 0.0
  %6068 = vmatpush1.msra.mxu0 0.0
  %6069 = vmatprep.subr.mxu0 0.0
  %6070 = vmatpush1.msra.mxu0 0.0
  %6071 = vmatprep.subr.mxu0 0.0
  %6072 = vmatpush1.msra.mxu0 0.0
  %6073 = vmatprep.subr.mxu0 0.0
  %6074 = vmatpush1.msra.mxu0 0.0
  %6075 = vmatprep.subr.mxu0 0.0
  %6076 = vmatpush1.msra.mxu0 0.0
  %6077 = vmatprep.subr.mxu0 0.0
  %6078 = vmatpush1.msra.mxu0 0.0
  %6079 = vmatprep.mubr.f32.mxu0 0.0
  %v6080 = vand.u32 %v5634, 4294901760
  %6081 = vmatmul.mubr.f32.gmra.mrb[0].mxu0 %v6080
  %v6082 = vpop.f32.mrb[0].mxu0
  %v6083 = vadd.f32 %v6011, %v6082
  %v6084 = vpop.f32.mrb[0].mxu0
  %6085 = vdwg.mxu0
  %v6087 = vlaneseq
  %v6088 = vshrl.u32 %v6087, 7
  %v6089 = vsub.s32 0, %v6088
  %v6090 = vrot.slane %v5165, %v6089
  %v6093 = vsel %vm938, %v5166, 0
  %v6096 = vsel %vm938, %v5167, 0
  %6098 = vmatprep.subr.mxu0 0.0
  %v6099 = vand.u32 %v5626, 4294901760
  %6100 = vmatpush1.msra.mxu0 %v6099
  %6101 = vmatprep.subr.mxu0 0.0
  %v6102 = vand.u32 %v6083, 4294901760
  %6103 = vmatpush1.msra.mxu0 %v6102
  %6104 = vmatprep.subr.mxu0 0.0
  %6105 = vmatpush1.msra.mxu0 0.0
  %6106 = vmatprep.subr.mxu0 0.0
  %6107 = vmatpush1.msra.mxu0 0.0
  %6108 = vmatprep.subr.mxu0 0.0
  %6109 = vmatpush1.msra.mxu0 0.0
  %6110 = vmatprep.subr.mxu0 0.0
  %6111 = vmatpush1.msra.mxu0 0.0
  %6112 = vmatprep.subr.mxu0 0.0
  %6113 = vmatpush1.msra.mxu0 0.0
  %6114 = vmatprep.subr.mxu0 0.0
  %6115 = vmatpush1.msra.mxu0 0.0
  %6116 = vmatprep.subr.mxu0 0.0
  %6117 = vmatpush1.msra.mxu0 0.0
  %6118 = vmatprep.subr.mxu0 0.0
  %6119 = vmatpush1.msra.mxu0 0.0
  %6120 = vmatprep.subr.mxu0 0.0
  %6121 = vmatpush1.msra.mxu0 0.0
  %6122 = vmatprep.subr.mxu0 0.0
  %6123 = vmatpush1.msra.mxu0 0.0
  %6124 = vmatprep.subr.mxu0 0.0
  %6125 = vmatpush1.msra.mxu0 0.0
  %6126 = vmatprep.subr.mxu0 0.0
  %6127 = vmatpush1.msra.mxu0 0.0
  %6128 = vmatprep.subr.mxu0 0.0
  %6129 = vmatpush1.msra.mxu0 0.0
  %6130 = vmatprep.subr.mxu0 0.0
  %6131 = vmatpush1.msra.mxu0 0.0
  %6132 = vmatprep.subr.mxu0 0.0
  %6133 = vmatpush1.msra.mxu0 0.0
  %6134 = vmatprep.subr.mxu0 0.0
  %6135 = vmatpush1.msra.mxu0 0.0
  %6136 = vmatprep.subr.mxu0 0.0
  %6137 = vmatpush1.msra.mxu0 0.0
  %6138 = vmatprep.subr.mxu0 0.0
  %6139 = vmatpush1.msra.mxu0 0.0
  %6140 = vmatprep.subr.mxu0 0.0
  %6141 = vmatpush1.msra.mxu0 0.0
  %6142 = vmatprep.subr.mxu0 0.0
  %6143 = vmatpush1.msra.mxu0 0.0
  %6144 = vmatprep.subr.mxu0 0.0
  %6145 = vmatpush1.msra.mxu0 0.0
  %6146 = vmatprep.subr.mxu0 0.0
  %6147 = vmatpush1.msra.mxu0 0.0
  %6148 = vmatprep.subr.mxu0 0.0
  %6149 = vmatpush1.msra.mxu0 0.0
  %6150 = vmatprep.subr.mxu0 0.0
  %6151 = vmatpush1.msra.mxu0 0.0
  %6152 = vmatprep.subr.mxu0 0.0
  %6153 = vmatpush1.msra.mxu0 0.0
  %6154 = vmatprep.subr.mxu0 0.0
  %6155 = vmatpush1.msra.mxu0 0.0
  %6156 = vmatprep.subr.mxu0 0.0
  %6157 = vmatpush1.msra.mxu0 0.0
  %6158 = vmatprep.subr.mxu0 0.0
  %6159 = vmatpush1.msra.mxu0 0.0
  %6160 = vmatprep.subr.mxu0 0.0
  %6161 = vmatpush1.msra.mxu0 0.0
  %6162 = vmatprep.subr.mxu0 0.0
  %6163 = vmatpush1.msra.mxu0 0.0
  %6164 = vmatprep.mubr.f32.mxu0 0.0
  %v6165 = vand.u32 %v6093, 4294901760
  %v6166 = vsub.f32 %v6093, %v6165
  %v6167 = vand.u32 %v6166, 4294901760
  %v6168 = vsub.f32 %v6166, %v6167
  %v6169 = vand.u32 %v6168, 4294901760
  %6170 = vmatmul.mubr.f32.gmra.mrb[0].mxu0 %v6169
  %v6171 = vpop.f32.mrb[0].mxu0
  %v6172 = vadd.f32 %v6090, %v6171
  %v6173 = vpop.f32.mrb[0].mxu0
  %6174 = vmatprep.mubr.f32.mxu0 0.0
  %v6175 = vand.u32 %v6096, 4294901760
  %v6176 = vsub.f32 %v6096, %v6175
  %v6177 = vand.u32 %v6176, 4294901760
  %v6178 = vsub.f32 %v6176, %v6177
  %v6179 = vand.u32 %v6178, 4294901760
  %6180 = vmatmul.mubr.f32.gmra.mrb[0].mxu0 %v6179
  %v6181 = vpop.f32.mrb[0].mxu0
  %v6182 = vadd.f32 %v6090, %v6181
  %v6183 = vpop.f32.mrb[0].mxu0
  %6184 = vdwg.mxu0
  %6185 = vmatprep.subr.mxu0 0.0
  %v6186 = vand.u32 %v5626, 4294901760
  %v6187 = vsub.f32 %v5626, %v6186
  %v6188 = vand.u32 %v6187, 4294901760
  %v6189 = vsub.f32 %v6187, %v6188
  %v6190 = vand.u32 %v6189, 4294901760
  %6191 = vmatpush1.msra.mxu0 %v6190
  %6192 = vmatprep.subr.mxu0 0.0
  %v6193 = vand.u32 %v6083, 4294901760
  %v6194 = vsub.f32 %v6083, %v6193
  %v6195 = vand.u32 %v6194, 4294901760
  %v6196 = vsub.f32 %v6194, %v6195
  %v6197 = vand.u32 %v6196, 4294901760
  %6198 = vmatpush1.msra.mxu0 %v6197
  %6199 = vmatprep.subr.mxu0 0.0
  %6200 = vmatpush1.msra.mxu0 0.0
  %6201 = vmatprep.subr.mxu0 0.0
  %6202 = vmatpush1.msra.mxu0 0.0
  %6203 = vmatprep.subr.mxu0 0.0
  %6204 = vmatpush1.msra.mxu0 0.0
  %6205 = vmatprep.subr.mxu0 0.0
  %6206 = vmatpush1.msra.mxu0 0.0
  %6207 = vmatprep.subr.mxu0 0.0
  %6208 = vmatpush1.msra.mxu0 0.0
  %6209 = vmatprep.subr.mxu0 0.0
  %6210 = vmatpush1.msra.mxu0 0.0
  %6211 = vmatprep.subr.mxu0 0.0
  %6212 = vmatpush1.msra.mxu0 0.0
  %6213 = vmatprep.subr.mxu0 0.0
  %6214 = vmatpush1.msra.mxu0 0.0
  %6215 = vmatprep.subr.mxu0 0.0
  %6216 = vmatpush1.msra.mxu0 0.0
  %6217 = vmatprep.subr.mxu0 0.0
  %6218 = vmatpush1.msra.mxu0 0.0
  %6219 = vmatprep.subr.mxu0 0.0
  %6220 = vmatpush1.msra.mxu0 0.0
  %6221 = vmatprep.subr.mxu0 0.0
  %6222 = vmatpush1.msra.mxu0 0.0
  %6223 = vmatprep.subr.mxu0 0.0
  %6224 = vmatpush1.msra.mxu0 0.0
  %6225 = vmatprep.subr.mxu0 0.0
  %6226 = vmatpush1.msra.mxu0 0.0
  %6227 = vmatprep.subr.mxu0 0.0
  %6228 = vmatpush1.msra.mxu0 0.0
  %6229 = vmatprep.subr.mxu0 0.0
  %6230 = vmatpush1.msra.mxu0 0.0
  %6231 = vmatprep.subr.mxu0 0.0
  %6232 = vmatpush1.msra.mxu0 0.0
  %6233 = vmatprep.subr.mxu0 0.0
  %6234 = vmatpush1.msra.mxu0 0.0
  %6235 = vmatprep.subr.mxu0 0.0
  %6236 = vmatpush1.msra.mxu0 0.0
  %6237 = vmatprep.subr.mxu0 0.0
  %6238 = vmatpush1.msra.mxu0 0.0
  %6239 = vmatprep.subr.mxu0 0.0
  %6240 = vmatpush1.msra.mxu0 0.0
  %6241 = vmatprep.subr.mxu0 0.0
  %6242 = vmatpush1.msra.mxu0 0.0
  %6243 = vmatprep.subr.mxu0 0.0
  %6244 = vmatpush1.msra.mxu0 0.0
  %6245 = vmatprep.subr.mxu0 0.0
  %6246 = vmatpush1.msra.mxu0 0.0
  %6247 = vmatprep.subr.mxu0 0.0
  %6248 = vmatpush1.msra.mxu0 0.0
  %6249 = vmatprep.subr.mxu0 0.0
  %6250 = vmatpush1.msra.mxu0 0.0
  %6251 = vmatprep.subr.mxu0 0.0
  %6252 = vmatpush1.msra.mxu0 0.0
  %6253 = vmatprep.subr.mxu0 0.0
  %6254 = vmatpush1.msra.mxu0 0.0
  %6255 = vmatprep.subr.mxu0 0.0
  %6256 = vmatpush1.msra.mxu0 0.0
  %6257 = vmatprep.subr.mxu0 0.0
  %6258 = vmatpush1.msra.mxu0 0.0
  %6259 = vmatprep.mubr.f32.mxu0 0.0
  %v6260 = vand.u32 %v6093, 4294901760
  %6261 = vmatmul.mubr.f32.gmra.mrb[0].mxu0 %v6260
  %v6262 = vpop.f32.mrb[0].mxu0
  %v6263 = vadd.f32 %v6172, %v6262
  %v6264 = vpop.f32.mrb[0].mxu0
  %6265 = vmatprep.mubr.f32.mxu0 0.0
  %v6266 = vand.u32 %v6096, 4294901760
  %6267 = vmatmul.mubr.f32.gmra.mrb[0].mxu0 %v6266
  %v6268 = vpop.f32.mrb[0].mxu0
  %v6269 = vadd.f32 %v6182, %v6268
  %v6270 = vpop.f32.mrb[0].mxu0
  %6271 = vdwg.mxu0
  %6272 = vmatprep.subr.mxu0 0.0
  %v6273 = vand.u32 %v5626, 4294901760
  %v6274 = vsub.f32 %v5626, %v6273
  %6275 = vmatpush1.msra.mxu0 %v6274
  %6276 = vmatprep.subr.mxu0 0.0
  %v6277 = vand.u32 %v6083, 4294901760
  %v6278 = vsub.f32 %v6083, %v6277
  %6279 = vmatpush1.msra.mxu0 %v6278
  %6280 = vmatprep.subr.mxu0 0.0
  %6281 = vmatpush1.msra.mxu0 0.0
  %6282 = vmatprep.subr.mxu0 0.0
  %6283 = vmatpush1.msra.mxu0 0.0
  %6284 = vmatprep.subr.mxu0 0.0
  %6285 = vmatpush1.msra.mxu0 0.0
  %6286 = vmatprep.subr.mxu0 0.0
  %6287 = vmatpush1.msra.mxu0 0.0
  %6288 = vmatprep.subr.mxu0 0.0
  %6289 = vmatpush1.msra.mxu0 0.0
  %6290 = vmatprep.subr.mxu0 0.0
  %6291 = vmatpush1.msra.mxu0 0.0
  %6292 = vmatprep.subr.mxu0 0.0
  %6293 = vmatpush1.msra.mxu0 0.0
  %6294 = vmatprep.subr.mxu0 0.0
  %6295 = vmatpush1.msra.mxu0 0.0
  %6296 = vmatprep.subr.mxu0 0.0
  %6297 = vmatpush1.msra.mxu0 0.0
  %6298 = vmatprep.subr.mxu0 0.0
  %6299 = vmatpush1.msra.mxu0 0.0
  %6300 = vmatprep.subr.mxu0 0.0
  %6301 = vmatpush1.msra.mxu0 0.0
  %6302 = vmatprep.subr.mxu0 0.0
  %6303 = vmatpush1.msra.mxu0 0.0
  %6304 = vmatprep.subr.mxu0 0.0
  %6305 = vmatpush1.msra.mxu0 0.0
  %6306 = vmatprep.subr.mxu0 0.0
  %6307 = vmatpush1.msra.mxu0 0.0
  %6308 = vmatprep.subr.mxu0 0.0
  %6309 = vmatpush1.msra.mxu0 0.0
  %6310 = vmatprep.subr.mxu0 0.0
  %6311 = vmatpush1.msra.mxu0 0.0
  %6312 = vmatprep.subr.mxu0 0.0
  %6313 = vmatpush1.msra.mxu0 0.0
  %6314 = vmatprep.subr.mxu0 0.0
  %6315 = vmatpush1.msra.mxu0 0.0
  %6316 = vmatprep.subr.mxu0 0.0
  %6317 = vmatpush1.msra.mxu0 0.0
  %6318 = vmatprep.subr.mxu0 0.0
  %6319 = vmatpush1.msra.mxu0 0.0
  %6320 = vmatprep.subr.mxu0 0.0
  %6321 = vmatpush1.msra.mxu0 0.0
  %6322 = vmatprep.subr.mxu0 0.0
  %6323 = vmatpush1.msra.mxu0 0.0
  %6324 = vmatprep.subr.mxu0 0.0
  %6325 = vmatpush1.msra.mxu0 0.0
  %6326 = vmatprep.subr.mxu0 0.0
  %6327 = vmatpush1.msra.mxu0 0.0
  %6328 = vmatprep.subr.mxu0 0.0
  %6329 = vmatpush1.msra.mxu0 0.0
  %6330 = vmatprep.subr.mxu0 0.0
  %6331 = vmatpush1.msra.mxu0 0.0
  %6332 = vmatprep.subr.mxu0 0.0
  %6333 = vmatpush1.msra.mxu0 0.0
  %6334 = vmatprep.subr.mxu0 0.0
  %6335 = vmatpush1.msra.mxu0 0.0
  %6336 = vmatprep.subr.mxu0 0.0
  %6337 = vmatpush1.msra.mxu0 0.0
  %6338 = vmatprep.subr.mxu0 0.0
  %6339 = vmatpush1.msra.mxu0 0.0
  %6340 = vmatprep.mubr.f32.mxu0 0.0
  %v6341 = vand.u32 %v6093, 4294901760
  %v6342 = vsub.f32 %v6093, %v6341
  %6343 = vmatmul.mubr.f32.gmra.mrb[0].mxu0 %v6342
  %v6344 = vpop.f32.mrb[0].mxu0
  %v6345 = vadd.f32 %v6263, %v6344
  %v6346 = vpop.f32.mrb[0].mxu0
  %6347 = vmatprep.mubr.f32.mxu0 0.0
  %v6348 = vand.u32 %v6096, 4294901760
  %v6349 = vsub.f32 %v6096, %v6348
  %6350 = vmatmul.mubr.f32.gmra.mrb[0].mxu0 %v6349
  %v6351 = vpop.f32.mrb[0].mxu0
  %v6352 = vadd.f32 %v6269, %v6351
  %v6353 = vpop.f32.mrb[0].mxu0
  %6354 = vdwg.mxu0
  %6355 = vmatprep.subr.mxu0 0.0
  %v6356 = vand.u32 %v5626, 4294901760
  %6357 = vmatpush1.msra.mxu0 %v6356
  %6358 = vmatprep.subr.mxu0 0.0
  %v6359 = vand.u32 %v6083, 4294901760
  %6360 = vmatpush1.msra.mxu0 %v6359
  %6361 = vmatprep.subr.mxu0 0.0
  %6362 = vmatpush1.msra.mxu0 0.0
  %6363 = vmatprep.subr.mxu0 0.0
  %6364 = vmatpush1.msra.mxu0 0.0
  %6365 = vmatprep.subr.mxu0 0.0
  %6366 = vmatpush1.msra.mxu0 0.0
  %6367 = vmatprep.subr.mxu0 0.0
  %6368 = vmatpush1.msra.mxu0 0.0
  %6369 = vmatprep.subr.mxu0 0.0
  %6370 = vmatpush1.msra.mxu0 0.0
  %6371 = vmatprep.subr.mxu0 0.0
  %6372 = vmatpush1.msra.mxu0 0.0
  %6373 = vmatprep.subr.mxu0 0.0
  %6374 = vmatpush1.msra.mxu0 0.0
  %6375 = vmatprep.subr.mxu0 0.0
  %6376 = vmatpush1.msra.mxu0 0.0
  %6377 = vmatprep.subr.mxu0 0.0
  %6378 = vmatpush1.msra.mxu0 0.0
  %6379 = vmatprep.subr.mxu0 0.0
  %6380 = vmatpush1.msra.mxu0 0.0
  %6381 = vmatprep.subr.mxu0 0.0
  %6382 = vmatpush1.msra.mxu0 0.0
  %6383 = vmatprep.subr.mxu0 0.0
  %6384 = vmatpush1.msra.mxu0 0.0
  %6385 = vmatprep.subr.mxu0 0.0
  %6386 = vmatpush1.msra.mxu0 0.0
  %6387 = vmatprep.subr.mxu0 0.0
  %6388 = vmatpush1.msra.mxu0 0.0
  %6389 = vmatprep.subr.mxu0 0.0
  %6390 = vmatpush1.msra.mxu0 0.0
  %6391 = vmatprep.subr.mxu0 0.0
  %6392 = vmatpush1.msra.mxu0 0.0
  %6393 = vmatprep.subr.mxu0 0.0
  %6394 = vmatpush1.msra.mxu0 0.0
  %6395 = vmatprep.subr.mxu0 0.0
  %6396 = vmatpush1.msra.mxu0 0.0
  %6397 = vmatprep.subr.mxu0 0.0
  %6398 = vmatpush1.msra.mxu0 0.0
  %6399 = vmatprep.subr.mxu0 0.0
  %6400 = vmatpush1.msra.mxu0 0.0
  %6401 = vmatprep.subr.mxu0 0.0
  %6402 = vmatpush1.msra.mxu0 0.0
  %6403 = vmatprep.subr.mxu0 0.0
  %6404 = vmatpush1.msra.mxu0 0.0
  %6405 = vmatprep.subr.mxu0 0.0
  %6406 = vmatpush1.msra.mxu0 0.0
  %6407 = vmatprep.subr.mxu0 0.0
  %6408 = vmatpush1.msra.mxu0 0.0
  %6409 = vmatprep.subr.mxu0 0.0
  %6410 = vmatpush1.msra.mxu0 0.0
  %6411 = vmatprep.subr.mxu0 0.0
  %6412 = vmatpush1.msra.mxu0 0.0
  %6413 = vmatprep.subr.mxu0 0.0
  %6414 = vmatpush1.msra.mxu0 0.0
  %6415 = vmatprep.subr.mxu0 0.0
  %6416 = vmatpush1.msra.mxu0 0.0
  %6417 = vmatprep.subr.mxu0 0.0
  %6418 = vmatpush1.msra.mxu0 0.0
  %6419 = vmatprep.subr.mxu0 0.0
  %6420 = vmatpush1.msra.mxu0 0.0
  %6421 = vmatprep.mubr.f32.mxu0 0.0
  %v6422 = vand.u32 %v6093, 4294901760
  %v6423 = vsub.f32 %v6093, %v6422
  %v6424 = vand.u32 %v6423, 4294901760
  %6425 = vmatmul.mubr.f32.gmra.mrb[0].mxu0 %v6424
  %v6426 = vpop.f32.mrb[0].mxu0
  %v6427 = vadd.f32 %v6345, %v6426
  %v6428 = vpop.f32.mrb[0].mxu0
  %6429 = vmatprep.mubr.f32.mxu0 0.0
  %v6430 = vand.u32 %v6096, 4294901760
  %v6431 = vsub.f32 %v6096, %v6430
  %v6432 = vand.u32 %v6431, 4294901760
  %6433 = vmatmul.mubr.f32.gmra.mrb[0].mxu0 %v6432
  %v6434 = vpop.f32.mrb[0].mxu0
  %v6435 = vadd.f32 %v6352, %v6434
  %v6436 = vpop.f32.mrb[0].mxu0
  %6437 = vdwg.mxu0
  %6438 = vmatprep.subr.mxu0 0.0
  %v6439 = vand.u32 %v5626, 4294901760
  %v6440 = vsub.f32 %v5626, %v6439
  %v6441 = vand.u32 %v6440, 4294901760
  %6442 = vmatpush1.msra.mxu0 %v6441
  %6443 = vmatprep.subr.mxu0 0.0
  %v6444 = vand.u32 %v6083, 4294901760
  %v6445 = vsub.f32 %v6083, %v6444
  %v6446 = vand.u32 %v6445, 4294901760
  %6447 = vmatpush1.msra.mxu0 %v6446
  %6448 = vmatprep.subr.mxu0 0.0
  %6449 = vmatpush1.msra.mxu0 0.0
  %6450 = vmatprep.subr.mxu0 0.0
  %6451 = vmatpush1.msra.mxu0 0.0
  %6452 = vmatprep.subr.mxu0 0.0
  %6453 = vmatpush1.msra.mxu0 0.0
  %6454 = vmatprep.subr.mxu0 0.0
  %6455 = vmatpush1.msra.mxu0 0.0
  %6456 = vmatprep.subr.mxu0 0.0
  %6457 = vmatpush1.msra.mxu0 0.0
  %6458 = vmatprep.subr.mxu0 0.0
  %6459 = vmatpush1.msra.mxu0 0.0
  %6460 = vmatprep.subr.mxu0 0.0
  %6461 = vmatpush1.msra.mxu0 0.0
  %6462 = vmatprep.subr.mxu0 0.0
  %6463 = vmatpush1.msra.mxu0 0.0
  %6464 = vmatprep.subr.mxu0 0.0
  %6465 = vmatpush1.msra.mxu0 0.0
  %6466 = vmatprep.subr.mxu0 0.0
  %6467 = vmatpush1.msra.mxu0 0.0
  %6468 = vmatprep.subr.mxu0 0.0
  %6469 = vmatpush1.msra.mxu0 0.0
  %6470 = vmatprep.subr.mxu0 0.0
  %6471 = vmatpush1.msra.mxu0 0.0
  %6472 = vmatprep.subr.mxu0 0.0
  %6473 = vmatpush1.msra.mxu0 0.0
  %6474 = vmatprep.subr.mxu0 0.0
  %6475 = vmatpush1.msra.mxu0 0.0
  %6476 = vmatprep.subr.mxu0 0.0
  %6477 = vmatpush1.msra.mxu0 0.0
  %6478 = vmatprep.subr.mxu0 0.0
  %6479 = vmatpush1.msra.mxu0 0.0
  %6480 = vmatprep.subr.mxu0 0.0
  %6481 = vmatpush1.msra.mxu0 0.0
  %6482 = vmatprep.subr.mxu0 0.0
  %6483 = vmatpush1.msra.mxu0 0.0
  %6484 = vmatprep.subr.mxu0 0.0
  %6485 = vmatpush1.msra.mxu0 0.0
  %6486 = vmatprep.subr.mxu0 0.0
  %6487 = vmatpush1.msra.mxu0 0.0
  %6488 = vmatprep.subr.mxu0 0.0
  %6489 = vmatpush1.msra.mxu0 0.0
  %6490 = vmatprep.subr.mxu0 0.0
  %6491 = vmatpush1.msra.mxu0 0.0
  %6492 = vmatprep.subr.mxu0 0.0
  %6493 = vmatpush1.msra.mxu0 0.0
  %6494 = vmatprep.subr.mxu0 0.0
  %6495 = vmatpush1.msra.mxu0 0.0
  %6496 = vmatprep.subr.mxu0 0.0
  %6497 = vmatpush1.msra.mxu0 0.0
  %6498 = vmatprep.subr.mxu0 0.0
  %6499 = vmatpush1.msra.mxu0 0.0
  %6500 = vmatprep.subr.mxu0 0.0
  %6501 = vmatpush1.msra.mxu0 0.0
  %6502 = vmatprep.subr.mxu0 0.0
  %6503 = vmatpush1.msra.mxu0 0.0
  %6504 = vmatprep.subr.mxu0 0.0
  %6505 = vmatpush1.msra.mxu0 0.0
  %6506 = vmatprep.subr.mxu0 0.0
  %6507 = vmatpush1.msra.mxu0 0.0
  %6508 = vmatprep.mubr.f32.mxu0 0.0
  %v6509 = vand.u32 %v6093, 4294901760
  %6510 = vmatmul.mubr.f32.gmra.mrb[0].mxu0 %v6509
  %v6511 = vpop.f32.mrb[0].mxu0
  %v6512 = vadd.f32 %v6427, %v6511
  %v6513 = vpop.f32.mrb[0].mxu0
  %6514 = vmatprep.mubr.f32.mxu0 0.0
  %v6515 = vand.u32 %v6096, 4294901760
  %6516 = vmatmul.mubr.f32.gmra.mrb[0].mxu0 %v6515
  %v6517 = vpop.f32.mrb[0].mxu0
  %v6518 = vadd.f32 %v6435, %v6517
  %v6519 = vpop.f32.mrb[0].mxu0
  %6520 = vdwg.mxu0
  %6521 = vmatprep.subr.mxu0 0.0
  %v6522 = vand.u32 %v5626, 4294901760
  %6523 = vmatpush1.msra.mxu0 %v6522
  %6524 = vmatprep.subr.mxu0 0.0
  %v6525 = vand.u32 %v6083, 4294901760
  %6526 = vmatpush1.msra.mxu0 %v6525
  %6527 = vmatprep.subr.mxu0 0.0
  %6528 = vmatpush1.msra.mxu0 0.0
  %6529 = vmatprep.subr.mxu0 0.0
  %6530 = vmatpush1.msra.mxu0 0.0
  %6531 = vmatprep.subr.mxu0 0.0
  %6532 = vmatpush1.msra.mxu0 0.0
  %6533 = vmatprep.subr.mxu0 0.0
  %6534 = vmatpush1.msra.mxu0 0.0
  %6535 = vmatprep.subr.mxu0 0.0
  %6536 = vmatpush1.msra.mxu0 0.0
  %6537 = vmatprep.subr.mxu0 0.0
  %6538 = vmatpush1.msra.mxu0 0.0
  %6539 = vmatprep.subr.mxu0 0.0
  %6540 = vmatpush1.msra.mxu0 0.0
  %6541 = vmatprep.subr.mxu0 0.0
  %6542 = vmatpush1.msra.mxu0 0.0
  %6543 = vmatprep.subr.mxu0 0.0
  %6544 = vmatpush1.msra.mxu0 0.0
  %6545 = vmatprep.subr.mxu0 0.0
  %6546 = vmatpush1.msra.mxu0 0.0
  %6547 = vmatprep.subr.mxu0 0.0
  %6548 = vmatpush1.msra.mxu0 0.0
  %6549 = vmatprep.subr.mxu0 0.0
  %6550 = vmatpush1.msra.mxu0 0.0
  %6551 = vmatprep.subr.mxu0 0.0
  %6552 = vmatpush1.msra.mxu0 0.0
  %6553 = vmatprep.subr.mxu0 0.0
  %6554 = vmatpush1.msra.mxu0 0.0
  %6555 = vmatprep.subr.mxu0 0.0
  %6556 = vmatpush1.msra.mxu0 0.0
  %6557 = vmatprep.subr.mxu0 0.0
  %6558 = vmatpush1.msra.mxu0 0.0
  %6559 = vmatprep.subr.mxu0 0.0
  %6560 = vmatpush1.msra.mxu0 0.0
  %6561 = vmatprep.subr.mxu0 0.0
  %6562 = vmatpush1.msra.mxu0 0.0
  %6563 = vmatprep.subr.mxu0 0.0
  %6564 = vmatpush1.msra.mxu0 0.0
  %6565 = vmatprep.subr.mxu0 0.0
  %6566 = vmatpush1.msra.mxu0 0.0
  %6567 = vmatprep.subr.mxu0 0.0
  %6568 = vmatpush1.msra.mxu0 0.0
  %6569 = vmatprep.subr.mxu0 0.0
  %6570 = vmatpush1.msra.mxu0 0.0
  %6571 = vmatprep.subr.mxu0 0.0
  %6572 = vmatpush1.msra.mxu0 0.0
  %6573 = vmatprep.subr.mxu0 0.0
  %6574 = vmatpush1.msra.mxu0 0.0
  %6575 = vmatprep.subr.mxu0 0.0
  %6576 = vmatpush1.msra.mxu0 0.0
  %6577 = vmatprep.subr.mxu0 0.0
  %6578 = vmatpush1.msra.mxu0 0.0
  %6579 = vmatprep.subr.mxu0 0.0
  %6580 = vmatpush1.msra.mxu0 0.0
  %6581 = vmatprep.subr.mxu0 0.0
  %6582 = vmatpush1.msra.mxu0 0.0
  %6583 = vmatprep.subr.mxu0 0.0
  %6584 = vmatpush1.msra.mxu0 0.0
  %6585 = vmatprep.subr.mxu0 0.0
  %6586 = vmatpush1.msra.mxu0 0.0
  %6587 = vmatprep.mubr.f32.mxu0 0.0
  %v6588 = vand.u32 %v6093, 4294901760
  %6589 = vmatmul.mubr.f32.gmra.mrb[0].mxu0 %v6588
  %v6590 = vpop.f32.mrb[0].mxu0
  %v6591 = vadd.f32 %v6512, %v6590
  %v6592 = vpop.f32.mrb[0].mxu0
  %6593 = vmatprep.mubr.f32.mxu0 0.0
  %v6594 = vand.u32 %v6096, 4294901760
  %6595 = vmatmul.mubr.f32.gmra.mrb[0].mxu0 %v6594
  %v6596 = vpop.f32.mrb[0].mxu0
  %v6597 = vadd.f32 %v6518, %v6596
  %v6598 = vpop.f32.mrb[0].mxu0
  %6599 = vdwg.mxu0
  %v6600 = vmax.f32 %v6591, 0.0
  %v6601 = vmax.f32 %v6597, 0.0
  %v6604 = vrot.slane %v6600, 7
  %v6605 = vrot.slane %v6601, 7
  %v6606 = vsel %vm195, %v6604, %v6605
  %v6609 = vsel %vm195, 0.0, %v6604
  %v6610 = vsel %vm2908, %v6609, 0.0
  %v6611 = vsel %vm2909, %v6606, 0.0
  %v6612 = vrot.slane %v6600, 1
  %v6613 = vrot.slane %v6601, 1
  %v6614 = vsel %vm212, %v6612, %v6613
  %v6617 = vsel %vm212, %v6613, 0.0
  %v6618 = vsel %vm2910, %v6614, 0.0
  %v6619 = vsel %vm2911, %v6617, 0.0
  %v6620 = vld [vmem:[%s39] sm:$0xff]
  %v6621 = vld [vmem:[%s39 + $0x8] sm:$0xff]
  %v6622 = vld [vmem:[%s39 + $0x10] sm:$0xff]
  %v6623 = vld [vmem:[%s39 + $0x18] sm:$0xff]
  %v6624 = vld [vmem:[%s39 + $0x20] sm:$0xff]
  %v6625 = vld [vmem:[%s39 + $0x28] sm:$0xff]
  %v6626 = vld [vmem:[%s41] sm:$0x1]
  %6627 = vrot.lane.b32.xlu0 %v6600, 16
  %v6628 = vpop.permute.xlu0 %6627
  %6629 = vrot.lane.b32.xlu0 %v6601, 16
  %v6630 = vpop.permute.xlu0 %6629
  %6635 = vrot.lane.b32.xlu0 %v6618, 32
  %v6636 = vpop.permute.xlu0 %6635
  %6637 = vrot.lane.b32.xlu0 %v6619, 32
  %v6638 = vpop.permute.xlu0 %6637
  %v6641 = vsel %vm938, %v6610, %v6628
  %v6642 = vsel %vm938, %v6611, %v6630
  %v6643 = vsel %vm943, %v6641, %v6636
  %v6644 = vsel %vm943, %v6642, %v6638
  %v6646 = vlaneseq
  %v6647 = vshrl.u32 %v6646, 7
  %v6648 = vsub.s32 0, %v6647
  %v6649 = vrot.slane %v6626, %v6648
  %v6652 = vsel %vm954, %v6643, 0
  %v6655 = vsel %vm954, %v6644, 0
  %6657 = vmatprep.subr.mxu0 0.0
  %v6658 = vand.u32 %v6620, 4294901760
  %6659 = vmatpush1.msra.mxu0 %v6658
  %6660 = vmatprep.subr.mxu0 0.0
  %v6661 = vand.u32 %v6621, 4294901760
  %6662 = vmatpush1.msra.mxu0 %v6661
  %6663 = vmatprep.subr.mxu0 0.0
  %v6664 = vand.u32 %v6622, 4294901760
  %6665 = vmatpush1.msra.mxu0 %v6664
  %6666 = vmatprep.subr.mxu0 0.0
  %v6667 = vand.u32 %v6623, 4294901760
  %6668 = vmatpush1.msra.mxu0 %v6667
  %6669 = vmatprep.subr.mxu0 0.0
  %v6670 = vand.u32 %v6624, 4294901760
  %6671 = vmatpush1.msra.mxu0 %v6670
  %6672 = vmatprep.subr.mxu0 0.0
  %v6673 = vand.u32 %v6625, 4294901760
  %6674 = vmatpush1.msra.mxu0 %v6673
  %6675 = vmatprep.subr.mxu0 0.0
  %6676 = vmatpush1.msra.mxu0 0.0
  %6677 = vmatprep.subr.mxu0 0.0
  %6678 = vmatpush1.msra.mxu0 0.0
  %6679 = vmatprep.subr.mxu0 0.0
  %6680 = vmatpush1.msra.mxu0 0.0
  %6681 = vmatprep.subr.mxu0 0.0
  %6682 = vmatpush1.msra.mxu0 0.0
  %6683 = vmatprep.subr.mxu0 0.0
  %6684 = vmatpush1.msra.mxu0 0.0
  %6685 = vmatprep.subr.mxu0 0.0
  %6686 = vmatpush1.msra.mxu0 0.0
  %6687 = vmatprep.subr.mxu0 0.0
  %6688 = vmatpush1.msra.mxu0 0.0
  %6689 = vmatprep.subr.mxu0 0.0
  %6690 = vmatpush1.msra.mxu0 0.0
  %6691 = vmatprep.subr.mxu0 0.0
  %6692 = vmatpush1.msra.mxu0 0.0
  %6693 = vmatprep.subr.mxu0 0.0
  %6694 = vmatpush1.msra.mxu0 0.0
  %6695 = vmatprep.subr.mxu0 0.0
  %6696 = vmatpush1.msra.mxu0 0.0
  %6697 = vmatprep.subr.mxu0 0.0
  %6698 = vmatpush1.msra.mxu0 0.0
  %6699 = vmatprep.subr.mxu0 0.0
  %6700 = vmatpush1.msra.mxu0 0.0
  %6701 = vmatprep.subr.mxu0 0.0
  %6702 = vmatpush1.msra.mxu0 0.0
  %6703 = vmatprep.subr.mxu0 0.0
  %6704 = vmatpush1.msra.mxu0 0.0
  %6705 = vmatprep.subr.mxu0 0.0
  %6706 = vmatpush1.msra.mxu0 0.0
  %6707 = vmatprep.subr.mxu0 0.0
  %6708 = vmatpush1.msra.mxu0 0.0
  %6709 = vmatprep.subr.mxu0 0.0
  %6710 = vmatpush1.msra.mxu0 0.0
  %6711 = vmatprep.subr.mxu0 0.0
  %6712 = vmatpush1.msra.mxu0 0.0
  %6713 = vmatprep.subr.mxu0 0.0
  %6714 = vmatpush1.msra.mxu0 0.0
  %6715 = vmatprep.subr.mxu0 0.0
  %6716 = vmatpush1.msra.mxu0 0.0
  %6717 = vmatprep.subr.mxu0 0.0
  %6718 = vmatpush1.msra.mxu0 0.0
  %6719 = vmatprep.subr.mxu0 0.0
  %6720 = vmatpush1.msra.mxu0 0.0
  %6721 = vmatprep.subr.mxu0 0.0
  %6722 = vmatpush1.msra.mxu0 0.0
  %6723 = vmatprep.subr.mxu0 0.0
  %6724 = vmatpush1.msra.mxu0 0.0
  %6725 = vmatprep.subr.mxu0 0.0
  %6726 = vmatpush1.msra.mxu0 0.0
  %6727 = vmatprep.mubr.f32.mxu0 0.0
  %v6728 = vand.u32 %v6652, 4294901760
  %v6729 = vsub.f32 %v6652, %v6728
  %v6730 = vand.u32 %v6729, 4294901760
  %v6731 = vsub.f32 %v6729, %v6730
  %v6732 = vand.u32 %v6731, 4294901760
  %6733 = vmatmul.mubr.f32.gmra.mrb[0].mxu0 %v6732
  %v6734 = vpop.f32.mrb[0].mxu0
  %v6735 = vadd.f32 %v6649, %v6734
  %v6736 = vpop.f32.mrb[0].mxu0
  %6737 = vmatprep.mubr.f32.mxu0 0.0
  %v6738 = vand.u32 %v6655, 4294901760
  %v6739 = vsub.f32 %v6655, %v6738
  %v6740 = vand.u32 %v6739, 4294901760
  %v6741 = vsub.f32 %v6739, %v6740
  %v6742 = vand.u32 %v6741, 4294901760
  %6743 = vmatmul.mubr.f32.gmra.mrb[0].mxu0 %v6742
  %v6744 = vpop.f32.mrb[0].mxu0
  %v6745 = vadd.f32 %v6649, %v6744
  %v6746 = vpop.f32.mrb[0].mxu0
  %6747 = vdwg.mxu0
  %6748 = vmatprep.subr.mxu0 0.0
  %v6749 = vand.u32 %v6620, 4294901760
  %v6750 = vsub.f32 %v6620, %v6749
  %v6751 = vand.u32 %v6750, 4294901760
  %v6752 = vsub.f32 %v6750, %v6751
  %v6753 = vand.u32 %v6752, 4294901760
  %6754 = vmatpush1.msra.mxu0 %v6753
  %6755 = vmatprep.subr.mxu0 0.0
  %v6756 = vand.u32 %v6621, 4294901760
  %v6757 = vsub.f32 %v6621, %v6756
  %v6758 = vand.u32 %v6757, 4294901760
  %v6759 = vsub.f32 %v6757, %v6758
  %v6760 = vand.u32 %v6759, 4294901760
  %6761 = vmatpush1.msra.mxu0 %v6760
  %6762 = vmatprep.subr.mxu0 0.0
  %v6763 = vand.u32 %v6622, 4294901760
  %v6764 = vsub.f32 %v6622, %v6763
  %v6765 = vand.u32 %v6764, 4294901760
  %v6766 = vsub.f32 %v6764, %v6765
  %v6767 = vand.u32 %v6766, 4294901760
  %6768 = vmatpush1.msra.mxu0 %v6767
  %6769 = vmatprep.subr.mxu0 0.0
  %v6770 = vand.u32 %v6623, 4294901760
  %v6771 = vsub.f32 %v6623, %v6770
  %v6772 = vand.u32 %v6771, 4294901760
  %v6773 = vsub.f32 %v6771, %v6772
  %v6774 = vand.u32 %v6773, 4294901760
  %6775 = vmatpush1.msra.mxu0 %v6774
  %6776 = vmatprep.subr.mxu0 0.0
  %v6777 = vand.u32 %v6624, 4294901760
  %v6778 = vsub.f32 %v6624, %v6777
  %v6779 = vand.u32 %v6778, 4294901760
  %v6780 = vsub.f32 %v6778, %v6779
  %v6781 = vand.u32 %v6780, 4294901760
  %6782 = vmatpush1.msra.mxu0 %v6781
  %6783 = vmatprep.subr.mxu0 0.0
  %v6784 = vand.u32 %v6625, 4294901760
  %v6785 = vsub.f32 %v6625, %v6784
  %v6786 = vand.u32 %v6785, 4294901760
  %v6787 = vsub.f32 %v6785, %v6786
  %v6788 = vand.u32 %v6787, 4294901760
  %6789 = vmatpush1.msra.mxu0 %v6788
  %6790 = vmatprep.subr.mxu0 0.0
  %6791 = vmatpush1.msra.mxu0 0.0
  %6792 = vmatprep.subr.mxu0 0.0
  %6793 = vmatpush1.msra.mxu0 0.0
  %6794 = vmatprep.subr.mxu0 0.0
  %6795 = vmatpush1.msra.mxu0 0.0
  %6796 = vmatprep.subr.mxu0 0.0
  %6797 = vmatpush1.msra.mxu0 0.0
  %6798 = vmatprep.subr.mxu0 0.0
  %6799 = vmatpush1.msra.mxu0 0.0
  %6800 = vmatprep.subr.mxu0 0.0
  %6801 = vmatpush1.msra.mxu0 0.0
  %6802 = vmatprep.subr.mxu0 0.0
  %6803 = vmatpush1.msra.mxu0 0.0
  %6804 = vmatprep.subr.mxu0 0.0
  %6805 = vmatpush1.msra.mxu0 0.0
  %6806 = vmatprep.subr.mxu0 0.0
  %6807 = vmatpush1.msra.mxu0 0.0
  %6808 = vmatprep.subr.mxu0 0.0
  %6809 = vmatpush1.msra.mxu0 0.0
  %6810 = vmatprep.subr.mxu0 0.0
  %6811 = vmatpush1.msra.mxu0 0.0
  %6812 = vmatprep.subr.mxu0 0.0
  %6813 = vmatpush1.msra.mxu0 0.0
  %6814 = vmatprep.subr.mxu0 0.0
  %6815 = vmatpush1.msra.mxu0 0.0
  %6816 = vmatprep.subr.mxu0 0.0
  %6817 = vmatpush1.msra.mxu0 0.0
  %6818 = vmatprep.subr.mxu0 0.0
  %6819 = vmatpush1.msra.mxu0 0.0
  %6820 = vmatprep.subr.mxu0 0.0
  %6821 = vmatpush1.msra.mxu0 0.0
  %6822 = vmatprep.subr.mxu0 0.0
  %6823 = vmatpush1.msra.mxu0 0.0
  %6824 = vmatprep.subr.mxu0 0.0
  %6825 = vmatpush1.msra.mxu0 0.0
  %6826 = vmatprep.subr.mxu0 0.0
  %6827 = vmatpush1.msra.mxu0 0.0
  %6828 = vmatprep.subr.mxu0 0.0
  %6829 = vmatpush1.msra.mxu0 0.0
  %6830 = vmatprep.subr.mxu0 0.0
  %6831 = vmatpush1.msra.mxu0 0.0
  %6832 = vmatprep.subr.mxu0 0.0
  %6833 = vmatpush1.msra.mxu0 0.0
  %6834 = vmatprep.subr.mxu0 0.0
  %6835 = vmatpush1.msra.mxu0 0.0
  %6836 = vmatprep.subr.mxu0 0.0
  %6837 = vmatpush1.msra.mxu0 0.0
  %6838 = vmatprep.subr.mxu0 0.0
  %6839 = vmatpush1.msra.mxu0 0.0
  %6840 = vmatprep.subr.mxu0 0.0
  %6841 = vmatpush1.msra.mxu0 0.0
  %6842 = vmatprep.mubr.f32.mxu0 0.0
  %v6843 = vand.u32 %v6652, 4294901760
  %6844 = vmatmul.mubr.f32.gmra.mrb[0].mxu0 %v6843
  %v6845 = vpop.f32.mrb[0].mxu0
  %v6846 = vadd.f32 %v6735, %v6845
  %v6847 = vpop.f32.mrb[0].mxu0
  %6848 = vmatprep.mubr.f32.mxu0 0.0
  %v6849 = vand.u32 %v6655, 4294901760
  %6850 = vmatmul.mubr.f32.gmra.mrb[0].mxu0 %v6849
  %v6851 = vpop.f32.mrb[0].mxu0
  %v6852 = vadd.f32 %v6745, %v6851
  %v6853 = vpop.f32.mrb[0].mxu0
  %6854 = vdwg.mxu0
  %6855 = vmatprep.subr.mxu0 0.0
  %v6856 = vand.u32 %v6620, 4294901760
  %v6857 = vsub.f32 %v6620, %v6856
  %6858 = vmatpush1.msra.mxu0 %v6857
  %6859 = vmatprep.subr.mxu0 0.0
  %v6860 = vand.u32 %v6621, 4294901760
  %v6861 = vsub.f32 %v6621, %v6860
  %6862 = vmatpush1.msra.mxu0 %v6861
  %6863 = vmatprep.subr.mxu0 0.0
  %v6864 = vand.u32 %v6622, 4294901760
  %v6865 = vsub.f32 %v6622, %v6864
  %6866 = vmatpush1.msra.mxu0 %v6865
  %6867 = vmatprep.subr.mxu0 0.0
  %v6868 = vand.u32 %v6623, 4294901760
  %v6869 = vsub.f32 %v6623, %v6868
  %6870 = vmatpush1.msra.mxu0 %v6869
  %6871 = vmatprep.subr.mxu0 0.0
  %v6872 = vand.u32 %v6624, 4294901760
  %v6873 = vsub.f32 %v6624, %v6872
  %6874 = vmatpush1.msra.mxu0 %v6873
  %6875 = vmatprep.subr.mxu0 0.0
  %v6876 = vand.u32 %v6625, 4294901760
  %v6877 = vsub.f32 %v6625, %v6876
  %6878 = vmatpush1.msra.mxu0 %v6877
  %6879 = vmatprep.subr.mxu0 0.0
  %6880 = vmatpush1.msra.mxu0 0.0
  %6881 = vmatprep.subr.mxu0 0.0
  %6882 = vmatpush1.msra.mxu0 0.0
  %6883 = vmatprep.subr.mxu0 0.0
  %6884 = vmatpush1.msra.mxu0 0.0
  %6885 = vmatprep.subr.mxu0 0.0
  %6886 = vmatpush1.msra.mxu0 0.0
  %6887 = vmatprep.subr.mxu0 0.0
  %6888 = vmatpush1.msra.mxu0 0.0
  %6889 = vmatprep.subr.mxu0 0.0
  %6890 = vmatpush1.msra.mxu0 0.0
  %6891 = vmatprep.subr.mxu0 0.0
  %6892 = vmatpush1.msra.mxu0 0.0
  %6893 = vmatprep.subr.mxu0 0.0
  %6894 = vmatpush1.msra.mxu0 0.0
  %6895 = vmatprep.subr.mxu0 0.0
  %6896 = vmatpush1.msra.mxu0 0.0
  %6897 = vmatprep.subr.mxu0 0.0
  %6898 = vmatpush1.msra.mxu0 0.0
  %6899 = vmatprep.subr.mxu0 0.0
  %6900 = vmatpush1.msra.mxu0 0.0
  %6901 = vmatprep.subr.mxu0 0.0
  %6902 = vmatpush1.msra.mxu0 0.0
  %6903 = vmatprep.subr.mxu0 0.0
  %6904 = vmatpush1.msra.mxu0 0.0
  %6905 = vmatprep.subr.mxu0 0.0
  %6906 = vmatpush1.msra.mxu0 0.0
  %6907 = vmatprep.subr.mxu0 0.0
  %6908 = vmatpush1.msra.mxu0 0.0
  %6909 = vmatprep.subr.mxu0 0.0
  %6910 = vmatpush1.msra.mxu0 0.0
  %6911 = vmatprep.subr.mxu0 0.0
  %6912 = vmatpush1.msra.mxu0 0.0
  %6913 = vmatprep.subr.mxu0 0.0
  %6914 = vmatpush1.msra.mxu0 0.0
  %6915 = vmatprep.subr.mxu0 0.0
  %6916 = vmatpush1.msra.mxu0 0.0
  %6917 = vmatprep.subr.mxu0 0.0
  %6918 = vmatpush1.msra.mxu0 0.0
  %6919 = vmatprep.subr.mxu0 0.0
  %6920 = vmatpush1.msra.mxu0 0.0
  %6921 = vmatprep.subr.mxu0 0.0
  %6922 = vmatpush1.msra.mxu0 0.0
  %6923 = vmatprep.subr.mxu0 0.0
  %6924 = vmatpush1.msra.mxu0 0.0
  %6925 = vmatprep.subr.mxu0 0.0
  %6926 = vmatpush1.msra.mxu0 0.0
  %6927 = vmatprep.subr.mxu0 0.0
  %6928 = vmatpush1.msra.mxu0 0.0
  %6929 = vmatprep.subr.mxu0 0.0
  %6930 = vmatpush1.msra.mxu0 0.0
  %6931 = vmatprep.mubr.f32.mxu0 0.0
  %v6932 = vand.u32 %v6652, 4294901760
  %v6933 = vsub.f32 %v6652, %v6932
  %6934 = vmatmul.mubr.f32.gmra.mrb[0].mxu0 %v6933
  %v6935 = vpop.f32.mrb[0].mxu0
  %v6936 = vadd.f32 %v6846, %v6935
  %v6937 = vpop.f32.mrb[0].mxu0
  %6938 = vmatprep.mubr.f32.mxu0 0.0
  %v6939 = vand.u32 %v6655, 4294901760
  %v6940 = vsub.f32 %v6655, %v6939
  %6941 = vmatmul.mubr.f32.gmra.mrb[0].mxu0 %v6940
  %v6942 = vpop.f32.mrb[0].mxu0
  %v6943 = vadd.f32 %v6852, %v6942
  %v6944 = vpop.f32.mrb[0].mxu0
  %6945 = vdwg.mxu0
  %6946 = vmatprep.subr.mxu0 0.0
  %v6947 = vand.u32 %v6620, 4294901760
  %6948 = vmatpush1.msra.mxu0 %v6947
  %6949 = vmatprep.subr.mxu0 0.0
  %v6950 = vand.u32 %v6621, 4294901760
  %6951 = vmatpush1.msra.mxu0 %v6950
  %6952 = vmatprep.subr.mxu0 0.0
  %v6953 = vand.u32 %v6622, 4294901760
  %6954 = vmatpush1.msra.mxu0 %v6953
  %6955 = vmatprep.subr.mxu0 0.0
  %v6956 = vand.u32 %v6623, 4294901760
  %6957 = vmatpush1.msra.mxu0 %v6956
  %6958 = vmatprep.subr.mxu0 0.0
  %v6959 = vand.u32 %v6624, 4294901760
  %6960 = vmatpush1.msra.mxu0 %v6959
  %6961 = vmatprep.subr.mxu0 0.0
  %v6962 = vand.u32 %v6625, 4294901760
  %6963 = vmatpush1.msra.mxu0 %v6962
  %6964 = vmatprep.subr.mxu0 0.0
  %6965 = vmatpush1.msra.mxu0 0.0
  %6966 = vmatprep.subr.mxu0 0.0
  %6967 = vmatpush1.msra.mxu0 0.0
  %6968 = vmatprep.subr.mxu0 0.0
  %6969 = vmatpush1.msra.mxu0 0.0
  %6970 = vmatprep.subr.mxu0 0.0
  %6971 = vmatpush1.msra.mxu0 0.0
  %6972 = vmatprep.subr.mxu0 0.0
  %6973 = vmatpush1.msra.mxu0 0.0
  %6974 = vmatprep.subr.mxu0 0.0
  %6975 = vmatpush1.msra.mxu0 0.0
  %6976 = vmatprep.subr.mxu0 0.0
  %6977 = vmatpush1.msra.mxu0 0.0
  %6978 = vmatprep.subr.mxu0 0.0
  %6979 = vmatpush1.msra.mxu0 0.0
  %6980 = vmatprep.subr.mxu0 0.0
  %6981 = vmatpush1.msra.mxu0 0.0
  %6982 = vmatprep.subr.mxu0 0.0
  %6983 = vmatpush1.msra.mxu0 0.0
  %6984 = vmatprep.subr.mxu0 0.0
  %6985 = vmatpush1.msra.mxu0 0.0
  %6986 = vmatprep.subr.mxu0 0.0
  %6987 = vmatpush1.msra.mxu0 0.0
  %6988 = vmatprep.subr.mxu0 0.0
  %6989 = vmatpush1.msra.mxu0 0.0
  %6990 = vmatprep.subr.mxu0 0.0
  %6991 = vmatpush1.msra.mxu0 0.0
  %6992 = vmatprep.subr.mxu0 0.0
  %6993 = vmatpush1.msra.mxu0 0.0
  %6994 = vmatprep.subr.mxu0 0.0
  %6995 = vmatpush1.msra.mxu0 0.0
  %6996 = vmatprep.subr.mxu0 0.0
  %6997 = vmatpush1.msra.mxu0 0.0
  %6998 = vmatprep.subr.mxu0 0.0
  %6999 = vmatpush1.msra.mxu0 0.0
  %7000 = vmatprep.subr.mxu0 0.0
  %7001 = vmatpush1.msra.mxu0 0.0
  %7002 = vmatprep.subr.mxu0 0.0
  %7003 = vmatpush1.msra.mxu0 0.0
  %7004 = vmatprep.subr.mxu0 0.0
  %7005 = vmatpush1.msra.mxu0 0.0
  %7006 = vmatprep.subr.mxu0 0.0
  %7007 = vmatpush1.msra.mxu0 0.0
  %7008 = vmatprep.subr.mxu0 0.0
  %7009 = vmatpush1.msra.mxu0 0.0
  %7010 = vmatprep.subr.mxu0 0.0
  %7011 = vmatpush1.msra.mxu0 0.0
  %7012 = vmatprep.subr.mxu0 0.0
  %7013 = vmatpush1.msra.mxu0 0.0
  %7014 = vmatprep.subr.mxu0 0.0
  %7015 = vmatpush1.msra.mxu0 0.0
  %7016 = vmatprep.mubr.f32.mxu0 0.0
  %v7017 = vand.u32 %v6652, 4294901760
  %v7018 = vsub.f32 %v6652, %v7017
  %v7019 = vand.u32 %v7018, 4294901760
  %7020 = vmatmul.mubr.f32.gmra.mrb[0].mxu0 %v7019
  %v7021 = vpop.f32.mrb[0].mxu0
  %v7022 = vadd.f32 %v6936, %v7021
  %v7023 = vpop.f32.mrb[0].mxu0
  %7024 = vmatprep.mubr.f32.mxu0 0.0
  %v7025 = vand.u32 %v6655, 4294901760
  %v7026 = vsub.f32 %v6655, %v7025
  %v7027 = vand.u32 %v7026, 4294901760
  %7028 = vmatmul.mubr.f32.gmra.mrb[0].mxu0 %v7027
  %v7029 = vpop.f32.mrb[0].mxu0
  %v7030 = vadd.f32 %v6943, %v7029
  %v7031 = vpop.f32.mrb[0].mxu0
  %7032 = vdwg.mxu0
  %7033 = vmatprep.subr.mxu0 0.0
  %v7034 = vand.u32 %v6620, 4294901760
  %v7035 = vsub.f32 %v6620, %v7034
  %v7036 = vand.u32 %v7035, 4294901760
  %7037 = vmatpush1.msra.mxu0 %v7036
  %7038 = vmatprep.subr.mxu0 0.0
  %v7039 = vand.u32 %v6621, 4294901760
  %v7040 = vsub.f32 %v6621, %v7039
  %v7041 = vand.u32 %v7040, 4294901760
  %7042 = vmatpush1.msra.mxu0 %v7041
  %7043 = vmatprep.subr.mxu0 0.0
  %v7044 = vand.u32 %v6622, 4294901760
  %v7045 = vsub.f32 %v6622, %v7044
  %v7046 = vand.u32 %v7045, 4294901760
  %7047 = vmatpush1.msra.mxu0 %v7046
  %7048 = vmatprep.subr.mxu0 0.0
  %v7049 = vand.u32 %v6623, 4294901760
  %v7050 = vsub.f32 %v6623, %v7049
  %v7051 = vand.u32 %v7050, 4294901760
  %7052 = vmatpush1.msra.mxu0 %v7051
  %7053 = vmatprep.subr.mxu0 0.0
  %v7054 = vand.u32 %v6624, 4294901760
  %v7055 = vsub.f32 %v6624, %v7054
  %v7056 = vand.u32 %v7055, 4294901760
  %7057 = vmatpush1.msra.mxu0 %v7056
  %7058 = vmatprep.subr.mxu0 0.0
  %v7059 = vand.u32 %v6625, 4294901760
  %v7060 = vsub.f32 %v6625, %v7059
  %v7061 = vand.u32 %v7060, 4294901760
  %7062 = vmatpush1.msra.mxu0 %v7061
  %7063 = vmatprep.subr.mxu0 0.0
  %7064 = vmatpush1.msra.mxu0 0.0
  %7065 = vmatprep.subr.mxu0 0.0
  %7066 = vmatpush1.msra.mxu0 0.0
  %7067 = vmatprep.subr.mxu0 0.0
  %7068 = vmatpush1.msra.mxu0 0.0
  %7069 = vmatprep.subr.mxu0 0.0
  %7070 = vmatpush1.msra.mxu0 0.0
  %7071 = vmatprep.subr.mxu0 0.0
  %7072 = vmatpush1.msra.mxu0 0.0
  %7073 = vmatprep.subr.mxu0 0.0
  %7074 = vmatpush1.msra.mxu0 0.0
  %7075 = vmatprep.subr.mxu0 0.0
  %7076 = vmatpush1.msra.mxu0 0.0
  %7077 = vmatprep.subr.mxu0 0.0
  %7078 = vmatpush1.msra.mxu0 0.0
  %7079 = vmatprep.subr.mxu0 0.0
  %7080 = vmatpush1.msra.mxu0 0.0
  %7081 = vmatprep.subr.mxu0 0.0
  %7082 = vmatpush1.msra.mxu0 0.0
  %7083 = vmatprep.subr.mxu0 0.0
  %7084 = vmatpush1.msra.mxu0 0.0
  %7085 = vmatprep.subr.mxu0 0.0
  %7086 = vmatpush1.msra.mxu0 0.0
  %7087 = vmatprep.subr.mxu0 0.0
  %7088 = vmatpush1.msra.mxu0 0.0
  %7089 = vmatprep.subr.mxu0 0.0
  %7090 = vmatpush1.msra.mxu0 0.0
  %7091 = vmatprep.subr.mxu0 0.0
  %7092 = vmatpush1.msra.mxu0 0.0
  %7093 = vmatprep.subr.mxu0 0.0
  %7094 = vmatpush1.msra.mxu0 0.0
  %7095 = vmatprep.subr.mxu0 0.0
  %7096 = vmatpush1.msra.mxu0 0.0
  %7097 = vmatprep.subr.mxu0 0.0
  %7098 = vmatpush1.msra.mxu0 0.0
  %7099 = vmatprep.subr.mxu0 0.0
  %7100 = vmatpush1.msra.mxu0 0.0
  %7101 = vmatprep.subr.mxu0 0.0
  %7102 = vmatpush1.msra.mxu0 0.0
  %7103 = vmatprep.subr.mxu0 0.0
  %7104 = vmatpush1.msra.mxu0 0.0
  %7105 = vmatprep.subr.mxu0 0.0
  %7106 = vmatpush1.msra.mxu0 0.0
  %7107 = vmatprep.subr.mxu0 0.0
  %7108 = vmatpush1.msra.mxu0 0.0
  %7109 = vmatprep.subr.mxu0 0.0
  %7110 = vmatpush1.msra.mxu0 0.0
  %7111 = vmatprep.subr.mxu0 0.0
  %7112 = vmatpush1.msra.mxu0 0.0
  %7113 = vmatprep.subr.mxu0 0.0
  %7114 = vmatpush1.msra.mxu0 0.0
  %7115 = vmatprep.mubr.f32.mxu0 0.0
  %v7116 = vand.u32 %v6652, 4294901760
  %7117 = vmatmul.mubr.f32.gmra.mrb[0].mxu0 %v7116
  %v7118 = vpop.f32.mrb[0].mxu0
  %v7119 = vadd.f32 %v7022, %v7118
  %v7120 = vpop.f32.mrb[0].mxu0
  %7121 = vmatprep.mubr.f32.mxu0 0.0
  %v7122 = vand.u32 %v6655, 4294901760
  %7123 = vmatmul.mubr.f32.gmra.mrb[0].mxu0 %v7122
  %v7124 = vpop.f32.mrb[0].mxu0
  %v7125 = vadd.f32 %v7030, %v7124
  %v7126 = vpop.f32.mrb[0].mxu0
  %7127 = vdwg.mxu0
  %7128 = vmatprep.subr.mxu0 0.0
  %v7129 = vand.u32 %v6620, 4294901760
  %7130 = vmatpush1.msra.mxu0 %v7129
  %7131 = vmatprep.subr.mxu0 0.0
  %v7132 = vand.u32 %v6621, 4294901760
  %7133 = vmatpush1.msra.mxu0 %v7132
  %7134 = vmatprep.subr.mxu0 0.0
  %v7135 = vand.u32 %v6622, 4294901760
  %7136 = vmatpush1.msra.mxu0 %v7135
  %7137 = vmatprep.subr.mxu0 0.0
  %v7138 = vand.u32 %v6623, 4294901760
  %7139 = vmatpush1.msra.mxu0 %v7138
  %7140 = vmatprep.subr.mxu0 0.0
  %v7141 = vand.u32 %v6624, 4294901760
  %7142 = vmatpush1.msra.mxu0 %v7141
  %7143 = vmatprep.subr.mxu0 0.0
  %v7144 = vand.u32 %v6625, 4294901760
  %7145 = vmatpush1.msra.mxu0 %v7144
  %7146 = vmatprep.subr.mxu0 0.0
  %7147 = vmatpush1.msra.mxu0 0.0
  %7148 = vmatprep.subr.mxu0 0.0
  %7149 = vmatpush1.msra.mxu0 0.0
  %7150 = vmatprep.subr.mxu0 0.0
  %7151 = vmatpush1.msra.mxu0 0.0
  %7152 = vmatprep.subr.mxu0 0.0
  %7153 = vmatpush1.msra.mxu0 0.0
  %7154 = vmatprep.subr.mxu0 0.0
  %7155 = vmatpush1.msra.mxu0 0.0
  %7156 = vmatprep.subr.mxu0 0.0
  %7157 = vmatpush1.msra.mxu0 0.0
  %7158 = vmatprep.subr.mxu0 0.0
  %7159 = vmatpush1.msra.mxu0 0.0
  %7160 = vmatprep.subr.mxu0 0.0
  %7161 = vmatpush1.msra.mxu0 0.0
  %7162 = vmatprep.subr.mxu0 0.0
  %7163 = vmatpush1.msra.mxu0 0.0
  %7164 = vmatprep.subr.mxu0 0.0
  %7165 = vmatpush1.msra.mxu0 0.0
  %7166 = vmatprep.subr.mxu0 0.0
  %7167 = vmatpush1.msra.mxu0 0.0
  %7168 = vmatprep.subr.mxu0 0.0
  %7169 = vmatpush1.msra.mxu0 0.0
  %7170 = vmatprep.subr.mxu0 0.0
  %7171 = vmatpush1.msra.mxu0 0.0
  %7172 = vmatprep.subr.mxu0 0.0
  %7173 = vmatpush1.msra.mxu0 0.0
  %7174 = vmatprep.subr.mxu0 0.0
  %7175 = vmatpush1.msra.mxu0 0.0
  %7176 = vmatprep.subr.mxu0 0.0
  %7177 = vmatpush1.msra.mxu0 0.0
  %7178 = vmatprep.subr.mxu0 0.0
  %7179 = vmatpush1.msra.mxu0 0.0
  %7180 = vmatprep.subr.mxu0 0.0
  %7181 = vmatpush1.msra.mxu0 0.0
  %7182 = vmatprep.subr.mxu0 0.0
  %7183 = vmatpush1.msra.mxu0 0.0
  %7184 = vmatprep.subr.mxu0 0.0
  %7185 = vmatpush1.msra.mxu0 0.0
  %7186 = vmatprep.subr.mxu0 0.0
  %7187 = vmatpush1.msra.mxu0 0.0
  %7188 = vmatprep.subr.mxu0 0.0
  %7189 = vmatpush1.msra.mxu0 0.0
  %7190 = vmatprep.subr.mxu0 0.0
  %7191 = vmatpush1.msra.mxu0 0.0
  %7192 = vmatprep.subr.mxu0 0.0
  %7193 = vmatpush1.msra.mxu0 0.0
  %7194 = vmatprep.subr.mxu0 0.0
  %7195 = vmatpush1.msra.mxu0 0.0
  %7196 = vmatprep.subr.mxu0 0.0
  %7197 = vmatpush1.msra.mxu0 0.0
  %7198 = vmatprep.mubr.f32.mxu0 0.0
  %v7199 = vand.u32 %v6652, 4294901760
  %7200 = vmatmul.mubr.f32.gmra.mrb[0].mxu0 %v7199
  %v7201 = vpop.f32.mrb[0].mxu0
  %v7202 = vadd.f32 %v7119, %v7201
  %v7203 = vpop.f32.mrb[0].mxu0
  %7204 = vmatprep.mubr.f32.mxu0 0.0
  %v7205 = vand.u32 %v6655, 4294901760
  %7206 = vmatmul.mubr.f32.gmra.mrb[0].mxu0 %v7205
  %v7207 = vpop.f32.mrb[0].mxu0
  %v7208 = vadd.f32 %v7125, %v7207
  %v7209 = vpop.f32.mrb[0].mxu0
  %7210 = vdwg.mxu0
  %v7213 = vrot.slane %v7202, 7
  %v7214 = vrot.slane %v7208, 7
  %v7215 = vsel %vm195, %v7213, %v7214
  %v7218 = vsel %vm195, 0.0, %v7213
  %v7219 = vsel %vm2908, %v7218, 0.0
  %v7220 = vsel %vm2909, %v7215, 0.0
  %v7221 = vrot.slane %v7202, 1
  %v7222 = vrot.slane %v7208, 1
  %v7223 = vsel %vm212, %v7221, %v7222
  %v7226 = vsel %vm212, %v7222, 0.0
  %v7227 = vsel %vm2910, %v7223, 0.0
  %v7228 = vsel %vm2911, %v7226, 0.0
  %v7229 = vld [vmem:[%s43] sm:$0xff]
  %v7230 = vld [vmem:[%s43 + $0x8] sm:$0xff]
  %v7231 = vld [vmem:[%s43 + $0x10] sm:$0xff]
  %v7232 = vld [vmem:[%s43 + $0x18] sm:$0xff]
  %v7233 = vld [vmem:[%s43 + $0x20] sm:$0xff]
  %v7234 = vld [vmem:[%s43 + $0x28] sm:$0xff]
  %v7235 = vld [vmem:[%s45] sm:$0xff]
  %v7236 = vld [vmem:[%s45 + $0x8] sm:$0xff]
  %v7237 = vld [vmem:[%s45 + $0x10] sm:$0xff]
  %v7238 = vld [vmem:[%s45 + $0x18] sm:$0xff]
  %v7239 = vld [vmem:[%s47] sm:$0x1]
  %v7240 = vld [vmem:[%s49] sm:$0xff]
  %v7241 = vld [vmem:[%s49 + $0x8] sm:$0xff]
  %v7242 = vld [vmem:[%s49 + $0x10] sm:$0xff]
  %v7243 = vld [vmem:[%s49 + $0x18] sm:$0xff]
  %7244 = vrot.lane.b32.xlu0 %v7202, 16
  %v7245 = vpop.permute.xlu0 %7244
  %7246 = vrot.lane.b32.xlu0 %v7208, 16
  %v7247 = vpop.permute.xlu0 %7246
  %7252 = vrot.lane.b32.xlu0 %v7227, 32
  %v7253 = vpop.permute.xlu0 %7252
  %7254 = vrot.lane.b32.xlu0 %v7228, 32
  %v7255 = vpop.permute.xlu0 %7254
  %v7258 = vsel %vm938, %v7219, %v7245
  %v7259 = vsel %vm938, %v7220, %v7247
  %v7260 = vsel %vm943, %v7258, %v7253
  %v7261 = vsel %vm943, %v7259, %v7255
  %v7263 = vsel %vm954, %v7260, 0
  %v7266 = vsel %vm954, %v7261, 0
  %7268 = vmatprep.subr.mxu0 0.0
  %v7269 = vand.u32 %v7229, 4294901760
  %7270 = vmatpush1.msra.mxu0 %v7269
  %7271 = vmatprep.subr.mxu0 0.0
  %v7272 = vand.u32 %v7230, 4294901760
  %7273 = vmatpush1.msra.mxu0 %v7272
  %7274 = vmatprep.subr.mxu0 0.0
  %v7275 = vand.u32 %v7231, 4294901760
  %7276 = vmatpush1.msra.mxu0 %v7275
  %7277 = vmatprep.subr.mxu0 0.0
  %v7278 = vand.u32 %v7232, 4294901760
  %7279 = vmatpush1.msra.mxu0 %v7278
  %7280 = vmatprep.subr.mxu0 0.0
  %v7281 = vand.u32 %v7233, 4294901760
  %7282 = vmatpush1.msra.mxu0 %v7281
  %7283 = vmatprep.subr.mxu0 0.0
  %v7284 = vand.u32 %v7234, 4294901760
  %7285 = vmatpush1.msra.mxu0 %v7284
  %7286 = vmatprep.subr.mxu0 0.0
  %7287 = vmatpush1.msra.mxu0 0.0
  %7288 = vmatprep.subr.mxu0 0.0
  %7289 = vmatpush1.msra.mxu0 0.0
  %7290 = vmatprep.subr.mxu0 0.0
  %7291 = vmatpush1.msra.mxu0 0.0
  %7292 = vmatprep.subr.mxu0 0.0
  %7293 = vmatpush1.msra.mxu0 0.0
  %7294 = vmatprep.subr.mxu0 0.0
  %7295 = vmatpush1.msra.mxu0 0.0
  %7296 = vmatprep.subr.mxu0 0.0
  %7297 = vmatpush1.msra.mxu0 0.0
  %7298 = vmatprep.subr.mxu0 0.0
  %7299 = vmatpush1.msra.mxu0 0.0
  %7300 = vmatprep.subr.mxu0 0.0
  %7301 = vmatpush1.msra.mxu0 0.0
  %7302 = vmatprep.subr.mxu0 0.0
  %7303 = vmatpush1.msra.mxu0 0.0
  %7304 = vmatprep.subr.mxu0 0.0
  %7305 = vmatpush1.msra.mxu0 0.0
  %7306 = vmatprep.subr.mxu0 0.0
  %7307 = vmatpush1.msra.mxu0 0.0
  %7308 = vmatprep.subr.mxu0 0.0
  %7309 = vmatpush1.msra.mxu0 0.0
  %7310 = vmatprep.subr.mxu0 0.0
  %7311 = vmatpush1.msra.mxu0 0.0
  %7312 = vmatprep.subr.mxu0 0.0
  %7313 = vmatpush1.msra.mxu0 0.0
  %7314 = vmatprep.subr.mxu0 0.0
  %7315 = vmatpush1.msra.mxu0 0.0
  %7316 = vmatprep.subr.mxu0 0.0
  %7317 = vmatpush1.msra.mxu0 0.0
  %7318 = vmatprep.subr.mxu0 0.0
  %7319 = vmatpush1.msra.mxu0 0.0
  %7320 = vmatprep.subr.mxu0 0.0
  %7321 = vmatpush1.msra.mxu0 0.0
  %7322 = vmatprep.subr.mxu0 0.0
  %7323 = vmatpush1.msra.mxu0 0.0
  %7324 = vmatprep.subr.mxu0 0.0
  %7325 = vmatpush1.msra.mxu0 0.0
  %7326 = vmatprep.subr.mxu0 0.0
  %7327 = vmatpush1.msra.mxu0 0.0
  %7328 = vmatprep.subr.mxu0 0.0
  %7329 = vmatpush1.msra.mxu0 0.0
  %7330 = vmatprep.subr.mxu0 0.0
  %7331 = vmatpush1.msra.mxu0 0.0
  %7332 = vmatprep.subr.mxu0 0.0
  %7333 = vmatpush1.msra.mxu0 0.0
  %7334 = vmatprep.subr.mxu0 0.0
  %7335 = vmatpush1.msra.mxu0 0.0
  %7336 = vmatprep.subr.mxu0 0.0
  %7337 = vmatpush1.msra.mxu0 0.0
  %7338 = vmatprep.mubr.f32.mxu0 0.0
  %v7339 = vand.u32 %v7263, 4294901760
  %v7340 = vsub.f32 %v7263, %v7339
  %v7341 = vand.u32 %v7340, 4294901760
  %v7342 = vsub.f32 %v7340, %v7341
  %v7343 = vand.u32 %v7342, 4294901760
  %7344 = vmatmul.mubr.f32.gmra.mrb[0].mxu0 %v7343
  %v7345 = vpop.f32.mrb[0].mxu0
  %v7346 = vadd.f32 0.0, %v7345
  %v7347 = vpop.f32.mrb[0].mxu0
  %7348 = vmatprep.mubr.f32.mxu0 0.0
  %v7349 = vand.u32 %v7266, 4294901760
  %v7350 = vsub.f32 %v7266, %v7349
  %v7351 = vand.u32 %v7350, 4294901760
  %v7352 = vsub.f32 %v7350, %v7351
  %v7353 = vand.u32 %v7352, 4294901760
  %7354 = vmatmul.mubr.f32.gmra.mrb[0].mxu0 %v7353
  %v7355 = vpop.f32.mrb[0].mxu0
  %v7356 = vadd.f32 0.0, %v7355
  %v7357 = vpop.f32.mrb[0].mxu0
  %7358 = vdwg.mxu0
  %7359 = vmatprep.subr.mxu0 0.0
  %v7360 = vand.u32 %v7229, 4294901760
  %v7361 = vsub.f32 %v7229, %v7360
  %v7362 = vand.u32 %v7361, 4294901760
  %v7363 = vsub.f32 %v7361, %v7362
  %v7364 = vand.u32 %v7363, 4294901760
  %7365 = vmatpush1.msra.mxu0 %v7364
  %7366 = vmatprep.subr.mxu0 0.0
  %v7367 = vand.u32 %v7230, 4294901760
  %v7368 = vsub.f32 %v7230, %v7367
  %v7369 = vand.u32 %v7368, 4294901760
  %v7370 = vsub.f32 %v7368, %v7369
  %v7371 = vand.u32 %v7370, 4294901760
  %7372 = vmatpush1.msra.mxu0 %v7371
  %7373 = vmatprep.subr.mxu0 0.0
  %v7374 = vand.u32 %v7231, 4294901760
  %v7375 = vsub.f32 %v7231, %v7374
  %v7376 = vand.u32 %v7375, 4294901760
  %v7377 = vsub.f32 %v7375, %v7376
  %v7378 = vand.u32 %v7377, 4294901760
  %7379 = vmatpush1.msra.mxu0 %v7378
  %7380 = vmatprep.subr.mxu0 0.0
  %v7381 = vand.u32 %v7232, 4294901760
  %v7382 = vsub.f32 %v7232, %v7381
  %v7383 = vand.u32 %v7382, 4294901760
  %v7384 = vsub.f32 %v7382, %v7383
  %v7385 = vand.u32 %v7384, 4294901760
  %7386 = vmatpush1.msra.mxu0 %v7385
  %7387 = vmatprep.subr.mxu0 0.0
  %v7388 = vand.u32 %v7233, 4294901760
  %v7389 = vsub.f32 %v7233, %v7388
  %v7390 = vand.u32 %v7389, 4294901760
  %v7391 = vsub.f32 %v7389, %v7390
  %v7392 = vand.u32 %v7391, 4294901760
  %7393 = vmatpush1.msra.mxu0 %v7392
  %7394 = vmatprep.subr.mxu0 0.0
  %v7395 = vand.u32 %v7234, 4294901760
  %v7396 = vsub.f32 %v7234, %v7395
  %v7397 = vand.u32 %v7396, 4294901760
  %v7398 = vsub.f32 %v7396, %v7397
  %v7399 = vand.u32 %v7398, 4294901760
  %7400 = vmatpush1.msra.mxu0 %v7399
  %7401 = vmatprep.subr.mxu0 0.0
  %7402 = vmatpush1.msra.mxu0 0.0
  %7403 = vmatprep.subr.mxu0 0.0
  %7404 = vmatpush1.msra.mxu0 0.0
  %7405 = vmatprep.subr.mxu0 0.0
  %7406 = vmatpush1.msra.mxu0 0.0
  %7407 = vmatprep.subr.mxu0 0.0
  %7408 = vmatpush1.msra.mxu0 0.0
  %7409 = vmatprep.subr.mxu0 0.0
  %7410 = vmatpush1.msra.mxu0 0.0
  %7411 = vmatprep.subr.mxu0 0.0
  %7412 = vmatpush1.msra.mxu0 0.0
  %7413 = vmatprep.subr.mxu0 0.0
  %7414 = vmatpush1.msra.mxu0 0.0
  %7415 = vmatprep.subr.mxu0 0.0
  %7416 = vmatpush1.msra.mxu0 0.0
  %7417 = vmatprep.subr.mxu0 0.0
  %7418 = vmatpush1.msra.mxu0 0.0
  %7419 = vmatprep.subr.mxu0 0.0
  %7420 = vmatpush1.msra.mxu0 0.0
  %7421 = vmatprep.subr.mxu0 0.0
  %7422 = vmatpush1.msra.mxu0 0.0
  %7423 = vmatprep.subr.mxu0 0.0
  %7424 = vmatpush1.msra.mxu0 0.0
  %7425 = vmatprep.subr.mxu0 0.0
  %7426 = vmatpush1.msra.mxu0 0.0
  %7427 = vmatprep.subr.mxu0 0.0
  %7428 = vmatpush1.msra.mxu0 0.0
  %7429 = vmatprep.subr.mxu0 0.0
  %7430 = vmatpush1.msra.mxu0 0.0
  %7431 = vmatprep.subr.mxu0 0.0
  %7432 = vmatpush1.msra.mxu0 0.0
  %7433 = vmatprep.subr.mxu0 0.0
  %7434 = vmatpush1.msra.mxu0 0.0
  %7435 = vmatprep.subr.mxu0 0.0
  %7436 = vmatpush1.msra.mxu0 0.0
  %7437 = vmatprep.subr.mxu0 0.0
  %7438 = vmatpush1.msra.mxu0 0.0
  %7439 = vmatprep.subr.mxu0 0.0
  %7440 = vmatpush1.msra.mxu0 0.0
  %7441 = vmatprep.subr.mxu0 0.0
  %7442 = vmatpush1.msra.mxu0 0.0
  %7443 = vmatprep.subr.mxu0 0.0
  %7444 = vmatpush1.msra.mxu0 0.0
  %7445 = vmatprep.subr.mxu0 0.0
  %7446 = vmatpush1.msra.mxu0 0.0
  %7447 = vmatprep.subr.mxu0 0.0
  %7448 = vmatpush1.msra.mxu0 0.0
  %7449 = vmatprep.subr.mxu0 0.0
  %7450 = vmatpush1.msra.mxu0 0.0
  %7451 = vmatprep.subr.mxu0 0.0
  %7452 = vmatpush1.msra.mxu0 0.0
  %7453 = vmatprep.mubr.f32.mxu0 0.0
  %v7454 = vand.u32 %v7263, 4294901760
  %7455 = vmatmul.mubr.f32.gmra.mrb[0].mxu0 %v7454
  %v7456 = vpop.f32.mrb[0].mxu0
  %v7457 = vadd.f32 %v7346, %v7456
  %v7458 = vpop.f32.mrb[0].mxu0
  %7459 = vmatprep.mubr.f32.mxu0 0.0
  %v7460 = vand.u32 %v7266, 4294901760
  %7461 = vmatmul.mubr.f32.gmra.mrb[0].mxu0 %v7460
  %v7462 = vpop.f32.mrb[0].mxu0
  %v7463 = vadd.f32 %v7356, %v7462
  %v7464 = vpop.f32.mrb[0].mxu0
  %7465 = vdwg.mxu0
  %7466 = vmatprep.subr.mxu0 0.0
  %v7467 = vand.u32 %v7229, 4294901760
  %v7468 = vsub.f32 %v7229, %v7467
  %7469 = vmatpush1.msra.mxu0 %v7468
  %7470 = vmatprep.subr.mxu0 0.0
  %v7471 = vand.u32 %v7230, 4294901760
  %v7472 = vsub.f32 %v7230, %v7471
  %7473 = vmatpush1.msra.mxu0 %v7472
  %7474 = vmatprep.subr.mxu0 0.0
  %v7475 = vand.u32 %v7231, 4294901760
  %v7476 = vsub.f32 %v7231, %v7475
  %7477 = vmatpush1.msra.mxu0 %v7476
  %7478 = vmatprep.subr.mxu0 0.0
  %v7479 = vand.u32 %v7232, 4294901760
  %v7480 = vsub.f32 %v7232, %v7479
  %7481 = vmatpush1.msra.mxu0 %v7480
  %7482 = vmatprep.subr.mxu0 0.0
  %v7483 = vand.u32 %v7233, 4294901760
  %v7484 = vsub.f32 %v7233, %v7483
  %7485 = vmatpush1.msra.mxu0 %v7484
  %7486 = vmatprep.subr.mxu0 0.0
  %v7487 = vand.u32 %v7234, 4294901760
  %v7488 = vsub.f32 %v7234, %v7487
  %7489 = vmatpush1.msra.mxu0 %v7488
  %7490 = vmatprep.subr.mxu0 0.0
  %7491 = vmatpush1.msra.mxu0 0.0
  %7492 = vmatprep.subr.mxu0 0.0
  %7493 = vmatpush1.msra.mxu0 0.0
  %7494 = vmatprep.subr.mxu0 0.0
  %7495 = vmatpush1.msra.mxu0 0.0
  %7496 = vmatprep.subr.mxu0 0.0
  %7497 = vmatpush1.msra.mxu0 0.0
  %7498 = vmatprep.subr.mxu0 0.0
  %7499 = vmatpush1.msra.mxu0 0.0
  %7500 = vmatprep.subr.mxu0 0.0
  %7501 = vmatpush1.msra.mxu0 0.0
  %7502 = vmatprep.subr.mxu0 0.0
  %7503 = vmatpush1.msra.mxu0 0.0
  %7504 = vmatprep.subr.mxu0 0.0
  %7505 = vmatpush1.msra.mxu0 0.0
  %7506 = vmatprep.subr.mxu0 0.0
  %7507 = vmatpush1.msra.mxu0 0.0
  %7508 = vmatprep.subr.mxu0 0.0
  %7509 = vmatpush1.msra.mxu0 0.0
  %7510 = vmatprep.subr.mxu0 0.0
  %7511 = vmatpush1.msra.mxu0 0.0
  %7512 = vmatprep.subr.mxu0 0.0
  %7513 = vmatpush1.msra.mxu0 0.0
  %7514 = vmatprep.subr.mxu0 0.0
  %7515 = vmatpush1.msra.mxu0 0.0
  %7516 = vmatprep.subr.mxu0 0.0
  %7517 = vmatpush1.msra.mxu0 0.0
  %7518 = vmatprep.subr.mxu0 0.0
  %7519 = vmatpush1.msra.mxu0 0.0
  %7520 = vmatprep.subr.mxu0 0.0
  %7521 = vmatpush1.msra.mxu0 0.0
  %7522 = vmatprep.subr.mxu0 0.0
  %7523 = vmatpush1.msra.mxu0 0.0
  %7524 = vmatprep.subr.mxu0 0.0
  %7525 = vmatpush1.msra.mxu0 0.0
  %7526 = vmatprep.subr.mxu0 0.0
  %7527 = vmatpush1.msra.mxu0 0.0
  %7528 = vmatprep.subr.mxu0 0.0
  %7529 = vmatpush1.msra.mxu0 0.0
  %7530 = vmatprep.subr.mxu0 0.0
  %7531 = vmatpush1.msra.mxu0 0.0
  %7532 = vmatprep.subr.mxu0 0.0
  %7533 = vmatpush1.msra.mxu0 0.0
  %7534 = vmatprep.subr.mxu0 0.0
  %7535 = vmatpush1.msra.mxu0 0.0
  %7536 = vmatprep.subr.mxu0 0.0
  %7537 = vmatpush1.msra.mxu0 0.0
  %7538 = vmatprep.subr.mxu0 0.0
  %7539 = vmatpush1.msra.mxu0 0.0
  %7540 = vmatprep.subr.mxu0 0.0
  %7541 = vmatpush1.msra.mxu0 0.0
  %7542 = vmatprep.mubr.f32.mxu0 0.0
  %v7543 = vand.u32 %v7263, 4294901760
  %v7544 = vsub.f32 %v7263, %v7543
  %7545 = vmatmul.mubr.f32.gmra.mrb[0].mxu0 %v7544
  %v7546 = vpop.f32.mrb[0].mxu0
  %v7547 = vadd.f32 %v7457, %v7546
  %v7548 = vpop.f32.mrb[0].mxu0
  %7549 = vmatprep.mubr.f32.mxu0 0.0
  %v7550 = vand.u32 %v7266, 4294901760
  %v7551 = vsub.f32 %v7266, %v7550
  %7552 = vmatmul.mubr.f32.gmra.mrb[0].mxu0 %v7551
  %v7553 = vpop.f32.mrb[0].mxu0
  %v7554 = vadd.f32 %v7463, %v7553
  %v7555 = vpop.f32.mrb[0].mxu0
  %7556 = vdwg.mxu0
  %7557 = vmatprep.subr.mxu0 0.0
  %v7558 = vand.u32 %v7229, 4294901760
  %7559 = vmatpush1.msra.mxu0 %v7558
  %7560 = vmatprep.subr.mxu0 0.0
  %v7561 = vand.u32 %v7230, 4294901760
  %7562 = vmatpush1.msra.mxu0 %v7561
  %7563 = vmatprep.subr.mxu0 0.0
  %v7564 = vand.u32 %v7231, 4294901760
  %7565 = vmatpush1.msra.mxu0 %v7564
  %7566 = vmatprep.subr.mxu0 0.0
  %v7567 = vand.u32 %v7232, 4294901760
  %7568 = vmatpush1.msra.mxu0 %v7567
  %7569 = vmatprep.subr.mxu0 0.0
  %v7570 = vand.u32 %v7233, 4294901760
  %7571 = vmatpush1.msra.mxu0 %v7570
  %7572 = vmatprep.subr.mxu0 0.0
  %v7573 = vand.u32 %v7234, 4294901760
  %7574 = vmatpush1.msra.mxu0 %v7573
  %7575 = vmatprep.subr.mxu0 0.0
  %7576 = vmatpush1.msra.mxu0 0.0
  %7577 = vmatprep.subr.mxu0 0.0
  %7578 = vmatpush1.msra.mxu0 0.0
  %7579 = vmatprep.subr.mxu0 0.0
  %7580 = vmatpush1.msra.mxu0 0.0
  %7581 = vmatprep.subr.mxu0 0.0
  %7582 = vmatpush1.msra.mxu0 0.0
  %7583 = vmatprep.subr.mxu0 0.0
  %7584 = vmatpush1.msra.mxu0 0.0
  %7585 = vmatprep.subr.mxu0 0.0
  %7586 = vmatpush1.msra.mxu0 0.0
  %7587 = vmatprep.subr.mxu0 0.0
  %7588 = vmatpush1.msra.mxu0 0.0
  %7589 = vmatprep.subr.mxu0 0.0
  %7590 = vmatpush1.msra.mxu0 0.0
  %7591 = vmatprep.subr.mxu0 0.0
  %7592 = vmatpush1.msra.mxu0 0.0
  %7593 = vmatprep.subr.mxu0 0.0
  %7594 = vmatpush1.msra.mxu0 0.0
  %7595 = vmatprep.subr.mxu0 0.0
  %7596 = vmatpush1.msra.mxu0 0.0
  %7597 = vmatprep.subr.mxu0 0.0
  %7598 = vmatpush1.msra.mxu0 0.0
  %7599 = vmatprep.subr.mxu0 0.0
  %7600 = vmatpush1.msra.mxu0 0.0
  %7601 = vmatprep.subr.mxu0 0.0
  %7602 = vmatpush1.msra.mxu0 0.0
  %7603 = vmatprep.subr.mxu0 0.0
  %7604 = vmatpush1.msra.mxu0 0.0
  %7605 = vmatprep.subr.mxu0 0.0
  %7606 = vmatpush1.msra.mxu0 0.0
  %7607 = vmatprep.subr.mxu0 0.0
  %7608 = vmatpush1.msra.mxu0 0.0
  %7609 = vmatprep.subr.mxu0 0.0
  %7610 = vmatpush1.msra.mxu0 0.0
  %7611 = vmatprep.subr.mxu0 0.0
  %7612 = vmatpush1.msra.mxu0 0.0
  %7613 = vmatprep.subr.mxu0 0.0
  %7614 = vmatpush1.msra.mxu0 0.0
  %7615 = vmatprep.subr.mxu0 0.0
  %7616 = vmatpush1.msra.mxu0 0.0
  %7617 = vmatprep.subr.mxu0 0.0
  %7618 = vmatpush1.msra.mxu0 0.0
  %7619 = vmatprep.subr.mxu0 0.0
  %7620 = vmatpush1.msra.mxu0 0.0
  %7621 = vmatprep.subr.mxu0 0.0
  %7622 = vmatpush1.msra.mxu0 0.0
  %7623 = vmatprep.subr.mxu0 0.0
  %7624 = vmatpush1.msra.mxu0 0.0
  %7625 = vmatprep.subr.mxu0 0.0
  %7626 = vmatpush1.msra.mxu0 0.0
  %7627 = vmatprep.mubr.f32.mxu0 0.0
  %v7628 = vand.u32 %v7263, 4294901760
  %v7629 = vsub.f32 %v7263, %v7628
  %v7630 = vand.u32 %v7629, 4294901760
  %7631 = vmatmul.mubr.f32.gmra.mrb[0].mxu0 %v7630
  %v7632 = vpop.f32.mrb[0].mxu0
  %v7633 = vadd.f32 %v7547, %v7632
  %v7634 = vpop.f32.mrb[0].mxu0
  %7635 = vmatprep.mubr.f32.mxu0 0.0
  %v7636 = vand.u32 %v7266, 4294901760
  %v7637 = vsub.f32 %v7266, %v7636
  %v7638 = vand.u32 %v7637, 4294901760
  %7639 = vmatmul.mubr.f32.gmra.mrb[0].mxu0 %v7638
  %v7640 = vpop.f32.mrb[0].mxu0
  %v7641 = vadd.f32 %v7554, %v7640
  %v7642 = vpop.f32.mrb[0].mxu0
  %7643 = vdwg.mxu0
  %7644 = vmatprep.subr.mxu0 0.0
  %v7645 = vand.u32 %v7229, 4294901760
  %v7646 = vsub.f32 %v7229, %v7645
  %v7647 = vand.u32 %v7646, 4294901760
  %7648 = vmatpush1.msra.mxu0 %v7647
  %7649 = vmatprep.subr.mxu0 0.0
  %v7650 = vand.u32 %v7230, 4294901760
  %v7651 = vsub.f32 %v7230, %v7650
  %v7652 = vand.u32 %v7651, 4294901760
  %7653 = vmatpush1.msra.mxu0 %v7652
  %7654 = vmatprep.subr.mxu0 0.0
  %v7655 = vand.u32 %v7231, 4294901760
  %v7656 = vsub.f32 %v7231, %v7655
  %v7657 = vand.u32 %v7656, 4294901760
  %7658 = vmatpush1.msra.mxu0 %v7657
  %7659 = vmatprep.subr.mxu0 0.0
  %v7660 = vand.u32 %v7232, 4294901760
  %v7661 = vsub.f32 %v7232, %v7660
  %v7662 = vand.u32 %v7661, 4294901760
  %7663 = vmatpush1.msra.mxu0 %v7662
  %7664 = vmatprep.subr.mxu0 0.0
  %v7665 = vand.u32 %v7233, 4294901760
  %v7666 = vsub.f32 %v7233, %v7665
  %v7667 = vand.u32 %v7666, 4294901760
  %7668 = vmatpush1.msra.mxu0 %v7667
  %7669 = vmatprep.subr.mxu0 0.0
  %v7670 = vand.u32 %v7234, 4294901760
  %v7671 = vsub.f32 %v7234, %v7670
  %v7672 = vand.u32 %v7671, 4294901760
  %7673 = vmatpush1.msra.mxu0 %v7672
  %7674 = vmatprep.subr.mxu0 0.0
  %7675 = vmatpush1.msra.mxu0 0.0
  %7676 = vmatprep.subr.mxu0 0.0
  %7677 = vmatpush1.msra.mxu0 0.0
  %7678 = vmatprep.subr.mxu0 0.0
  %7679 = vmatpush1.msra.mxu0 0.0
  %7680 = vmatprep.subr.mxu0 0.0
  %7681 = vmatpush1.msra.mxu0 0.0
  %7682 = vmatprep.subr.mxu0 0.0
  %7683 = vmatpush1.msra.mxu0 0.0
  %7684 = vmatprep.subr.mxu0 0.0
  %7685 = vmatpush1.msra.mxu0 0.0
  %7686 = vmatprep.subr.mxu0 0.0
  %7687 = vmatpush1.msra.mxu0 0.0
  %7688 = vmatprep.subr.mxu0 0.0
  %7689 = vmatpush1.msra.mxu0 0.0
  %7690 = vmatprep.subr.mxu0 0.0
  %7691 = vmatpush1.msra.mxu0 0.0
  %7692 = vmatprep.subr.mxu0 0.0
  %7693 = vmatpush1.msra.mxu0 0.0
  %7694 = vmatprep.subr.mxu0 0.0
  %7695 = vmatpush1.msra.mxu0 0.0
  %7696 = vmatprep.subr.mxu0 0.0
  %7697 = vmatpush1.msra.mxu0 0.0
  %7698 = vmatprep.subr.mxu0 0.0
  %7699 = vmatpush1.msra.mxu0 0.0
  %7700 = vmatprep.subr.mxu0 0.0
  %7701 = vmatpush1.msra.mxu0 0.0
  %7702 = vmatprep.subr.mxu0 0.0
  %7703 = vmatpush1.msra.mxu0 0.0
  %7704 = vmatprep.subr.mxu0 0.0
  %7705 = vmatpush1.msra.mxu0 0.0
  %7706 = vmatprep.subr.mxu0 0.0
  %7707 = vmatpush1.msra.mxu0 0.0
  %7708 = vmatprep.subr.mxu0 0.0
  %7709 = vmatpush1.msra.mxu0 0.0
  %7710 = vmatprep.subr.mxu0 0.0
  %7711 = vmatpush1.msra.mxu0 0.0
  %7712 = vmatprep.subr.mxu0 0.0
  %7713 = vmatpush1.msra.mxu0 0.0
  %7714 = vmatprep.subr.mxu0 0.0
  %7715 = vmatpush1.msra.mxu0 0.0
  %7716 = vmatprep.subr.mxu0 0.0
  %7717 = vmatpush1.msra.mxu0 0.0
  %7718 = vmatprep.subr.mxu0 0.0
  %7719 = vmatpush1.msra.mxu0 0.0
  %7720 = vmatprep.subr.mxu0 0.0
  %7721 = vmatpush1.msra.mxu0 0.0
  %7722 = vmatprep.subr.mxu0 0.0
  %7723 = vmatpush1.msra.mxu0 0.0
  %7724 = vmatprep.subr.mxu0 0.0
  %7725 = vmatpush1.msra.mxu0 0.0
  %7726 = vmatprep.mubr.f32.mxu0 0.0
  %v7727 = vand.u32 %v7263, 4294901760
  %7728 = vmatmul.mubr.f32.gmra.mrb[0].mxu0 %v7727
  %v7729 = vpop.f32.mrb[0].mxu0
  %v7730 = vadd.f32 %v7633, %v7729
  %v7731 = vpop.f32.mrb[0].mxu0
  %7732 = vmatprep.mubr.f32.mxu0 0.0
  %v7733 = vand.u32 %v7266, 4294901760
  %7734 = vmatmul.mubr.f32.gmra.mrb[0].mxu0 %v7733
  %v7735 = vpop.f32.mrb[0].mxu0
  %v7736 = vadd.f32 %v7641, %v7735
  %v7737 = vpop.f32.mrb[0].mxu0
  %7738 = vdwg.mxu0
  %7739 = vmatprep.subr.mxu0 0.0
  %v7740 = vand.u32 %v7229, 4294901760
  %7741 = vmatpush1.msra.mxu0 %v7740
  %7742 = vmatprep.subr.mxu0 0.0
  %v7743 = vand.u32 %v7230, 4294901760
  %7744 = vmatpush1.msra.mxu0 %v7743
  %7745 = vmatprep.subr.mxu0 0.0
  %v7746 = vand.u32 %v7231, 4294901760
  %7747 = vmatpush1.msra.mxu0 %v7746
  %7748 = vmatprep.subr.mxu0 0.0
  %v7749 = vand.u32 %v7232, 4294901760
  %7750 = vmatpush1.msra.mxu0 %v7749
  %7751 = vmatprep.subr.mxu0 0.0
  %v7752 = vand.u32 %v7233, 4294901760
  %7753 = vmatpush1.msra.mxu0 %v7752
  %7754 = vmatprep.subr.mxu0 0.0
  %v7755 = vand.u32 %v7234, 4294901760
  %7756 = vmatpush1.msra.mxu0 %v7755
  %7757 = vmatprep.subr.mxu0 0.0
  %7758 = vmatpush1.msra.mxu0 0.0
  %7759 = vmatprep.subr.mxu0 0.0
  %7760 = vmatpush1.msra.mxu0 0.0
  %7761 = vmatprep.subr.mxu0 0.0
  %7762 = vmatpush1.msra.mxu0 0.0
  %7763 = vmatprep.subr.mxu0 0.0
  %7764 = vmatpush1.msra.mxu0 0.0
  %7765 = vmatprep.subr.mxu0 0.0
  %7766 = vmatpush1.msra.mxu0 0.0
  %7767 = vmatprep.subr.mxu0 0.0
  %7768 = vmatpush1.msra.mxu0 0.0
  %7769 = vmatprep.subr.mxu0 0.0
  %7770 = vmatpush1.msra.mxu0 0.0
  %7771 = vmatprep.subr.mxu0 0.0
  %7772 = vmatpush1.msra.mxu0 0.0
  %7773 = vmatprep.subr.mxu0 0.0
  %7774 = vmatpush1.msra.mxu0 0.0
  %7775 = vmatprep.subr.mxu0 0.0
  %7776 = vmatpush1.msra.mxu0 0.0
  %7777 = vmatprep.subr.mxu0 0.0
  %7778 = vmatpush1.msra.mxu0 0.0
  %7779 = vmatprep.subr.mxu0 0.0
  %7780 = vmatpush1.msra.mxu0 0.0
  %7781 = vmatprep.subr.mxu0 0.0
  %7782 = vmatpush1.msra.mxu0 0.0
  %7783 = vmatprep.subr.mxu0 0.0
  %7784 = vmatpush1.msra.mxu0 0.0
  %7785 = vmatprep.subr.mxu0 0.0
  %7786 = vmatpush1.msra.mxu0 0.0
  %7787 = vmatprep.subr.mxu0 0.0
  %7788 = vmatpush1.msra.mxu0 0.0
  %7789 = vmatprep.subr.mxu0 0.0
  %7790 = vmatpush1.msra.mxu0 0.0
  %7791 = vmatprep.subr.mxu0 0.0
  %7792 = vmatpush1.msra.mxu0 0.0
  %7793 = vmatprep.subr.mxu0 0.0
  %7794 = vmatpush1.msra.mxu0 0.0
  %7795 = vmatprep.subr.mxu0 0.0
  %7796 = vmatpush1.msra.mxu0 0.0
  %7797 = vmatprep.subr.mxu0 0.0
  %7798 = vmatpush1.msra.mxu0 0.0
  %7799 = vmatprep.subr.mxu0 0.0
  %7800 = vmatpush1.msra.mxu0 0.0
  %7801 = vmatprep.subr.mxu0 0.0
  %7802 = vmatpush1.msra.mxu0 0.0
  %7803 = vmatprep.subr.mxu0 0.0
  %7804 = vmatpush1.msra.mxu0 0.0
  %7805 = vmatprep.subr.mxu0 0.0
  %7806 = vmatpush1.msra.mxu0 0.0
  %7807 = vmatprep.subr.mxu0 0.0
  %7808 = vmatpush1.msra.mxu0 0.0
  %7809 = vmatprep.mubr.f32.mxu0 0.0
  %v7810 = vand.u32 %v7263, 4294901760
  %7811 = vmatmul.mubr.f32.gmra.mrb[0].mxu0 %v7810
  %v7812 = vpop.f32.mrb[0].mxu0
  %v7813 = vadd.f32 %v7730, %v7812
  %v7814 = vpop.f32.mrb[0].mxu0
  %7815 = vmatprep.mubr.f32.mxu0 0.0
  %v7816 = vand.u32 %v7266, 4294901760
  %7817 = vmatmul.mubr.f32.gmra.mrb[0].mxu0 %v7816
  %v7818 = vpop.f32.mrb[0].mxu0
  %v7819 = vadd.f32 %v7736, %v7818
  %v7820 = vpop.f32.mrb[0].mxu0
  %7821 = vdwg.mxu0
  %7822 = vrot.lane.b32.xlu0 %v7227, 16
  %v7823 = vpop.permute.xlu0 %7822
  %7824 = vrot.lane.b32.xlu0 %v7228, 16
  %v7825 = vpop.permute.xlu0 %7824
  %v7828 = vsel %vm938, %v7202, %v7823
  %v7829 = vsel %vm938, %v7208, %v7825
  %v7831 = vsel %vm943, %v7828, 0
  %v7834 = vsel %vm943, %v7829, 0
  %7836 = vmatprep.subr.mxu0 0.0
  %v7837 = vand.u32 %v7235, 4294901760
  %7838 = vmatpush1.msra.mxu0 %v7837
  %7839 = vmatprep.subr.mxu0 0.0
  %v7840 = vand.u32 %v7236, 4294901760
  %7841 = vmatpush1.msra.mxu0 %v7840
  %7842 = vmatprep.subr.mxu0 0.0
  %v7843 = vand.u32 %v7237, 4294901760
  %7844 = vmatpush1.msra.mxu0 %v7843
  %7845 = vmatprep.subr.mxu0 0.0
  %v7846 = vand.u32 %v7238, 4294901760
  %7847 = vmatpush1.msra.mxu0 %v7846
  %7848 = vmatprep.subr.mxu0 0.0
  %7849 = vmatpush1.msra.mxu0 0.0
  %7850 = vmatprep.subr.mxu0 0.0
  %7851 = vmatpush1.msra.mxu0 0.0
  %7852 = vmatprep.subr.mxu0 0.0
  %7853 = vmatpush1.msra.mxu0 0.0
  %7854 = vmatprep.subr.mxu0 0.0
  %7855 = vmatpush1.msra.mxu0 0.0
  %7856 = vmatprep.subr.mxu0 0.0
  %7857 = vmatpush1.msra.mxu0 0.0
  %7858 = vmatprep.subr.mxu0 0.0
  %7859 = vmatpush1.msra.mxu0 0.0
  %7860 = vmatprep.subr.mxu0 0.0
  %7861 = vmatpush1.msra.mxu0 0.0
  %7862 = vmatprep.subr.mxu0 0.0
  %7863 = vmatpush1.msra.mxu0 0.0
  %7864 = vmatprep.subr.mxu0 0.0
  %7865 = vmatpush1.msra.mxu0 0.0
  %7866 = vmatprep.subr.mxu0 0.0
  %7867 = vmatpush1.msra.mxu0 0.0
  %7868 = vmatprep.subr.mxu0 0.0
  %7869 = vmatpush1.msra.mxu0 0.0
  %7870 = vmatprep.subr.mxu0 0.0
  %7871 = vmatpush1.msra.mxu0 0.0
  %7872 = vmatprep.subr.mxu0 0.0
  %7873 = vmatpush1.msra.mxu0 0.0
  %7874 = vmatprep.subr.mxu0 0.0
  %7875 = vmatpush1.msra.mxu0 0.0
  %7876 = vmatprep.subr.mxu0 0.0
  %7877 = vmatpush1.msra.mxu0 0.0
  %7878 = vmatprep.subr.mxu0 0.0
  %7879 = vmatpush1.msra.mxu0 0.0
  %7880 = vmatprep.subr.mxu0 0.0
  %7881 = vmatpush1.msra.mxu0 0.0
  %7882 = vmatprep.subr.mxu0 0.0
  %7883 = vmatpush1.msra.mxu0 0.0
  %7884 = vmatprep.subr.mxu0 0.0
  %7885 = vmatpush1.msra.mxu0 0.0
  %7886 = vmatprep.subr.mxu0 0.0
  %7887 = vmatpush1.msra.mxu0 0.0
  %7888 = vmatprep.subr.mxu0 0.0
  %7889 = vmatpush1.msra.mxu0 0.0
  %7890 = vmatprep.subr.mxu0 0.0
  %7891 = vmatpush1.msra.mxu0 0.0
  %7892 = vmatprep.subr.mxu0 0.0
  %7893 = vmatpush1.msra.mxu0 0.0
  %7894 = vmatprep.subr.mxu0 0.0
  %7895 = vmatpush1.msra.mxu0 0.0
  %7896 = vmatprep.subr.mxu0 0.0
  %7897 = vmatpush1.msra.mxu0 0.0
  %7898 = vmatprep.subr.mxu0 0.0
  %7899 = vmatpush1.msra.mxu0 0.0
  %7900 = vmatprep.subr.mxu0 0.0
  %7901 = vmatpush1.msra.mxu0 0.0
  %7902 = vmatprep.subr.mxu0 0.0
  %7903 = vmatpush1.msra.mxu0 0.0
  %7904 = vmatprep.mubr.f32.mxu0 0.0
  %v7905 = vand.u32 %v7831, 4294901760
  %v7906 = vsub.f32 %v7831, %v7905
  %v7907 = vand.u32 %v7906, 4294901760
  %v7908 = vsub.f32 %v7906, %v7907
  %v7909 = vand.u32 %v7908, 4294901760
  %7910 = vmatmul.mubr.f32.gmra.mrb[0].mxu0 %v7909
  %v7911 = vpop.f32.mrb[0].mxu0
  %v7912 = vadd.f32 0.0, %v7911
  %v7913 = vpop.f32.mrb[0].mxu0
  %7914 = vmatprep.mubr.f32.mxu0 0.0
  %v7915 = vand.u32 %v7834, 4294901760
  %v7916 = vsub.f32 %v7834, %v7915
  %v7917 = vand.u32 %v7916, 4294901760
  %v7918 = vsub.f32 %v7916, %v7917
  %v7919 = vand.u32 %v7918, 4294901760
  %7920 = vmatmul.mubr.f32.gmra.mrb[0].mxu0 %v7919
  %v7921 = vpop.f32.mrb[0].mxu0
  %v7922 = vadd.f32 0.0, %v7921
  %v7923 = vpop.f32.mrb[0].mxu0
  %7924 = vdwg.mxu0
  %7925 = vmatprep.subr.mxu0 0.0
  %v7926 = vand.u32 %v7235, 4294901760
  %v7927 = vsub.f32 %v7235, %v7926
  %v7928 = vand.u32 %v7927, 4294901760
  %v7929 = vsub.f32 %v7927, %v7928
  %v7930 = vand.u32 %v7929, 4294901760
  %7931 = vmatpush1.msra.mxu0 %v7930
  %7932 = vmatprep.subr.mxu0 0.0
  %v7933 = vand.u32 %v7236, 4294901760
  %v7934 = vsub.f32 %v7236, %v7933
  %v7935 = vand.u32 %v7934, 4294901760
  %v7936 = vsub.f32 %v7934, %v7935
  %v7937 = vand.u32 %v7936, 4294901760
  %7938 = vmatpush1.msra.mxu0 %v7937
  %7939 = vmatprep.subr.mxu0 0.0
  %v7940 = vand.u32 %v7237, 4294901760
  %v7941 = vsub.f32 %v7237, %v7940
  %v7942 = vand.u32 %v7941, 4294901760
  %v7943 = vsub.f32 %v7941, %v7942
  %v7944 = vand.u32 %v7943, 4294901760
  %7945 = vmatpush1.msra.mxu0 %v7944
  %7946 = vmatprep.subr.mxu0 0.0
  %v7947 = vand.u32 %v7238, 4294901760
  %v7948 = vsub.f32 %v7238, %v7947
  %v7949 = vand.u32 %v7948, 4294901760
  %v7950 = vsub.f32 %v7948, %v7949
  %v7951 = vand.u32 %v7950, 4294901760
  %7952 = vmatpush1.msra.mxu0 %v7951
  %7953 = vmatprep.subr.mxu0 0.0
  %7954 = vmatpush1.msra.mxu0 0.0
  %7955 = vmatprep.subr.mxu0 0.0
  %7956 = vmatpush1.msra.mxu0 0.0
  %7957 = vmatprep.subr.mxu0 0.0
  %7958 = vmatpush1.msra.mxu0 0.0
  %7959 = vmatprep.subr.mxu0 0.0
  %7960 = vmatpush1.msra.mxu0 0.0
  %7961 = vmatprep.subr.mxu0 0.0
  %7962 = vmatpush1.msra.mxu0 0.0
  %7963 = vmatprep.subr.mxu0 0.0
  %7964 = vmatpush1.msra.mxu0 0.0
  %7965 = vmatprep.subr.mxu0 0.0
  %7966 = vmatpush1.msra.mxu0 0.0
  %7967 = vmatprep.subr.mxu0 0.0
  %7968 = vmatpush1.msra.mxu0 0.0
  %7969 = vmatprep.subr.mxu0 0.0
  %7970 = vmatpush1.msra.mxu0 0.0
  %7971 = vmatprep.subr.mxu0 0.0
  %7972 = vmatpush1.msra.mxu0 0.0
  %7973 = vmatprep.subr.mxu0 0.0
  %7974 = vmatpush1.msra.mxu0 0.0
  %7975 = vmatprep.subr.mxu0 0.0
  %7976 = vmatpush1.msra.mxu0 0.0
  %7977 = vmatprep.subr.mxu0 0.0
  %7978 = vmatpush1.msra.mxu0 0.0
  %7979 = vmatprep.subr.mxu0 0.0
  %7980 = vmatpush1.msra.mxu0 0.0
  %7981 = vmatprep.subr.mxu0 0.0
  %7982 = vmatpush1.msra.mxu0 0.0
  %7983 = vmatprep.subr.mxu0 0.0
  %7984 = vmatpush1.msra.mxu0 0.0
  %7985 = vmatprep.subr.mxu0 0.0
  %7986 = vmatpush1.msra.mxu0 0.0
  %7987 = vmatprep.subr.mxu0 0.0
  %7988 = vmatpush1.msra.mxu0 0.0
  %7989 = vmatprep.subr.mxu0 0.0
  %7990 = vmatpush1.msra.mxu0 0.0
  %7991 = vmatprep.subr.mxu0 0.0
  %7992 = vmatpush1.msra.mxu0 0.0
  %7993 = vmatprep.subr.mxu0 0.0
  %7994 = vmatpush1.msra.mxu0 0.0
  %7995 = vmatprep.subr.mxu0 0.0
  %7996 = vmatpush1.msra.mxu0 0.0
  %7997 = vmatprep.subr.mxu0 0.0
  %7998 = vmatpush1.msra.mxu0 0.0
  %7999 = vmatprep.subr.mxu0 0.0
  %8000 = vmatpush1.msra.mxu0 0.0
  %8001 = vmatprep.subr.mxu0 0.0
  %8002 = vmatpush1.msra.mxu0 0.0
  %8003 = vmatprep.subr.mxu0 0.0
  %8004 = vmatpush1.msra.mxu0 0.0
  %8005 = vmatprep.subr.mxu0 0.0
  %8006 = vmatpush1.msra.mxu0 0.0
  %8007 = vmatprep.subr.mxu0 0.0
  %8008 = vmatpush1.msra.mxu0 0.0
  %8009 = vmatprep.mubr.f32.mxu0 0.0
  %v8010 = vand.u32 %v7831, 4294901760
  %8011 = vmatmul.mubr.f32.gmra.mrb[0].mxu0 %v8010
  %v8012 = vpop.f32.mrb[0].mxu0
  %v8013 = vadd.f32 %v7912, %v8012
  %v8014 = vpop.f32.mrb[0].mxu0
  %8015 = vmatprep.mubr.f32.mxu0 0.0
  %v8016 = vand.u32 %v7834, 4294901760
  %8017 = vmatmul.mubr.f32.gmra.mrb[0].mxu0 %v8016
  %v8018 = vpop.f32.mrb[0].mxu0
  %v8019 = vadd.f32 %v7922, %v8018
  %v8020 = vpop.f32.mrb[0].mxu0
  %8021 = vdwg.mxu0
  %8022 = vmatprep.subr.mxu0 0.0
  %v8023 = vand.u32 %v7235, 4294901760
  %v8024 = vsub.f32 %v7235, %v8023
  %8025 = vmatpush1.msra.mxu0 %v8024
  %8026 = vmatprep.subr.mxu0 0.0
  %v8027 = vand.u32 %v7236, 4294901760
  %v8028 = vsub.f32 %v7236, %v8027
  %8029 = vmatpush1.msra.mxu0 %v8028
  %8030 = vmatprep.subr.mxu0 0.0
  %v8031 = vand.u32 %v7237, 4294901760
  %v8032 = vsub.f32 %v7237, %v8031
  %8033 = vmatpush1.msra.mxu0 %v8032
  %8034 = vmatprep.subr.mxu0 0.0
  %v8035 = vand.u32 %v7238, 4294901760
  %v8036 = vsub.f32 %v7238, %v8035
  %8037 = vmatpush1.msra.mxu0 %v8036
  %8038 = vmatprep.subr.mxu0 0.0
  %8039 = vmatpush1.msra.mxu0 0.0
  %8040 = vmatprep.subr.mxu0 0.0
  %8041 = vmatpush1.msra.mxu0 0.0
  %8042 = vmatprep.subr.mxu0 0.0
  %8043 = vmatpush1.msra.mxu0 0.0
  %8044 = vmatprep.subr.mxu0 0.0
  %8045 = vmatpush1.msra.mxu0 0.0
  %8046 = vmatprep.subr.mxu0 0.0
  %8047 = vmatpush1.msra.mxu0 0.0
  %8048 = vmatprep.subr.mxu0 0.0
  %8049 = vmatpush1.msra.mxu0 0.0
  %8050 = vmatprep.subr.mxu0 0.0
  %8051 = vmatpush1.msra.mxu0 0.0
  %8052 = vmatprep.subr.mxu0 0.0
  %8053 = vmatpush1.msra.mxu0 0.0
  %8054 = vmatprep.subr.mxu0 0.0
  %8055 = vmatpush1.msra.mxu0 0.0
  %8056 = vmatprep.subr.mxu0 0.0
  %8057 = vmatpush1.msra.mxu0 0.0
  %8058 = vmatprep.subr.mxu0 0.0
  %8059 = vmatpush1.msra.mxu0 0.0
  %8060 = vmatprep.subr.mxu0 0.0
  %8061 = vmatpush1.msra.mxu0 0.0
  %8062 = vmatprep.subr.mxu0 0.0
  %8063 = vmatpush1.msra.mxu0 0.0
  %8064 = vmatprep.subr.mxu0 0.0
  %8065 = vmatpush1.msra.mxu0 0.0
  %8066 = vmatprep.subr.mxu0 0.0
  %8067 = vmatpush1.msra.mxu0 0.0
  %8068 = vmatprep.subr.mxu0 0.0
  %8069 = vmatpush1.msra.mxu0 0.0
  %8070 = vmatprep.subr.mxu0 0.0
  %8071 = vmatpush1.msra.mxu0 0.0
  %8072 = vmatprep.subr.mxu0 0.0
  %8073 = vmatpush1.msra.mxu0 0.0
  %8074 = vmatprep.subr.mxu0 0.0
  %8075 = vmatpush1.msra.mxu0 0.0
  %8076 = vmatprep.subr.mxu0 0.0
  %8077 = vmatpush1.msra.mxu0 0.0
  %8078 = vmatprep.subr.mxu0 0.0
  %8079 = vmatpush1.msra.mxu0 0.0
  %8080 = vmatprep.subr.mxu0 0.0
  %8081 = vmatpush1.msra.mxu0 0.0
  %8082 = vmatprep.subr.mxu0 0.0
  %8083 = vmatpush1.msra.mxu0 0.0
  %8084 = vmatprep.subr.mxu0 0.0
  %8085 = vmatpush1.msra.mxu0 0.0
  %8086 = vmatprep.subr.mxu0 0.0
  %8087 = vmatpush1.msra.mxu0 0.0
  %8088 = vmatprep.subr.mxu0 0.0
  %8089 = vmatpush1.msra.mxu0 0.0
  %8090 = vmatprep.subr.mxu0 0.0
  %8091 = vmatpush1.msra.mxu0 0.0
  %8092 = vmatprep.subr.mxu0 0.0
  %8093 = vmatpush1.msra.mxu0 0.0
  %8094 = vmatprep.mubr.f32.mxu0 0.0
  %v8095 = vand.u32 %v7831, 4294901760
  %v8096 = vsub.f32 %v7831, %v8095
  %8097 = vmatmul.mubr.f32.gmra.mrb[0].mxu0 %v8096
  %v8098 = vpop.f32.mrb[0].mxu0
  %v8099 = vadd.f32 %v8013, %v8098
  %v8100 = vpop.f32.mrb[0].mxu0
  %8101 = vmatprep.mubr.f32.mxu0 0.0
  %v8102 = vand.u32 %v7834, 4294901760
  %v8103 = vsub.f32 %v7834, %v8102
  %8104 = vmatmul.mubr.f32.gmra.mrb[0].mxu0 %v8103
  %v8105 = vpop.f32.mrb[0].mxu0
  %v8106 = vadd.f32 %v8019, %v8105
  %v8107 = vpop.f32.mrb[0].mxu0
  %8108 = vdwg.mxu0
  %8109 = vmatprep.subr.mxu0 0.0
  %v8110 = vand.u32 %v7235, 4294901760
  %8111 = vmatpush1.msra.mxu0 %v8110
  %8112 = vmatprep.subr.mxu0 0.0
  %v8113 = vand.u32 %v7236, 4294901760
  %8114 = vmatpush1.msra.mxu0 %v8113
  %8115 = vmatprep.subr.mxu0 0.0
  %v8116 = vand.u32 %v7237, 4294901760
  %8117 = vmatpush1.msra.mxu0 %v8116
  %8118 = vmatprep.subr.mxu0 0.0
  %v8119 = vand.u32 %v7238, 4294901760
  %8120 = vmatpush1.msra.mxu0 %v8119
  %8121 = vmatprep.subr.mxu0 0.0
  %8122 = vmatpush1.msra.mxu0 0.0
  %8123 = vmatprep.subr.mxu0 0.0
  %8124 = vmatpush1.msra.mxu0 0.0
  %8125 = vmatprep.subr.mxu0 0.0
  %8126 = vmatpush1.msra.mxu0 0.0
  %8127 = vmatprep.subr.mxu0 0.0
  %8128 = vmatpush1.msra.mxu0 0.0
  %8129 = vmatprep.subr.mxu0 0.0
  %8130 = vmatpush1.msra.mxu0 0.0
  %8131 = vmatprep.subr.mxu0 0.0
  %8132 = vmatpush1.msra.mxu0 0.0
  %8133 = vmatprep.subr.mxu0 0.0
  %8134 = vmatpush1.msra.mxu0 0.0
  %8135 = vmatprep.subr.mxu0 0.0
  %8136 = vmatpush1.msra.mxu0 0.0
  %8137 = vmatprep.subr.mxu0 0.0
  %8138 = vmatpush1.msra.mxu0 0.0
  %8139 = vmatprep.subr.mxu0 0.0
  %8140 = vmatpush1.msra.mxu0 0.0
  %8141 = vmatprep.subr.mxu0 0.0
  %8142 = vmatpush1.msra.mxu0 0.0
  %8143 = vmatprep.subr.mxu0 0.0
  %8144 = vmatpush1.msra.mxu0 0.0
  %8145 = vmatprep.subr.mxu0 0.0
  %8146 = vmatpush1.msra.mxu0 0.0
  %8147 = vmatprep.subr.mxu0 0.0
  %8148 = vmatpush1.msra.mxu0 0.0
  %8149 = vmatprep.subr.mxu0 0.0
  %8150 = vmatpush1.msra.mxu0 0.0
  %8151 = vmatprep.subr.mxu0 0.0
  %8152 = vmatpush1.msra.mxu0 0.0
  %8153 = vmatprep.subr.mxu0 0.0
  %8154 = vmatpush1.msra.mxu0 0.0
  %8155 = vmatprep.subr.mxu0 0.0
  %8156 = vmatpush1.msra.mxu0 0.0
  %8157 = vmatprep.subr.mxu0 0.0
  %8158 = vmatpush1.msra.mxu0 0.0
  %8159 = vmatprep.subr.mxu0 0.0
  %8160 = vmatpush1.msra.mxu0 0.0
  %8161 = vmatprep.subr.mxu0 0.0
  %8162 = vmatpush1.msra.mxu0 0.0
  %8163 = vmatprep.subr.mxu0 0.0
  %8164 = vmatpush1.msra.mxu0 0.0
  %8165 = vmatprep.subr.mxu0 0.0
  %8166 = vmatpush1.msra.mxu0 0.0
  %8167 = vmatprep.subr.mxu0 0.0
  %8168 = vmatpush1.msra.mxu0 0.0
  %8169 = vmatprep.subr.mxu0 0.0
  %8170 = vmatpush1.msra.mxu0 0.0
  %8171 = vmatprep.subr.mxu0 0.0
  %8172 = vmatpush1.msra.mxu0 0.0
  %8173 = vmatprep.subr.mxu0 0.0
  %8174 = vmatpush1.msra.mxu0 0.0
  %8175 = vmatprep.subr.mxu0 0.0
  %8176 = vmatpush1.msra.mxu0 0.0
  %8177 = vmatprep.mubr.f32.mxu0 0.0
  %v8178 = vand.u32 %v7831, 4294901760
  %v8179 = vsub.f32 %v7831, %v8178
  %v8180 = vand.u32 %v8179, 4294901760
  %8181 = vmatmul.mubr.f32.gmra.mrb[0].mxu0 %v8180
  %v8182 = vpop.f32.mrb[0].mxu0
  %v8183 = vadd.f32 %v8099, %v8182
  %v8184 = vpop.f32.mrb[0].mxu0
  %8185 = vmatprep.mubr.f32.mxu0 0.0
  %v8186 = vand.u32 %v7834, 4294901760
  %v8187 = vsub.f32 %v7834, %v8186
  %v8188 = vand.u32 %v8187, 4294901760
  %8189 = vmatmul.mubr.f32.gmra.mrb[0].mxu0 %v8188
  %v8190 = vpop.f32.mrb[0].mxu0
  %v8191 = vadd.f32 %v8106, %v8190
  %v8192 = vpop.f32.mrb[0].mxu0
  %8193 = vdwg.mxu0
  %8194 = vmatprep.subr.mxu0 0.0
  %v8195 = vand.u32 %v7235, 4294901760
  %v8196 = vsub.f32 %v7235, %v8195
  %v8197 = vand.u32 %v8196, 4294901760
  %8198 = vmatpush1.msra.mxu0 %v8197
  %8199 = vmatprep.subr.mxu0 0.0
  %v8200 = vand.u32 %v7236, 4294901760
  %v8201 = vsub.f32 %v7236, %v8200
  %v8202 = vand.u32 %v8201, 4294901760
  %8203 = vmatpush1.msra.mxu0 %v8202
  %8204 = vmatprep.subr.mxu0 0.0
  %v8205 = vand.u32 %v7237, 4294901760
  %v8206 = vsub.f32 %v7237, %v8205
  %v8207 = vand.u32 %v8206, 4294901760
  %8208 = vmatpush1.msra.mxu0 %v8207
  %8209 = vmatprep.subr.mxu0 0.0
  %v8210 = vand.u32 %v7238, 4294901760
  %v8211 = vsub.f32 %v7238, %v8210
  %v8212 = vand.u32 %v8211, 4294901760
  %8213 = vmatpush1.msra.mxu0 %v8212
  %8214 = vmatprep.subr.mxu0 0.0
  %8215 = vmatpush1.msra.mxu0 0.0
  %8216 = vmatprep.subr.mxu0 0.0
  %8217 = vmatpush1.msra.mxu0 0.0
  %8218 = vmatprep.subr.mxu0 0.0
  %8219 = vmatpush1.msra.mxu0 0.0
  %8220 = vmatprep.subr.mxu0 0.0
  %8221 = vmatpush1.msra.mxu0 0.0
  %8222 = vmatprep.subr.mxu0 0.0
  %8223 = vmatpush1.msra.mxu0 0.0
  %8224 = vmatprep.subr.mxu0 0.0
  %8225 = vmatpush1.msra.mxu0 0.0
  %8226 = vmatprep.subr.mxu0 0.0
  %8227 = vmatpush1.msra.mxu0 0.0
  %8228 = vmatprep.subr.mxu0 0.0
  %8229 = vmatpush1.msra.mxu0 0.0
  %8230 = vmatprep.subr.mxu0 0.0
  %8231 = vmatpush1.msra.mxu0 0.0
  %8232 = vmatprep.subr.mxu0 0.0
  %8233 = vmatpush1.msra.mxu0 0.0
  %8234 = vmatprep.subr.mxu0 0.0
  %8235 = vmatpush1.msra.mxu0 0.0
  %8236 = vmatprep.subr.mxu0 0.0
  %8237 = vmatpush1.msra.mxu0 0.0
  %8238 = vmatprep.subr.mxu0 0.0
  %8239 = vmatpush1.msra.mxu0 0.0
  %8240 = vmatprep.subr.mxu0 0.0
  %8241 = vmatpush1.msra.mxu0 0.0
  %8242 = vmatprep.subr.mxu0 0.0
  %8243 = vmatpush1.msra.mxu0 0.0
  %8244 = vmatprep.subr.mxu0 0.0
  %8245 = vmatpush1.msra.mxu0 0.0
  %8246 = vmatprep.subr.mxu0 0.0
  %8247 = vmatpush1.msra.mxu0 0.0
  %8248 = vmatprep.subr.mxu0 0.0
  %8249 = vmatpush1.msra.mxu0 0.0
  %8250 = vmatprep.subr.mxu0 0.0
  %8251 = vmatpush1.msra.mxu0 0.0
  %8252 = vmatprep.subr.mxu0 0.0
  %8253 = vmatpush1.msra.mxu0 0.0
  %8254 = vmatprep.subr.mxu0 0.0
  %8255 = vmatpush1.msra.mxu0 0.0
  %8256 = vmatprep.subr.mxu0 0.0
  %8257 = vmatpush1.msra.mxu0 0.0
  %8258 = vmatprep.subr.mxu0 0.0
  %8259 = vmatpush1.msra.mxu0 0.0
  %8260 = vmatprep.subr.mxu0 0.0
  %8261 = vmatpush1.msra.mxu0 0.0
  %8262 = vmatprep.subr.mxu0 0.0
  %8263 = vmatpush1.msra.mxu0 0.0
  %8264 = vmatprep.subr.mxu0 0.0
  %8265 = vmatpush1.msra.mxu0 0.0
  %8266 = vmatprep.subr.mxu0 0.0
  %8267 = vmatpush1.msra.mxu0 0.0
  %8268 = vmatprep.subr.mxu0 0.0
  %8269 = vmatpush1.msra.mxu0 0.0
  %8270 = vmatprep.mubr.f32.mxu0 0.0
  %v8271 = vand.u32 %v7831, 4294901760
  %8272 = vmatmul.mubr.f32.gmra.mrb[0].mxu0 %v8271
  %v8273 = vpop.f32.mrb[0].mxu0
  %v8274 = vadd.f32 %v8183, %v8273
  %v8275 = vpop.f32.mrb[0].mxu0
  %8276 = vmatprep.mubr.f32.mxu0 0.0
  %v8277 = vand.u32 %v7834, 4294901760
  %8278 = vmatmul.mubr.f32.gmra.mrb[0].mxu0 %v8277
  %v8279 = vpop.f32.mrb[0].mxu0
  %v8280 = vadd.f32 %v8191, %v8279
  %v8281 = vpop.f32.mrb[0].mxu0
  %8282 = vdwg.mxu0
  %8283 = vmatprep.subr.mxu0 0.0
  %v8284 = vand.u32 %v7235, 4294901760
  %8285 = vmatpush1.msra.mxu0 %v8284
  %8286 = vmatprep.subr.mxu0 0.0
  %v8287 = vand.u32 %v7236, 4294901760
  %8288 = vmatpush1.msra.mxu0 %v8287
  %8289 = vmatprep.subr.mxu0 0.0
  %v8290 = vand.u32 %v7237, 4294901760
  %8291 = vmatpush1.msra.mxu0 %v8290
  %8292 = vmatprep.subr.mxu0 0.0
  %v8293 = vand.u32 %v7238, 4294901760
  %8294 = vmatpush1.msra.mxu0 %v8293
  %8295 = vmatprep.subr.mxu0 0.0
  %8296 = vmatpush1.msra.mxu0 0.0
  %8297 = vmatprep.subr.mxu0 0.0
  %8298 = vmatpush1.msra.mxu0 0.0
  %8299 = vmatprep.subr.mxu0 0.0
  %8300 = vmatpush1.msra.mxu0 0.0
  %8301 = vmatprep.subr.mxu0 0.0
  %8302 = vmatpush1.msra.mxu0 0.0
  %8303 = vmatprep.subr.mxu0 0.0
  %8304 = vmatpush1.msra.mxu0 0.0
  %8305 = vmatprep.subr.mxu0 0.0
  %8306 = vmatpush1.msra.mxu0 0.0
  %8307 = vmatprep.subr.mxu0 0.0
  %8308 = vmatpush1.msra.mxu0 0.0
  %8309 = vmatprep.subr.mxu0 0.0
  %8310 = vmatpush1.msra.mxu0 0.0
  %8311 = vmatprep.subr.mxu0 0.0
  %8312 = vmatpush1.msra.mxu0 0.0
  %8313 = vmatprep.subr.mxu0 0.0
  %8314 = vmatpush1.msra.mxu0 0.0
  %8315 = vmatprep.subr.mxu0 0.0
  %8316 = vmatpush1.msra.mxu0 0.0
  %8317 = vmatprep.subr.mxu0 0.0
  %8318 = vmatpush1.msra.mxu0 0.0
  %8319 = vmatprep.subr.mxu0 0.0
  %8320 = vmatpush1.msra.mxu0 0.0
  %8321 = vmatprep.subr.mxu0 0.0
  %8322 = vmatpush1.msra.mxu0 0.0
  %8323 = vmatprep.subr.mxu0 0.0
  %8324 = vmatpush1.msra.mxu0 0.0
  %8325 = vmatprep.subr.mxu0 0.0
  %8326 = vmatpush1.msra.mxu0 0.0
  %8327 = vmatprep.subr.mxu0 0.0
  %8328 = vmatpush1.msra.mxu0 0.0
  %8329 = vmatprep.subr.mxu0 0.0
  %8330 = vmatpush1.msra.mxu0 0.0
  %8331 = vmatprep.subr.mxu0 0.0
  %8332 = vmatpush1.msra.mxu0 0.0
  %8333 = vmatprep.subr.mxu0 0.0
  %8334 = vmatpush1.msra.mxu0 0.0
  %8335 = vmatprep.subr.mxu0 0.0
  %8336 = vmatpush1.msra.mxu0 0.0
  %8337 = vmatprep.subr.mxu0 0.0
  %8338 = vmatpush1.msra.mxu0 0.0
  %8339 = vmatprep.subr.mxu0 0.0
  %8340 = vmatpush1.msra.mxu0 0.0
  %8341 = vmatprep.subr.mxu0 0.0
  %8342 = vmatpush1.msra.mxu0 0.0
  %8343 = vmatprep.subr.mxu0 0.0
  %8344 = vmatpush1.msra.mxu0 0.0
  %8345 = vmatprep.subr.mxu0 0.0
  %8346 = vmatpush1.msra.mxu0 0.0
  %8347 = vmatprep.subr.mxu0 0.0
  %8348 = vmatpush1.msra.mxu0 0.0
  %8349 = vmatprep.subr.mxu0 0.0
  %8350 = vmatpush1.msra.mxu0 0.0
  %8351 = vmatprep.mubr.f32.mxu0 0.0
  %v8352 = vand.u32 %v7831, 4294901760
  %8353 = vmatmul.mubr.f32.gmra.mrb[0].mxu0 %v8352
  %v8354 = vpop.f32.mrb[0].mxu0
  %v8355 = vadd.f32 %v8274, %v8354
  %v8356 = vpop.f32.mrb[0].mxu0
  %8357 = vmatprep.mubr.f32.mxu0 0.0
  %v8358 = vand.u32 %v7834, 4294901760
  %8359 = vmatmul.mubr.f32.gmra.mrb[0].mxu0 %v8358
  %v8360 = vpop.f32.mrb[0].mxu0
  %v8361 = vadd.f32 %v8280, %v8360
  %v8362 = vpop.f32.mrb[0].mxu0
  %8363 = vdwg.mxu0
  %v8365 = vlaneseq
  %v8366 = vshrl.u32 %v8365, 7
  %v8367 = vsub.s32 0, %v8366
  %v8368 = vrot.slane %v7239, %v8367
  %v8371 = vsel %vm943, %v7240, 0
  %v8374 = vsel %vm943, %v7241, 0
  %v8377 = vsel %vm943, %v7242, 0
  %v8380 = vsel %vm943, %v7243, 0
  %8382 = vmatprep.subr.mxu0 0.0
  %v8383 = vand.u32 %v7813, 4294901760
  %8384 = vmatpush1.msra.mxu0 %v8383
  %8385 = vmatprep.subr.mxu0 0.0
  %v8386 = vand.u32 %v7819, 4294901760
  %8387 = vmatpush1.msra.mxu0 %v8386
  %8388 = vmatprep.subr.mxu0 0.0
  %v8389 = vand.u32 %v8355, 4294901760
  %8390 = vmatpush1.msra.mxu0 %v8389
  %8391 = vmatprep.subr.mxu0 0.0
  %v8392 = vand.u32 %v8361, 4294901760
  %8393 = vmatpush1.msra.mxu0 %v8392
  %8394 = vmatprep.subr.mxu0 0.0
  %8395 = vmatpush1.msra.mxu0 0.0
  %8396 = vmatprep.subr.mxu0 0.0
  %8397 = vmatpush1.msra.mxu0 0.0
  %8398 = vmatprep.subr.mxu0 0.0
  %8399 = vmatpush1.msra.mxu0 0.0
  %8400 = vmatprep.subr.mxu0 0.0
  %8401 = vmatpush1.msra.mxu0 0.0
  %8402 = vmatprep.subr.mxu0 0.0
  %8403 = vmatpush1.msra.mxu0 0.0
  %8404 = vmatprep.subr.mxu0 0.0
  %8405 = vmatpush1.msra.mxu0 0.0
  %8406 = vmatprep.subr.mxu0 0.0
  %8407 = vmatpush1.msra.mxu0 0.0
  %8408 = vmatprep.subr.mxu0 0.0
  %8409 = vmatpush1.msra.mxu0 0.0
  %8410 = vmatprep.subr.mxu0 0.0
  %8411 = vmatpush1.msra.mxu0 0.0
  %8412 = vmatprep.subr.mxu0 0.0
  %8413 = vmatpush1.msra.mxu0 0.0
  %8414 = vmatprep.subr.mxu0 0.0
  %8415 = vmatpush1.msra.mxu0 0.0
  %8416 = vmatprep.subr.mxu0 0.0
  %8417 = vmatpush1.msra.mxu0 0.0
  %8418 = vmatprep.subr.mxu0 0.0
  %8419 = vmatpush1.msra.mxu0 0.0
  %8420 = vmatprep.subr.mxu0 0.0
  %8421 = vmatpush1.msra.mxu0 0.0
  %8422 = vmatprep.subr.mxu0 0.0
  %8423 = vmatpush1.msra.mxu0 0.0
  %8424 = vmatprep.subr.mxu0 0.0
  %8425 = vmatpush1.msra.mxu0 0.0
  %8426 = vmatprep.subr.mxu0 0.0
  %8427 = vmatpush1.msra.mxu0 0.0
  %8428 = vmatprep.subr.mxu0 0.0
  %8429 = vmatpush1.msra.mxu0 0.0
  %8430 = vmatprep.subr.mxu0 0.0
  %8431 = vmatpush1.msra.mxu0 0.0
  %8432 = vmatprep.subr.mxu0 0.0
  %8433 = vmatpush1.msra.mxu0 0.0
  %8434 = vmatprep.subr.mxu0 0.0
  %8435 = vmatpush1.msra.mxu0 0.0
  %8436 = vmatprep.subr.mxu0 0.0
  %8437 = vmatpush1.msra.mxu0 0.0
  %8438 = vmatprep.subr.mxu0 0.0
  %8439 = vmatpush1.msra.mxu0 0.0
  %8440 = vmatprep.subr.mxu0 0.0
  %8441 = vmatpush1.msra.mxu0 0.0
  %8442 = vmatprep.subr.mxu0 0.0
  %8443 = vmatpush1.msra.mxu0 0.0
  %8444 = vmatprep.subr.mxu0 0.0
  %8445 = vmatpush1.msra.mxu0 0.0
  %8446 = vmatprep.subr.mxu0 0.0
  %8447 = vmatpush1.msra.mxu0 0.0
  %8448 = vmatprep.subr.mxu0 0.0
  %8449 = vmatpush1.msra.mxu0 0.0
  %8450 = vmatprep.mubr.f32.mxu0 0.0
  %v8451 = vand.u32 %v8371, 4294901760
  %v8452 = vsub.f32 %v8371, %v8451
  %v8453 = vand.u32 %v8452, 4294901760
  %v8454 = vsub.f32 %v8452, %v8453
  %v8455 = vand.u32 %v8454, 4294901760
  %8456 = vmatmul.mubr.f32.gmra.mrb[0].mxu0 %v8455
  %v8457 = vpop.f32.mrb[0].mxu0
  %v8458 = vadd.f32 %v8368, %v8457
  %v8459 = vpop.f32.mrb[0].mxu0
  %8460 = vmatprep.mubr.f32.mxu0 0.0
  %v8461 = vand.u32 %v8374, 4294901760
  %v8462 = vsub.f32 %v8374, %v8461
  %v8463 = vand.u32 %v8462, 4294901760
  %v8464 = vsub.f32 %v8462, %v8463
  %v8465 = vand.u32 %v8464, 4294901760
  %8466 = vmatmul.mubr.f32.gmra.mrb[0].mxu0 %v8465
  %v8467 = vpop.f32.mrb[0].mxu0
  %v8468 = vadd.f32 %v8368, %v8467
  %v8469 = vpop.f32.mrb[0].mxu0
  %8470 = vmatprep.mubr.f32.mxu0 0.0
  %v8471 = vand.u32 %v8377, 4294901760
  %v8472 = vsub.f32 %v8377, %v8471
  %v8473 = vand.u32 %v8472, 4294901760
  %v8474 = vsub.f32 %v8472, %v8473
  %v8475 = vand.u32 %v8474, 4294901760
  %8476 = vmatmul.mubr.f32.gmra.mrb[0].mxu0 %v8475
  %v8477 = vpop.f32.mrb[0].mxu0
  %v8478 = vadd.f32 %v8368, %v8477
  %v8479 = vpop.f32.mrb[0].mxu0
  %8480 = vmatprep.mubr.f32.mxu0 0.0
  %v8481 = vand.u32 %v8380, 4294901760
  %v8482 = vsub.f32 %v8380, %v8481
  %v8483 = vand.u32 %v8482, 4294901760
  %v8484 = vsub.f32 %v8482, %v8483
  %v8485 = vand.u32 %v8484, 4294901760
  %8486 = vmatmul.mubr.f32.gmra.mrb[0].mxu0 %v8485
  %v8487 = vpop.f32.mrb[0].mxu0
  %v8488 = vadd.f32 %v8368, %v8487
  %v8489 = vpop.f32.mrb[0].mxu0
  %8490 = vdwg.mxu0
  %8491 = vmatprep.subr.mxu0 0.0
  %v8492 = vand.u32 %v7813, 4294901760
  %v8493 = vsub.f32 %v7813, %v8492
  %v8494 = vand.u32 %v8493, 4294901760
  %v8495 = vsub.f32 %v8493, %v8494
  %v8496 = vand.u32 %v8495, 4294901760
  %8497 = vmatpush1.msra.mxu0 %v8496
  %8498 = vmatprep.subr.mxu0 0.0
  %v8499 = vand.u32 %v7819, 4294901760
  %v8500 = vsub.f32 %v7819, %v8499
  %v8501 = vand.u32 %v8500, 4294901760
  %v8502 = vsub.f32 %v8500, %v8501
  %v8503 = vand.u32 %v8502, 4294901760
  %8504 = vmatpush1.msra.mxu0 %v8503
  %8505 = vmatprep.subr.mxu0 0.0
  %v8506 = vand.u32 %v8355, 4294901760
  %v8507 = vsub.f32 %v8355, %v8506
  %v8508 = vand.u32 %v8507, 4294901760
  %v8509 = vsub.f32 %v8507, %v8508
  %v8510 = vand.u32 %v8509, 4294901760
  %8511 = vmatpush1.msra.mxu0 %v8510
  %8512 = vmatprep.subr.mxu0 0.0
  %v8513 = vand.u32 %v8361, 4294901760
  %v8514 = vsub.f32 %v8361, %v8513
  %v8515 = vand.u32 %v8514, 4294901760
  %v8516 = vsub.f32 %v8514, %v8515
  %v8517 = vand.u32 %v8516, 4294901760
  %8518 = vmatpush1.msra.mxu0 %v8517
  %8519 = vmatprep.subr.mxu0 0.0
  %8520 = vmatpush1.msra.mxu0 0.0
  %8521 = vmatprep.subr.mxu0 0.0
  %8522 = vmatpush1.msra.mxu0 0.0
  %8523 = vmatprep.subr.mxu0 0.0
  %8524 = vmatpush1.msra.mxu0 0.0
  %8525 = vmatprep.subr.mxu0 0.0
  %8526 = vmatpush1.msra.mxu0 0.0
  %8527 = vmatprep.subr.mxu0 0.0
  %8528 = vmatpush1.msra.mxu0 0.0
  %8529 = vmatprep.subr.mxu0 0.0
  %8530 = vmatpush1.msra.mxu0 0.0
  %8531 = vmatprep.subr.mxu0 0.0
  %8532 = vmatpush1.msra.mxu0 0.0
  %8533 = vmatprep.subr.mxu0 0.0
  %8534 = vmatpush1.msra.mxu0 0.0
  %8535 = vmatprep.subr.mxu0 0.0
  %8536 = vmatpush1.msra.mxu0 0.0
  %8537 = vmatprep.subr.mxu0 0.0
  %8538 = vmatpush1.msra.mxu0 0.0
  %8539 = vmatprep.subr.mxu0 0.0
  %8540 = vmatpush1.msra.mxu0 0.0
  %8541 = vmatprep.subr.mxu0 0.0
  %8542 = vmatpush1.msra.mxu0 0.0
  %8543 = vmatprep.subr.mxu0 0.0
  %8544 = vmatpush1.msra.mxu0 0.0
  %8545 = vmatprep.subr.mxu0 0.0
  %8546 = vmatpush1.msra.mxu0 0.0
  %8547 = vmatprep.subr.mxu0 0.0
  %8548 = vmatpush1.msra.mxu0 0.0
  %8549 = vmatprep.subr.mxu0 0.0
  %8550 = vmatpush1.msra.mxu0 0.0
  %8551 = vmatprep.subr.mxu0 0.0
  %8552 = vmatpush1.msra.mxu0 0.0
  %8553 = vmatprep.subr.mxu0 0.0
  %8554 = vmatpush1.msra.mxu0 0.0
  %8555 = vmatprep.subr.mxu0 0.0
  %8556 = vmatpush1.msra.mxu0 0.0
  %8557 = vmatprep.subr.mxu0 0.0
  %8558 = vmatpush1.msra.mxu0 0.0
  %8559 = vmatprep.subr.mxu0 0.0
  %8560 = vmatpush1.msra.mxu0 0.0
  %8561 = vmatprep.subr.mxu0 0.0
  %8562 = vmatpush1.msra.mxu0 0.0
  %8563 = vmatprep.subr.mxu0 0.0
  %8564 = vmatpush1.msra.mxu0 0.0
  %8565 = vmatprep.subr.mxu0 0.0
  %8566 = vmatpush1.msra.mxu0 0.0
  %8567 = vmatprep.subr.mxu0 0.0
  %8568 = vmatpush1.msra.mxu0 0.0
  %8569 = vmatprep.subr.mxu0 0.0
  %8570 = vmatpush1.msra.mxu0 0.0
  %8571 = vmatprep.subr.mxu0 0.0
  %8572 = vmatpush1.msra.mxu0 0.0
  %8573 = vmatprep.subr.mxu0 0.0
  %8574 = vmatpush1.msra.mxu0 0.0
  %8575 = vmatprep.mubr.f32.mxu0 0.0
  %v8576 = vand.u32 %v8371, 4294901760
  %8577 = vmatmul.mubr.f32.gmra.mrb[0].mxu0 %v8576
  %v8578 = vpop.f32.mrb[0].mxu0
  %v8579 = vadd.f32 %v8458, %v8578
  %v8580 = vpop.f32.mrb[0].mxu0
  %8581 = vmatprep.mubr.f32.mxu0 0.0
  %v8582 = vand.u32 %v8374, 4294901760
  %8583 = vmatmul.mubr.f32.gmra.mrb[0].mxu0 %v8582
  %v8584 = vpop.f32.mrb[0].mxu0
  %v8585 = vadd.f32 %v8468, %v8584
  %v8586 = vpop.f32.mrb[0].mxu0
  %8587 = vmatprep.mubr.f32.mxu0 0.0
  %v8588 = vand.u32 %v8377, 4294901760
  %8589 = vmatmul.mubr.f32.gmra.mrb[0].mxu0 %v8588
  %v8590 = vpop.f32.mrb[0].mxu0
  %v8591 = vadd.f32 %v8478, %v8590
  %v8592 = vpop.f32.mrb[0].mxu0
  %8593 = vmatprep.mubr.f32.mxu0 0.0
  %v8594 = vand.u32 %v8380, 4294901760
  %8595 = vmatmul.mubr.f32.gmra.mrb[0].mxu0 %v8594
  %v8596 = vpop.f32.mrb[0].mxu0
  %v8597 = vadd.f32 %v8488, %v8596
  %v8598 = vpop.f32.mrb[0].mxu0
  %8599 = vdwg.mxu0
  %8600 = vmatprep.subr.mxu0 0.0
  %v8601 = vand.u32 %v7813, 4294901760
  %v8602 = vsub.f32 %v7813, %v8601
  %8603 = vmatpush1.msra.mxu0 %v8602
  %8604 = vmatprep.subr.mxu0 0.0
  %v8605 = vand.u32 %v7819, 4294901760
  %v8606 = vsub.f32 %v7819, %v8605
  %8607 = vmatpush1.msra.mxu0 %v8606
  %8608 = vmatprep.subr.mxu0 0.0
  %v8609 = vand.u32 %v8355, 4294901760
  %v8610 = vsub.f32 %v8355, %v8609
  %8611 = vmatpush1.msra.mxu0 %v8610
  %8612 = vmatprep.subr.mxu0 0.0
  %v8613 = vand.u32 %v8361, 4294901760
  %v8614 = vsub.f32 %v8361, %v8613
  %8615 = vmatpush1.msra.mxu0 %v8614
  %8616 = vmatprep.subr.mxu0 0.0
  %8617 = vmatpush1.msra.mxu0 0.0
  %8618 = vmatprep.subr.mxu0 0.0
  %8619 = vmatpush1.msra.mxu0 0.0
  %8620 = vmatprep.subr.mxu0 0.0
  %8621 = vmatpush1.msra.mxu0 0.0
  %8622 = vmatprep.subr.mxu0 0.0
  %8623 = vmatpush1.msra.mxu0 0.0
  %8624 = vmatprep.subr.mxu0 0.0
  %8625 = vmatpush1.msra.mxu0 0.0
  %8626 = vmatprep.subr.mxu0 0.0
  %8627 = vmatpush1.msra.mxu0 0.0
  %8628 = vmatprep.subr.mxu0 0.0
  %8629 = vmatpush1.msra.mxu0 0.0
  %8630 = vmatprep.subr.mxu0 0.0
  %8631 = vmatpush1.msra.mxu0 0.0
  %8632 = vmatprep.subr.mxu0 0.0
  %8633 = vmatpush1.msra.mxu0 0.0
  %8634 = vmatprep.subr.mxu0 0.0
  %8635 = vmatpush1.msra.mxu0 0.0
  %8636 = vmatprep.subr.mxu0 0.0
  %8637 = vmatpush1.msra.mxu0 0.0
  %8638 = vmatprep.subr.mxu0 0.0
  %8639 = vmatpush1.msra.mxu0 0.0
  %8640 = vmatprep.subr.mxu0 0.0
  %8641 = vmatpush1.msra.mxu0 0.0
  %8642 = vmatprep.subr.mxu0 0.0
  %8643 = vmatpush1.msra.mxu0 0.0
  %8644 = vmatprep.subr.mxu0 0.0
  %8645 = vmatpush1.msra.mxu0 0.0
  %8646 = vmatprep.subr.mxu0 0.0
  %8647 = vmatpush1.msra.mxu0 0.0
  %8648 = vmatprep.subr.mxu0 0.0
  %8649 = vmatpush1.msra.mxu0 0.0
  %8650 = vmatprep.subr.mxu0 0.0
  %8651 = vmatpush1.msra.mxu0 0.0
  %8652 = vmatprep.subr.mxu0 0.0
  %8653 = vmatpush1.msra.mxu0 0.0
  %8654 = vmatprep.subr.mxu0 0.0
  %8655 = vmatpush1.msra.mxu0 0.0
  %8656 = vmatprep.subr.mxu0 0.0
  %8657 = vmatpush1.msra.mxu0 0.0
  %8658 = vmatprep.subr.mxu0 0.0
  %8659 = vmatpush1.msra.mxu0 0.0
  %8660 = vmatprep.subr.mxu0 0.0
  %8661 = vmatpush1.msra.mxu0 0.0
  %8662 = vmatprep.subr.mxu0 0.0
  %8663 = vmatpush1.msra.mxu0 0.0
  %8664 = vmatprep.subr.mxu0 0.0
  %8665 = vmatpush1.msra.mxu0 0.0
  %8666 = vmatprep.subr.mxu0 0.0
  %8667 = vmatpush1.msra.mxu0 0.0
  %8668 = vmatprep.subr.mxu0 0.0
  %8669 = vmatpush1.msra.mxu0 0.0
  %8670 = vmatprep.subr.mxu0 0.0
  %8671 = vmatpush1.msra.mxu0 0.0
  %8672 = vmatprep.mubr.f32.mxu0 0.0
  %v8673 = vand.u32 %v8371, 4294901760
  %v8674 = vsub.f32 %v8371, %v8673
  %8675 = vmatmul.mubr.f32.gmra.mrb[0].mxu0 %v8674
  %v8676 = vpop.f32.mrb[0].mxu0
  %v8677 = vadd.f32 %v8579, %v8676
  %v8678 = vpop.f32.mrb[0].mxu0
  %8679 = vmatprep.mubr.f32.mxu0 0.0
  %v8680 = vand.u32 %v8374, 4294901760
  %v8681 = vsub.f32 %v8374, %v8680
  %8682 = vmatmul.mubr.f32.gmra.mrb[0].mxu0 %v8681
  %v8683 = vpop.f32.mrb[0].mxu0
  %v8684 = vadd.f32 %v8585, %v8683
  %v8685 = vpop.f32.mrb[0].mxu0
  %8686 = vmatprep.mubr.f32.mxu0 0.0
  %v8687 = vand.u32 %v8377, 4294901760
  %v8688 = vsub.f32 %v8377, %v8687
  %8689 = vmatmul.mubr.f32.gmra.mrb[0].mxu0 %v8688
  %v8690 = vpop.f32.mrb[0].mxu0
  %v8691 = vadd.f32 %v8591, %v8690
  %v8692 = vpop.f32.mrb[0].mxu0
  %8693 = vmatprep.mubr.f32.mxu0 0.0
  %v8694 = vand.u32 %v8380, 4294901760
  %v8695 = vsub.f32 %v8380, %v8694
  %8696 = vmatmul.mubr.f32.gmra.mrb[0].mxu0 %v8695
  %v8697 = vpop.f32.mrb[0].mxu0
  %v8698 = vadd.f32 %v8597, %v8697
  %v8699 = vpop.f32.mrb[0].mxu0
  %8700 = vdwg.mxu0
  %8701 = vmatprep.subr.mxu0 0.0
  %v8702 = vand.u32 %v7813, 4294901760
  %8703 = vmatpush1.msra.mxu0 %v8702
  %8704 = vmatprep.subr.mxu0 0.0
  %v8705 = vand.u32 %v7819, 4294901760
  %8706 = vmatpush1.msra.mxu0 %v8705
  %8707 = vmatprep.subr.mxu0 0.0
  %v8708 = vand.u32 %v8355, 4294901760
  %8709 = vmatpush1.msra.mxu0 %v8708
  %8710 = vmatprep.subr.mxu0 0.0
  %v8711 = vand.u32 %v8361, 4294901760
  %8712 = vmatpush1.msra.mxu0 %v8711
  %8713 = vmatprep.subr.mxu0 0.0
  %8714 = vmatpush1.msra.mxu0 0.0
  %8715 = vmatprep.subr.mxu0 0.0
  %8716 = vmatpush1.msra.mxu0 0.0
  %8717 = vmatprep.subr.mxu0 0.0
  %8718 = vmatpush1.msra.mxu0 0.0
  %8719 = vmatprep.subr.mxu0 0.0
  %8720 = vmatpush1.msra.mxu0 0.0
  %8721 = vmatprep.subr.mxu0 0.0
  %8722 = vmatpush1.msra.mxu0 0.0
  %8723 = vmatprep.subr.mxu0 0.0
  %8724 = vmatpush1.msra.mxu0 0.0
  %8725 = vmatprep.subr.mxu0 0.0
  %8726 = vmatpush1.msra.mxu0 0.0
  %8727 = vmatprep.subr.mxu0 0.0
  %8728 = vmatpush1.msra.mxu0 0.0
  %8729 = vmatprep.subr.mxu0 0.0
  %8730 = vmatpush1.msra.mxu0 0.0
  %8731 = vmatprep.subr.mxu0 0.0
  %8732 = vmatpush1.msra.mxu0 0.0
  %8733 = vmatprep.subr.mxu0 0.0
  %8734 = vmatpush1.msra.mxu0 0.0
  %8735 = vmatprep.subr.mxu0 0.0
  %8736 = vmatpush1.msra.mxu0 0.0
  %8737 = vmatprep.subr.mxu0 0.0
  %8738 = vmatpush1.msra.mxu0 0.0
  %8739 = vmatprep.subr.mxu0 0.0
  %8740 = vmatpush1.msra.mxu0 0.0
  %8741 = vmatprep.subr.mxu0 0.0
  %8742 = vmatpush1.msra.mxu0 0.0
  %8743 = vmatprep.subr.mxu0 0.0
  %8744 = vmatpush1.msra.mxu0 0.0
  %8745 = vmatprep.subr.mxu0 0.0
  %8746 = vmatpush1.msra.mxu0 0.0
  %8747 = vmatprep.subr.mxu0 0.0
  %8748 = vmatpush1.msra.mxu0 0.0
  %8749 = vmatprep.subr.mxu0 0.0
  %8750 = vmatpush1.msra.mxu0 0.0
  %8751 = vmatprep.subr.mxu0 0.0
  %8752 = vmatpush1.msra.mxu0 0.0
  %8753 = vmatprep.subr.mxu0 0.0
  %8754 = vmatpush1.msra.mxu0 0.0
  %8755 = vmatprep.subr.mxu0 0.0
  %8756 = vmatpush1.msra.mxu0 0.0
  %8757 = vmatprep.subr.mxu0 0.0
  %8758 = vmatpush1.msra.mxu0 0.0
  %8759 = vmatprep.subr.mxu0 0.0
  %8760 = vmatpush1.msra.mxu0 0.0
  %8761 = vmatprep.subr.mxu0 0.0
  %8762 = vmatpush1.msra.mxu0 0.0
  %8763 = vmatprep.subr.mxu0 0.0
  %8764 = vmatpush1.msra.mxu0 0.0
  %8765 = vmatprep.subr.mxu0 0.0
  %8766 = vmatpush1.msra.mxu0 0.0
  %8767 = vmatprep.subr.mxu0 0.0
  %8768 = vmatpush1.msra.mxu0 0.0
  %8769 = vmatprep.mubr.f32.mxu0 0.0
  %v8770 = vand.u32 %v8371, 4294901760
  %v8771 = vsub.f32 %v8371, %v8770
  %v8772 = vand.u32 %v8771, 4294901760
  %8773 = vmatmul.mubr.f32.gmra.mrb[0].mxu0 %v8772
  %v8774 = vpop.f32.mrb[0].mxu0
  %v8775 = vadd.f32 %v8677, %v8774
  %v8776 = vpop.f32.mrb[0].mxu0
  %8777 = vmatprep.mubr.f32.mxu0 0.0
  %v8778 = vand.u32 %v8374, 4294901760
  %v8779 = vsub.f32 %v8374, %v8778
  %v8780 = vand.u32 %v8779, 4294901760
  %8781 = vmatmul.mubr.f32.gmra.mrb[0].mxu0 %v8780
  %v8782 = vpop.f32.mrb[0].mxu0
  %v8783 = vadd.f32 %v8684, %v8782
  %v8784 = vpop.f32.mrb[0].mxu0
  %8785 = vmatprep.mubr.f32.mxu0 0.0
  %v8786 = vand.u32 %v8377, 4294901760
  %v8787 = vsub.f32 %v8377, %v8786
  %v8788 = vand.u32 %v8787, 4294901760
  %8789 = vmatmul.mubr.f32.gmra.mrb[0].mxu0 %v8788
  %v8790 = vpop.f32.mrb[0].mxu0
  %v8791 = vadd.f32 %v8691, %v8790
  %v8792 = vpop.f32.mrb[0].mxu0
  %8793 = vmatprep.mubr.f32.mxu0 0.0
  %v8794 = vand.u32 %v8380, 4294901760
  %v8795 = vsub.f32 %v8380, %v8794
  %v8796 = vand.u32 %v8795, 4294901760
  %8797 = vmatmul.mubr.f32.gmra.mrb[0].mxu0 %v8796
  %v8798 = vpop.f32.mrb[0].mxu0
  %v8799 = vadd.f32 %v8698, %v8798
  %v8800 = vpop.f32.mrb[0].mxu0
  %8801 = vdwg.mxu0
  %8802 = vmatprep.subr.mxu0 0.0
  %v8803 = vand.u32 %v7813, 4294901760
  %v8804 = vsub.f32 %v7813, %v8803
  %v8805 = vand.u32 %v8804, 4294901760
  %8806 = vmatpush1.msra.mxu0 %v8805
  %8807 = vmatprep.subr.mxu0 0.0
  %v8808 = vand.u32 %v7819, 4294901760
  %v8809 = vsub.f32 %v7819, %v8808
  %v8810 = vand.u32 %v8809, 4294901760
  %8811 = vmatpush1.msra.mxu0 %v8810
  %8812 = vmatprep.subr.mxu0 0.0
  %v8813 = vand.u32 %v8355, 4294901760
  %v8814 = vsub.f32 %v8355, %v8813
  %v8815 = vand.u32 %v8814, 4294901760
  %8816 = vmatpush1.msra.mxu0 %v8815
  %8817 = vmatprep.subr.mxu0 0.0
  %v8818 = vand.u32 %v8361, 4294901760
  %v8819 = vsub.f32 %v8361, %v8818
  %v8820 = vand.u32 %v8819, 4294901760
  %8821 = vmatpush1.msra.mxu0 %v8820
  %8822 = vmatprep.subr.mxu0 0.0
  %8823 = vmatpush1.msra.mxu0 0.0
  %8824 = vmatprep.subr.mxu0 0.0
  %8825 = vmatpush1.msra.mxu0 0.0
  %8826 = vmatprep.subr.mxu0 0.0
  %8827 = vmatpush1.msra.mxu0 0.0
  %8828 = vmatprep.subr.mxu0 0.0
  %8829 = vmatpush1.msra.mxu0 0.0
  %8830 = vmatprep.subr.mxu0 0.0
  %8831 = vmatpush1.msra.mxu0 0.0
  %8832 = vmatprep.subr.mxu0 0.0
  %8833 = vmatpush1.msra.mxu0 0.0
  %8834 = vmatprep.subr.mxu0 0.0
  %8835 = vmatpush1.msra.mxu0 0.0
  %8836 = vmatprep.subr.mxu0 0.0
  %8837 = vmatpush1.msra.mxu0 0.0
  %8838 = vmatprep.subr.mxu0 0.0
  %8839 = vmatpush1.msra.mxu0 0.0
  %8840 = vmatprep.subr.mxu0 0.0
  %8841 = vmatpush1.msra.mxu0 0.0
  %8842 = vmatprep.subr.mxu0 0.0
  %8843 = vmatpush1.msra.mxu0 0.0
  %8844 = vmatprep.subr.mxu0 0.0
  %8845 = vmatpush1.msra.mxu0 0.0
  %8846 = vmatprep.subr.mxu0 0.0
  %8847 = vmatpush1.msra.mxu0 0.0
  %8848 = vmatprep.subr.mxu0 0.0
  %8849 = vmatpush1.msra.mxu0 0.0
  %8850 = vmatprep.subr.mxu0 0.0
  %8851 = vmatpush1.msra.mxu0 0.0
  %8852 = vmatprep.subr.mxu0 0.0
  %8853 = vmatpush1.msra.mxu0 0.0
  %8854 = vmatprep.subr.mxu0 0.0
  %8855 = vmatpush1.msra.mxu0 0.0
  %8856 = vmatprep.subr.mxu0 0.0
  %8857 = vmatpush1.msra.mxu0 0.0
  %8858 = vmatprep.subr.mxu0 0.0
  %8859 = vmatpush1.msra.mxu0 0.0
  %8860 = vmatprep.subr.mxu0 0.0
  %8861 = vmatpush1.msra.mxu0 0.0
  %8862 = vmatprep.subr.mxu0 0.0
  %8863 = vmatpush1.msra.mxu0 0.0
  %8864 = vmatprep.subr.mxu0 0.0
  %8865 = vmatpush1.msra.mxu0 0.0
  %8866 = vmatprep.subr.mxu0 0.0
  %8867 = vmatpush1.msra.mxu0 0.0
  %8868 = vmatprep.subr.mxu0 0.0
  %8869 = vmatpush1.msra.mxu0 0.0
  %8870 = vmatprep.subr.mxu0 0.0
  %8871 = vmatpush1.msra.mxu0 0.0
  %8872 = vmatprep.subr.mxu0 0.0
  %8873 = vmatpush1.msra.mxu0 0.0
  %8874 = vmatprep.subr.mxu0 0.0
  %8875 = vmatpush1.msra.mxu0 0.0
  %8876 = vmatprep.subr.mxu0 0.0
  %8877 = vmatpush1.msra.mxu0 0.0
  %8878 = vmatprep.mubr.f32.mxu0 0.0
  %v8879 = vand.u32 %v8371, 4294901760
  %8880 = vmatmul.mubr.f32.gmra.mrb[0].mxu0 %v8879
  %v8881 = vpop.f32.mrb[0].mxu0
  %v8882 = vadd.f32 %v8775, %v8881
  %v8883 = vpop.f32.mrb[0].mxu0
  %8884 = vmatprep.mubr.f32.mxu0 0.0
  %v8885 = vand.u32 %v8374, 4294901760
  %8886 = vmatmul.mubr.f32.gmra.mrb[0].mxu0 %v8885
  %v8887 = vpop.f32.mrb[0].mxu0
  %v8888 = vadd.f32 %v8783, %v8887
  %v8889 = vpop.f32.mrb[0].mxu0
  %8890 = vmatprep.mubr.f32.mxu0 0.0
  %v8891 = vand.u32 %v8377, 4294901760
  %8892 = vmatmul.mubr.f32.gmra.mrb[0].mxu0 %v8891
  %v8893 = vpop.f32.mrb[0].mxu0
  %v8894 = vadd.f32 %v8791, %v8893
  %v8895 = vpop.f32.mrb[0].mxu0
  %8896 = vmatprep.mubr.f32.mxu0 0.0
  %v8897 = vand.u32 %v8380, 4294901760
  %8898 = vmatmul.mubr.f32.gmra.mrb[0].mxu0 %v8897
  %v8899 = vpop.f32.mrb[0].mxu0
  %v8900 = vadd.f32 %v8799, %v8899
  %v8901 = vpop.f32.mrb[0].mxu0
  %8902 = vdwg.mxu0
  %8903 = vmatprep.subr.mxu0 0.0
  %v8904 = vand.u32 %v7813, 4294901760
  %8905 = vmatpush1.msra.mxu0 %v8904
  %8906 = vmatprep.subr.mxu0 0.0
  %v8907 = vand.u32 %v7819, 4294901760
  %8908 = vmatpush1.msra.mxu0 %v8907
  %8909 = vmatprep.subr.mxu0 0.0
  %v8910 = vand.u32 %v8355, 4294901760
  %8911 = vmatpush1.msra.mxu0 %v8910
  %8912 = vmatprep.subr.mxu0 0.0
  %v8913 = vand.u32 %v8361, 4294901760
  %8914 = vmatpush1.msra.mxu0 %v8913
  %8915 = vmatprep.subr.mxu0 0.0
  %8916 = vmatpush1.msra.mxu0 0.0
  %8917 = vmatprep.subr.mxu0 0.0
  %8918 = vmatpush1.msra.mxu0 0.0
  %8919 = vmatprep.subr.mxu0 0.0
  %8920 = vmatpush1.msra.mxu0 0.0
  %8921 = vmatprep.subr.mxu0 0.0
  %8922 = vmatpush1.msra.mxu0 0.0
  %8923 = vmatprep.subr.mxu0 0.0
  %8924 = vmatpush1.msra.mxu0 0.0
  %8925 = vmatprep.subr.mxu0 0.0
  %8926 = vmatpush1.msra.mxu0 0.0
  %8927 = vmatprep.subr.mxu0 0.0
  %8928 = vmatpush1.msra.mxu0 0.0
  %8929 = vmatprep.subr.mxu0 0.0
  %8930 = vmatpush1.msra.mxu0 0.0
  %8931 = vmatprep.subr.mxu0 0.0
  %8932 = vmatpush1.msra.mxu0 0.0
  %8933 = vmatprep.subr.mxu0 0.0
  %8934 = vmatpush1.msra.mxu0 0.0
  %8935 = vmatprep.subr.mxu0 0.0
  %8936 = vmatpush1.msra.mxu0 0.0
  %8937 = vmatprep.subr.mxu0 0.0
  %8938 = vmatpush1.msra.mxu0 0.0
  %8939 = vmatprep.subr.mxu0 0.0
  %8940 = vmatpush1.msra.mxu0 0.0
  %8941 = vmatprep.subr.mxu0 0.0
  %8942 = vmatpush1.msra.mxu0 0.0
  %8943 = vmatprep.subr.mxu0 0.0
  %8944 = vmatpush1.msra.mxu0 0.0
  %8945 = vmatprep.subr.mxu0 0.0
  %8946 = vmatpush1.msra.mxu0 0.0
  %8947 = vmatprep.subr.mxu0 0.0
  %8948 = vmatpush1.msra.mxu0 0.0
  %8949 = vmatprep.subr.mxu0 0.0
  %8950 = vmatpush1.msra.mxu0 0.0
  %8951 = vmatprep.subr.mxu0 0.0
  %8952 = vmatpush1.msra.mxu0 0.0
  %8953 = vmatprep.subr.mxu0 0.0
  %8954 = vmatpush1.msra.mxu0 0.0
  %8955 = vmatprep.subr.mxu0 0.0
  %8956 = vmatpush1.msra.mxu0 0.0
  %8957 = vmatprep.subr.mxu0 0.0
  %8958 = vmatpush1.msra.mxu0 0.0
  %8959 = vmatprep.subr.mxu0 0.0
  %8960 = vmatpush1.msra.mxu0 0.0
  %8961 = vmatprep.subr.mxu0 0.0
  %8962 = vmatpush1.msra.mxu0 0.0
  %8963 = vmatprep.subr.mxu0 0.0
  %8964 = vmatpush1.msra.mxu0 0.0
  %8965 = vmatprep.subr.mxu0 0.0
  %8966 = vmatpush1.msra.mxu0 0.0
  %8967 = vmatprep.subr.mxu0 0.0
  %8968 = vmatpush1.msra.mxu0 0.0
  %8969 = vmatprep.subr.mxu0 0.0
  %8970 = vmatpush1.msra.mxu0 0.0
  %8971 = vmatprep.mubr.f32.mxu0 0.0
  %v8972 = vand.u32 %v8371, 4294901760
  %8973 = vmatmul.mubr.f32.gmra.mrb[0].mxu0 %v8972
  %v8974 = vpop.f32.mrb[0].mxu0
  %v8975 = vadd.f32 %v8882, %v8974
  %v8976 = vpop.f32.mrb[0].mxu0
  %8977 = vmatprep.mubr.f32.mxu0 0.0
  %v8978 = vand.u32 %v8374, 4294901760
  %8979 = vmatmul.mubr.f32.gmra.mrb[0].mxu0 %v8978
  %v8980 = vpop.f32.mrb[0].mxu0
  %v8981 = vadd.f32 %v8888, %v8980
  %v8982 = vpop.f32.mrb[0].mxu0
  %8983 = vmatprep.mubr.f32.mxu0 0.0
  %v8984 = vand.u32 %v8377, 4294901760
  %8985 = vmatmul.mubr.f32.gmra.mrb[0].mxu0 %v8984
  %v8986 = vpop.f32.mrb[0].mxu0
  %v8987 = vadd.f32 %v8894, %v8986
  %v8988 = vpop.f32.mrb[0].mxu0
  %8989 = vmatprep.mubr.f32.mxu0 0.0
  %v8990 = vand.u32 %v8380, 4294901760
  %8991 = vmatmul.mubr.f32.gmra.mrb[0].mxu0 %v8990
  %v8992 = vpop.f32.mrb[0].mxu0
  %v8993 = vadd.f32 %v8900, %v8992
  %v8994 = vpop.f32.mrb[0].mxu0
  %8995 = vdwg.mxu0
  %v8996 = vmax.f32 %v8975, 0.0
  %v8997 = vmax.f32 %v8981, 0.0
  %v8998 = vmax.f32 %v8987, 0.0
  %v8999 = vmax.f32 %v8993, 0.0
  %v9004 = vrot.slane %v8996, 7
  %v9005 = vrot.slane %v8997, 7
  %v9006 = vsel %vm195, %v9004, %v9005
  %v9007 = vrot.slane %v8998, 7
  %v9008 = vsel %vm195, %v9005, %v9007
  %v9009 = vrot.slane %v8999, 7
  %v9010 = vsel %vm195, %v9007, %v9009
  %v9015 = vsel %vm195, 0.0, %v9004
  %v9016 = vsel %vm183, %v9015, 0.0
  %v9017 = vsel %vm184, %v9006, 0.0
  %v9018 = vsel %vm185, %v9008, 0.0
  %v9019 = vsel %vm186, %v9010, 0.0
  %v9020 = vrot.slane %v8996, 1
  %v9021 = vrot.slane %v8997, 1
  %v9022 = vsel %vm212, %v9020, %v9021
  %v9023 = vrot.slane %v8998, 1
  %v9024 = vsel %vm212, %v9021, %v9023
  %v9025 = vrot.slane %v8999, 1
  %v9026 = vsel %vm212, %v9023, %v9025
  %v9031 = vsel %vm212, %v9025, 0.0
  %v9032 = vsel %vm187, %v9022, 0.0
  %v9033 = vsel %vm188, %v9024, 0.0
  %v9034 = vsel %vm189, %v9026, 0.0
  %v9035 = vsel %vm190, %v9031, 0.0
  %v9036 = vld [vmem:[%s51] sm:$0xff]
  %v9037 = vld [vmem:[%s51 + $0x8] sm:$0xff]
  %v9038 = vld [vmem:[%s51 + $0x10] sm:$0xff]
  %v9039 = vld [vmem:[%s51 + $0x18] sm:$0xff]
  %v9040 = vld [vmem:[%s51 + $0x20] sm:$0xff]
  %v9041 = vld [vmem:[%s51 + $0x28] sm:$0xff]
  %v9042 = vld [vmem:[%s53] sm:$0x1]
  %9043 = vrot.lane.b32.xlu0 %v8996, 16
  %v9044 = vpop.permute.xlu0 %9043
  %9045 = vrot.lane.b32.xlu0 %v8997, 16
  %v9046 = vpop.permute.xlu0 %9045
  %9047 = vrot.lane.b32.xlu0 %v8998, 16
  %v9048 = vpop.permute.xlu0 %9047
  %9049 = vrot.lane.b32.xlu0 %v8999, 16
  %v9050 = vpop.permute.xlu0 %9049
  %9059 = vrot.lane.b32.xlu0 %v9032, 32
  %v9060 = vpop.permute.xlu0 %9059
  %9061 = vrot.lane.b32.xlu0 %v9033, 32
  %v9062 = vpop.permute.xlu0 %9061
  %9063 = vrot.lane.b32.xlu0 %v9034, 32
  %v9064 = vpop.permute.xlu0 %9063
  %9065 = vrot.lane.b32.xlu0 %v9035, 32
  %v9066 = vpop.permute.xlu0 %9065
  %v9071 = vsel %vm938, %v9016, %v9044
  %v9072 = vsel %vm938, %v9017, %v9046
  %v9073 = vsel %vm938, %v9018, %v9048
  %v9074 = vsel %vm938, %v9019, %v9050
  %v9075 = vsel %vm943, %v9071, %v9060
  %v9076 = vsel %vm943, %v9072, %v9062
  %v9077 = vsel %vm943, %v9073, %v9064
  %v9078 = vsel %vm943, %v9074, %v9066
  %v9080 = vlaneseq
  %v9081 = vshrl.u32 %v9080, 7
  %v9082 = vsub.s32 0, %v9081
  %v9083 = vrot.slane %v9042, %v9082
  %v9086 = vsel %vm954, %v9075, 0
  %v9089 = vsel %vm954, %v9076, 0
  %v9092 = vsel %vm954, %v9077, 0
  %v9095 = vsel %vm954, %v9078, 0
  %9097 = vmatprep.subr.mxu0 0.0
  %v9098 = vand.u32 %v9036, 4294901760
  %9099 = vmatpush1.msra.mxu0 %v9098
  %9100 = vmatprep.subr.mxu0 0.0
  %v9101 = vand.u32 %v9037, 4294901760
  %9102 = vmatpush1.msra.mxu0 %v9101
  %9103 = vmatprep.subr.mxu0 0.0
  %v9104 = vand.u32 %v9038, 4294901760
  %9105 = vmatpush1.msra.mxu0 %v9104
  %9106 = vmatprep.subr.mxu0 0.0
  %v9107 = vand.u32 %v9039, 4294901760
  %9108 = vmatpush1.msra.mxu0 %v9107
  %9109 = vmatprep.subr.mxu0 0.0
  %v9110 = vand.u32 %v9040, 4294901760
  %9111 = vmatpush1.msra.mxu0 %v9110
  %9112 = vmatprep.subr.mxu0 0.0
  %v9113 = vand.u32 %v9041, 4294901760
  %9114 = vmatpush1.msra.mxu0 %v9113
  %9115 = vmatprep.subr.mxu0 0.0
  %9116 = vmatpush1.msra.mxu0 0.0
  %9117 = vmatprep.subr.mxu0 0.0
  %9118 = vmatpush1.msra.mxu0 0.0
  %9119 = vmatprep.subr.mxu0 0.0
  %9120 = vmatpush1.msra.mxu0 0.0
  %9121 = vmatprep.subr.mxu0 0.0
  %9122 = vmatpush1.msra.mxu0 0.0
  %9123 = vmatprep.subr.mxu0 0.0
  %9124 = vmatpush1.msra.mxu0 0.0
  %9125 = vmatprep.subr.mxu0 0.0
  %9126 = vmatpush1.msra.mxu0 0.0
  %9127 = vmatprep.subr.mxu0 0.0
  %9128 = vmatpush1.msra.mxu0 0.0
  %9129 = vmatprep.subr.mxu0 0.0
  %9130 = vmatpush1.msra.mxu0 0.0
  %9131 = vmatprep.subr.mxu0 0.0
  %9132 = vmatpush1.msra.mxu0 0.0
  %9133 = vmatprep.subr.mxu0 0.0
  %9134 = vmatpush1.msra.mxu0 0.0
  %9135 = vmatprep.subr.mxu0 0.0
  %9136 = vmatpush1.msra.mxu0 0.0
  %9137 = vmatprep.subr.mxu0 0.0
  %9138 = vmatpush1.msra.mxu0 0.0
  %9139 = vmatprep.subr.mxu0 0.0
  %9140 = vmatpush1.msra.mxu0 0.0
  %9141 = vmatprep.subr.mxu0 0.0
  %9142 = vmatpush1.msra.mxu0 0.0
  %9143 = vmatprep.subr.mxu0 0.0
  %9144 = vmatpush1.msra.mxu0 0.0
  %9145 = vmatprep.subr.mxu0 0.0
  %9146 = vmatpush1.msra.mxu0 0.0
  %9147 = vmatprep.subr.mxu0 0.0
  %9148 = vmatpush1.msra.mxu0 0.0
  %9149 = vmatprep.subr.mxu0 0.0
  %9150 = vmatpush1.msra.mxu0 0.0
  %9151 = vmatprep.subr.mxu0 0.0
  %9152 = vmatpush1.msra.mxu0 0.0
  %9153 = vmatprep.subr.mxu0 0.0
  %9154 = vmatpush1.msra.mxu0 0.0
  %9155 = vmatprep.subr.mxu0 0.0
  %9156 = vmatpush1.msra.mxu0 0.0
  %9157 = vmatprep.subr.mxu0 0.0
  %9158 = vmatpush1.msra.mxu0 0.0
  %9159 = vmatprep.subr.mxu0 0.0
  %9160 = vmatpush1.msra.mxu0 0.0
  %9161 = vmatprep.subr.mxu0 0.0
  %9162 = vmatpush1.msra.mxu0 0.0
  %9163 = vmatprep.subr.mxu0 0.0
  %9164 = vmatpush1.msra.mxu0 0.0
  %9165 = vmatprep.subr.mxu0 0.0
  %9166 = vmatpush1.msra.mxu0 0.0
  %9167 = vmatprep.mubr.f32.mxu0 0.0
  %v9168 = vand.u32 %v9086, 4294901760
  %v9169 = vsub.f32 %v9086, %v9168
  %v9170 = vand.u32 %v9169, 4294901760
  %v9171 = vsub.f32 %v9169, %v9170
  %v9172 = vand.u32 %v9171, 4294901760
  %9173 = vmatmul.mubr.f32.gmra.mrb[0].mxu0 %v9172
  %v9174 = vpop.f32.mrb[0].mxu0
  %v9175 = vadd.f32 %v9083, %v9174
  %v9176 = vpop.f32.mrb[0].mxu0
  %9177 = vmatprep.mubr.f32.mxu0 0.0
  %v9178 = vand.u32 %v9089, 4294901760
  %v9179 = vsub.f32 %v9089, %v9178
  %v9180 = vand.u32 %v9179, 4294901760
  %v9181 = vsub.f32 %v9179, %v9180
  %v9182 = vand.u32 %v9181, 4294901760
  %9183 = vmatmul.mubr.f32.gmra.mrb[0].mxu0 %v9182
  %v9184 = vpop.f32.mrb[0].mxu0
  %v9185 = vadd.f32 %v9083, %v9184
  %v9186 = vpop.f32.mrb[0].mxu0
  %9187 = vmatprep.mubr.f32.mxu0 0.0
  %v9188 = vand.u32 %v9092, 4294901760
  %v9189 = vsub.f32 %v9092, %v9188
  %v9190 = vand.u32 %v9189, 4294901760
  %v9191 = vsub.f32 %v9189, %v9190
  %v9192 = vand.u32 %v9191, 4294901760
  %9193 = vmatmul.mubr.f32.gmra.mrb[0].mxu0 %v9192
  %v9194 = vpop.f32.mrb[0].mxu0
  %v9195 = vadd.f32 %v9083, %v9194
  %v9196 = vpop.f32.mrb[0].mxu0
  %9197 = vmatprep.mubr.f32.mxu0 0.0
  %v9198 = vand.u32 %v9095, 4294901760
  %v9199 = vsub.f32 %v9095, %v9198
  %v9200 = vand.u32 %v9199, 4294901760
  %v9201 = vsub.f32 %v9199, %v9200
  %v9202 = vand.u32 %v9201, 4294901760
  %9203 = vmatmul.mubr.f32.gmra.mrb[0].mxu0 %v9202
  %v9204 = vpop.f32.mrb[0].mxu0
  %v9205 = vadd.f32 %v9083, %v9204
  %v9206 = vpop.f32.mrb[0].mxu0
  %9207 = vdwg.mxu0
  %9208 = vmatprep.subr.mxu0 0.0
  %v9209 = vand.u32 %v9036, 4294901760
  %v9210 = vsub.f32 %v9036, %v9209
  %v9211 = vand.u32 %v9210, 4294901760
  %v9212 = vsub.f32 %v9210, %v9211
  %v9213 = vand.u32 %v9212, 4294901760
  %9214 = vmatpush1.msra.mxu0 %v9213
  %9215 = vmatprep.subr.mxu0 0.0
  %v9216 = vand.u32 %v9037, 4294901760
  %v9217 = vsub.f32 %v9037, %v9216
  %v9218 = vand.u32 %v9217, 4294901760
  %v9219 = vsub.f32 %v9217, %v9218
  %v9220 = vand.u32 %v9219, 4294901760
  %9221 = vmatpush1.msra.mxu0 %v9220
  %9222 = vmatprep.subr.mxu0 0.0
  %v9223 = vand.u32 %v9038, 4294901760
  %v9224 = vsub.f32 %v9038, %v9223
  %v9225 = vand.u32 %v9224, 4294901760
  %v9226 = vsub.f32 %v9224, %v9225
  %v9227 = vand.u32 %v9226, 4294901760
  %9228 = vmatpush1.msra.mxu0 %v9227
  %9229 = vmatprep.subr.mxu0 0.0
  %v9230 = vand.u32 %v9039, 4294901760
  %v9231 = vsub.f32 %v9039, %v9230
  %v9232 = vand.u32 %v9231, 4294901760
  %v9233 = vsub.f32 %v9231, %v9232
  %v9234 = vand.u32 %v9233, 4294901760
  %9235 = vmatpush1.msra.mxu0 %v9234
  %9236 = vmatprep.subr.mxu0 0.0
  %v9237 = vand.u32 %v9040, 4294901760
  %v9238 = vsub.f32 %v9040, %v9237
  %v9239 = vand.u32 %v9238, 4294901760
  %v9240 = vsub.f32 %v9238, %v9239
  %v9241 = vand.u32 %v9240, 4294901760
  %9242 = vmatpush1.msra.mxu0 %v9241
  %9243 = vmatprep.subr.mxu0 0.0
  %v9244 = vand.u32 %v9041, 4294901760
  %v9245 = vsub.f32 %v9041, %v9244
  %v9246 = vand.u32 %v9245, 4294901760
  %v9247 = vsub.f32 %v9245, %v9246
  %v9248 = vand.u32 %v9247, 4294901760
  %9249 = vmatpush1.msra.mxu0 %v9248
  %9250 = vmatprep.subr.mxu0 0.0
  %9251 = vmatpush1.msra.mxu0 0.0
  %9252 = vmatprep.subr.mxu0 0.0
  %9253 = vmatpush1.msra.mxu0 0.0
  %9254 = vmatprep.subr.mxu0 0.0
  %9255 = vmatpush1.msra.mxu0 0.0
  %9256 = vmatprep.subr.mxu0 0.0
  %9257 = vmatpush1.msra.mxu0 0.0
  %9258 = vmatprep.subr.mxu0 0.0
  %9259 = vmatpush1.msra.mxu0 0.0
  %9260 = vmatprep.subr.mxu0 0.0
  %9261 = vmatpush1.msra.mxu0 0.0
  %9262 = vmatprep.subr.mxu0 0.0
  %9263 = vmatpush1.msra.mxu0 0.0
  %9264 = vmatprep.subr.mxu0 0.0
  %9265 = vmatpush1.msra.mxu0 0.0
  %9266 = vmatprep.subr.mxu0 0.0
  %9267 = vmatpush1.msra.mxu0 0.0
  %9268 = vmatprep.subr.mxu0 0.0
  %9269 = vmatpush1.msra.mxu0 0.0
  %9270 = vmatprep.subr.mxu0 0.0
  %9271 = vmatpush1.msra.mxu0 0.0
  %9272 = vmatprep.subr.mxu0 0.0
  %9273 = vmatpush1.msra.mxu0 0.0
  %9274 = vmatprep.subr.mxu0 0.0
  %9275 = vmatpush1.msra.mxu0 0.0
  %9276 = vmatprep.subr.mxu0 0.0
  %9277 = vmatpush1.msra.mxu0 0.0
  %9278 = vmatprep.subr.mxu0 0.0
  %9279 = vmatpush1.msra.mxu0 0.0
  %9280 = vmatprep.subr.mxu0 0.0
  %9281 = vmatpush1.msra.mxu0 0.0
  %9282 = vmatprep.subr.mxu0 0.0
  %9283 = vmatpush1.msra.mxu0 0.0
  %9284 = vmatprep.subr.mxu0 0.0
  %9285 = vmatpush1.msra.mxu0 0.0
  %9286 = vmatprep.subr.mxu0 0.0
  %9287 = vmatpush1.msra.mxu0 0.0
  %9288 = vmatprep.subr.mxu0 0.0
  %9289 = vmatpush1.msra.mxu0 0.0
  %9290 = vmatprep.subr.mxu0 0.0
  %9291 = vmatpush1.msra.mxu0 0.0
  %9292 = vmatprep.subr.mxu0 0.0
  %9293 = vmatpush1.msra.mxu0 0.0
  %9294 = vmatprep.subr.mxu0 0.0
  %9295 = vmatpush1.msra.mxu0 0.0
  %9296 = vmatprep.subr.mxu0 0.0
  %9297 = vmatpush1.msra.mxu0 0.0
  %9298 = vmatprep.subr.mxu0 0.0
  %9299 = vmatpush1.msra.mxu0 0.0
  %9300 = vmatprep.subr.mxu0 0.0
  %9301 = vmatpush1.msra.mxu0 0.0
  %9302 = vmatprep.mubr.f32.mxu0 0.0
  %v9303 = vand.u32 %v9086, 4294901760
  %9304 = vmatmul.mubr.f32.gmra.mrb[0].mxu0 %v9303
  %v9305 = vpop.f32.mrb[0].mxu0
  %v9306 = vadd.f32 %v9175, %v9305
  %v9307 = vpop.f32.mrb[0].mxu0
  %9308 = vmatprep.mubr.f32.mxu0 0.0
  %v9309 = vand.u32 %v9089, 4294901760
  %9310 = vmatmul.mubr.f32.gmra.mrb[0].mxu0 %v9309
  %v9311 = vpop.f32.mrb[0].mxu0
  %v9312 = vadd.f32 %v9185, %v9311
  %v9313 = vpop.f32.mrb[0].mxu0
  %9314 = vmatprep.mubr.f32.mxu0 0.0
  %v9315 = vand.u32 %v9092, 4294901760
  %9316 = vmatmul.mubr.f32.gmra.mrb[0].mxu0 %v9315
  %v9317 = vpop.f32.mrb[0].mxu0
  %v9318 = vadd.f32 %v9195, %v9317
  %v9319 = vpop.f32.mrb[0].mxu0
  %9320 = vmatprep.mubr.f32.mxu0 0.0
  %v9321 = vand.u32 %v9095, 4294901760
  %9322 = vmatmul.mubr.f32.gmra.mrb[0].mxu0 %v9321
  %v9323 = vpop.f32.mrb[0].mxu0
  %v9324 = vadd.f32 %v9205, %v9323
  %v9325 = vpop.f32.mrb[0].mxu0
  %9326 = vdwg.mxu0
  %9327 = vmatprep.subr.mxu0 0.0
  %v9328 = vand.u32 %v9036, 4294901760
  %v9329 = vsub.f32 %v9036, %v9328
  %9330 = vmatpush1.msra.mxu0 %v9329
  %9331 = vmatprep.subr.mxu0 0.0
  %v9332 = vand.u32 %v9037, 4294901760
  %v9333 = vsub.f32 %v9037, %v9332
  %9334 = vmatpush1.msra.mxu0 %v9333
  %9335 = vmatprep.subr.mxu0 0.0
  %v9336 = vand.u32 %v9038, 4294901760
  %v9337 = vsub.f32 %v9038, %v9336
  %9338 = vmatpush1.msra.mxu0 %v9337
  %9339 = vmatprep.subr.mxu0 0.0
  %v9340 = vand.u32 %v9039, 4294901760
  %v9341 = vsub.f32 %v9039, %v9340
  %9342 = vmatpush1.msra.mxu0 %v9341
  %9343 = vmatprep.subr.mxu0 0.0
  %v9344 = vand.u32 %v9040, 4294901760
  %v9345 = vsub.f32 %v9040, %v9344
  %9346 = vmatpush1.msra.mxu0 %v9345
  %9347 = vmatprep.subr.mxu0 0.0
  %v9348 = vand.u32 %v9041, 4294901760
  %v9349 = vsub.f32 %v9041, %v9348
  %9350 = vmatpush1.msra.mxu0 %v9349
  %9351 = vmatprep.subr.mxu0 0.0
  %9352 = vmatpush1.msra.mxu0 0.0
  %9353 = vmatprep.subr.mxu0 0.0
  %9354 = vmatpush1.msra.mxu0 0.0
  %9355 = vmatprep.subr.mxu0 0.0
  %9356 = vmatpush1.msra.mxu0 0.0
  %9357 = vmatprep.subr.mxu0 0.0
  %9358 = vmatpush1.msra.mxu0 0.0
  %9359 = vmatprep.subr.mxu0 0.0
  %9360 = vmatpush1.msra.mxu0 0.0
  %9361 = vmatprep.subr.mxu0 0.0
  %9362 = vmatpush1.msra.mxu0 0.0
  %9363 = vmatprep.subr.mxu0 0.0
  %9364 = vmatpush1.msra.mxu0 0.0
  %9365 = vmatprep.subr.mxu0 0.0
  %9366 = vmatpush1.msra.mxu0 0.0
  %9367 = vmatprep.subr.mxu0 0.0
  %9368 = vmatpush1.msra.mxu0 0.0
  %9369 = vmatprep.subr.mxu0 0.0
  %9370 = vmatpush1.msra.mxu0 0.0
  %9371 = vmatprep.subr.mxu0 0.0
  %9372 = vmatpush1.msra.mxu0 0.0
  %9373 = vmatprep.subr.mxu0 0.0
  %9374 = vmatpush1.msra.mxu0 0.0
  %9375 = vmatprep.subr.mxu0 0.0
  %9376 = vmatpush1.msra.mxu0 0.0
  %9377 = vmatprep.subr.mxu0 0.0
  %9378 = vmatpush1.msra.mxu0 0.0
  %9379 = vmatprep.subr.mxu0 0.0
  %9380 = vmatpush1.msra.mxu0 0.0
  %9381 = vmatprep.subr.mxu0 0.0
  %9382 = vmatpush1.msra.mxu0 0.0
  %9383 = vmatprep.subr.mxu0 0.0
  %9384 = vmatpush1.msra.mxu0 0.0
  %9385 = vmatprep.subr.mxu0 0.0
  %9386 = vmatpush1.msra.mxu0 0.0
  %9387 = vmatprep.subr.mxu0 0.0
  %9388 = vmatpush1.msra.mxu0 0.0
  %9389 = vmatprep.subr.mxu0 0.0
  %9390 = vmatpush1.msra.mxu0 0.0
  %9391 = vmatprep.subr.mxu0 0.0
  %9392 = vmatpush1.msra.mxu0 0.0
  %9393 = vmatprep.subr.mxu0 0.0
  %9394 = vmatpush1.msra.mxu0 0.0
  %9395 = vmatprep.subr.mxu0 0.0
  %9396 = vmatpush1.msra.mxu0 0.0
  %9397 = vmatprep.subr.mxu0 0.0
  %9398 = vmatpush1.msra.mxu0 0.0
  %9399 = vmatprep.subr.mxu0 0.0
  %9400 = vmatpush1.msra.mxu0 0.0
  %9401 = vmatprep.subr.mxu0 0.0
  %9402 = vmatpush1.msra.mxu0 0.0
  %9403 = vmatprep.mubr.f32.mxu0 0.0
  %v9404 = vand.u32 %v9086, 4294901760
  %v9405 = vsub.f32 %v9086, %v9404
  %9406 = vmatmul.mubr.f32.gmra.mrb[0].mxu0 %v9405
  %v9407 = vpop.f32.mrb[0].mxu0
  %v9408 = vadd.f32 %v9306, %v9407
  %v9409 = vpop.f32.mrb[0].mxu0
  %9410 = vmatprep.mubr.f32.mxu0 0.0
  %v9411 = vand.u32 %v9089, 4294901760
  %v9412 = vsub.f32 %v9089, %v9411
  %9413 = vmatmul.mubr.f32.gmra.mrb[0].mxu0 %v9412
  %v9414 = vpop.f32.mrb[0].mxu0
  %v9415 = vadd.f32 %v9312, %v9414
  %v9416 = vpop.f32.mrb[0].mxu0
  %9417 = vmatprep.mubr.f32.mxu0 0.0
  %v9418 = vand.u32 %v9092, 4294901760
  %v9419 = vsub.f32 %v9092, %v9418
  %9420 = vmatmul.mubr.f32.gmra.mrb[0].mxu0 %v9419
  %v9421 = vpop.f32.mrb[0].mxu0
  %v9422 = vadd.f32 %v9318, %v9421
  %v9423 = vpop.f32.mrb[0].mxu0
  %9424 = vmatprep.mubr.f32.mxu0 0.0
  %v9425 = vand.u32 %v9095, 4294901760
  %v9426 = vsub.f32 %v9095, %v9425
  %9427 = vmatmul.mubr.f32.gmra.mrb[0].mxu0 %v9426
  %v9428 = vpop.f32.mrb[0].mxu0
  %v9429 = vadd.f32 %v9324, %v9428
  %v9430 = vpop.f32.mrb[0].mxu0
  %9431 = vdwg.mxu0
  %9432 = vmatprep.subr.mxu0 0.0
  %v9433 = vand.u32 %v9036, 4294901760
  %9434 = vmatpush1.msra.mxu0 %v9433
  %9435 = vmatprep.subr.mxu0 0.0
  %v9436 = vand.u32 %v9037, 4294901760
  %9437 = vmatpush1.msra.mxu0 %v9436
  %9438 = vmatprep.subr.mxu0 0.0
  %v9439 = vand.u32 %v9038, 4294901760
  %9440 = vmatpush1.msra.mxu0 %v9439
  %9441 = vmatprep.subr.mxu0 0.0
  %v9442 = vand.u32 %v9039, 4294901760
  %9443 = vmatpush1.msra.mxu0 %v9442
  %9444 = vmatprep.subr.mxu0 0.0
  %v9445 = vand.u32 %v9040, 4294901760
  %9446 = vmatpush1.msra.mxu0 %v9445
  %9447 = vmatprep.subr.mxu0 0.0
  %v9448 = vand.u32 %v9041, 4294901760
  %9449 = vmatpush1.msra.mxu0 %v9448
  %9450 = vmatprep.subr.mxu0 0.0
  %9451 = vmatpush1.msra.mxu0 0.0
  %9452 = vmatprep.subr.mxu0 0.0
  %9453 = vmatpush1.msra.mxu0 0.0
  %9454 = vmatprep.subr.mxu0 0.0
  %9455 = vmatpush1.msra.mxu0 0.0
  %9456 = vmatprep.subr.mxu0 0.0
  %9457 = vmatpush1.msra.mxu0 0.0
  %9458 = vmatprep.subr.mxu0 0.0
  %9459 = vmatpush1.msra.mxu0 0.0
  %9460 = vmatprep.subr.mxu0 0.0
  %9461 = vmatpush1.msra.mxu0 0.0
  %9462 = vmatprep.subr.mxu0 0.0
  %9463 = vmatpush1.msra.mxu0 0.0
  %9464 = vmatprep.subr.mxu0 0.0
  %9465 = vmatpush1.msra.mxu0 0.0
  %9466 = vmatprep.subr.mxu0 0.0
  %9467 = vmatpush1.msra.mxu0 0.0
  %9468 = vmatprep.subr.mxu0 0.0
  %9469 = vmatpush1.msra.mxu0 0.0
  %9470 = vmatprep.subr.mxu0 0.0
  %9471 = vmatpush1.msra.mxu0 0.0
  %9472 = vmatprep.subr.mxu0 0.0
  %9473 = vmatpush1.msra.mxu0 0.0
  %9474 = vmatprep.subr.mxu0 0.0
  %9475 = vmatpush1.msra.mxu0 0.0
  %9476 = vmatprep.subr.mxu0 0.0
  %9477 = vmatpush1.msra.mxu0 0.0
  %9478 = vmatprep.subr.mxu0 0.0
  %9479 = vmatpush1.msra.mxu0 0.0
  %9480 = vmatprep.subr.mxu0 0.0
  %9481 = vmatpush1.msra.mxu0 0.0
  %9482 = vmatprep.subr.mxu0 0.0
  %9483 = vmatpush1.msra.mxu0 0.0
  %9484 = vmatprep.subr.mxu0 0.0
  %9485 = vmatpush1.msra.mxu0 0.0
  %9486 = vmatprep.subr.mxu0 0.0
  %9487 = vmatpush1.msra.mxu0 0.0
  %9488 = vmatprep.subr.mxu0 0.0
  %9489 = vmatpush1.msra.mxu0 0.0
  %9490 = vmatprep.subr.mxu0 0.0
  %9491 = vmatpush1.msra.mxu0 0.0
  %9492 = vmatprep.subr.mxu0 0.0
  %9493 = vmatpush1.msra.mxu0 0.0
  %9494 = vmatprep.subr.mxu0 0.0
  %9495 = vmatpush1.msra.mxu0 0.0
  %9496 = vmatprep.subr.mxu0 0.0
  %9497 = vmatpush1.msra.mxu0 0.0
  %9498 = vmatprep.subr.mxu0 0.0
  %9499 = vmatpush1.msra.mxu0 0.0
  %9500 = vmatprep.subr.mxu0 0.0
  %9501 = vmatpush1.msra.mxu0 0.0
  %9502 = vmatprep.mubr.f32.mxu0 0.0
  %v9503 = vand.u32 %v9086, 4294901760
  %v9504 = vsub.f32 %v9086, %v9503
  %v9505 = vand.u32 %v9504, 4294901760
  %9506 = vmatmul.mubr.f32.gmra.mrb[0].mxu0 %v9505
  %v9507 = vpop.f32.mrb[0].mxu0
  %v9508 = vadd.f32 %v9408, %v9507
  %v9509 = vpop.f32.mrb[0].mxu0
  %9510 = vmatprep.mubr.f32.mxu0 0.0
  %v9511 = vand.u32 %v9089, 4294901760
  %v9512 = vsub.f32 %v9089, %v9511
  %v9513 = vand.u32 %v9512, 4294901760
  %9514 = vmatmul.mubr.f32.gmra.mrb[0].mxu0 %v9513
  %v9515 = vpop.f32.mrb[0].mxu0
  %v9516 = vadd.f32 %v9415, %v9515
  %v9517 = vpop.f32.mrb[0].mxu0
  %9518 = vmatprep.mubr.f32.mxu0 0.0
  %v9519 = vand.u32 %v9092, 4294901760
  %v9520 = vsub.f32 %v9092, %v9519
  %v9521 = vand.u32 %v9520, 4294901760
  %9522 = vmatmul.mubr.f32.gmra.mrb[0].mxu0 %v9521
  %v9523 = vpop.f32.mrb[0].mxu0
  %v9524 = vadd.f32 %v9422, %v9523
  %v9525 = vpop.f32.mrb[0].mxu0
  %9526 = vmatprep.mubr.f32.mxu0 0.0
  %v9527 = vand.u32 %v9095, 4294901760
  %v9528 = vsub.f32 %v9095, %v9527
  %v9529 = vand.u32 %v9528, 4294901760
  %9530 = vmatmul.mubr.f32.gmra.mrb[0].mxu0 %v9529
  %v9531 = vpop.f32.mrb[0].mxu0
  %v9532 = vadd.f32 %v9429, %v9531
  %v9533 = vpop.f32.mrb[0].mxu0
  %9534 = vdwg.mxu0
  %9535 = vmatprep.subr.mxu0 0.0
  %v9536 = vand.u32 %v9036, 4294901760
  %v9537 = vsub.f32 %v9036, %v9536
  %v9538 = vand.u32 %v9537, 4294901760
  %9539 = vmatpush1.msra.mxu0 %v9538
  %9540 = vmatprep.subr.mxu0 0.0
  %v9541 = vand.u32 %v9037, 4294901760
  %v9542 = vsub.f32 %v9037, %v9541
  %v9543 = vand.u32 %v9542, 4294901760
  %9544 = vmatpush1.msra.mxu0 %v9543
  %9545 = vmatprep.subr.mxu0 0.0
  %v9546 = vand.u32 %v9038, 4294901760
  %v9547 = vsub.f32 %v9038, %v9546
  %v9548 = vand.u32 %v9547, 4294901760
  %9549 = vmatpush1.msra.mxu0 %v9548
  %9550 = vmatprep.subr.mxu0 0.0
  %v9551 = vand.u32 %v9039, 4294901760
  %v9552 = vsub.f32 %v9039, %v9551
  %v9553 = vand.u32 %v9552, 4294901760
  %9554 = vmatpush1.msra.mxu0 %v9553
  %9555 = vmatprep.subr.mxu0 0.0
  %v9556 = vand.u32 %v9040, 4294901760
  %v9557 = vsub.f32 %v9040, %v9556
  %v9558 = vand.u32 %v9557, 4294901760
  %9559 = vmatpush1.msra.mxu0 %v9558
  %9560 = vmatprep.subr.mxu0 0.0
  %v9561 = vand.u32 %v9041, 4294901760
  %v9562 = vsub.f32 %v9041, %v9561
  %v9563 = vand.u32 %v9562, 4294901760
  %9564 = vmatpush1.msra.mxu0 %v9563
  %9565 = vmatprep.subr.mxu0 0.0
  %9566 = vmatpush1.msra.mxu0 0.0
  %9567 = vmatprep.subr.mxu0 0.0
  %9568 = vmatpush1.msra.mxu0 0.0
  %9569 = vmatprep.subr.mxu0 0.0
  %9570 = vmatpush1.msra.mxu0 0.0
  %9571 = vmatprep.subr.mxu0 0.0
  %9572 = vmatpush1.msra.mxu0 0.0
  %9573 = vmatprep.subr.mxu0 0.0
  %9574 = vmatpush1.msra.mxu0 0.0
  %9575 = vmatprep.subr.mxu0 0.0
  %9576 = vmatpush1.msra.mxu0 0.0
  %9577 = vmatprep.subr.mxu0 0.0
  %9578 = vmatpush1.msra.mxu0 0.0
  %9579 = vmatprep.subr.mxu0 0.0
  %9580 = vmatpush1.msra.mxu0 0.0
  %9581 = vmatprep.subr.mxu0 0.0
  %9582 = vmatpush1.msra.mxu0 0.0
  %9583 = vmatprep.subr.mxu0 0.0
  %9584 = vmatpush1.msra.mxu0 0.0
  %9585 = vmatprep.subr.mxu0 0.0
  %9586 = vmatpush1.msra.mxu0 0.0
  %9587 = vmatprep.subr.mxu0 0.0
  %9588 = vmatpush1.msra.mxu0 0.0
  %9589 = vmatprep.subr.mxu0 0.0
  %9590 = vmatpush1.msra.mxu0 0.0
  %9591 = vmatprep.subr.mxu0 0.0
  %9592 = vmatpush1.msra.mxu0 0.0
  %9593 = vmatprep.subr.mxu0 0.0
  %9594 = vmatpush1.msra.mxu0 0.0
  %9595 = vmatprep.subr.mxu0 0.0
  %9596 = vmatpush1.msra.mxu0 0.0
  %9597 = vmatprep.subr.mxu0 0.0
  %9598 = vmatpush1.msra.mxu0 0.0
  %9599 = vmatprep.subr.mxu0 0.0
  %9600 = vmatpush1.msra.mxu0 0.0
  %9601 = vmatprep.subr.mxu0 0.0
  %9602 = vmatpush1.msra.mxu0 0.0
  %9603 = vmatprep.subr.mxu0 0.0
  %9604 = vmatpush1.msra.mxu0 0.0
  %9605 = vmatprep.subr.mxu0 0.0
  %9606 = vmatpush1.msra.mxu0 0.0
  %9607 = vmatprep.subr.mxu0 0.0
  %9608 = vmatpush1.msra.mxu0 0.0
  %9609 = vmatprep.subr.mxu0 0.0
  %9610 = vmatpush1.msra.mxu0 0.0
  %9611 = vmatprep.subr.mxu0 0.0
  %9612 = vmatpush1.msra.mxu0 0.0
  %9613 = vmatprep.subr.mxu0 0.0
  %9614 = vmatpush1.msra.mxu0 0.0
  %9615 = vmatprep.subr.mxu0 0.0
  %9616 = vmatpush1.msra.mxu0 0.0
  %9617 = vmatprep.mubr.f32.mxu0 0.0
  %v9618 = vand.u32 %v9086, 4294901760
  %9619 = vmatmul.mubr.f32.gmra.mrb[0].mxu0 %v9618
  %v9620 = vpop.f32.mrb[0].mxu0
  %v9621 = vadd.f32 %v9508, %v9620
  %v9622 = vpop.f32.mrb[0].mxu0
  %9623 = vmatprep.mubr.f32.mxu0 0.0
  %v9624 = vand.u32 %v9089, 4294901760
  %9625 = vmatmul.mubr.f32.gmra.mrb[0].mxu0 %v9624
  %v9626 = vpop.f32.mrb[0].mxu0
  %v9627 = vadd.f32 %v9516, %v9626
  %v9628 = vpop.f32.mrb[0].mxu0
  %9629 = vmatprep.mubr.f32.mxu0 0.0
  %v9630 = vand.u32 %v9092, 4294901760
  %9631 = vmatmul.mubr.f32.gmra.mrb[0].mxu0 %v9630
  %v9632 = vpop.f32.mrb[0].mxu0
  %v9633 = vadd.f32 %v9524, %v9632
  %v9634 = vpop.f32.mrb[0].mxu0
  %9635 = vmatprep.mubr.f32.mxu0 0.0
  %v9636 = vand.u32 %v9095, 4294901760
  %9637 = vmatmul.mubr.f32.gmra.mrb[0].mxu0 %v9636
  %v9638 = vpop.f32.mrb[0].mxu0
  %v9639 = vadd.f32 %v9532, %v9638
  %v9640 = vpop.f32.mrb[0].mxu0
  %9641 = vdwg.mxu0
  %9642 = vmatprep.subr.mxu0 0.0
  %v9643 = vand.u32 %v9036, 4294901760
  %9644 = vmatpush1.msra.mxu0 %v9643
  %9645 = vmatprep.subr.mxu0 0.0
  %v9646 = vand.u32 %v9037, 4294901760
  %9647 = vmatpush1.msra.mxu0 %v9646
  %9648 = vmatprep.subr.mxu0 0.0
  %v9649 = vand.u32 %v9038, 4294901760
  %9650 = vmatpush1.msra.mxu0 %v9649
  %9651 = vmatprep.subr.mxu0 0.0
  %v9652 = vand.u32 %v9039, 4294901760
  %9653 = vmatpush1.msra.mxu0 %v9652
  %9654 = vmatprep.subr.mxu0 0.0
  %v9655 = vand.u32 %v9040, 4294901760
  %9656 = vmatpush1.msra.mxu0 %v9655
  %9657 = vmatprep.subr.mxu0 0.0
  %v9658 = vand.u32 %v9041, 4294901760
  %9659 = vmatpush1.msra.mxu0 %v9658
  %9660 = vmatprep.subr.mxu0 0.0
  %9661 = vmatpush1.msra.mxu0 0.0
  %9662 = vmatprep.subr.mxu0 0.0
  %9663 = vmatpush1.msra.mxu0 0.0
  %9664 = vmatprep.subr.mxu0 0.0
  %9665 = vmatpush1.msra.mxu0 0.0
  %9666 = vmatprep.subr.mxu0 0.0
  %9667 = vmatpush1.msra.mxu0 0.0
  %9668 = vmatprep.subr.mxu0 0.0
  %9669 = vmatpush1.msra.mxu0 0.0
  %9670 = vmatprep.subr.mxu0 0.0
  %9671 = vmatpush1.msra.mxu0 0.0
  %9672 = vmatprep.subr.mxu0 0.0
  %9673 = vmatpush1.msra.mxu0 0.0
  %9674 = vmatprep.subr.mxu0 0.0
  %9675 = vmatpush1.msra.mxu0 0.0
  %9676 = vmatprep.subr.mxu0 0.0
  %9677 = vmatpush1.msra.mxu0 0.0
  %9678 = vmatprep.subr.mxu0 0.0
  %9679 = vmatpush1.msra.mxu0 0.0
  %9680 = vmatprep.subr.mxu0 0.0
  %9681 = vmatpush1.msra.mxu0 0.0
  %9682 = vmatprep.subr.mxu0 0.0
  %9683 = vmatpush1.msra.mxu0 0.0
  %9684 = vmatprep.subr.mxu0 0.0
  %9685 = vmatpush1.msra.mxu0 0.0
  %9686 = vmatprep.subr.mxu0 0.0
  %9687 = vmatpush1.msra.mxu0 0.0
  %9688 = vmatprep.subr.mxu0 0.0
  %9689 = vmatpush1.msra.mxu0 0.0
  %9690 = vmatprep.subr.mxu0 0.0
  %9691 = vmatpush1.msra.mxu0 0.0
  %9692 = vmatprep.subr.mxu0 0.0
  %9693 = vmatpush1.msra.mxu0 0.0
  %9694 = vmatprep.subr.mxu0 0.0
  %9695 = vmatpush1.msra.mxu0 0.0
  %9696 = vmatprep.subr.mxu0 0.0
  %9697 = vmatpush1.msra.mxu0 0.0
  %9698 = vmatprep.subr.mxu0 0.0
  %9699 = vmatpush1.msra.mxu0 0.0
  %9700 = vmatprep.subr.mxu0 0.0
  %9701 = vmatpush1.msra.mxu0 0.0
  %9702 = vmatprep.subr.mxu0 0.0
  %9703 = vmatpush1.msra.mxu0 0.0
  %9704 = vmatprep.subr.mxu0 0.0
  %9705 = vmatpush1.msra.mxu0 0.0
  %9706 = vmatprep.subr.mxu0 0.0
  %9707 = vmatpush1.msra.mxu0 0.0
  %9708 = vmatprep.subr.mxu0 0.0
  %9709 = vmatpush1.msra.mxu0 0.0
  %9710 = vmatprep.subr.mxu0 0.0
  %9711 = vmatpush1.msra.mxu0 0.0
  %9712 = vmatprep.mubr.f32.mxu0 0.0
  %v9713 = vand.u32 %v9086, 4294901760
  %9714 = vmatmul.mubr.f32.gmra.mrb[0].mxu0 %v9713
  %v9715 = vpop.f32.mrb[0].mxu0
  %v9716 = vadd.f32 %v9621, %v9715
  %v9717 = vpop.f32.mrb[0].mxu0
  %9718 = vmatprep.mubr.f32.mxu0 0.0
  %v9719 = vand.u32 %v9089, 4294901760
  %9720 = vmatmul.mubr.f32.gmra.mrb[0].mxu0 %v9719
  %v9721 = vpop.f32.mrb[0].mxu0
  %v9722 = vadd.f32 %v9627, %v9721
  %v9723 = vpop.f32.mrb[0].mxu0
  %9724 = vmatprep.mubr.f32.mxu0 0.0
  %v9725 = vand.u32 %v9092, 4294901760
  %9726 = vmatmul.mubr.f32.gmra.mrb[0].mxu0 %v9725
  %v9727 = vpop.f32.mrb[0].mxu0
  %v9728 = vadd.f32 %v9633, %v9727
  %v9729 = vpop.f32.mrb[0].mxu0
  %9730 = vmatprep.mubr.f32.mxu0 0.0
  %v9731 = vand.u32 %v9095, 4294901760
  %9732 = vmatmul.mubr.f32.gmra.mrb[0].mxu0 %v9731
  %v9733 = vpop.f32.mrb[0].mxu0
  %v9734 = vadd.f32 %v9639, %v9733
  %v9735 = vpop.f32.mrb[0].mxu0
  %9736 = vdwg.mxu0
  %v9741 = vrot.slane %v9716, 7
  %v9742 = vrot.slane %v9722, 7
  %v9743 = vsel %vm195, %v9741, %v9742
  %v9744 = vrot.slane %v9728, 7
  %v9745 = vsel %vm195, %v9742, %v9744
  %v9746 = vrot.slane %v9734, 7
  %v9747 = vsel %vm195, %v9744, %v9746
  %v9752 = vsel %vm195, 0.0, %v9741
  %v9753 = vsel %vm183, %v9752, 0.0
  %v9754 = vsel %vm184, %v9743, 0.0
  %v9755 = vsel %vm185, %v9745, 0.0
  %v9756 = vsel %vm186, %v9747, 0.0
  %v9757 = vrot.slane %v9716, 1
  %v9758 = vrot.slane %v9722, 1
  %v9759 = vsel %vm212, %v9757, %v9758
  %v9760 = vrot.slane %v9728, 1
  %v9761 = vsel %vm212, %v9758, %v9760
  %v9762 = vrot.slane %v9734, 1
  %v9763 = vsel %vm212, %v9760, %v9762
  %v9768 = vsel %vm212, %v9762, 0.0
  %v9769 = vsel %vm187, %v9759, 0.0
  %v9770 = vsel %vm188, %v9761, 0.0
  %v9771 = vsel %vm189, %v9763, 0.0
  %v9772 = vsel %vm190, %v9768, 0.0
  %v9773 = vld [vmem:[%s55] sm:$0xff]
  %v9774 = vld [vmem:[%s55 + $0x8] sm:$0xff]
  %v9775 = vld [vmem:[%s55 + $0x10] sm:$0xff]
  %v9776 = vld [vmem:[%s55 + $0x18] sm:$0xff]
  %v9777 = vld [vmem:[%s55 + $0x20] sm:$0xff]
  %v9778 = vld [vmem:[%s55 + $0x28] sm:$0xff]
  %v9779 = vld [vmem:[#allocation3] sm:$0x1]
  %9780 = vrot.lane.b32.xlu0 %v9716, 16
  %v9781 = vpop.permute.xlu0 %9780
  %9782 = vrot.lane.b32.xlu0 %v9722, 16
  %v9783 = vpop.permute.xlu0 %9782
  %9784 = vrot.lane.b32.xlu0 %v9728, 16
  %v9785 = vpop.permute.xlu0 %9784
  %9786 = vrot.lane.b32.xlu0 %v9734, 16
  %v9787 = vpop.permute.xlu0 %9786
  %9796 = vrot.lane.b32.xlu0 %v9769, 32
  %v9797 = vpop.permute.xlu0 %9796
  %9798 = vrot.lane.b32.xlu0 %v9770, 32
  %v9799 = vpop.permute.xlu0 %9798
  %9800 = vrot.lane.b32.xlu0 %v9771, 32
  %v9801 = vpop.permute.xlu0 %9800
  %9802 = vrot.lane.b32.xlu0 %v9772, 32
  %v9803 = vpop.permute.xlu0 %9802
  %v9808 = vsel %vm938, %v9753, %v9781
  %v9809 = vsel %vm938, %v9754, %v9783
  %v9810 = vsel %vm938, %v9755, %v9785
  %v9811 = vsel %vm938, %v9756, %v9787
  %v9812 = vsel %vm943, %v9808, %v9797
  %v9813 = vsel %vm943, %v9809, %v9799
  %v9814 = vsel %vm943, %v9810, %v9801
  %v9815 = vsel %vm943, %v9811, %v9803
  %v9817 = vlaneseq
  %v9818 = vshrl.u32 %v9817, 7
  %v9819 = vsub.s32 0, %v9818
  %v9820 = vrot.slane %v9779, %v9819
  %v9823 = vsel %vm954, %v9812, 0
  %v9826 = vsel %vm954, %v9813, 0
  %v9829 = vsel %vm954, %v9814, 0
  %v9832 = vsel %vm954, %v9815, 0
  %9834 = vmatprep.subr.mxu0 0.0
  %v9835 = vand.u32 %v9773, 4294901760
  %9836 = vmatpush1.msra.mxu0 %v9835
  %9837 = vmatprep.subr.mxu0 0.0
  %v9838 = vand.u32 %v9774, 4294901760
  %9839 = vmatpush1.msra.mxu0 %v9838
  %9840 = vmatprep.subr.mxu0 0.0
  %v9841 = vand.u32 %v9775, 4294901760
  %9842 = vmatpush1.msra.mxu0 %v9841
  %9843 = vmatprep.subr.mxu0 0.0
  %v9844 = vand.u32 %v9776, 4294901760
  %9845 = vmatpush1.msra.mxu0 %v9844
  %9846 = vmatprep.subr.mxu0 0.0
  %v9847 = vand.u32 %v9777, 4294901760
  %9848 = vmatpush1.msra.mxu0 %v9847
  %9849 = vmatprep.subr.mxu0 0.0
  %v9850 = vand.u32 %v9778, 4294901760
  %9851 = vmatpush1.msra.mxu0 %v9850
  %9852 = vmatprep.subr.mxu0 0.0
  %9853 = vmatpush1.msra.mxu0 0.0
  %9854 = vmatprep.subr.mxu0 0.0
  %9855 = vmatpush1.msra.mxu0 0.0
  %9856 = vmatprep.subr.mxu0 0.0
  %9857 = vmatpush1.msra.mxu0 0.0
  %9858 = vmatprep.subr.mxu0 0.0
  %9859 = vmatpush1.msra.mxu0 0.0
  %9860 = vmatprep.subr.mxu0 0.0
  %9861 = vmatpush1.msra.mxu0 0.0
  %9862 = vmatprep.subr.mxu0 0.0
  %9863 = vmatpush1.msra.mxu0 0.0
  %9864 = vmatprep.subr.mxu0 0.0
  %9865 = vmatpush1.msra.mxu0 0.0
  %9866 = vmatprep.subr.mxu0 0.0
  %9867 = vmatpush1.msra.mxu0 0.0
  %9868 = vmatprep.subr.mxu0 0.0
  %9869 = vmatpush1.msra.mxu0 0.0
  %9870 = vmatprep.subr.mxu0 0.0
  %9871 = vmatpush1.msra.mxu0 0.0
  %9872 = vmatprep.subr.mxu0 0.0
  %9873 = vmatpush1.msra.mxu0 0.0
  %9874 = vmatprep.subr.mxu0 0.0
  %9875 = vmatpush1.msra.mxu0 0.0
  %9876 = vmatprep.subr.mxu0 0.0
  %9877 = vmatpush1.msra.mxu0 0.0
  %9878 = vmatprep.subr.mxu0 0.0
  %9879 = vmatpush1.msra.mxu0 0.0
  %9880 = vmatprep.subr.mxu0 0.0
  %9881 = vmatpush1.msra.mxu0 0.0
  %9882 = vmatprep.subr.mxu0 0.0
  %9883 = vmatpush1.msra.mxu0 0.0
  %9884 = vmatprep.subr.mxu0 0.0
  %9885 = vmatpush1.msra.mxu0 0.0
  %9886 = vmatprep.subr.mxu0 0.0
  %9887 = vmatpush1.msra.mxu0 0.0
  %9888 = vmatprep.subr.mxu0 0.0
  %9889 = vmatpush1.msra.mxu0 0.0
  %9890 = vmatprep.subr.mxu0 0.0
  %9891 = vmatpush1.msra.mxu0 0.0
  %9892 = vmatprep.subr.mxu0 0.0
  %9893 = vmatpush1.msra.mxu0 0.0
  %9894 = vmatprep.subr.mxu0 0.0
  %9895 = vmatpush1.msra.mxu0 0.0
  %9896 = vmatprep.subr.mxu0 0.0
  %9897 = vmatpush1.msra.mxu0 0.0
  %9898 = vmatprep.subr.mxu0 0.0
  %9899 = vmatpush1.msra.mxu0 0.0
  %9900 = vmatprep.subr.mxu0 0.0
  %9901 = vmatpush1.msra.mxu0 0.0
  %9902 = vmatprep.subr.mxu0 0.0
  %9903 = vmatpush1.msra.mxu0 0.0
  %9904 = vmatprep.mubr.f32.mxu0 0.0
  %v9905 = vand.u32 %v9823, 4294901760
  %v9906 = vsub.f32 %v9823, %v9905
  %v9907 = vand.u32 %v9906, 4294901760
  %v9908 = vsub.f32 %v9906, %v9907
  %v9909 = vand.u32 %v9908, 4294901760
  %9910 = vmatmul.mubr.f32.gmra.mrb[0].mxu0 %v9909
  %v9911 = vpop.f32.mrb[0].mxu0
  %v9912 = vadd.f32 %v9820, %v9911
  %v9913 = vpop.f32.mrb[0].mxu0
  %9914 = vmatprep.mubr.f32.mxu0 0.0
  %v9915 = vand.u32 %v9826, 4294901760
  %v9916 = vsub.f32 %v9826, %v9915
  %v9917 = vand.u32 %v9916, 4294901760
  %v9918 = vsub.f32 %v9916, %v9917
  %v9919 = vand.u32 %v9918, 4294901760
  %9920 = vmatmul.mubr.f32.gmra.mrb[0].mxu0 %v9919
  %v9921 = vpop.f32.mrb[0].mxu0
  %v9922 = vadd.f32 %v9820, %v9921
  %v9923 = vpop.f32.mrb[0].mxu0
  %9924 = vmatprep.mubr.f32.mxu0 0.0
  %v9925 = vand.u32 %v9829, 4294901760
  %v9926 = vsub.f32 %v9829, %v9925
  %v9927 = vand.u32 %v9926, 4294901760
  %v9928 = vsub.f32 %v9926, %v9927
  %v9929 = vand.u32 %v9928, 4294901760
  %9930 = vmatmul.mubr.f32.gmra.mrb[0].mxu0 %v9929
  %v9931 = vpop.f32.mrb[0].mxu0
  %v9932 = vadd.f32 %v9820, %v9931
  %v9933 = vpop.f32.mrb[0].mxu0
  %9934 = vmatprep.mubr.f32.mxu0 0.0
  %v9935 = vand.u32 %v9832, 4294901760
  %v9936 = vsub.f32 %v9832, %v9935
  %v9937 = vand.u32 %v9936, 4294901760
  %v9938 = vsub.f32 %v9936, %v9937
  %v9939 = vand.u32 %v9938, 4294901760
  %9940 = vmatmul.mubr.f32.gmra.mrb[0].mxu0 %v9939
  %v9941 = vpop.f32.mrb[0].mxu0
  %v9942 = vadd.f32 %v9820, %v9941
  %v9943 = vpop.f32.mrb[0].mxu0
  %9944 = vdwg.mxu0
  %9945 = vmatprep.subr.mxu0 0.0
  %v9946 = vand.u32 %v9773, 4294901760
  %v9947 = vsub.f32 %v9773, %v9946
  %v9948 = vand.u32 %v9947, 4294901760
  %v9949 = vsub.f32 %v9947, %v9948
  %v9950 = vand.u32 %v9949, 4294901760
  %9951 = vmatpush1.msra.mxu0 %v9950
  %9952 = vmatprep.subr.mxu0 0.0
  %v9953 = vand.u32 %v9774, 4294901760
  %v9954 = vsub.f32 %v9774, %v9953
  %v9955 = vand.u32 %v9954, 4294901760
  %v9956 = vsub.f32 %v9954, %v9955
  %v9957 = vand.u32 %v9956, 4294901760
  %9958 = vmatpush1.msra.mxu0 %v9957
  %9959 = vmatprep.subr.mxu0 0.0
  %v9960 = vand.u32 %v9775, 4294901760
  %v9961 = vsub.f32 %v9775, %v9960
  %v9962 = vand.u32 %v9961, 4294901760
  %v9963 = vsub.f32 %v9961, %v9962
  %v9964 = vand.u32 %v9963, 4294901760
  %9965 = vmatpush1.msra.mxu0 %v9964
  %9966 = vmatprep.subr.mxu0 0.0
  %v9967 = vand.u32 %v9776, 4294901760
  %v9968 = vsub.f32 %v9776, %v9967
  %v9969 = vand.u32 %v9968, 4294901760
  %v9970 = vsub.f32 %v9968, %v9969
  %v9971 = vand.u32 %v9970, 4294901760
  %9972 = vmatpush1.msra.mxu0 %v9971
  %9973 = vmatprep.subr.mxu0 0.0
  %v9974 = vand.u32 %v9777, 4294901760
  %v9975 = vsub.f32 %v9777, %v9974
  %v9976 = vand.u32 %v9975, 4294901760
  %v9977 = vsub.f32 %v9975, %v9976
  %v9978 = vand.u32 %v9977, 4294901760
  %9979 = vmatpush1.msra.mxu0 %v9978
  %9980 = vmatprep.subr.mxu0 0.0
  %v9981 = vand.u32 %v9778, 4294901760
  %v9982 = vsub.f32 %v9778, %v9981
  %v9983 = vand.u32 %v9982, 4294901760
  %v9984 = vsub.f32 %v9982, %v9983
  %v9985 = vand.u32 %v9984, 4294901760
  %9986 = vmatpush1.msra.mxu0 %v9985
  %9987 = vmatprep.subr.mxu0 0.0
  %9988 = vmatpush1.msra.mxu0 0.0
  %9989 = vmatprep.subr.mxu0 0.0
  %9990 = vmatpush1.msra.mxu0 0.0
  %9991 = vmatprep.subr.mxu0 0.0
  %9992 = vmatpush1.msra.mxu0 0.0
  %9993 = vmatprep.subr.mxu0 0.0
  %9994 = vmatpush1.msra.mxu0 0.0
  %9995 = vmatprep.subr.mxu0 0.0
  %9996 = vmatpush1.msra.mxu0 0.0
  %9997 = vmatprep.subr.mxu0 0.0
  %9998 = vmatpush1.msra.mxu0 0.0
  %9999 = vmatprep.subr.mxu0 0.0
  %10000 = vmatpush1.msra.mxu0 0.0
  %10001 = vmatprep.subr.mxu0 0.0
  %10002 = vmatpush1.msra.mxu0 0.0
  %10003 = vmatprep.subr.mxu0 0.0
  %10004 = vmatpush1.msra.mxu0 0.0
  %10005 = vmatprep.subr.mxu0 0.0
  %10006 = vmatpush1.msra.mxu0 0.0
  %10007 = vmatprep.subr.mxu0 0.0
  %10008 = vmatpush1.msra.mxu0 0.0
  %10009 = vmatprep.subr.mxu0 0.0
  %10010 = vmatpush1.msra.mxu0 0.0
  %10011 = vmatprep.subr.mxu0 0.0
  %10012 = vmatpush1.msra.mxu0 0.0
  %10013 = vmatprep.subr.mxu0 0.0
  %10014 = vmatpush1.msra.mxu0 0.0
  %10015 = vmatprep.subr.mxu0 0.0
  %10016 = vmatpush1.msra.mxu0 0.0
  %10017 = vmatprep.subr.mxu0 0.0
  %10018 = vmatpush1.msra.mxu0 0.0
  %10019 = vmatprep.subr.mxu0 0.0
  %10020 = vmatpush1.msra.mxu0 0.0
  %10021 = vmatprep.subr.mxu0 0.0
  %10022 = vmatpush1.msra.mxu0 0.0
  %10023 = vmatprep.subr.mxu0 0.0
  %10024 = vmatpush1.msra.mxu0 0.0
  %10025 = vmatprep.subr.mxu0 0.0
  %10026 = vmatpush1.msra.mxu0 0.0
  %10027 = vmatprep.subr.mxu0 0.0
  %10028 = vmatpush1.msra.mxu0 0.0
  %10029 = vmatprep.subr.mxu0 0.0
  %10030 = vmatpush1.msra.mxu0 0.0
  %10031 = vmatprep.subr.mxu0 0.0
  %10032 = vmatpush1.msra.mxu0 0.0
  %10033 = vmatprep.subr.mxu0 0.0
  %10034 = vmatpush1.msra.mxu0 0.0
  %10035 = vmatprep.subr.mxu0 0.0
  %10036 = vmatpush1.msra.mxu0 0.0
  %10037 = vmatprep.subr.mxu0 0.0
  %10038 = vmatpush1.msra.mxu0 0.0
  %10039 = vmatprep.mubr.f32.mxu0 0.0
  %v10040 = vand.u32 %v9823, 4294901760
  %10041 = vmatmul.mubr.f32.gmra.mrb[0].mxu0 %v10040
  %v10042 = vpop.f32.mrb[0].mxu0
  %v10043 = vadd.f32 %v9912, %v10042
  %v10044 = vpop.f32.mrb[0].mxu0
  %10045 = vmatprep.mubr.f32.mxu0 0.0
  %v10046 = vand.u32 %v9826, 4294901760
  %10047 = vmatmul.mubr.f32.gmra.mrb[0].mxu0 %v10046
  %v10048 = vpop.f32.mrb[0].mxu0
  %v10049 = vadd.f32 %v9922, %v10048
  %v10050 = vpop.f32.mrb[0].mxu0
  %10051 = vmatprep.mubr.f32.mxu0 0.0
  %v10052 = vand.u32 %v9829, 4294901760
  %10053 = vmatmul.mubr.f32.gmra.mrb[0].mxu0 %v10052
  %v10054 = vpop.f32.mrb[0].mxu0
  %v10055 = vadd.f32 %v9932, %v10054
  %v10056 = vpop.f32.mrb[0].mxu0
  %10057 = vmatprep.mubr.f32.mxu0 0.0
  %v10058 = vand.u32 %v9832, 4294901760
  %10059 = vmatmul.mubr.f32.gmra.mrb[0].mxu0 %v10058
  %v10060 = vpop.f32.mrb[0].mxu0
  %v10061 = vadd.f32 %v9942, %v10060
  %v10062 = vpop.f32.mrb[0].mxu0
  %10063 = vdwg.mxu0
  %10064 = vmatprep.subr.mxu0 0.0
  %v10065 = vand.u32 %v9773, 4294901760
  %v10066 = vsub.f32 %v9773, %v10065
  %10067 = vmatpush1.msra.mxu0 %v10066
  %10068 = vmatprep.subr.mxu0 0.0
  %v10069 = vand.u32 %v9774, 4294901760
  %v10070 = vsub.f32 %v9774, %v10069
  %10071 = vmatpush1.msra.mxu0 %v10070
  %10072 = vmatprep.subr.mxu0 0.0
  %v10073 = vand.u32 %v9775, 4294901760
  %v10074 = vsub.f32 %v9775, %v10073
  %10075 = vmatpush1.msra.mxu0 %v10074
  %10076 = vmatprep.subr.mxu0 0.0
  %v10077 = vand.u32 %v9776, 4294901760
  %v10078 = vsub.f32 %v9776, %v10077
  %10079 = vmatpush1.msra.mxu0 %v10078
  %10080 = vmatprep.subr.mxu0 0.0
  %v10081 = vand.u32 %v9777, 4294901760
  %v10082 = vsub.f32 %v9777, %v10081
  %10083 = vmatpush1.msra.mxu0 %v10082
  %10084 = vmatprep.subr.mxu0 0.0
  %v10085 = vand.u32 %v9778, 4294901760
  %v10086 = vsub.f32 %v9778, %v10085
  %10087 = vmatpush1.msra.mxu0 %v10086
  %10088 = vmatprep.subr.mxu0 0.0
  %10089 = vmatpush1.msra.mxu0 0.0
  %10090 = vmatprep.subr.mxu0 0.0
  %10091 = vmatpush1.msra.mxu0 0.0
  %10092 = vmatprep.subr.mxu0 0.0
  %10093 = vmatpush1.msra.mxu0 0.0
  %10094 = vmatprep.subr.mxu0 0.0
  %10095 = vmatpush1.msra.mxu0 0.0
  %10096 = vmatprep.subr.mxu0 0.0
  %10097 = vmatpush1.msra.mxu0 0.0
  %10098 = vmatprep.subr.mxu0 0.0
  %10099 = vmatpush1.msra.mxu0 0.0
  %10100 = vmatprep.subr.mxu0 0.0
  %10101 = vmatpush1.msra.mxu0 0.0
  %10102 = vmatprep.subr.mxu0 0.0
  %10103 = vmatpush1.msra.mxu0 0.0
  %10104 = vmatprep.subr.mxu0 0.0
  %10105 = vmatpush1.msra.mxu0 0.0
  %10106 = vmatprep.subr.mxu0 0.0
  %10107 = vmatpush1.msra.mxu0 0.0
  %10108 = vmatprep.subr.mxu0 0.0
  %10109 = vmatpush1.msra.mxu0 0.0
  %10110 = vmatprep.subr.mxu0 0.0
  %10111 = vmatpush1.msra.mxu0 0.0
  %10112 = vmatprep.subr.mxu0 0.0
  %10113 = vmatpush1.msra.mxu0 0.0
  %10114 = vmatprep.subr.mxu0 0.0
  %10115 = vmatpush1.msra.mxu0 0.0
  %10116 = vmatprep.subr.mxu0 0.0
  %10117 = vmatpush1.msra.mxu0 0.0
  %10118 = vmatprep.subr.mxu0 0.0
  %10119 = vmatpush1.msra.mxu0 0.0
  %10120 = vmatprep.subr.mxu0 0.0
  %10121 = vmatpush1.msra.mxu0 0.0
  %10122 = vmatprep.subr.mxu0 0.0
  %10123 = vmatpush1.msra.mxu0 0.0
  %10124 = vmatprep.subr.mxu0 0.0
  %10125 = vmatpush1.msra.mxu0 0.0
  %10126 = vmatprep.subr.mxu0 0.0
  %10127 = vmatpush1.msra.mxu0 0.0
  %10128 = vmatprep.subr.mxu0 0.0
  %10129 = vmatpush1.msra.mxu0 0.0
  %10130 = vmatprep.subr.mxu0 0.0
  %10131 = vmatpush1.msra.mxu0 0.0
  %10132 = vmatprep.subr.mxu0 0.0
  %10133 = vmatpush1.msra.mxu0 0.0
  %10134 = vmatprep.subr.mxu0 0.0
  %10135 = vmatpush1.msra.mxu0 0.0
  %10136 = vmatprep.subr.mxu0 0.0
  %10137 = vmatpush1.msra.mxu0 0.0
  %10138 = vmatprep.subr.mxu0 0.0
  %10139 = vmatpush1.msra.mxu0 0.0
  %10140 = vmatprep.mubr.f32.mxu0 0.0
  %v10141 = vand.u32 %v9823, 4294901760
  %v10142 = vsub.f32 %v9823, %v10141
  %10143 = vmatmul.mubr.f32.gmra.mrb[0].mxu0 %v10142
  %v10144 = vpop.f32.mrb[0].mxu0
  %v10145 = vadd.f32 %v10043, %v10144
  %v10146 = vpop.f32.mrb[0].mxu0
  %10147 = vmatprep.mubr.f32.mxu0 0.0
  %v10148 = vand.u32 %v9826, 4294901760
  %v10149 = vsub.f32 %v9826, %v10148
  %10150 = vmatmul.mubr.f32.gmra.mrb[0].mxu0 %v10149
  %v10151 = vpop.f32.mrb[0].mxu0
  %v10152 = vadd.f32 %v10049, %v10151
  %v10153 = vpop.f32.mrb[0].mxu0
  %10154 = vmatprep.mubr.f32.mxu0 0.0
  %v10155 = vand.u32 %v9829, 4294901760
  %v10156 = vsub.f32 %v9829, %v10155
  %10157 = vmatmul.mubr.f32.gmra.mrb[0].mxu0 %v10156
  %v10158 = vpop.f32.mrb[0].mxu0
  %v10159 = vadd.f32 %v10055, %v10158
  %v10160 = vpop.f32.mrb[0].mxu0
  %10161 = vmatprep.mubr.f32.mxu0 0.0
  %v10162 = vand.u32 %v9832, 4294901760
  %v10163 = vsub.f32 %v9832, %v10162
  %10164 = vmatmul.mubr.f32.gmra.mrb[0].mxu0 %v10163
  %v10165 = vpop.f32.mrb[0].mxu0
  %v10166 = vadd.f32 %v10061, %v10165
  %v10167 = vpop.f32.mrb[0].mxu0
  %10168 = vdwg.mxu0
  %10169 = vmatprep.subr.mxu0 0.0
  %v10170 = vand.u32 %v9773, 4294901760
  %10171 = vmatpush1.msra.mxu0 %v10170
  %10172 = vmatprep.subr.mxu0 0.0
  %v10173 = vand.u32 %v9774, 4294901760
  %10174 = vmatpush1.msra.mxu0 %v10173
  %10175 = vmatprep.subr.mxu0 0.0
  %v10176 = vand.u32 %v9775, 4294901760
  %10177 = vmatpush1.msra.mxu0 %v10176
  %10178 = vmatprep.subr.mxu0 0.0
  %v10179 = vand.u32 %v9776, 4294901760
  %10180 = vmatpush1.msra.mxu0 %v10179
  %10181 = vmatprep.subr.mxu0 0.0
  %v10182 = vand.u32 %v9777, 4294901760
  %10183 = vmatpush1.msra.mxu0 %v10182
  %10184 = vmatprep.subr.mxu0 0.0
  %v10185 = vand.u32 %v9778, 4294901760
  %10186 = vmatpush1.msra.mxu0 %v10185
  %10187 = vmatprep.subr.mxu0 0.0
  %10188 = vmatpush1.msra.mxu0 0.0
  %10189 = vmatprep.subr.mxu0 0.0
  %10190 = vmatpush1.msra.mxu0 0.0
  %10191 = vmatprep.subr.mxu0 0.0
  %10192 = vmatpush1.msra.mxu0 0.0
  %10193 = vmatprep.subr.mxu0 0.0
  %10194 = vmatpush1.msra.mxu0 0.0
  %10195 = vmatprep.subr.mxu0 0.0
  %10196 = vmatpush1.msra.mxu0 0.0
  %10197 = vmatprep.subr.mxu0 0.0
  %10198 = vmatpush1.msra.mxu0 0.0
  %10199 = vmatprep.subr.mxu0 0.0
  %10200 = vmatpush1.msra.mxu0 0.0
  %10201 = vmatprep.subr.mxu0 0.0
  %10202 = vmatpush1.msra.mxu0 0.0
  %10203 = vmatprep.subr.mxu0 0.0
  %10204 = vmatpush1.msra.mxu0 0.0
  %10205 = vmatprep.subr.mxu0 0.0
  %10206 = vmatpush1.msra.mxu0 0.0
  %10207 = vmatprep.subr.mxu0 0.0
  %10208 = vmatpush1.msra.mxu0 0.0
  %10209 = vmatprep.subr.mxu0 0.0
  %10210 = vmatpush1.msra.mxu0 0.0
  %10211 = vmatprep.subr.mxu0 0.0
  %10212 = vmatpush1.msra.mxu0 0.0
  %10213 = vmatprep.subr.mxu0 0.0
  %10214 = vmatpush1.msra.mxu0 0.0
  %10215 = vmatprep.subr.mxu0 0.0
  %10216 = vmatpush1.msra.mxu0 0.0
  %10217 = vmatprep.subr.mxu0 0.0
  %10218 = vmatpush1.msra.mxu0 0.0
  %10219 = vmatprep.subr.mxu0 0.0
  %10220 = vmatpush1.msra.mxu0 0.0
  %10221 = vmatprep.subr.mxu0 0.0
  %10222 = vmatpush1.msra.mxu0 0.0
  %10223 = vmatprep.subr.mxu0 0.0
  %10224 = vmatpush1.msra.mxu0 0.0
  %10225 = vmatprep.subr.mxu0 0.0
  %10226 = vmatpush1.msra.mxu0 0.0
  %10227 = vmatprep.subr.mxu0 0.0
  %10228 = vmatpush1.msra.mxu0 0.0
  %10229 = vmatprep.subr.mxu0 0.0
  %10230 = vmatpush1.msra.mxu0 0.0
  %10231 = vmatprep.subr.mxu0 0.0
  %10232 = vmatpush1.msra.mxu0 0.0
  %10233 = vmatprep.subr.mxu0 0.0
  %10234 = vmatpush1.msra.mxu0 0.0
  %10235 = vmatprep.subr.mxu0 0.0
  %10236 = vmatpush1.msra.mxu0 0.0
  %10237 = vmatprep.subr.mxu0 0.0
  %10238 = vmatpush1.msra.mxu0 0.0
  %10239 = vmatprep.mubr.f32.mxu0 0.0
  %v10240 = vand.u32 %v9823, 4294901760
  %v10241 = vsub.f32 %v9823, %v10240
  %v10242 = vand.u32 %v10241, 4294901760
  %10243 = vmatmul.mubr.f32.gmra.mrb[0].mxu0 %v10242
  %v10244 = vpop.f32.mrb[0].mxu0
  %v10245 = vadd.f32 %v10145, %v10244
  %v10246 = vpop.f32.mrb[0].mxu0
  %10247 = vmatprep.mubr.f32.mxu0 0.0
  %v10248 = vand.u32 %v9826, 4294901760
  %v10249 = vsub.f32 %v9826, %v10248
  %v10250 = vand.u32 %v10249, 4294901760
  %10251 = vmatmul.mubr.f32.gmra.mrb[0].mxu0 %v10250
  %v10252 = vpop.f32.mrb[0].mxu0
  %v10253 = vadd.f32 %v10152, %v10252
  %v10254 = vpop.f32.mrb[0].mxu0
  %10255 = vmatprep.mubr.f32.mxu0 0.0
  %v10256 = vand.u32 %v9829, 4294901760
  %v10257 = vsub.f32 %v9829, %v10256
  %v10258 = vand.u32 %v10257, 4294901760
  %10259 = vmatmul.mubr.f32.gmra.mrb[0].mxu0 %v10258
  %v10260 = vpop.f32.mrb[0].mxu0
  %v10261 = vadd.f32 %v10159, %v10260
  %v10262 = vpop.f32.mrb[0].mxu0
  %10263 = vmatprep.mubr.f32.mxu0 0.0
  %v10264 = vand.u32 %v9832, 4294901760
  %v10265 = vsub.f32 %v9832, %v10264
  %v10266 = vand.u32 %v10265, 4294901760
  %10267 = vmatmul.mubr.f32.gmra.mrb[0].mxu0 %v10266
  %v10268 = vpop.f32.mrb[0].mxu0
  %v10269 = vadd.f32 %v10166, %v10268
  %v10270 = vpop.f32.mrb[0].mxu0
  %10271 = vdwg.mxu0
  %10272 = vmatprep.subr.mxu0 0.0
  %v10273 = vand.u32 %v9773, 4294901760
  %v10274 = vsub.f32 %v9773, %v10273
  %v10275 = vand.u32 %v10274, 4294901760
  %10276 = vmatpush1.msra.mxu0 %v10275
  %10277 = vmatprep.subr.mxu0 0.0
  %v10278 = vand.u32 %v9774, 4294901760
  %v10279 = vsub.f32 %v9774, %v10278
  %v10280 = vand.u32 %v10279, 4294901760
  %10281 = vmatpush1.msra.mxu0 %v10280
  %10282 = vmatprep.subr.mxu0 0.0
  %v10283 = vand.u32 %v9775, 4294901760
  %v10284 = vsub.f32 %v9775, %v10283
  %v10285 = vand.u32 %v10284, 4294901760
  %10286 = vmatpush1.msra.mxu0 %v10285
  %10287 = vmatprep.subr.mxu0 0.0
  %v10288 = vand.u32 %v9776, 4294901760
  %v10289 = vsub.f32 %v9776, %v10288
  %v10290 = vand.u32 %v10289, 4294901760
  %10291 = vmatpush1.msra.mxu0 %v10290
  %10292 = vmatprep.subr.mxu0 0.0
  %v10293 = vand.u32 %v9777, 4294901760
  %v10294 = vsub.f32 %v9777, %v10293
  %v10295 = vand.u32 %v10294, 4294901760
  %10296 = vmatpush1.msra.mxu0 %v10295
  %10297 = vmatprep.subr.mxu0 0.0
  %v10298 = vand.u32 %v9778, 4294901760
  %v10299 = vsub.f32 %v9778, %v10298
  %v10300 = vand.u32 %v10299, 4294901760
  %10301 = vmatpush1.msra.mxu0 %v10300
  %10302 = vmatprep.subr.mxu0 0.0
  %10303 = vmatpush1.msra.mxu0 0.0
  %10304 = vmatprep.subr.mxu0 0.0
  %10305 = vmatpush1.msra.mxu0 0.0
  %10306 = vmatprep.subr.mxu0 0.0
  %10307 = vmatpush1.msra.mxu0 0.0
  %10308 = vmatprep.subr.mxu0 0.0
  %10309 = vmatpush1.msra.mxu0 0.0
  %10310 = vmatprep.subr.mxu0 0.0
  %10311 = vmatpush1.msra.mxu0 0.0
  %10312 = vmatprep.subr.mxu0 0.0
  %10313 = vmatpush1.msra.mxu0 0.0
  %10314 = vmatprep.subr.mxu0 0.0
  %10315 = vmatpush1.msra.mxu0 0.0
  %10316 = vmatprep.subr.mxu0 0.0
  %10317 = vmatpush1.msra.mxu0 0.0
  %10318 = vmatprep.subr.mxu0 0.0
  %10319 = vmatpush1.msra.mxu0 0.0
  %10320 = vmatprep.subr.mxu0 0.0
  %10321 = vmatpush1.msra.mxu0 0.0
  %10322 = vmatprep.subr.mxu0 0.0
  %10323 = vmatpush1.msra.mxu0 0.0
  %10324 = vmatprep.subr.mxu0 0.0
  %10325 = vmatpush1.msra.mxu0 0.0
  %10326 = vmatprep.subr.mxu0 0.0
  %10327 = vmatpush1.msra.mxu0 0.0
  %10328 = vmatprep.subr.mxu0 0.0
  %10329 = vmatpush1.msra.mxu0 0.0
  %10330 = vmatprep.subr.mxu0 0.0
  %10331 = vmatpush1.msra.mxu0 0.0
  %10332 = vmatprep.subr.mxu0 0.0
  %10333 = vmatpush1.msra.mxu0 0.0
  %10334 = vmatprep.subr.mxu0 0.0
  %10335 = vmatpush1.msra.mxu0 0.0
  %10336 = vmatprep.subr.mxu0 0.0
  %10337 = vmatpush1.msra.mxu0 0.0
  %10338 = vmatprep.subr.mxu0 0.0
  %10339 = vmatpush1.msra.mxu0 0.0
  %10340 = vmatprep.subr.mxu0 0.0
  %10341 = vmatpush1.msra.mxu0 0.0
  %10342 = vmatprep.subr.mxu0 0.0
  %10343 = vmatpush1.msra.mxu0 0.0
  %10344 = vmatprep.subr.mxu0 0.0
  %10345 = vmatpush1.msra.mxu0 0.0
  %10346 = vmatprep.subr.mxu0 0.0
  %10347 = vmatpush1.msra.mxu0 0.0
  %10348 = vmatprep.subr.mxu0 0.0
  %10349 = vmatpush1.msra.mxu0 0.0
  %10350 = vmatprep.subr.mxu0 0.0
  %10351 = vmatpush1.msra.mxu0 0.0
  %10352 = vmatprep.subr.mxu0 0.0
  %10353 = vmatpush1.msra.mxu0 0.0
  %10354 = vmatprep.mubr.f32.mxu0 0.0
  %v10355 = vand.u32 %v9823, 4294901760
  %10356 = vmatmul.mubr.f32.gmra.mrb[0].mxu0 %v10355
  %v10357 = vpop.f32.mrb[0].mxu0
  %v10358 = vadd.f32 %v10245, %v10357
  %v10359 = vpop.f32.mrb[0].mxu0
  %10360 = vmatprep.mubr.f32.mxu0 0.0
  %v10361 = vand.u32 %v9826, 4294901760
  %10362 = vmatmul.mubr.f32.gmra.mrb[0].mxu0 %v10361
  %v10363 = vpop.f32.mrb[0].mxu0
  %v10364 = vadd.f32 %v10253, %v10363
  %v10365 = vpop.f32.mrb[0].mxu0
  %10366 = vmatprep.mubr.f32.mxu0 0.0
  %v10367 = vand.u32 %v9829, 4294901760
  %10368 = vmatmul.mubr.f32.gmra.mrb[0].mxu0 %v10367
  %v10369 = vpop.f32.mrb[0].mxu0
  %v10370 = vadd.f32 %v10261, %v10369
  %v10371 = vpop.f32.mrb[0].mxu0
  %10372 = vmatprep.mubr.f32.mxu0 0.0
  %v10373 = vand.u32 %v9832, 4294901760
  %10374 = vmatmul.mubr.f32.gmra.mrb[0].mxu0 %v10373
  %v10375 = vpop.f32.mrb[0].mxu0
  %v10376 = vadd.f32 %v10269, %v10375
  %v10377 = vpop.f32.mrb[0].mxu0
  %10378 = vdwg.mxu0
  %10379 = vmatprep.subr.mxu0 0.0
  %v10380 = vand.u32 %v9773, 4294901760
  %10381 = vmatpush1.msra.mxu0 %v10380
  %10382 = vmatprep.subr.mxu0 0.0
  %v10383 = vand.u32 %v9774, 4294901760
  %10384 = vmatpush1.msra.mxu0 %v10383
  %10385 = vmatprep.subr.mxu0 0.0
  %v10386 = vand.u32 %v9775, 4294901760
  %10387 = vmatpush1.msra.mxu0 %v10386
  %10388 = vmatprep.subr.mxu0 0.0
  %v10389 = vand.u32 %v9776, 4294901760
  %10390 = vmatpush1.msra.mxu0 %v10389
  %10391 = vmatprep.subr.mxu0 0.0
  %v10392 = vand.u32 %v9777, 4294901760
  %10393 = vmatpush1.msra.mxu0 %v10392
  %10394 = vmatprep.subr.mxu0 0.0
  %v10395 = vand.u32 %v9778, 4294901760
  %10396 = vmatpush1.msra.mxu0 %v10395
  %10397 = vmatprep.subr.mxu0 0.0
  %10398 = vmatpush1.msra.mxu0 0.0
  %10399 = vmatprep.subr.mxu0 0.0
  %10400 = vmatpush1.msra.mxu0 0.0
  %10401 = vmatprep.subr.mxu0 0.0
  %10402 = vmatpush1.msra.mxu0 0.0
  %10403 = vmatprep.subr.mxu0 0.0
  %10404 = vmatpush1.msra.mxu0 0.0
  %10405 = vmatprep.subr.mxu0 0.0
  %10406 = vmatpush1.msra.mxu0 0.0
  %10407 = vmatprep.subr.mxu0 0.0
  %10408 = vmatpush1.msra.mxu0 0.0
  %10409 = vmatprep.subr.mxu0 0.0
  %10410 = vmatpush1.msra.mxu0 0.0
  %10411 = vmatprep.subr.mxu0 0.0
  %10412 = vmatpush1.msra.mxu0 0.0
  %10413 = vmatprep.subr.mxu0 0.0
  %10414 = vmatpush1.msra.mxu0 0.0
  %10415 = vmatprep.subr.mxu0 0.0
  %10416 = vmatpush1.msra.mxu0 0.0
  %10417 = vmatprep.subr.mxu0 0.0
  %10418 = vmatpush1.msra.mxu0 0.0
  %10419 = vmatprep.subr.mxu0 0.0
  %10420 = vmatpush1.msra.mxu0 0.0
  %10421 = vmatprep.subr.mxu0 0.0
  %10422 = vmatpush1.msra.mxu0 0.0
  %10423 = vmatprep.subr.mxu0 0.0
  %10424 = vmatpush1.msra.mxu0 0.0
  %10425 = vmatprep.subr.mxu0 0.0
  %10426 = vmatpush1.msra.mxu0 0.0
  %10427 = vmatprep.subr.mxu0 0.0
  %10428 = vmatpush1.msra.mxu0 0.0
  %10429 = vmatprep.subr.mxu0 0.0
  %10430 = vmatpush1.msra.mxu0 0.0
  %10431 = vmatprep.subr.mxu0 0.0
  %10432 = vmatpush1.msra.mxu0 0.0
  %10433 = vmatprep.subr.mxu0 0.0
  %10434 = vmatpush1.msra.mxu0 0.0
  %10435 = vmatprep.subr.mxu0 0.0
  %10436 = vmatpush1.msra.mxu0 0.0
  %10437 = vmatprep.subr.mxu0 0.0
  %10438 = vmatpush1.msra.mxu0 0.0
  %10439 = vmatprep.subr.mxu0 0.0
  %10440 = vmatpush1.msra.mxu0 0.0
  %10441 = vmatprep.subr.mxu0 0.0
  %10442 = vmatpush1.msra.mxu0 0.0
  %10443 = vmatprep.subr.mxu0 0.0
  %10444 = vmatpush1.msra.mxu0 0.0
  %10445 = vmatprep.subr.mxu0 0.0
  %10446 = vmatpush1.msra.mxu0 0.0
  %10447 = vmatprep.subr.mxu0 0.0
  %10448 = vmatpush1.msra.mxu0 0.0
  %10449 = vmatprep.mubr.f32.mxu0 0.0
  %v10450 = vand.u32 %v9823, 4294901760
  %10451 = vmatmul.mubr.f32.gmra.mrb[0].mxu0 %v10450
  %v10452 = vpop.f32.mrb[0].mxu0
  %v10453 = vadd.f32 %v10358, %v10452
  %v10454 = vpop.f32.mrb[0].mxu0
  %10455 = vmatprep.mubr.f32.mxu0 0.0
  %v10456 = vand.u32 %v9826, 4294901760
  %10457 = vmatmul.mubr.f32.gmra.mrb[0].mxu0 %v10456
  %v10458 = vpop.f32.mrb[0].mxu0
  %v10459 = vadd.f32 %v10364, %v10458
  %v10460 = vpop.f32.mrb[0].mxu0
  %10461 = vmatprep.mubr.f32.mxu0 0.0
  %v10462 = vand.u32 %v9829, 4294901760
  %10463 = vmatmul.mubr.f32.gmra.mrb[0].mxu0 %v10462
  %v10464 = vpop.f32.mrb[0].mxu0
  %v10465 = vadd.f32 %v10370, %v10464
  %v10466 = vpop.f32.mrb[0].mxu0
  %10467 = vmatprep.mubr.f32.mxu0 0.0
  %v10468 = vand.u32 %v9832, 4294901760
  %10469 = vmatmul.mubr.f32.gmra.mrb[0].mxu0 %v10468
  %v10470 = vpop.f32.mrb[0].mxu0
  %v10471 = vadd.f32 %v10376, %v10470
  %v10472 = vpop.f32.mrb[0].mxu0
  %10473 = vdwg.mxu0
  %10474 = vst.msk [vmem:[%s59] sm:$0xff] %vm259, %v10453
  %10475 = vst.msk [vmem:[%s59 + $0x8] sm:$0xff] %vm259, %v10459
  %10476 = vst.msk [vmem:[%s59 + $0x10] sm:$0xff] %vm259, %v10465
  %10477 = vst.msk [vmem:[%s59 + $0x18] sm:$0xff] %vm259, %v10471
  // Predicated region
  $region118: #{autoencoder_forward.1} parent=0 // pred_check
    _
  $region119: #{autoencoder_forward.1} parent=0 // pred_check_branch
    %10479 = sbr.rel (0) target = $region121
  $region120: #{autoencoder_forward.1} parent=0 // pred_region
    _
  $region121: #{autoencoder_forward.1} parent=0 // pred_fallthru
    _
  // Predicated region
  $region122: #{autoencoder_forward.1} parent=0 // pred_check
    _
  $region123: #{autoencoder_forward.1} parent=0 // pred_check_branch
    %10481 = sbr.rel (0) target = $region125
  $region124: #{autoencoder_forward.1} parent=0 // pred_region
    _
  $region125: #{autoencoder_forward.1} parent=0 // pred_fallthru
    _

</llo_original>
